<compile_context>
chip_gen: v5e
topology: v5e:2x2
jax: 0.10.0
libtpu: 0.0.40
codegen_flags: <defaults>
</compile_context>

<pallas_src>
import jax
import jax.numpy as jnp
from jax import lax
from jax.experimental import pallas as pl
from jax.experimental.pallas import tpu as pltpu

FEAT = 512      # projection-head width, fixed by the module
LANE = 128      # TPU lane width: document/output axis is padded to a multiple of this
SUBLANE = 8     # sublane width: query axis is padded to a multiple of this


def _colbert_kernel(qt_ref, qi_ref, dt_ref, di_ref,
                    tw1_ref, tb1_ref, tw2_ref, tb2_ref,
                    iw1_ref, ib1_ref, iw2_ref, ib2_ref,
                    out_ref):
    """One grid step == `bg` batch elements.

    qt_ref: (bg, Nqp, F) bf16   query text features    (Nq padded to Nqp, mult of 8)
    qi_ref: (bg, 1,   F) bf16   query image features
    dt_ref: (bg, Ndp, F) bf16   document text features  (Nd padded to Ndp, mult of 128)
    di_ref: (bg, Ndp, F) bf16   document image features
    t*/i* : (F, F) bf16 weights, (1, F) f32 biases
    out_ref: (bg, Nqp, Ndp) f32
    """
    bg, nqp, f = qt_ref.shape
    ndp = dt_ref.shape[1]
    bf16 = jnp.bfloat16

    tw1, tb1, tw2, tb2 = tw1_ref[...], tb1_ref[...], tw2_ref[...], tb2_ref[...]
    iw1, ib1, iw2, ib2 = iw1_ref[...], ib1_ref[...], iw2_ref[...], ib2_ref[...]

    def mlp(x_bf16, w1, b1, w2, b2):
        # Linear -> Tanh -> Linear; bf16 MXU operands, f32 accumulate, f32 tanh/bias
        # (f32 elementwise path kept for v5e portability: no bf16 VPU/EUP there).
        h = jnp.dot(x_bf16, w1, preferred_element_type=jnp.float32) + b1
        h = jnp.tanh(h).astype(bf16)
        return jnp.dot(h, w2, preferred_element_type=jnp.float32) + b2

    # ---- document heads: one big MXU pass each (M = bg*Ndp rows) -----------------
    d_text = mlp(dt_ref[...].reshape(bg * ndp, f),
                 tw1, tb1, tw2, tb2).astype(bf16).reshape(bg, ndp, f)
    d_img = mlp(di_ref[...].reshape(bg * ndp, f),
                iw1, ib1, iw2, ib2).astype(bf16).reshape(bg, ndp, f)

    # ---- query heads: small extra MXU passes (M = bg*Nqp and M = bg) -------------
    # 0.5 blend folded into the query-side bf16 cast (exact power-of-two scale).
    q_text = (mlp(qt_ref[...].reshape(bg * nqp, f), tw1, tb1, tw2, tb2)
              * 0.5).astype(bf16).reshape(bg, nqp, f)
    q_img = (mlp(qi_ref[...].reshape(bg, f), iw1, ib1, iw2, ib2)
             * 0.5).astype(bf16).reshape(bg, 1, f)

    # ---- scores: two batched K=512 matmuls contracting the feature axis ----------
    # (no RHS transpose materialized; image row broadcast-added over query rows)
    dn = (((2,), (2,)), ((0,), (0,)))
    text_score = lax.dot_general(q_text, d_text, dn,
                                 preferred_element_type=jnp.float32)
    img_score = lax.dot_general(q_img, d_img, dn,
                                preferred_element_type=jnp.float32)
    out_ref[...] = text_score + img_score            # (bg,Nqp,Ndp) + (bg,1,Ndp)


def prepare_colbert_params(params):
    """Cast weights to bf16 / biases to (1,F) f32 once at parameter-load time."""
    tw1, tb1, tw2, tb2, iw1, ib1, iw2, ib2 = params
    to_w = lambda w: w.astype(jnp.bfloat16)
    to_b = lambda b: b.reshape(1, FEAT).astype(jnp.float32)
    return (to_w(tw1), to_b(tb1), to_w(tw2), to_b(tb2),
            to_w(iw1), to_b(ib1), to_w(iw2), to_b(ib2))


def colbert_scores(q_text, q_img, d_text, d_img, prepared_params, *,
                   batch_group=None):
    """q_text: (B,Nq,F), q_img: (B,1,F), d_text/d_img: (B,Nd,F) -> (B,Nq,Nd) f32."""
    B, Nq, F = q_text.shape
    Nd = d_text.shape[1]
    assert F == FEAT and q_img.shape == (B, 1, F)
    assert d_img.shape == d_text.shape

    bf16 = jnp.bfloat16
    # Cast the feature inputs to bf16 on the host (they are only ever bf16 MXU
    # operands in the kernel) and fuse the padding with that cast: one pass over HBM.
    Ndp = pl.cdiv(Nd, LANE) * LANE          # lane-dense / MXU-friendly document axis
    Nqp = pl.cdiv(Nq, SUBLANE) * SUBLANE    # sublane-aligned query axis
    q_img = q_img.astype(bf16)
    q_text = jnp.pad(q_text.astype(bf16), ((0, 0), (0, Nqp - Nq), (0, 0)))
    d_text = jnp.pad(d_text.astype(bf16), ((0, 0), (0, Ndp - Nd), (0, 0)))
    d_img = jnp.pad(d_img.astype(bf16), ((0, 0), (0, Ndp - Nd), (0, 0)))

    # Pack batch elements per grid step so the MXU M-dim reaches ~1024 document rows
    # (amortizes the ~0.35us/step pipeline overhead), but keep >= 2 grid steps so a
    # v7x megacore can shard the "parallel" batch axis across its 2 TensorCores.
    if batch_group is None:
        target = max(1, 1024 // Ndp)
        cap = min(B, target)
        if B >= 2:
            cap = max(1, min(cap, B // 2))
        batch_group = 1
        for cand in range(cap, 0, -1):
            if B % cand == 0:
                batch_group = cand
                break
    bg = batch_group
    assert B % bg == 0, "batch_group must divide the batch size"

    tw1, tb1, tw2, tb2, iw1, ib1, iw2, ib2 = prepared_params

    def batched(shape):
        return pl.BlockSpec(shape, lambda b: (b, 0, 0))

    # Weights/biases are grid-invariant (constant index_map -> DMA'd only once).
    weight_spec = pl.BlockSpec((FEAT, FEAT), lambda b: (0, 0))
    bias_spec = pl.BlockSpec((1, FEAT), lambda b: (0, 0))

    grid_spec = pltpu.PrefetchScalarGridSpec(
        num_scalar_prefetch=0,
        grid=(B // bg,),
        in_specs=[
            batched((bg, Nqp, FEAT)),   # q_text (bf16, padded)
            batched((bg, 1, FEAT)),     # q_img  (bf16)
            batched((bg, Ndp, FEAT)),   # d_text (bf16, padded)
            batched((bg, Ndp, FEAT)),   # d_img  (bf16, padded)
            weight_spec, bias_spec, weight_spec, bias_spec,   # text_linear
            weight_spec, bias_spec, weight_spec, bias_spec,   # image_linear
        ],
        out_specs=pl.BlockSpec((bg, Nqp, Ndp), lambda b: (b, 0, 0)),
    )

    out_padded = pl.pallas_call(
        _colbert_kernel,
        out_shape=jax.ShapeDtypeStruct((B, Nqp, Ndp), jnp.float32),
        grid_spec=grid_spec,
        compiler_params=pltpu.CompilerParams(
            dimension_semantics=("parallel",),
            # 48 MiB: plenty for ~10-20 MB actual use, leaves headroom on v7x (64 MiB).
            vmem_limit_bytes=48 * 1024 * 1024),
    )(q_text, q_img, d_text, d_img,
      tw1, tb1, tw2, tb2, iw1, ib1, iw2, ib2)

    # Padded document columns / query rows carry bias-only garbage; slice them off.
    return out_padded[:, :Nq, :Nd]


# ----------------------------- references -------------------------------------------


def _reference_f32(q_text, q_img, d_text, d_img, params):
    tw1, tb1, tw2, tb2, iw1, ib1, iw2, ib2 = params

    def mlp(x, w1, b1, w2, b2):
        return jnp.tanh(x @ w1 + b1) @ w2 + b2

    qt = mlp(q_text, tw1, tb1, tw2, tb2)
    dt = mlp(d_text, tw1, tb1, tw2, tb2)
    qi = mlp(q_img, iw1, ib1, iw2, ib2)
    di = mlp(d_img, iw1, ib1, iw2, ib2)
    return (0.5 * jnp.einsum("bqf,bdf->bqd", qt, dt)
            + 0.5 * jnp.einsum("bqf,bdf->bqd", qi, di))


def _reference_bf16(q_text, q_img, d_text, d_img, params):
    """Reference using the same bf16-operand / f32-accumulate casts as the kernel."""
    tw1, tb1, tw2, tb2, iw1, ib1, iw2, ib2 = params
    bf16 = jnp.bfloat16

    def mlp(x, w1, b1, w2, b2):
        h = jnp.dot(x.astype(bf16), w1.astype(bf16),
                    preferred_element_type=jnp.float32) + b1
        h = jnp.tanh(h).astype(bf16)
        return jnp.dot(h, w2.astype(bf16), preferred_element_type=jnp.float32) + b2

    qt = mlp(q_text, tw1, tb1, tw2, tb2)
    dt = mlp(d_text, tw1, tb1, tw2, tb2)
    qi = mlp(q_img, iw1, ib1, iw2, ib2)
    di = mlp(d_img, iw1, ib1, iw2, ib2)
    ts = jnp.einsum("bqf,bdf->bqd", qt.astype(bf16), dt.astype(bf16),
                    preferred_element_type=jnp.float32)
    ims = jnp.einsum("bqf,bdf->bqd", qi.astype(bf16), di.astype(bf16),
                     preferred_element_type=jnp.float32)
    return 0.5 * ts + 0.5 * ims


def make_params(key):
    ks = jax.random.split(key, 8)
    scale = 1.0 / jnp.sqrt(jnp.float32(FEAT))

    def w(k):
        return jax.random.normal(k, (FEAT, FEAT), jnp.float32) * scale

    def b(k):
        return jax.random.normal(k, (1, FEAT), jnp.float32) * 0.01

    return (w(ks[0]), b(ks[1]), w(ks[2]), b(ks[3]),
            w(ks[4]), b(ks[5]), w(ks[6]), b(ks[7]))


if __name__ == "__main__":
    key = jax.random.PRNGKey(0)
    kp, k1, k2, k3, k4 = jax.random.split(key, 5)

    B, Nq, Nd = 2, 8, 8   # small synthetic shapes; feature dim fixed at 512 by the module

    params = make_params(kp)
    prepared = prepare_colbert_params(params)   # bf16 weights cast ONCE, not per call
    # Synthetic BioCLIP encoder outputs (the pretrained towers are not translated).
    q_text = jax.random.normal(k1, (B, Nq, FEAT), jnp.float32)
    q_img = jax.random.normal(k2, (B, 1, FEAT), jnp.float32)
    d_text = jax.random.normal(k3, (B, Nd, FEAT), jnp.float32)
    d_img = jax.random.normal(k4, (B, Nd, FEAT), jnp.float32)

    out = colbert_scores(q_text, q_img, d_text, d_img, prepared)
    out = jax.block_until_ready(out)
    assert out.shape == (B, Nq, Nd)

    ref_matched = _reference_bf16(q_text, q_img, d_text, d_img, params)
    ref_f32 = _reference_f32(q_text, q_img, d_text, d_img, params)
    err_matched = float(jnp.max(jnp.abs(out - ref_matched)))
    err_f32 = float(jnp.max(jnp.abs(out - ref_f32)))
    # tight check vs a reference that uses the same bf16 matmul operands
    assert jnp.allclose(out, ref_matched, rtol=1e-2, atol=5e-2), err_matched
    # loose semantic check vs the full-f32 reference (bf16 operand rounding slack)
    assert jnp.allclose(out, ref_f32, rtol=5e-2, atol=5e-1), err_f32

    print("KERNEL_OK")
</pallas_src>

<mosaic_0001>
module attributes {stable_mosaic.version = 11 : i64} {
  func.func @_colbert_kernel(%arg0: i32, %arg1: memref<1x8x512xbf16, #tpu.memory_space<vmem>>, %arg2: memref<1x1x512xbf16, #tpu.memory_space<vmem>>, %arg3: memref<1x128x512xbf16, #tpu.memory_space<vmem>>, %arg4: memref<1x128x512xbf16, #tpu.memory_space<vmem>>, %arg5: memref<512x512xbf16, #tpu.memory_space<vmem>>, %arg6: memref<1x512xf32, #tpu.memory_space<vmem>>, %arg7: memref<512x512xbf16, #tpu.memory_space<vmem>>, %arg8: memref<1x512xf32, #tpu.memory_space<vmem>>, %arg9: memref<512x512xbf16, #tpu.memory_space<vmem>>, %arg10: memref<1x512xf32, #tpu.memory_space<vmem>>, %arg11: memref<512x512xbf16, #tpu.memory_space<vmem>>, %arg12: memref<1x512xf32, #tpu.memory_space<vmem>>, %arg13: memref<1x8x128xf32, #tpu.memory_space<vmem>>) attributes {dimension_semantics = [#tpu.dimension_semantics<parallel>], iteration_bounds = array<i64: 2>, scalar_prefetch = 0 : i64, scratch_operands = 0 : i64, tpu.core_type = #tpu.core_type<tc>, window_params = [{transform_indices = @transform_0, window_bounds = array<i64: 1, 8, 512>}, {transform_indices = @transform_1, window_bounds = array<i64: 1, 1, 512>}, {transform_indices = @transform_2, window_bounds = array<i64: 1, 128, 512>}, {transform_indices = @transform_3, window_bounds = array<i64: 1, 128, 512>}, {pipeline_mode = #tpu.pipeline_mode<synchronous>, transform_indices = @transform_4, window_bounds = array<i64: 512, 512>}, {pipeline_mode = #tpu.pipeline_mode<synchronous>, transform_indices = @transform_5, window_bounds = array<i64: 1, 512>}, {pipeline_mode = #tpu.pipeline_mode<synchronous>, transform_indices = @transform_6, window_bounds = array<i64: 512, 512>}, {pipeline_mode = #tpu.pipeline_mode<synchronous>, transform_indices = @transform_7, window_bounds = array<i64: 1, 512>}, {pipeline_mode = #tpu.pipeline_mode<synchronous>, transform_indices = @transform_8, window_bounds = array<i64: 512, 512>}, {pipeline_mode = #tpu.pipeline_mode<synchronous>, transform_indices = @transform_9, window_bounds = array<i64: 1, 512>}, {pipeline_mode = #tpu.pipeline_mode<synchronous>, transform_indices = @transform_10, window_bounds = array<i64: 512, 512>}, {pipeline_mode = #tpu.pipeline_mode<synchronous>, transform_indices = @transform_11, window_bounds = array<i64: 1, 512>}, {transform_indices = @transform_12, window_bounds = array<i64: 1, 8, 128>}]} {
    %c0 = arith.constant 0 : index
    %c0_0 = arith.constant 0 : index
    %0 = vector.load %arg5[%c0, %c0_0] : memref<512x512xbf16, #tpu.memory_space<vmem>>, vector<512x512xbf16>
    %c0_1 = arith.constant 0 : index
    %c0_2 = arith.constant 0 : index
    %1 = vector.load %arg6[%c0_1, %c0_2] : memref<1x512xf32, #tpu.memory_space<vmem>>, vector<1x512xf32>
    %c0_3 = arith.constant 0 : index
    %c0_4 = arith.constant 0 : index
    %2 = vector.load %arg7[%c0_3, %c0_4] : memref<512x512xbf16, #tpu.memory_space<vmem>>, vector<512x512xbf16>
    %c0_5 = arith.constant 0 : index
    %c0_6 = arith.constant 0 : index
    %3 = vector.load %arg8[%c0_5, %c0_6] : memref<1x512xf32, #tpu.memory_space<vmem>>, vector<1x512xf32>
    %c0_7 = arith.constant 0 : index
    %c0_8 = arith.constant 0 : index
    %4 = vector.load %arg9[%c0_7, %c0_8] : memref<512x512xbf16, #tpu.memory_space<vmem>>, vector<512x512xbf16>
    %c0_9 = arith.constant 0 : index
    %c0_10 = arith.constant 0 : index
    %5 = vector.load %arg10[%c0_9, %c0_10] : memref<1x512xf32, #tpu.memory_space<vmem>>, vector<1x512xf32>
    %c0_11 = arith.constant 0 : index
    %c0_12 = arith.constant 0 : index
    %6 = vector.load %arg11[%c0_11, %c0_12] : memref<512x512xbf16, #tpu.memory_space<vmem>>, vector<512x512xbf16>
    %c0_13 = arith.constant 0 : index
    %c0_14 = arith.constant 0 : index
    %7 = vector.load %arg12[%c0_13, %c0_14] : memref<1x512xf32, #tpu.memory_space<vmem>>, vector<1x512xf32>
    %c0_15 = arith.constant 0 : index
    %c0_16 = arith.constant 0 : index
    %c0_17 = arith.constant 0 : index
    %8 = vector.load %arg3[%c0_15, %c0_16, %c0_17] : memref<1x128x512xbf16, #tpu.memory_space<vmem>>, vector<1x128x512xbf16>
    %9 = vector.shape_cast %8 : vector<1x128x512xbf16> to vector<128x512xbf16>
    %cst = arith.constant dense<0.000000e+00> : vector<128x512xf32>
    %10 = tpu.matmul %9, %0, %cst {dimension_numbers = #tpu.dot_dimension_numbers<[1], [0], [0], [1], [0, 0, 1, 1], [], []>} : vector<128x512xbf16>, vector<512x512xbf16>, vector<128x512xf32> -> vector<128x512xf32>
    %11 = vector.broadcast %1 : vector<1x512xf32> to vector<128x512xf32>
    %12 = arith.addf %10, %11 : vector<128x512xf32>
    %13 = math.tanh %12 : vector<128x512xf32>
    %14 = arith.truncf %13 : vector<128x512xf32> to vector<128x512xbf16>
    %cst_18 = arith.constant dense<0.000000e+00> : vector<128x512xf32>
    %15 = tpu.matmul %14, %2, %cst_18 {dimension_numbers = #tpu.dot_dimension_numbers<[1], [0], [0], [1], [0, 0, 1, 1], [], []>} : vector<128x512xbf16>, vector<512x512xbf16>, vector<128x512xf32> -> vector<128x512xf32>
    %16 = vector.broadcast %3 : vector<1x512xf32> to vector<128x512xf32>
    %17 = arith.addf %15, %16 : vector<128x512xf32>
    %18 = arith.truncf %17 : vector<128x512xf32> to vector<128x512xbf16>
    %19 = vector.shape_cast %18 : vector<128x512xbf16> to vector<1x128x512xbf16>
    %c0_19 = arith.constant 0 : index
    %c0_20 = arith.constant 0 : index
    %c0_21 = arith.constant 0 : index
    %20 = vector.load %arg4[%c0_19, %c0_20, %c0_21] : memref<1x128x512xbf16, #tpu.memory_space<vmem>>, vector<1x128x512xbf16>
    %21 = vector.shape_cast %20 : vector<1x128x512xbf16> to vector<128x512xbf16>
    %cst_22 = arith.constant dense<0.000000e+00> : vector<128x512xf32>
    %22 = tpu.matmul %21, %4, %cst_22 {dimension_numbers = #tpu.dot_dimension_numbers<[1], [0], [0], [1], [0, 0, 1, 1], [], []>} : vector<128x512xbf16>, vector<512x512xbf16>, vector<128x512xf32> -> vector<128x512xf32>
    %23 = vector.broadcast %5 : vector<1x512xf32> to vector<128x512xf32>
    %24 = arith.addf %22, %23 : vector<128x512xf32>
    %25 = math.tanh %24 : vector<128x512xf32>
    %26 = arith.truncf %25 : vector<128x512xf32> to vector<128x512xbf16>
    %cst_23 = arith.constant dense<0.000000e+00> : vector<128x512xf32>
    %27 = tpu.matmul %26, %6, %cst_23 {dimension_numbers = #tpu.dot_dimension_numbers<[1], [0], [0], [1], [0, 0, 1, 1], [], []>} : vector<128x512xbf16>, vector<512x512xbf16>, vector<128x512xf32> -> vector<128x512xf32>
    %28 = vector.broadcast %7 : vector<1x512xf32> to vector<128x512xf32>
    %29 = arith.addf %27, %28 : vector<128x512xf32>
    %30 = arith.truncf %29 : vector<128x512xf32> to vector<128x512xbf16>
    %31 = vector.shape_cast %30 : vector<128x512xbf16> to vector<1x128x512xbf16>
    %c0_24 = arith.constant 0 : index
    %c0_25 = arith.constant 0 : index
    %c0_26 = arith.constant 0 : index
    %32 = vector.load %arg1[%c0_24, %c0_25, %c0_26] : memref<1x8x512xbf16, #tpu.memory_space<vmem>>, vector<1x8x512xbf16>
    %33 = vector.shape_cast %32 : vector<1x8x512xbf16> to vector<8x512xbf16>
    %cst_27 = arith.constant dense<0.000000e+00> : vector<8x512xf32>
    %34 = tpu.matmul %33, %0, %cst_27 {dimension_numbers = #tpu.dot_dimension_numbers<[1], [0], [0], [1], [0, 0, 1, 1], [], []>} : vector<8x512xbf16>, vector<512x512xbf16>, vector<8x512xf32> -> vector<8x512xf32>
    %35 = vector.broadcast %1 : vector<1x512xf32> to vector<8x512xf32>
    %36 = arith.addf %34, %35 : vector<8x512xf32>
    %37 = math.tanh %36 : vector<8x512xf32>
    %38 = arith.truncf %37 : vector<8x512xf32> to vector<8x512xbf16>
    %cst_28 = arith.constant dense<0.000000e+00> : vector<8x512xf32>
    %39 = tpu.matmul %38, %2, %cst_28 {dimension_numbers = #tpu.dot_dimension_numbers<[1], [0], [0], [1], [0, 0, 1, 1], [], []>} : vector<8x512xbf16>, vector<512x512xbf16>, vector<8x512xf32> -> vector<8x512xf32>
    %40 = vector.broadcast %3 : vector<1x512xf32> to vector<8x512xf32>
    %41 = arith.addf %39, %40 : vector<8x512xf32>
    %cst_29 = arith.constant 5.000000e-01 : f32
    %42 = vector.broadcast %cst_29 : f32 to vector<8x512xf32>
    %43 = arith.mulf %41, %42 : vector<8x512xf32>
    %44 = arith.truncf %43 : vector<8x512xf32> to vector<8x512xbf16>
    %45 = vector.shape_cast %44 : vector<8x512xbf16> to vector<1x8x512xbf16>
    %c0_30 = arith.constant 0 : index
    %c0_31 = arith.constant 0 : index
    %c0_32 = arith.constant 0 : index
    %46 = vector.load %arg2[%c0_30, %c0_31, %c0_32] : memref<1x1x512xbf16, #tpu.memory_space<vmem>>, vector<1x1x512xbf16>
    %47 = vector.shape_cast %46 : vector<1x1x512xbf16> to vector<1x512xbf16>
    %cst_33 = arith.constant dense<0.000000e+00> : vector<1x512xf32>
    %48 = tpu.matmul %47, %4, %cst_33 {dimension_numbers = #tpu.dot_dimension_numbers<[1], [0], [0], [1], [0, 0, 1, 1], [], []>} : vector<1x512xbf16>, vector<512x512xbf16>, vector<1x512xf32> -> vector<1x512xf32>
    %49 = arith.addf %48, %5 : vector<1x512xf32>
    %50 = math.tanh %49 : vector<1x512xf32>
    %51 = arith.truncf %50 : vector<1x512xf32> to vector<1x512xbf16>
    %cst_34 = arith.constant dense<0.000000e+00> : vector<1x512xf32>
    %52 = tpu.matmul %51, %6, %cst_34 {dimension_numbers = #tpu.dot_dimension_numbers<[1], [0], [0], [1], [0, 0, 1, 1], [], []>} : vector<1x512xbf16>, vector<512x512xbf16>, vector<1x512xf32> -> vector<1x512xf32>
    %53 = arith.addf %52, %7 : vector<1x512xf32>
    %cst_35 = arith.constant 5.000000e-01 : f32
    %54 = vector.broadcast %cst_35 : f32 to vector<1x512xf32>
    %55 = arith.mulf %53, %54 : vector<1x512xf32>
    %56 = arith.truncf %55 : vector<1x512xf32> to vector<1x512xbf16>
    %57 = vector.shape_cast %56 : vector<1x512xbf16> to vector<1x1x512xbf16>
    %cst_36 = arith.constant dense<0.000000e+00> : vector<1x8x128xf32>
    %58 = tpu.matmul %45, %19, %cst_36 {dimension_numbers = #tpu.dot_dimension_numbers<[2], [2], [1], [1], [0, 0, 0, 1, 1, 1], [0], [0]>} : vector<1x8x512xbf16>, vector<1x128x512xbf16>, vector<1x8x128xf32> -> vector<1x8x128xf32>
    %cst_37 = arith.constant dense<0.000000e+00> : vector<1x1x128xf32>
    %59 = tpu.matmul %57, %31, %cst_37 {dimension_numbers = #tpu.dot_dimension_numbers<[2], [2], [1], [1], [0, 0, 0, 1, 1, 1], [0], [0]>} : vector<1x1x512xbf16>, vector<1x128x512xbf16>, vector<1x1x128xf32> -> vector<1x1x128xf32>
    %60 = vector.broadcast %59 : vector<1x1x128xf32> to vector<1x8x128xf32>
    %61 = arith.addf %58, %60 : vector<1x8x128xf32>
    %c0_38 = arith.constant 0 : index
    %c0_39 = arith.constant 0 : index
    %c0_40 = arith.constant 0 : index
    %62 = vector.load %arg13[%c0_38, %c0_39, %c0_40] : memref<1x8x128xf32, #tpu.memory_space<vmem>>, vector<1x8x128xf32>
    tpu.vector_store %arg13[%c0_38, %c0_39, %c0_40], %61 {strides = array<i32>} : memref<1x8x128xf32, #tpu.memory_space<vmem>>, vector<1x8x128xf32>,
    return
  }
  func.func @transform_0(%arg0: i32) -> (i32, i32, i32) {
    %c0_i32 = arith.constant 0 : i32
    %c0_i32_0 = arith.constant 0 : i32
    %c0_i32_1 = arith.constant 0 : i32
    return %arg0, %c0_i32, %c0_i32_0 : i32, i32, i32
  }
  func.func @transform_1(%arg0: i32) -> (i32, i32, i32) {
    %c0_i32 = arith.constant 0 : i32
    %c0_i32_0 = arith.constant 0 : i32
    %c0_i32_1 = arith.constant 0 : i32
    return %arg0, %c0_i32, %c0_i32_0 : i32, i32, i32
  }
  func.func @transform_2(%arg0: i32) -> (i32, i32, i32) {
    %c0_i32 = arith.constant 0 : i32
    %c0_i32_0 = arith.constant 0 : i32
    %c0_i32_1 = arith.constant 0 : i32
    return %arg0, %c0_i32, %c0_i32_0 : i32, i32, i32
  }
  func.func @transform_3(%arg0: i32) -> (i32, i32, i32) {
    %c0_i32 = arith.constant 0 : i32
    %c0_i32_0 = arith.constant 0 : i32
    %c0_i32_1 = arith.constant 0 : i32
    return %arg0, %c0_i32, %c0_i32_0 : i32, i32, i32
  }
  func.func @transform_4(%arg0: i32) -> (i32, i32) {
    %c0_i32 = arith.constant 0 : i32
    %c0_i32_0 = arith.constant 0 : i32
    %c0_i32_1 = arith.constant 0 : i32
    return %c0_i32, %c0_i32_0 : i32, i32
  }
  func.func @transform_5(%arg0: i32) -> (i32, i32) {
    %c0_i32 = arith.constant 0 : i32
    %c0_i32_0 = arith.constant 0 : i32
    %c0_i32_1 = arith.constant 0 : i32
    return %c0_i32, %c0_i32_0 : i32, i32
  }
  func.func @transform_6(%arg0: i32) -> (i32, i32) {
    %c0_i32 = arith.constant 0 : i32
    %c0_i32_0 = arith.constant 0 : i32
    %c0_i32_1 = arith.constant 0 : i32
    return %c0_i32, %c0_i32_0 : i32, i32
  }
  func.func @transform_7(%arg0: i32) -> (i32, i32) {
    %c0_i32 = arith.constant 0 : i32
    %c0_i32_0 = arith.constant 0 : i32
    %c0_i32_1 = arith.constant 0 : i32
    return %c0_i32, %c0_i32_0 : i32, i32
  }
  func.func @transform_8(%arg0: i32) -> (i32, i32) {
    %c0_i32 = arith.constant 0 : i32
    %c0_i32_0 = arith.constant 0 : i32
    %c0_i32_1 = arith.constant 0 : i32
    return %c0_i32, %c0_i32_0 : i32, i32
  }
  func.func @transform_9(%arg0: i32) -> (i32, i32) {
    %c0_i32 = arith.constant 0 : i32
    %c0_i32_0 = arith.constant 0 : i32
    %c0_i32_1 = arith.constant 0 : i32
    return %c0_i32, %c0_i32_0 : i32, i32
  }
  func.func @transform_10(%arg0: i32) -> (i32, i32) {
    %c0_i32 = arith.constant 0 : i32
    %c0_i32_0 = arith.constant 0 : i32
    %c0_i32_1 = arith.constant 0 : i32
    return %c0_i32, %c0_i32_0 : i32, i32
  }
  func.func @transform_11(%arg0: i32) -> (i32, i32) {
    %c0_i32 = arith.constant 0 : i32
    %c0_i32_0 = arith.constant 0 : i32
    %c0_i32_1 = arith.constant 0 : i32
    return %c0_i32, %c0_i32_0 : i32, i32
  }
  func.func @transform_12(%arg0: i32) -> (i32, i32, i32) {
    %c0_i32 = arith.constant 0 : i32
    %c0_i32_0 = arith.constant 0 : i32
    %c0_i32_1 = arith.constant 0 : i32
    return %arg0, %c0_i32, %c0_i32_0 : i32, i32, i32
  }
}

</mosaic_0001>

<llo_original>
// kernel: tpu_custom_call.1
$region0: #{tpu_custom_call.1}
  #allocation0 [shape = 'u32[]', space=smem, size = 0x4, offset = 0x4, fixed_abs, tag = 'smem constant byte address 0x4 - core index']
  #allocation1 [shape = 'u32[72,128]{1,0:T(1,128)}', space=vmem, size = 0x9000, scoped, tag = 'internal scratch']
  %s0 = inlined_call_operand.hbm [shape: bf16[2,8,512], index: 0, kind: input, shape index: {}]
  %s1 = inlined_call_operand.vmem [shape: bf16[2,1,512], index: 1, kind: input, shape index: {}]
  %s2 = inlined_call_operand.hbm [shape: bf16[2,128,512], index: 2, kind: input, shape index: {}]
  %s3 = inlined_call_operand.hbm [shape: bf16[2,128,512], index: 3, kind: input, shape index: {}]
  %s4 = inlined_call_operand.hbm [shape: bf16[512,512], index: 4, kind: input, shape index: {}]
  %s5 = inlined_call_operand.vmem [shape: f32[1,512], index: 5, kind: input, shape index: {}]
  %s6 = inlined_call_operand.hbm [shape: bf16[512,512], index: 6, kind: input, shape index: {}]
  %s7 = inlined_call_operand.vmem [shape: f32[1,512], index: 7, kind: input, shape index: {}]
  %s8 = inlined_call_operand.hbm [shape: bf16[512,512], index: 8, kind: input, shape index: {}]
  %s9 = inlined_call_operand.vmem [shape: f32[1,512], index: 9, kind: input, shape index: {}]
  %s10 = inlined_call_operand.hbm [shape: bf16[512,512], index: 10, kind: input, shape index: {}]
  %s11 = inlined_call_operand.vmem [shape: f32[1,512], index: 11, kind: input, shape index: {}]
  %s12 = inlined_call_operand.hbm [shape: f32[2,8,128], index: 12, kind: output, shape index: {}]
  %s13 = sld [smem:[#allocation0]]
  $region109: #{tpu_custom_call.1} parent=0
    _
  %s15 = ssub.s32 1, %s13
  %s16 = scalar_select 0, %s15, %s13
  $region1: #{tpu_custom_call.1} parent=0
    #allocation2 [shape = 'u8[16384]{0}', space=vmem, size = 0x4000, scoped, tag = 'input window, operand 0']
    #allocation3 [shape = 's32[2]{0}', space=sflag, size = 0x8, scoped, tag = 'scoped memory for tpu_custom_call.1']
    #allocation4 [shape = 's32[2]{0}', space=sflag, size = 0x8, scoped, tag = 'scoped memory for tpu_custom_call.1']
    #allocation5 [shape = 'u8[262144]{0}', space=vmem, size = 0x40000, scoped, tag = 'input window, operand 2']
    #allocation6 [shape = 's32[2]{0}', space=sflag, size = 0x8, scoped, tag = 'scoped memory for tpu_custom_call.1']
    #allocation7 [shape = 'u8[262144]{0}', space=vmem, size = 0x40000, scoped, tag = 'input window, operand 3']
    #allocation8 [shape = 'u8[524288]{0}', space=vmem, size = 0x80000, scoped, tag = 'input window, operand 4, single buffered']
    #allocation9 [shape = 's32[1]{0}', space=sflag, size = 0x4, scoped, tag = 'scoped memory for tpu_custom_call.1']
    #allocation10 [shape = 'u8[524288]{0}', space=vmem, size = 0x80000, scoped, tag = 'input window, operand 6, single buffered']
    #allocation11 [shape = 'u8[524288]{0}', space=vmem, size = 0x80000, scoped, tag = 'input window, operand 8, single buffered']
    #allocation12 [shape = 's32[1]{0}', space=sflag, size = 0x4, scoped, tag = 'scoped memory for tpu_custom_call.1']
    #allocation13 [shape = 'u8[524288]{0}', space=vmem, size = 0x80000, scoped, tag = 'input window, operand 10, single buffered']
    #allocation14 [shape = 'u8[8192]{0}', space=vmem, size = 0x2000, scoped, tag = 'output window, operand 0']
    %17 = vsyncpa [#allocation3], 0
    %s18 = scalar_lea.sflag [#allocation3], 1
    %19 = vsyncpa %s18, 0
    %20 = vsyncpa [#allocation6], 0
    %s21 = scalar_lea.sflag [#allocation6], 1
    %22 = vsyncpa %s21, 0
    %23 = vsyncpa [#allocation9], 0
    %24 = vsyncpa [#allocation12], 0
    %25 = vsyncpa [#allocation4], 0
    %s26 = scalar_lea.sflag [#allocation4], 1
    %27 = vsyncpa %s26, 0
    loop: start=0, step=1, limit=4
    $region2: #{tpu_custom_call.1} parent=1 // loop_pre_header
      _
    $region3: #{tpu_custom_call.1} parent=1 // loop_header
      %s29 = sphi 0, %s33
      %p30 = scmp.ge.s32.totalorder %s29, 4
      %s39 = sphi 0, %s41
      %s42 = sphi 0, %s39
      %s43 = sphi 0, %s42
      %s59 = sphi 0, %s43
      %s65 = sphi 0, %s67
      %s68 = sphi 0, %s65
      %s69 = sphi 0, %s68
      %s85 = sphi 0, %s69
      %s91 = sphi 0, %s93
      %s94 = sphi 0, %s91
      %s95 = sphi 0, %s94
      %s111 = sphi 0, %s95
      %s117 = sphi 0, %s119
      %s120 = sphi 0, %s117
      %s121 = sphi 0, %s120
      %s137 = sphi 0, %s121
      %s141 = sphi 0, %s141
      %s143 = sphi 0, %s141
      %s144 = sphi 0, %s143
      %s158 = sphi 0, %s144
      %s162 = sphi 0, %s162
      %s164 = sphi 0, %s162
      %s165 = sphi 0, %s164
      %s179 = sphi 0, %s165
      %s183 = sphi 0, %s183
      %s185 = sphi 0, %s183
      %s186 = sphi 0, %s185
      %s200 = sphi 0, %s186
      %s204 = sphi 0, %s204
      %s206 = sphi 0, %s204
      %s207 = sphi 0, %s206
      %s221 = sphi 0, %s207
      %s225 = sphi 0, %s225
      %s227 = sphi 0, %s225
      %s228 = sphi 0, %s227
      %s242 = sphi 0, %s228
      %s246 = sphi 0, %s246
      %s248 = sphi 0, %s246
      %s249 = sphi 0, %s248
      %s263 = sphi 0, %s249
      %s267 = sphi 0, %s267
      %s269 = sphi 0, %s267
      %s270 = sphi 0, %s269
      %s284 = sphi 0, %s270
      %s288 = sphi 0, %s288
      %s290 = sphi 0, %s288
      %s291 = sphi 0, %s290
      %s305 = sphi 0, %s291
      %s311 = sphi 0, %s313
      %s314 = sphi 0, %s311
      %s315 = sphi 0, %s314
      %s331 = sphi 0, %s315
    $region4: #{tpu_custom_call.1} parent=1 // loop_header_branch
      %32 = sbr.rel (%p30) target = $region8
    $region5: #{tpu_custom_call.1} parent=1 // loop_body
      %s34 = ssub.s32 %s29, 1
      %s35 = ssub.s32 %s29, 2
      %s36 = sadd.s32 %s29, 1
      %s37 = ssub.s32 %s29, %s36
      %p38 = scmp.eq.s32.totalorder %s37, 0
      %s40 = sadd.s32 %s39, 1
      %s41 = scalar_select %p38, %s39, %s40
      %p44 = pneg %p38
      %p45 = scmp.eq.s32.totalorder %s29, 1
      %p46 = por %p44, %p45
      %p47 = scmp.ne.s32.totalorder %s39, %s42
      %p48 = scmp.eq.s32.totalorder %s29, 0
      %p49 = por %p47, %p48
      %p50 = scmp.ne.s32.totalorder %s39, %s42
      %p51 = scmp.eq.s32.totalorder %s34, 1
      %p52 = por %p50, %p51
      %p53 = scmp.ne.s32.totalorder %s42, %s43
      %p54 = scmp.eq.s32.totalorder %s34, 0
      %p55 = por %p53, %p54
      %p56 = scmp.ne.s32.totalorder %s42, %s43
      %p57 = scmp.eq.s32.totalorder %s35, 1
      %p58 = por %p56, %p57
      %p60 = scmp.ne.s32.totalorder %s43, %s59
      %p61 = scmp.eq.s32.totalorder %s35, 0
      %p62 = por %p60, %p61
      %s63 = ssub.s32 %s29, %s36
      %p64 = scmp.eq.s32.totalorder %s63, 0
      %s66 = sadd.s32 %s65, 1
      %s67 = scalar_select %p64, %s65, %s66
      %p70 = pneg %p64
      %p71 = scmp.eq.s32.totalorder %s29, 1
      %p72 = por %p70, %p71
      %p73 = scmp.ne.s32.totalorder %s65, %s68
      %p74 = scmp.eq.s32.totalorder %s29, 0
      %p75 = por %p73, %p74
      %p76 = scmp.ne.s32.totalorder %s65, %s68
      %p77 = scmp.eq.s32.totalorder %s34, 1
      %p78 = por %p76, %p77
      %p79 = scmp.ne.s32.totalorder %s68, %s69
      %p80 = scmp.eq.s32.totalorder %s34, 0
      %p81 = por %p79, %p80
      %p82 = scmp.ne.s32.totalorder %s68, %s69
      %p83 = scmp.eq.s32.totalorder %s35, 1
      %p84 = por %p82, %p83
      %p86 = scmp.ne.s32.totalorder %s69, %s85
      %p87 = scmp.eq.s32.totalorder %s35, 0
      %p88 = por %p86, %p87
      %s89 = ssub.s32 %s29, %s36
      %p90 = scmp.eq.s32.totalorder %s89, 0
      %s92 = sadd.s32 %s91, 1
      %s93 = scalar_select %p90, %s91, %s92
      %p96 = pneg %p90
      %p97 = scmp.eq.s32.totalorder %s29, 1
      %p98 = por %p96, %p97
      %p99 = scmp.ne.s32.totalorder %s91, %s94
      %p100 = scmp.eq.s32.totalorder %s29, 0
      %p101 = por %p99, %p100
      %p102 = scmp.ne.s32.totalorder %s91, %s94
      %p103 = scmp.eq.s32.totalorder %s34, 1
      %p104 = por %p102, %p103
      %p105 = scmp.ne.s32.totalorder %s94, %s95
      %p106 = scmp.eq.s32.totalorder %s34, 0
      %p107 = por %p105, %p106
      %p108 = scmp.ne.s32.totalorder %s94, %s95
      %p109 = scmp.eq.s32.totalorder %s35, 1
      %p110 = por %p108, %p109
      %p112 = scmp.ne.s32.totalorder %s95, %s111
      %p113 = scmp.eq.s32.totalorder %s35, 0
      %p114 = por %p112, %p113
      %s115 = ssub.s32 %s29, %s36
      %p116 = scmp.eq.s32.totalorder %s115, 0
      %s118 = sadd.s32 %s117, 1
      %s119 = scalar_select %p116, %s117, %s118
      %p122 = pneg %p116
      %p123 = scmp.eq.s32.totalorder %s29, 1
      %p124 = por %p122, %p123
      %p125 = scmp.ne.s32.totalorder %s117, %s120
      %p126 = scmp.eq.s32.totalorder %s29, 0
      %p127 = por %p125, %p126
      %p128 = scmp.ne.s32.totalorder %s117, %s120
      %p129 = scmp.eq.s32.totalorder %s34, 1
      %p130 = por %p128, %p129
      %p131 = scmp.ne.s32.totalorder %s120, %s121
      %p132 = scmp.eq.s32.totalorder %s34, 0
      %p133 = por %p131, %p132
      %p134 = scmp.ne.s32.totalorder %s120, %s121
      %p135 = scmp.eq.s32.totalorder %s35, 1
      %p136 = por %p134, %p135
      %p138 = scmp.ne.s32.totalorder %s121, %s137
      %p139 = scmp.eq.s32.totalorder %s35, 0
      %p140 = por %p138, %p139
      %s142 = sadd.s32 %s141, 1
      %p145 = scmp.eq.s32.totalorder %s29, 1
      %p146 = scmp.ne.s32.totalorder %s141, %s143
      %p147 = scmp.eq.s32.totalorder %s29, 0
      %p148 = por %p146, %p147
      %p149 = scmp.ne.s32.totalorder %s141, %s143
      %p150 = scmp.eq.s32.totalorder %s34, 1
      %p151 = por %p149, %p150
      %p152 = scmp.ne.s32.totalorder %s143, %s144
      %p153 = scmp.eq.s32.totalorder %s34, 0
      %p154 = por %p152, %p153
      %p155 = scmp.ne.s32.totalorder %s143, %s144
      %p156 = scmp.eq.s32.totalorder %s35, 1
      %p157 = por %p155, %p156
      %p159 = scmp.ne.s32.totalorder %s144, %s158
      %p160 = scmp.eq.s32.totalorder %s35, 0
      %p161 = por %p159, %p160
      %s163 = sadd.s32 %s162, 1
      %p166 = scmp.eq.s32.totalorder %s29, 1
      %p167 = scmp.ne.s32.totalorder %s162, %s164
      %p168 = scmp.eq.s32.totalorder %s29, 0
      %p169 = por %p167, %p168
      %p170 = scmp.ne.s32.totalorder %s162, %s164
      %p171 = scmp.eq.s32.totalorder %s34, 1
      %p172 = por %p170, %p171
      %p173 = scmp.ne.s32.totalorder %s164, %s165
      %p174 = scmp.eq.s32.totalorder %s34, 0
      %p175 = por %p173, %p174
      %p176 = scmp.ne.s32.totalorder %s164, %s165
      %p177 = scmp.eq.s32.totalorder %s35, 1
      %p178 = por %p176, %p177
      %p180 = scmp.ne.s32.totalorder %s165, %s179
      %p181 = scmp.eq.s32.totalorder %s35, 0
      %p182 = por %p180, %p181
      %s184 = sadd.s32 %s183, 1
      %p187 = scmp.eq.s32.totalorder %s29, 1
      %p188 = scmp.ne.s32.totalorder %s183, %s185
      %p189 = scmp.eq.s32.totalorder %s29, 0
      %p190 = por %p188, %p189
      %p191 = scmp.ne.s32.totalorder %s183, %s185
      %p192 = scmp.eq.s32.totalorder %s34, 1
      %p193 = por %p191, %p192
      %p194 = scmp.ne.s32.totalorder %s185, %s186
      %p195 = scmp.eq.s32.totalorder %s34, 0
      %p196 = por %p194, %p195
      %p197 = scmp.ne.s32.totalorder %s185, %s186
      %p198 = scmp.eq.s32.totalorder %s35, 1
      %p199 = por %p197, %p198
      %p201 = scmp.ne.s32.totalorder %s186, %s200
      %p202 = scmp.eq.s32.totalorder %s35, 0
      %p203 = por %p201, %p202
      %s205 = sadd.s32 %s204, 1
      %p208 = scmp.eq.s32.totalorder %s29, 1
      %p209 = scmp.ne.s32.totalorder %s204, %s206
      %p210 = scmp.eq.s32.totalorder %s29, 0
      %p211 = por %p209, %p210
      %p212 = scmp.ne.s32.totalorder %s204, %s206
      %p213 = scmp.eq.s32.totalorder %s34, 1
      %p214 = por %p212, %p213
      %p215 = scmp.ne.s32.totalorder %s206, %s207
      %p216 = scmp.eq.s32.totalorder %s34, 0
      %p217 = por %p215, %p216
      %p218 = scmp.ne.s32.totalorder %s206, %s207
      %p219 = scmp.eq.s32.totalorder %s35, 1
      %p220 = por %p218, %p219
      %p222 = scmp.ne.s32.totalorder %s207, %s221
      %p223 = scmp.eq.s32.totalorder %s35, 0
      %p224 = por %p222, %p223
      %s226 = sadd.s32 %s225, 1
      %p229 = scmp.eq.s32.totalorder %s29, 1
      %p230 = scmp.ne.s32.totalorder %s225, %s227
      %p231 = scmp.eq.s32.totalorder %s29, 0
      %p232 = por %p230, %p231
      %p233 = scmp.ne.s32.totalorder %s225, %s227
      %p234 = scmp.eq.s32.totalorder %s34, 1
      %p235 = por %p233, %p234
      %p236 = scmp.ne.s32.totalorder %s227, %s228
      %p237 = scmp.eq.s32.totalorder %s34, 0
      %p238 = por %p236, %p237
      %p239 = scmp.ne.s32.totalorder %s227, %s228
      %p240 = scmp.eq.s32.totalorder %s35, 1
      %p241 = por %p239, %p240
      %p243 = scmp.ne.s32.totalorder %s228, %s242
      %p244 = scmp.eq.s32.totalorder %s35, 0
      %p245 = por %p243, %p244
      %s247 = sadd.s32 %s246, 1
      %p250 = scmp.eq.s32.totalorder %s29, 1
      %p251 = scmp.ne.s32.totalorder %s246, %s248
      %p252 = scmp.eq.s32.totalorder %s29, 0
      %p253 = por %p251, %p252
      %p254 = scmp.ne.s32.totalorder %s246, %s248
      %p255 = scmp.eq.s32.totalorder %s34, 1
      %p256 = por %p254, %p255
      %p257 = scmp.ne.s32.totalorder %s248, %s249
      %p258 = scmp.eq.s32.totalorder %s34, 0
      %p259 = por %p257, %p258
      %p260 = scmp.ne.s32.totalorder %s248, %s249
      %p261 = scmp.eq.s32.totalorder %s35, 1
      %p262 = por %p260, %p261
      %p264 = scmp.ne.s32.totalorder %s249, %s263
      %p265 = scmp.eq.s32.totalorder %s35, 0
      %p266 = por %p264, %p265
      %s268 = sadd.s32 %s267, 1
      %p271 = scmp.eq.s32.totalorder %s29, 1
      %p272 = scmp.ne.s32.totalorder %s267, %s269
      %p273 = scmp.eq.s32.totalorder %s29, 0
      %p274 = por %p272, %p273
      %p275 = scmp.ne.s32.totalorder %s267, %s269
      %p276 = scmp.eq.s32.totalorder %s34, 1
      %p277 = por %p275, %p276
      %p278 = scmp.ne.s32.totalorder %s269, %s270
      %p279 = scmp.eq.s32.totalorder %s34, 0
      %p280 = por %p278, %p279
      %p281 = scmp.ne.s32.totalorder %s269, %s270
      %p282 = scmp.eq.s32.totalorder %s35, 1
      %p283 = por %p281, %p282
      %p285 = scmp.ne.s32.totalorder %s270, %s284
      %p286 = scmp.eq.s32.totalorder %s35, 0
      %p287 = por %p285, %p286
      %s289 = sadd.s32 %s288, 1
      %p292 = scmp.eq.s32.totalorder %s29, 1
      %p293 = scmp.ne.s32.totalorder %s288, %s290
      %p294 = scmp.eq.s32.totalorder %s29, 0
      %p295 = por %p293, %p294
      %p296 = scmp.ne.s32.totalorder %s288, %s290
      %p297 = scmp.eq.s32.totalorder %s34, 1
      %p298 = por %p296, %p297
      %p299 = scmp.ne.s32.totalorder %s290, %s291
      %p300 = scmp.eq.s32.totalorder %s34, 0
      %p301 = por %p299, %p300
      %p302 = scmp.ne.s32.totalorder %s290, %s291
      %p303 = scmp.eq.s32.totalorder %s35, 1
      %p304 = por %p302, %p303
      %p306 = scmp.ne.s32.totalorder %s291, %s305
      %p307 = scmp.eq.s32.totalorder %s35, 0
      %p308 = por %p306, %p307
      %s309 = ssub.s32 %s29, %s36
      %p310 = scmp.eq.s32.totalorder %s309, 0
      %s312 = sadd.s32 %s311, 1
      %s313 = scalar_select %p310, %s311, %s312
      %p316 = pneg %p310
      %p317 = scmp.eq.s32.totalorder %s29, 1
      %p318 = por %p316, %p317
      %p319 = scmp.ne.s32.totalorder %s311, %s314
      %p320 = scmp.eq.s32.totalorder %s29, 0
      %p321 = por %p319, %p320
      %p322 = scmp.ne.s32.totalorder %s311, %s314
      %p323 = scmp.eq.s32.totalorder %s34, 1
      %p324 = por %p322, %p323
      %p325 = scmp.ne.s32.totalorder %s314, %s315
      %p326 = scmp.eq.s32.totalorder %s34, 0
      %p327 = por %p325, %p326
      %p328 = scmp.ne.s32.totalorder %s314, %s315
      %p329 = scmp.eq.s32.totalorder %s35, 1
      %p330 = por %p328, %p329
      %p332 = scmp.ne.s32.totalorder %s315, %s331
      %p333 = scmp.eq.s32.totalorder %s35, 0
      %p334 = por %p332, %p333
      %p335 = scmp.le.s32.totalorder 1, %s29
      %p336 = scmp.lt.s32.totalorder %s29, 3
      %p337 = pnand %p335, %p336
      %p338 = pneg %p337
      // Predicated region
      $region9: #{tpu_custom_call.1} parent=5 // pred_check
        _
      $region10: #{tpu_custom_call.1} parent=5 // pred_check_branch
        %340 = sbr.rel (%p337) target = $region12
      $region11: #{tpu_custom_call.1} parent=5 // pred_region
        %s341 = ssub.s32 %s29, 1
        // Predicated region
        $region13: #{tpu_custom_call.1} parent=11 // pred_check
          %p342 = pneg %p154
        $region14: #{tpu_custom_call.1} parent=11 // pred_check_branch
          %344 = sbr.rel (%p342) target = $region16
        $region15: #{tpu_custom_call.1} parent=11 // pred_region
          %346 = vsyncadd [#allocation9], 0
          %s347 = sshll.u32 %s4, 4
          %s348 = int_to_ptr.hbm [resolvable:$true] %s347
          %s349 = sshll.u32 [#allocation8], 4
          %s350 = int_to_ptr.vmem [resolvable:$true] %s349
          %355 = dma.hbm_to_vmem [thread:$0]  %s348, 16384, %s350, [#allocation9], 256, 256, 16
        $region16: #{tpu_custom_call.1} parent=11 // pred_fallthru
          _
        // Predicated region
        $region17: #{tpu_custom_call.1} parent=11 // pred_check
          %p356 = pneg %p175
        $region18: #{tpu_custom_call.1} parent=11 // pred_check_branch
          %358 = sbr.rel (%p356) target = $region20
        $region19: #{tpu_custom_call.1} parent=11 // pred_region
          _
        $region20: #{tpu_custom_call.1} parent=11 // pred_fallthru
          _
        // Predicated region
        $region21: #{tpu_custom_call.1} parent=11 // pred_check
          %p359 = pneg %p196
        $region22: #{tpu_custom_call.1} parent=11 // pred_check_branch
          %361 = sbr.rel (%p359) target = $region24
        $region23: #{tpu_custom_call.1} parent=11 // pred_region
          %363 = vsyncadd [#allocation9], 0
          %s364 = sshll.u32 %s6, 4
          %s365 = int_to_ptr.hbm [resolvable:$true] %s364
          %s366 = sshll.u32 [#allocation10], 4
          %s367 = int_to_ptr.vmem [resolvable:$true] %s366
          %372 = dma.hbm_to_vmem [thread:$0]  %s365, 16384, %s367, [#allocation9], 256, 256, 16
        $region24: #{tpu_custom_call.1} parent=11 // pred_fallthru
          _
        // Predicated region
        $region25: #{tpu_custom_call.1} parent=11 // pred_check
          %p373 = pneg %p217
        $region26: #{tpu_custom_call.1} parent=11 // pred_check_branch
          %375 = sbr.rel (%p373) target = $region28
        $region27: #{tpu_custom_call.1} parent=11 // pred_region
          _
        $region28: #{tpu_custom_call.1} parent=11 // pred_fallthru
          _
        // Predicated region
        $region29: #{tpu_custom_call.1} parent=11 // pred_check
          %p376 = pneg %p238
        $region30: #{tpu_custom_call.1} parent=11 // pred_check_branch
          %378 = sbr.rel (%p376) target = $region32
        $region31: #{tpu_custom_call.1} parent=11 // pred_region
          %380 = vsyncadd [#allocation12], 0
          %s381 = sshll.u32 %s8, 4
          %s382 = int_to_ptr.hbm [resolvable:$true] %s381
          %s383 = sshll.u32 [#allocation11], 4
          %s384 = int_to_ptr.vmem [resolvable:$true] %s383
          %389 = dma.hbm_to_vmem [thread:$0]  %s382, 16384, %s384, [#allocation12], 256, 256, 16
        $region32: #{tpu_custom_call.1} parent=11 // pred_fallthru
          _
        // Predicated region
        $region33: #{tpu_custom_call.1} parent=11 // pred_check
          %p390 = pneg %p259
        $region34: #{tpu_custom_call.1} parent=11 // pred_check_branch
          %392 = sbr.rel (%p390) target = $region36
        $region35: #{tpu_custom_call.1} parent=11 // pred_region
          _
        $region36: #{tpu_custom_call.1} parent=11 // pred_fallthru
          _
        // Predicated region
        $region37: #{tpu_custom_call.1} parent=11 // pred_check
          %p393 = pneg %p280
        $region38: #{tpu_custom_call.1} parent=11 // pred_check_branch
          %395 = sbr.rel (%p393) target = $region40
        $region39: #{tpu_custom_call.1} parent=11 // pred_region
          %397 = vsyncadd [#allocation12], 0
          %s398 = sshll.u32 %s10, 4
          %s399 = int_to_ptr.hbm [resolvable:$true] %s398
          %s400 = sshll.u32 [#allocation13], 4
          %s401 = int_to_ptr.vmem [resolvable:$true] %s400
          %406 = dma.hbm_to_vmem [thread:$0]  %s399, 16384, %s401, [#allocation12], 256, 256, 16
        $region40: #{tpu_custom_call.1} parent=11 // pred_fallthru
          _
        // Predicated region
        $region41: #{tpu_custom_call.1} parent=11 // pred_check
          %p407 = pneg %p301
        $region42: #{tpu_custom_call.1} parent=11 // pred_check_branch
          %409 = sbr.rel (%p407) target = $region44
        $region43: #{tpu_custom_call.1} parent=11 // pred_region
          _
        $region44: #{tpu_custom_call.1} parent=11 // pred_fallthru
          _
      $region12: #{tpu_custom_call.1} parent=5 // pred_fallthru
        _
      %p410 = scmp.lt.s32.totalorder %s29, 2
      // Predicated region
      $region45: #{tpu_custom_call.1} parent=5 // pred_check
        %p411 = pneg %p410
      $region46: #{tpu_custom_call.1} parent=5 // pred_check_branch
        %413 = sbr.rel (%p411) target = $region48
      $region47: #{tpu_custom_call.1} parent=5 // pred_region
        // Predicated region
        $region49: #{tpu_custom_call.1} parent=47 // pred_check
          %p414 = pneg %p49
        $region50: #{tpu_custom_call.1} parent=47 // pred_check_branch
          %416 = sbr.rel (%p414) target = $region52
        $region51: #{tpu_custom_call.1} parent=47 // pred_region
          %s417 = sand.u32 %s39, 1
          %s418 = scalar_lea.sflag [#allocation3], %s417
          %s419 = sand.u32 %s39, 1
          %s420 = smul.addr %s419, 16
          %s421 = scalar_lea.vmem [#allocation2], %s420
          %423 = vsyncadd %s418, 0
          %s424 = smul.addr %s29, 4
          %s425 = smul.addr %s424, 4
          %s426 = scalar_lea.hbm %s0, %s425
          %s428 = sshll.u32 %s426, 4
          %s429 = int_to_ptr.hbm [resolvable:$true] %s428
          %s430 = sshll.u32 %s421, 4
          %s431 = int_to_ptr.vmem [resolvable:$true] %s430
          %433 = dma.hbm_to_vmem [thread:$0]  %s429, 256, %s431, %s418
        $region52: #{tpu_custom_call.1} parent=47 // pred_fallthru
          _
        // Predicated region
        $region53: #{tpu_custom_call.1} parent=47 // pred_check
          %p434 = pneg %p75
        $region54: #{tpu_custom_call.1} parent=47 // pred_check_branch
          %436 = sbr.rel (%p434) target = $region56
        $region55: #{tpu_custom_call.1} parent=47 // pred_region
          %p437 = scmp.lt.s32.totalorder %s29, 1
          %s438 = scalar_select %p437, %s29, 1
          %s439 = smul.addr %s438, 4
          %s440 = scalar_lea.vmem %s1, %s439
        $region56: #{tpu_custom_call.1} parent=47 // pred_fallthru
          _
        // Predicated region
        $region57: #{tpu_custom_call.1} parent=47 // pred_check
          %p441 = pneg %p101
        $region58: #{tpu_custom_call.1} parent=47 // pred_check_branch
          %443 = sbr.rel (%p441) target = $region60
        $region59: #{tpu_custom_call.1} parent=47 // pred_region
          %s444 = sand.u32 %s29, 1
          %s445 = scalar_lea.sflag [#allocation6], %s444
          %s446 = sand.u32 %s91, 1
          %s447 = smul.addr %s446, 256
          %s448 = scalar_lea.vmem [#allocation5], %s447
          %450 = vsyncadd %s445, 0
          %s451 = smul.addr %s29, 64
          %s452 = smul.addr %s451, 4
          %s453 = scalar_lea.hbm %s2, %s452
          %s454 = sshll.u32 %s453, 4
          %s455 = int_to_ptr.hbm [resolvable:$true] %s454
          %s456 = sshll.u32 %s448, 4
          %s457 = int_to_ptr.vmem [resolvable:$true] %s456
          %462 = dma.hbm_to_vmem [thread:$0]  %s455, 4096, %s457, %s445, 256, 256, 16
        $region60: #{tpu_custom_call.1} parent=47 // pred_fallthru
          _
        // Predicated region
        $region61: #{tpu_custom_call.1} parent=47 // pred_check
          %p463 = pneg %p127
        $region62: #{tpu_custom_call.1} parent=47 // pred_check_branch
          %465 = sbr.rel (%p463) target = $region64
        $region63: #{tpu_custom_call.1} parent=47 // pred_region
          %s466 = sand.u32 %s29, 1
          %s467 = scalar_lea.sflag [#allocation6], %s466
          %s468 = sand.u32 %s117, 1
          %s469 = smul.addr %s468, 256
          %s470 = scalar_lea.vmem [#allocation7], %s469
          %472 = vsyncadd %s467, 0
          %s473 = smul.addr %s29, 64
          %s474 = smul.addr %s473, 4
          %s475 = scalar_lea.hbm %s3, %s474
          %s476 = sshll.u32 %s475, 4
          %s477 = int_to_ptr.hbm [resolvable:$true] %s476
          %s478 = sshll.u32 %s470, 4
          %s479 = int_to_ptr.vmem [resolvable:$true] %s478
          %484 = dma.hbm_to_vmem [thread:$0]  %s477, 4096, %s479, %s467, 256, 256, 16
        $region64: #{tpu_custom_call.1} parent=47 // pred_fallthru
          _
      $region48: #{tpu_custom_call.1} parent=5 // pred_fallthru
        _
      %p485 = scmp.le.s32.totalorder 1, %s29
      %p486 = scmp.lt.s32.totalorder %s29, 3
      %p487 = pnand %p485, %p486
      %p488 = pneg %p487
      // Predicated region
      $region65: #{tpu_custom_call.1} parent=5 // pred_check
        _
      $region66: #{tpu_custom_call.1} parent=5 // pred_check_branch
        %490 = sbr.rel (%p487) target = $region68
      $region67: #{tpu_custom_call.1} parent=5 // pred_region
        %s491 = ssub.s32 %s29, 1
        %s492 = sand.u32 %s42, 1
        %s493 = scalar_lea.sflag [#allocation3], %s492
        %s494 = sand.u32 %s42, 1
        %s495 = smul.addr %s494, 16
        %s496 = scalar_lea.vmem [#allocation2], %s495
        // Predicated region
        $region69: #{tpu_custom_call.1} parent=67 // pred_check
          %p497 = pneg %p55
        $region70: #{tpu_custom_call.1} parent=67 // pred_check_branch
          %499 = sbr.rel (%p497) target = $region72
        $region71: #{tpu_custom_call.1} parent=67 // pred_region
          %501 = dma.done %s493, 256
        $region72: #{tpu_custom_call.1} parent=67 // pred_fallthru
          _
        %s502 = sand.u32 %s34, 1
        %s503 = scalar_lea.sflag [#allocation6], %s502
        %s504 = sand.u32 %s94, 1
        %s505 = smul.addr %s504, 256
        %s506 = scalar_lea.vmem [#allocation5], %s505
        // Predicated region
        $region73: #{tpu_custom_call.1} parent=67 // pred_check
          %p507 = pneg %p107
        $region74: #{tpu_custom_call.1} parent=67 // pred_check_branch
          %509 = sbr.rel (%p507) target = $region76
        $region75: #{tpu_custom_call.1} parent=67 // pred_region
          %511 = dma.done %s503, 4096
        $region76: #{tpu_custom_call.1} parent=67 // pred_fallthru
          _
        %s512 = sand.u32 %s34, 1
        %s513 = scalar_lea.sflag [#allocation6], %s512
        %s514 = sand.u32 %s120, 1
        %s515 = smul.addr %s514, 256
        %s516 = scalar_lea.vmem [#allocation7], %s515
        // Predicated region
        $region77: #{tpu_custom_call.1} parent=67 // pred_check
          %p517 = pneg %p133
        $region78: #{tpu_custom_call.1} parent=67 // pred_check_branch
          %519 = sbr.rel (%p517) target = $region80
        $region79: #{tpu_custom_call.1} parent=67 // pred_region
          %521 = dma.done %s513, 4096
        $region80: #{tpu_custom_call.1} parent=67 // pred_fallthru
          _
        // Predicated region
        $region81: #{tpu_custom_call.1} parent=67 // pred_check
          %p522 = pneg %p154
        $region82: #{tpu_custom_call.1} parent=67 // pred_check_branch
          %524 = sbr.rel (%p522) target = $region84
        $region83: #{tpu_custom_call.1} parent=67 // pred_region
          %526 = dma.done [#allocation9], 16384
        $region84: #{tpu_custom_call.1} parent=67 // pred_fallthru
          _
        // Predicated region
        $region85: #{tpu_custom_call.1} parent=67 // pred_check
          %p527 = pneg %p196
        $region86: #{tpu_custom_call.1} parent=67 // pred_check_branch
          %529 = sbr.rel (%p527) target = $region88
        $region87: #{tpu_custom_call.1} parent=67 // pred_region
          %531 = dma.done [#allocation9], 16384
        $region88: #{tpu_custom_call.1} parent=67 // pred_fallthru
          _
        // Predicated region
        $region89: #{tpu_custom_call.1} parent=67 // pred_check
          %p532 = pneg %p238
        $region90: #{tpu_custom_call.1} parent=67 // pred_check_branch
          %534 = sbr.rel (%p532) target = $region92
        $region91: #{tpu_custom_call.1} parent=67 // pred_region
          %536 = dma.done [#allocation12], 16384
        $region92: #{tpu_custom_call.1} parent=67 // pred_fallthru
          _
        // Predicated region
        $region93: #{tpu_custom_call.1} parent=67 // pred_check
          %p537 = pneg %p280
        $region94: #{tpu_custom_call.1} parent=67 // pred_check_branch
          %539 = sbr.rel (%p537) target = $region96
        $region95: #{tpu_custom_call.1} parent=67 // pred_region
          %541 = dma.done [#allocation12], 16384
        $region96: #{tpu_custom_call.1} parent=67 // pred_fallthru
          _
        %s542 = sand.u32 %s42, 1
        %s543 = scalar_lea.sflag [#allocation3], %s542
        %s544 = sand.u32 %s42, 1
        %s545 = smul.addr %s544, 16
        %s546 = scalar_lea.vmem [#allocation2], %s545
        %p547 = pneg %p55
        %p548 = pneg %p52
        %p549 = scmp.lt.s32.totalorder %s34, 1
        %s550 = scalar_select %p549, %s34, 1
        %s551 = smul.addr %s550, 4
        %s552 = scalar_lea.vmem %s1, %s551
        %p553 = pneg %p81
        %p554 = pneg %p78
        %s555 = sand.u32 %s34, 1
        %s556 = scalar_lea.sflag [#allocation6], %s555
        %s557 = sand.u32 %s94, 1
        %s558 = smul.addr %s557, 256
        %s559 = scalar_lea.vmem [#allocation5], %s558
        %p560 = pneg %p107
        %p561 = pneg %p104
        %s562 = sand.u32 %s34, 1
        %s563 = scalar_lea.sflag [#allocation6], %s562
        %s564 = sand.u32 %s120, 1
        %s565 = smul.addr %s564, 256
        %s566 = scalar_lea.vmem [#allocation7], %s565
        %p567 = pneg %p133
        %p568 = pneg %p130
        %p569 = pneg %p154
        %p570 = pneg %p151
        %p571 = pneg %p175
        %p572 = pneg %p172
        %p573 = pneg %p196
        %p574 = pneg %p193
        %p575 = pneg %p217
        %p576 = pneg %p214
        %p577 = pneg %p238
        %p578 = pneg %p235
        %p579 = pneg %p259
        %p580 = pneg %p256
        %p581 = pneg %p280
        %p582 = pneg %p277
        %p583 = pneg %p301
        %p584 = pneg %p298
        %p585 = pneg %p327
        %p586 = pneg %p324
        %s587 = sand.u32 %s314, 1
        %s588 = scalar_lea.sflag [#allocation4], %s587
        %s589 = sand.u32 %s314, 1
        %s590 = smul.addr %s589, 8
        %s591 = scalar_lea.vmem [#allocation14], %s590
        %p592 = scmp.lt.s32.totalorder %s34, 1
        %s593 = scalar_select %p592, %s34, 1
        %s594 = smul.addr %s593, 4
        %s595 = scalar_lea.vmem %s1, %s594
        %v596 = vld [vmem:[#allocation8] sm:$0xff]
        %v597 = vld [vmem:[#allocation8 + $0x8] sm:$0xff]
        %v598 = vld [vmem:[#allocation8 + $0x10] sm:$0xff]
        %v599 = vld [vmem:[#allocation8 + $0x18] sm:$0xff]
        %v600 = vld [vmem:[#allocation8 + $0x20] sm:$0xff]
        %v601 = vld [vmem:[#allocation8 + $0x28] sm:$0xff]
        %v602 = vld [vmem:[#allocation8 + $0x30] sm:$0xff]
        %v603 = vld [vmem:[#allocation8 + $0x38] sm:$0xff]
        %v604 = vld [vmem:[#allocation8 + $0x40] sm:$0xff]
        %v605 = vld [vmem:[#allocation8 + $0x48] sm:$0xff]
        %v606 = vld [vmem:[#allocation8 + $0x50] sm:$0xff]
        %v607 = vld [vmem:[#allocation8 + $0x58] sm:$0xff]
        %v608 = vld [vmem:[#allocation8 + $0x60] sm:$0xff]
        %v609 = vld [vmem:[#allocation8 + $0x68] sm:$0xff]
        %v610 = vld [vmem:[#allocation8 + $0x70] sm:$0xff]
        %v611 = vld [vmem:[#allocation8 + $0x78] sm:$0xff]
        %v612 = vld [vmem:[#allocation8 + $0x80] sm:$0xff]
        %v613 = vld [vmem:[#allocation8 + $0x88] sm:$0xff]
        %v614 = vld [vmem:[#allocation8 + $0x90] sm:$0xff]
        %v615 = vld [vmem:[#allocation8 + $0x98] sm:$0xff]
        %v616 = vld [vmem:[#allocation8 + $0xa0] sm:$0xff]
        %v617 = vld [vmem:[#allocation8 + $0xa8] sm:$0xff]
        %v618 = vld [vmem:[#allocation8 + $0xb0] sm:$0xff]
        %v619 = vld [vmem:[#allocation8 + $0xb8] sm:$0xff]
        %v620 = vld [vmem:[#allocation8 + $0xc0] sm:$0xff]
        %v621 = vld [vmem:[#allocation8 + $0xc8] sm:$0xff]
        %v622 = vld [vmem:[#allocation8 + $0xd0] sm:$0xff]
        %v623 = vld [vmem:[#allocation8 + $0xd8] sm:$0xff]
        %v624 = vld [vmem:[#allocation8 + $0xe0] sm:$0xff]
        %v625 = vld [vmem:[#allocation8 + $0xe8] sm:$0xff]
        %v626 = vld [vmem:[#allocation8 + $0xf0] sm:$0xff]
        %v627 = vld [vmem:[#allocation8 + $0xf8] sm:$0xff]
        %v628 = vld [vmem:[#allocation8 + $0x100] sm:$0xff]
        %v629 = vld [vmem:[#allocation8 + $0x108] sm:$0xff]
        %v630 = vld [vmem:[#allocation8 + $0x110] sm:$0xff]
        %v631 = vld [vmem:[#allocation8 + $0x118] sm:$0xff]
        %v632 = vld [vmem:[#allocation8 + $0x120] sm:$0xff]
        %v633 = vld [vmem:[#allocation8 + $0x128] sm:$0xff]
        %v634 = vld [vmem:[#allocation8 + $0x130] sm:$0xff]
        %v635 = vld [vmem:[#allocation8 + $0x138] sm:$0xff]
        %v636 = vld [vmem:[#allocation8 + $0x140] sm:$0xff]
        %v637 = vld [vmem:[#allocation8 + $0x148] sm:$0xff]
        %v638 = vld [vmem:[#allocation8 + $0x150] sm:$0xff]
        %v639 = vld [vmem:[#allocation8 + $0x158] sm:$0xff]
        %v640 = vld [vmem:[#allocation8 + $0x160] sm:$0xff]
        %v641 = vld [vmem:[#allocation8 + $0x168] sm:$0xff]
        %v642 = vld [vmem:[#allocation8 + $0x170] sm:$0xff]
        %v643 = vld [vmem:[#allocation8 + $0x178] sm:$0xff]
        %v644 = vld [vmem:[#allocation8 + $0x180] sm:$0xff]
        %v645 = vld [vmem:[#allocation8 + $0x188] sm:$0xff]
        %v646 = vld [vmem:[#allocation8 + $0x190] sm:$0xff]
        %v647 = vld [vmem:[#allocation8 + $0x198] sm:$0xff]
        %v648 = vld [vmem:[#allocation8 + $0x1a0] sm:$0xff]
        %v649 = vld [vmem:[#allocation8 + $0x1a8] sm:$0xff]
        %v650 = vld [vmem:[#allocation8 + $0x1b0] sm:$0xff]
        %v651 = vld [vmem:[#allocation8 + $0x1b8] sm:$0xff]
        %v652 = vld [vmem:[#allocation8 + $0x1c0] sm:$0xff]
        %v653 = vld [vmem:[#allocation8 + $0x1c8] sm:$0xff]
        %v654 = vld [vmem:[#allocation8 + $0x1d0] sm:$0xff]
        %v655 = vld [vmem:[#allocation8 + $0x1d8] sm:$0xff]
        %v656 = vld [vmem:[#allocation8 + $0x1e0] sm:$0xff]
        %v657 = vld [vmem:[#allocation8 + $0x1e8] sm:$0xff]
        %v658 = vld [vmem:[#allocation8 + $0x1f0] sm:$0xff]
        %v659 = vld [vmem:[#allocation8 + $0x1f8] sm:$0xff]
        %v660 = vld [vmem:[#allocation8 + $0x200] sm:$0xff]
        %v661 = vld [vmem:[#allocation8 + $0x208] sm:$0xff]
        %v662 = vld [vmem:[#allocation8 + $0x210] sm:$0xff]
        %v663 = vld [vmem:[#allocation8 + $0x218] sm:$0xff]
        %v664 = vld [vmem:[#allocation8 + $0x220] sm:$0xff]
        %v665 = vld [vmem:[#allocation8 + $0x228] sm:$0xff]
        %v666 = vld [vmem:[#allocation8 + $0x230] sm:$0xff]
        %v667 = vld [vmem:[#allocation8 + $0x238] sm:$0xff]
        %v668 = vld [vmem:[#allocation8 + $0x240] sm:$0xff]
        %v669 = vld [vmem:[#allocation8 + $0x248] sm:$0xff]
        %v670 = vld [vmem:[#allocation8 + $0x250] sm:$0xff]
        %v671 = vld [vmem:[#allocation8 + $0x258] sm:$0xff]
        %v672 = vld [vmem:[#allocation8 + $0x260] sm:$0xff]
        %v673 = vld [vmem:[#allocation8 + $0x268] sm:$0xff]
        %v674 = vld [vmem:[#allocation8 + $0x270] sm:$0xff]
        %v675 = vld [vmem:[#allocation8 + $0x278] sm:$0xff]
        %v676 = vld [vmem:[#allocation8 + $0x280] sm:$0xff]
        %v677 = vld [vmem:[#allocation8 + $0x288] sm:$0xff]
        %v678 = vld [vmem:[#allocation8 + $0x290] sm:$0xff]
        %v679 = vld [vmem:[#allocation8 + $0x298] sm:$0xff]
        %v680 = vld [vmem:[#allocation8 + $0x2a0] sm:$0xff]
        %v681 = vld [vmem:[#allocation8 + $0x2a8] sm:$0xff]
        %v682 = vld [vmem:[#allocation8 + $0x2b0] sm:$0xff]
        %v683 = vld [vmem:[#allocation8 + $0x2b8] sm:$0xff]
        %v684 = vld [vmem:[#allocation8 + $0x2c0] sm:$0xff]
        %v685 = vld [vmem:[#allocation8 + $0x2c8] sm:$0xff]
        %v686 = vld [vmem:[#allocation8 + $0x2d0] sm:$0xff]
        %v687 = vld [vmem:[#allocation8 + $0x2d8] sm:$0xff]
        %v688 = vld [vmem:[#allocation8 + $0x2e0] sm:$0xff]
        %v689 = vld [vmem:[#allocation8 + $0x2e8] sm:$0xff]
        %v690 = vld [vmem:[#allocation8 + $0x2f0] sm:$0xff]
        %v691 = vld [vmem:[#allocation8 + $0x2f8] sm:$0xff]
        %v692 = vld [vmem:[#allocation8 + $0x300] sm:$0xff]
        %v693 = vld [vmem:[#allocation8 + $0x308] sm:$0xff]
        %v694 = vld [vmem:[#allocation8 + $0x310] sm:$0xff]
        %v695 = vld [vmem:[#allocation8 + $0x318] sm:$0xff]
        %v696 = vld [vmem:[#allocation8 + $0x320] sm:$0xff]
        %v697 = vld [vmem:[#allocation8 + $0x328] sm:$0xff]
        %v698 = vld [vmem:[#allocation8 + $0x330] sm:$0xff]
        %v699 = vld [vmem:[#allocation8 + $0x338] sm:$0xff]
        %v700 = vld [vmem:[#allocation8 + $0x340] sm:$0xff]
        %v701 = vld [vmem:[#allocation8 + $0x348] sm:$0xff]
        %v702 = vld [vmem:[#allocation8 + $0x350] sm:$0xff]
        %v703 = vld [vmem:[#allocation8 + $0x358] sm:$0xff]
        %v704 = vld [vmem:[#allocation8 + $0x360] sm:$0xff]
        %v705 = vld [vmem:[#allocation8 + $0x368] sm:$0xff]
        %v706 = vld [vmem:[#allocation8 + $0x370] sm:$0xff]
        %v707 = vld [vmem:[#allocation8 + $0x378] sm:$0xff]
        %v708 = vld [vmem:[#allocation8 + $0x380] sm:$0xff]
        %v709 = vld [vmem:[#allocation8 + $0x388] sm:$0xff]
        %v710 = vld [vmem:[#allocation8 + $0x390] sm:$0xff]
        %v711 = vld [vmem:[#allocation8 + $0x398] sm:$0xff]
        %v712 = vld [vmem:[#allocation8 + $0x3a0] sm:$0xff]
        %v713 = vld [vmem:[#allocation8 + $0x3a8] sm:$0xff]
        %v714 = vld [vmem:[#allocation8 + $0x3b0] sm:$0xff]
        %v715 = vld [vmem:[#allocation8 + $0x3b8] sm:$0xff]
        %v716 = vld [vmem:[#allocation8 + $0x3c0] sm:$0xff]
        %v717 = vld [vmem:[#allocation8 + $0x3c8] sm:$0xff]
        %v718 = vld [vmem:[#allocation8 + $0x3d0] sm:$0xff]
        %v719 = vld [vmem:[#allocation8 + $0x3d8] sm:$0xff]
        %v720 = vld [vmem:[#allocation8 + $0x3e0] sm:$0xff]
        %v721 = vld [vmem:[#allocation8 + $0x3e8] sm:$0xff]
        %v722 = vld [vmem:[#allocation8 + $0x3f0] sm:$0xff]
        %v723 = vld [vmem:[#allocation8 + $0x3f8] sm:$0xff]
        %v724 = vld [vmem:[%s5] sm:$0xf]
        %v725 = vld [vmem:[#allocation10] sm:$0xff]
        %v726 = vld [vmem:[#allocation10 + $0x8] sm:$0xff]
        %v727 = vld [vmem:[#allocation10 + $0x10] sm:$0xff]
        %v728 = vld [vmem:[#allocation10 + $0x18] sm:$0xff]
        %v729 = vld [vmem:[#allocation10 + $0x20] sm:$0xff]
        %v730 = vld [vmem:[#allocation10 + $0x28] sm:$0xff]
        %v731 = vld [vmem:[#allocation10 + $0x30] sm:$0xff]
        %v732 = vld [vmem:[#allocation10 + $0x38] sm:$0xff]
        %v733 = vld [vmem:[#allocation10 + $0x40] sm:$0xff]
        %v734 = vld [vmem:[#allocation10 + $0x48] sm:$0xff]
        %v735 = vld [vmem:[#allocation10 + $0x50] sm:$0xff]
        %v736 = vld [vmem:[#allocation10 + $0x58] sm:$0xff]
        %v737 = vld [vmem:[#allocation10 + $0x60] sm:$0xff]
        %v738 = vld [vmem:[#allocation10 + $0x68] sm:$0xff]
        %v739 = vld [vmem:[#allocation10 + $0x70] sm:$0xff]
        %v740 = vld [vmem:[#allocation10 + $0x78] sm:$0xff]
        %v741 = vld [vmem:[#allocation10 + $0x80] sm:$0xff]
        %v742 = vld [vmem:[#allocation10 + $0x88] sm:$0xff]
        %v743 = vld [vmem:[#allocation10 + $0x90] sm:$0xff]
        %v744 = vld [vmem:[#allocation10 + $0x98] sm:$0xff]
        %v745 = vld [vmem:[#allocation10 + $0xa0] sm:$0xff]
        %v746 = vld [vmem:[#allocation10 + $0xa8] sm:$0xff]
        %v747 = vld [vmem:[#allocation10 + $0xb0] sm:$0xff]
        %v748 = vld [vmem:[#allocation10 + $0xb8] sm:$0xff]
        %v749 = vld [vmem:[#allocation10 + $0xc0] sm:$0xff]
        %v750 = vld [vmem:[#allocation10 + $0xc8] sm:$0xff]
        %v751 = vld [vmem:[#allocation10 + $0xd0] sm:$0xff]
        %v752 = vld [vmem:[#allocation10 + $0xd8] sm:$0xff]
        %v753 = vld [vmem:[#allocation10 + $0xe0] sm:$0xff]
        %v754 = vld [vmem:[#allocation10 + $0xe8] sm:$0xff]
        %v755 = vld [vmem:[#allocation10 + $0xf0] sm:$0xff]
        %v756 = vld [vmem:[#allocation10 + $0xf8] sm:$0xff]
        %v757 = vld [vmem:[#allocation10 + $0x100] sm:$0xff]
        %v758 = vld [vmem:[#allocation10 + $0x108] sm:$0xff]
        %v759 = vld [vmem:[#allocation10 + $0x110] sm:$0xff]
        %v760 = vld [vmem:[#allocation10 + $0x118] sm:$0xff]
        %v761 = vld [vmem:[#allocation10 + $0x120] sm:$0xff]
        %v762 = vld [vmem:[#allocation10 + $0x128] sm:$0xff]
        %v763 = vld [vmem:[#allocation10 + $0x130] sm:$0xff]
        %v764 = vld [vmem:[#allocation10 + $0x138] sm:$0xff]
        %v765 = vld [vmem:[#allocation10 + $0x140] sm:$0xff]
        %v766 = vld [vmem:[#allocation10 + $0x148] sm:$0xff]
        %v767 = vld [vmem:[#allocation10 + $0x150] sm:$0xff]
        %v768 = vld [vmem:[#allocation10 + $0x158] sm:$0xff]
        %v769 = vld [vmem:[#allocation10 + $0x160] sm:$0xff]
        %v770 = vld [vmem:[#allocation10 + $0x168] sm:$0xff]
        %v771 = vld [vmem:[#allocation10 + $0x170] sm:$0xff]
        %v772 = vld [vmem:[#allocation10 + $0x178] sm:$0xff]
        %v773 = vld [vmem:[#allocation10 + $0x180] sm:$0xff]
        %v774 = vld [vmem:[#allocation10 + $0x188] sm:$0xff]
        %v775 = vld [vmem:[#allocation10 + $0x190] sm:$0xff]
        %v776 = vld [vmem:[#allocation10 + $0x198] sm:$0xff]
        %v777 = vld [vmem:[#allocation10 + $0x1a0] sm:$0xff]
        %v778 = vld [vmem:[#allocation10 + $0x1a8] sm:$0xff]
        %v779 = vld [vmem:[#allocation10 + $0x1b0] sm:$0xff]
        %v780 = vld [vmem:[#allocation10 + $0x1b8] sm:$0xff]
        %v781 = vld [vmem:[#allocation10 + $0x1c0] sm:$0xff]
        %v782 = vld [vmem:[#allocation10 + $0x1c8] sm:$0xff]
        %v783 = vld [vmem:[#allocation10 + $0x1d0] sm:$0xff]
        %v784 = vld [vmem:[#allocation10 + $0x1d8] sm:$0xff]
        %v785 = vld [vmem:[#allocation10 + $0x1e0] sm:$0xff]
        %v786 = vld [vmem:[#allocation10 + $0x1e8] sm:$0xff]
        %v787 = vld [vmem:[#allocation10 + $0x1f0] sm:$0xff]
        %v788 = vld [vmem:[#allocation10 + $0x1f8] sm:$0xff]
        %v789 = vld [vmem:[#allocation10 + $0x200] sm:$0xff]
        %v790 = vld [vmem:[#allocation10 + $0x208] sm:$0xff]
        %v791 = vld [vmem:[#allocation10 + $0x210] sm:$0xff]
        %v792 = vld [vmem:[#allocation10 + $0x218] sm:$0xff]
        %v793 = vld [vmem:[#allocation10 + $0x220] sm:$0xff]
        %v794 = vld [vmem:[#allocation10 + $0x228] sm:$0xff]
        %v795 = vld [vmem:[#allocation10 + $0x230] sm:$0xff]
        %v796 = vld [vmem:[#allocation10 + $0x238] sm:$0xff]
        %v797 = vld [vmem:[#allocation10 + $0x240] sm:$0xff]
        %v798 = vld [vmem:[#allocation10 + $0x248] sm:$0xff]
        %v799 = vld [vmem:[#allocation10 + $0x250] sm:$0xff]
        %v800 = vld [vmem:[#allocation10 + $0x258] sm:$0xff]
        %v801 = vld [vmem:[#allocation10 + $0x260] sm:$0xff]
        %v802 = vld [vmem:[#allocation10 + $0x268] sm:$0xff]
        %v803 = vld [vmem:[#allocation10 + $0x270] sm:$0xff]
        %v804 = vld [vmem:[#allocation10 + $0x278] sm:$0xff]
        %v805 = vld [vmem:[#allocation10 + $0x280] sm:$0xff]
        %v806 = vld [vmem:[#allocation10 + $0x288] sm:$0xff]
        %v807 = vld [vmem:[#allocation10 + $0x290] sm:$0xff]
        %v808 = vld [vmem:[#allocation10 + $0x298] sm:$0xff]
        %v809 = vld [vmem:[#allocation10 + $0x2a0] sm:$0xff]
        %v810 = vld [vmem:[#allocation10 + $0x2a8] sm:$0xff]
        %v811 = vld [vmem:[#allocation10 + $0x2b0] sm:$0xff]
        %v812 = vld [vmem:[#allocation10 + $0x2b8] sm:$0xff]
        %v813 = vld [vmem:[#allocation10 + $0x2c0] sm:$0xff]
        %v814 = vld [vmem:[#allocation10 + $0x2c8] sm:$0xff]
        %v815 = vld [vmem:[#allocation10 + $0x2d0] sm:$0xff]
        %v816 = vld [vmem:[#allocation10 + $0x2d8] sm:$0xff]
        %v817 = vld [vmem:[#allocation10 + $0x2e0] sm:$0xff]
        %v818 = vld [vmem:[#allocation10 + $0x2e8] sm:$0xff]
        %v819 = vld [vmem:[#allocation10 + $0x2f0] sm:$0xff]
        %v820 = vld [vmem:[#allocation10 + $0x2f8] sm:$0xff]
        %v821 = vld [vmem:[#allocation10 + $0x300] sm:$0xff]
        %v822 = vld [vmem:[#allocation10 + $0x308] sm:$0xff]
        %v823 = vld [vmem:[#allocation10 + $0x310] sm:$0xff]
        %v824 = vld [vmem:[#allocation10 + $0x318] sm:$0xff]
        %v825 = vld [vmem:[#allocation10 + $0x320] sm:$0xff]
        %v826 = vld [vmem:[#allocation10 + $0x328] sm:$0xff]
        %v827 = vld [vmem:[#allocation10 + $0x330] sm:$0xff]
        %v828 = vld [vmem:[#allocation10 + $0x338] sm:$0xff]
        %v829 = vld [vmem:[#allocation10 + $0x340] sm:$0xff]
        %v830 = vld [vmem:[#allocation10 + $0x348] sm:$0xff]
        %v831 = vld [vmem:[#allocation10 + $0x350] sm:$0xff]
        %v832 = vld [vmem:[#allocation10 + $0x358] sm:$0xff]
        %v833 = vld [vmem:[#allocation10 + $0x360] sm:$0xff]
        %v834 = vld [vmem:[#allocation10 + $0x368] sm:$0xff]
        %v835 = vld [vmem:[#allocation10 + $0x370] sm:$0xff]
        %v836 = vld [vmem:[#allocation10 + $0x378] sm:$0xff]
        %v837 = vld [vmem:[#allocation10 + $0x380] sm:$0xff]
        %v838 = vld [vmem:[#allocation10 + $0x388] sm:$0xff]
        %v839 = vld [vmem:[#allocation10 + $0x390] sm:$0xff]
        %v840 = vld [vmem:[#allocation10 + $0x398] sm:$0xff]
        %v841 = vld [vmem:[#allocation10 + $0x3a0] sm:$0xff]
        %v842 = vld [vmem:[#allocation10 + $0x3a8] sm:$0xff]
        %v843 = vld [vmem:[#allocation10 + $0x3b0] sm:$0xff]
        %v844 = vld [vmem:[#allocation10 + $0x3b8] sm:$0xff]
        %v845 = vld [vmem:[#allocation10 + $0x3c0] sm:$0xff]
        %v846 = vld [vmem:[#allocation10 + $0x3c8] sm:$0xff]
        %v847 = vld [vmem:[#allocation10 + $0x3d0] sm:$0xff]
        %v848 = vld [vmem:[#allocation10 + $0x3d8] sm:$0xff]
        %v849 = vld [vmem:[#allocation10 + $0x3e0] sm:$0xff]
        %v850 = vld [vmem:[#allocation10 + $0x3e8] sm:$0xff]
        %v851 = vld [vmem:[#allocation10 + $0x3f0] sm:$0xff]
        %v852 = vld [vmem:[#allocation10 + $0x3f8] sm:$0xff]
        %v853 = vld [vmem:[%s7] sm:$0xf]
        %v854 = vld [vmem:[#allocation11] sm:$0xff]
        %v855 = vld [vmem:[#allocation11 + $0x8] sm:$0xff]
        %v856 = vld [vmem:[#allocation11 + $0x10] sm:$0xff]
        %v857 = vld [vmem:[#allocation11 + $0x18] sm:$0xff]
        %v858 = vld [vmem:[#allocation11 + $0x20] sm:$0xff]
        %v859 = vld [vmem:[#allocation11 + $0x28] sm:$0xff]
        %v860 = vld [vmem:[#allocation11 + $0x30] sm:$0xff]
        %v861 = vld [vmem:[#allocation11 + $0x38] sm:$0xff]
        %v862 = vld [vmem:[#allocation11 + $0x40] sm:$0xff]
        %v863 = vld [vmem:[#allocation11 + $0x48] sm:$0xff]
        %v864 = vld [vmem:[#allocation11 + $0x50] sm:$0xff]
        %v865 = vld [vmem:[#allocation11 + $0x58] sm:$0xff]
        %v866 = vld [vmem:[#allocation11 + $0x60] sm:$0xff]
        %v867 = vld [vmem:[#allocation11 + $0x68] sm:$0xff]
        %v868 = vld [vmem:[#allocation11 + $0x70] sm:$0xff]
        %v869 = vld [vmem:[#allocation11 + $0x78] sm:$0xff]
        %v870 = vld [vmem:[#allocation11 + $0x80] sm:$0xff]
        %v871 = vld [vmem:[#allocation11 + $0x88] sm:$0xff]
        %v872 = vld [vmem:[#allocation11 + $0x90] sm:$0xff]
        %v873 = vld [vmem:[#allocation11 + $0x98] sm:$0xff]
        %v874 = vld [vmem:[#allocation11 + $0xa0] sm:$0xff]
        %v875 = vld [vmem:[#allocation11 + $0xa8] sm:$0xff]
        %v876 = vld [vmem:[#allocation11 + $0xb0] sm:$0xff]
        %v877 = vld [vmem:[#allocation11 + $0xb8] sm:$0xff]
        %v878 = vld [vmem:[#allocation11 + $0xc0] sm:$0xff]
        %v879 = vld [vmem:[#allocation11 + $0xc8] sm:$0xff]
        %v880 = vld [vmem:[#allocation11 + $0xd0] sm:$0xff]
        %v881 = vld [vmem:[#allocation11 + $0xd8] sm:$0xff]
        %v882 = vld [vmem:[#allocation11 + $0xe0] sm:$0xff]
        %v883 = vld [vmem:[#allocation11 + $0xe8] sm:$0xff]
        %v884 = vld [vmem:[#allocation11 + $0xf0] sm:$0xff]
        %v885 = vld [vmem:[#allocation11 + $0xf8] sm:$0xff]
        %v886 = vld [vmem:[#allocation11 + $0x100] sm:$0xff]
        %v887 = vld [vmem:[#allocation11 + $0x108] sm:$0xff]
        %v888 = vld [vmem:[#allocation11 + $0x110] sm:$0xff]
        %v889 = vld [vmem:[#allocation11 + $0x118] sm:$0xff]
        %v890 = vld [vmem:[#allocation11 + $0x120] sm:$0xff]
        %v891 = vld [vmem:[#allocation11 + $0x128] sm:$0xff]
        %v892 = vld [vmem:[#allocation11 + $0x130] sm:$0xff]
        %v893 = vld [vmem:[#allocation11 + $0x138] sm:$0xff]
        %v894 = vld [vmem:[#allocation11 + $0x140] sm:$0xff]
        %v895 = vld [vmem:[#allocation11 + $0x148] sm:$0xff]
        %v896 = vld [vmem:[#allocation11 + $0x150] sm:$0xff]
        %v897 = vld [vmem:[#allocation11 + $0x158] sm:$0xff]
        %v898 = vld [vmem:[#allocation11 + $0x160] sm:$0xff]
        %v899 = vld [vmem:[#allocation11 + $0x168] sm:$0xff]
        %v900 = vld [vmem:[#allocation11 + $0x170] sm:$0xff]
        %v901 = vld [vmem:[#allocation11 + $0x178] sm:$0xff]
        %v902 = vld [vmem:[#allocation11 + $0x180] sm:$0xff]
        %v903 = vld [vmem:[#allocation11 + $0x188] sm:$0xff]
        %v904 = vld [vmem:[#allocation11 + $0x190] sm:$0xff]
        %v905 = vld [vmem:[#allocation11 + $0x198] sm:$0xff]
        %v906 = vld [vmem:[#allocation11 + $0x1a0] sm:$0xff]
        %v907 = vld [vmem:[#allocation11 + $0x1a8] sm:$0xff]
        %v908 = vld [vmem:[#allocation11 + $0x1b0] sm:$0xff]
        %v909 = vld [vmem:[#allocation11 + $0x1b8] sm:$0xff]
        %v910 = vld [vmem:[#allocation11 + $0x1c0] sm:$0xff]
        %v911 = vld [vmem:[#allocation11 + $0x1c8] sm:$0xff]
        %v912 = vld [vmem:[#allocation11 + $0x1d0] sm:$0xff]
        %v913 = vld [vmem:[#allocation11 + $0x1d8] sm:$0xff]
        %v914 = vld [vmem:[#allocation11 + $0x1e0] sm:$0xff]
        %v915 = vld [vmem:[#allocation11 + $0x1e8] sm:$0xff]
        %v916 = vld [vmem:[#allocation11 + $0x1f0] sm:$0xff]
        %v917 = vld [vmem:[#allocation11 + $0x1f8] sm:$0xff]
        %v918 = vld [vmem:[#allocation11 + $0x200] sm:$0xff]
        %v919 = vld [vmem:[#allocation11 + $0x208] sm:$0xff]
        %v920 = vld [vmem:[#allocation11 + $0x210] sm:$0xff]
        %v921 = vld [vmem:[#allocation11 + $0x218] sm:$0xff]
        %v922 = vld [vmem:[#allocation11 + $0x220] sm:$0xff]
        %v923 = vld [vmem:[#allocation11 + $0x228] sm:$0xff]
        %v924 = vld [vmem:[#allocation11 + $0x230] sm:$0xff]
        %v925 = vld [vmem:[#allocation11 + $0x238] sm:$0xff]
        %v926 = vld [vmem:[#allocation11 + $0x240] sm:$0xff]
        %v927 = vld [vmem:[#allocation11 + $0x248] sm:$0xff]
        %v928 = vld [vmem:[#allocation11 + $0x250] sm:$0xff]
        %v929 = vld [vmem:[#allocation11 + $0x258] sm:$0xff]
        %v930 = vld [vmem:[#allocation11 + $0x260] sm:$0xff]
        %v931 = vld [vmem:[#allocation11 + $0x268] sm:$0xff]
        %v932 = vld [vmem:[#allocation11 + $0x270] sm:$0xff]
        %v933 = vld [vmem:[#allocation11 + $0x278] sm:$0xff]
        %v934 = vld [vmem:[#allocation11 + $0x280] sm:$0xff]
        %v935 = vld [vmem:[#allocation11 + $0x288] sm:$0xff]
        %v936 = vld [vmem:[#allocation11 + $0x290] sm:$0xff]
        %v937 = vld [vmem:[#allocation11 + $0x298] sm:$0xff]
        %v938 = vld [vmem:[#allocation11 + $0x2a0] sm:$0xff]
        %v939 = vld [vmem:[#allocation11 + $0x2a8] sm:$0xff]
        %v940 = vld [vmem:[#allocation11 + $0x2b0] sm:$0xff]
        %v941 = vld [vmem:[#allocation11 + $0x2b8] sm:$0xff]
        %v942 = vld [vmem:[#allocation11 + $0x2c0] sm:$0xff]
        %v943 = vld [vmem:[#allocation11 + $0x2c8] sm:$0xff]
        %v944 = vld [vmem:[#allocation11 + $0x2d0] sm:$0xff]
        %v945 = vld [vmem:[#allocation11 + $0x2d8] sm:$0xff]
        %v946 = vld [vmem:[#allocation11 + $0x2e0] sm:$0xff]
        %v947 = vld [vmem:[#allocation11 + $0x2e8] sm:$0xff]
        %v948 = vld [vmem:[#allocation11 + $0x2f0] sm:$0xff]
        %v949 = vld [vmem:[#allocation11 + $0x2f8] sm:$0xff]
        %v950 = vld [vmem:[#allocation11 + $0x300] sm:$0xff]
        %v951 = vld [vmem:[#allocation11 + $0x308] sm:$0xff]
        %v952 = vld [vmem:[#allocation11 + $0x310] sm:$0xff]
        %v953 = vld [vmem:[#allocation11 + $0x318] sm:$0xff]
        %v954 = vld [vmem:[#allocation11 + $0x320] sm:$0xff]
        %v955 = vld [vmem:[#allocation11 + $0x328] sm:$0xff]
        %v956 = vld [vmem:[#allocation11 + $0x330] sm:$0xff]
        %v957 = vld [vmem:[#allocation11 + $0x338] sm:$0xff]
        %v958 = vld [vmem:[#allocation11 + $0x340] sm:$0xff]
        %v959 = vld [vmem:[#allocation11 + $0x348] sm:$0xff]
        %v960 = vld [vmem:[#allocation11 + $0x350] sm:$0xff]
        %v961 = vld [vmem:[#allocation11 + $0x358] sm:$0xff]
        %v962 = vld [vmem:[#allocation11 + $0x360] sm:$0xff]
        %v963 = vld [vmem:[#allocation11 + $0x368] sm:$0xff]
        %v964 = vld [vmem:[#allocation11 + $0x370] sm:$0xff]
        %v965 = vld [vmem:[#allocation11 + $0x378] sm:$0xff]
        %v966 = vld [vmem:[#allocation11 + $0x380] sm:$0xff]
        %v967 = vld [vmem:[#allocation11 + $0x388] sm:$0xff]
        %v968 = vld [vmem:[#allocation11 + $0x390] sm:$0xff]
        %v969 = vld [vmem:[#allocation11 + $0x398] sm:$0xff]
        %v970 = vld [vmem:[#allocation11 + $0x3a0] sm:$0xff]
        %v971 = vld [vmem:[#allocation11 + $0x3a8] sm:$0xff]
        %v972 = vld [vmem:[#allocation11 + $0x3b0] sm:$0xff]
        %v973 = vld [vmem:[#allocation11 + $0x3b8] sm:$0xff]
        %v974 = vld [vmem:[#allocation11 + $0x3c0] sm:$0xff]
        %v975 = vld [vmem:[#allocation11 + $0x3c8] sm:$0xff]
        %v976 = vld [vmem:[#allocation11 + $0x3d0] sm:$0xff]
        %v977 = vld [vmem:[#allocation11 + $0x3d8] sm:$0xff]
        %v978 = vld [vmem:[#allocation11 + $0x3e0] sm:$0xff]
        %v979 = vld [vmem:[#allocation11 + $0x3e8] sm:$0xff]
        %v980 = vld [vmem:[#allocation11 + $0x3f0] sm:$0xff]
        %v981 = vld [vmem:[#allocation11 + $0x3f8] sm:$0xff]
        %v982 = vld [vmem:[%s9] sm:$0xf]
        %v983 = vld [vmem:[#allocation13] sm:$0xff]
        %v984 = vld [vmem:[#allocation13 + $0x8] sm:$0xff]
        %v985 = vld [vmem:[#allocation13 + $0x10] sm:$0xff]
        %v986 = vld [vmem:[#allocation13 + $0x18] sm:$0xff]
        %v987 = vld [vmem:[#allocation13 + $0x20] sm:$0xff]
        %v988 = vld [vmem:[#allocation13 + $0x28] sm:$0xff]
        %v989 = vld [vmem:[#allocation13 + $0x30] sm:$0xff]
        %v990 = vld [vmem:[#allocation13 + $0x38] sm:$0xff]
        %v991 = vld [vmem:[#allocation13 + $0x40] sm:$0xff]
        %v992 = vld [vmem:[#allocation13 + $0x48] sm:$0xff]
        %v993 = vld [vmem:[#allocation13 + $0x50] sm:$0xff]
        %v994 = vld [vmem:[#allocation13 + $0x58] sm:$0xff]
        %v995 = vld [vmem:[#allocation13 + $0x60] sm:$0xff]
        %v996 = vld [vmem:[#allocation13 + $0x68] sm:$0xff]
        %v997 = vld [vmem:[#allocation13 + $0x70] sm:$0xff]
        %v998 = vld [vmem:[#allocation13 + $0x78] sm:$0xff]
        %v999 = vld [vmem:[#allocation13 + $0x80] sm:$0xff]
        %v1000 = vld [vmem:[#allocation13 + $0x88] sm:$0xff]
        %v1001 = vld [vmem:[#allocation13 + $0x90] sm:$0xff]
        %v1002 = vld [vmem:[#allocation13 + $0x98] sm:$0xff]
        %v1003 = vld [vmem:[#allocation13 + $0xa0] sm:$0xff]
        %v1004 = vld [vmem:[#allocation13 + $0xa8] sm:$0xff]
        %v1005 = vld [vmem:[#allocation13 + $0xb0] sm:$0xff]
        %v1006 = vld [vmem:[#allocation13 + $0xb8] sm:$0xff]
        %v1007 = vld [vmem:[#allocation13 + $0xc0] sm:$0xff]
        %v1008 = vld [vmem:[#allocation13 + $0xc8] sm:$0xff]
        %v1009 = vld [vmem:[#allocation13 + $0xd0] sm:$0xff]
        %v1010 = vld [vmem:[#allocation13 + $0xd8] sm:$0xff]
        %v1011 = vld [vmem:[#allocation13 + $0xe0] sm:$0xff]
        %v1012 = vld [vmem:[#allocation13 + $0xe8] sm:$0xff]
        %v1013 = vld [vmem:[#allocation13 + $0xf0] sm:$0xff]
        %v1014 = vld [vmem:[#allocation13 + $0xf8] sm:$0xff]
        %v1015 = vld [vmem:[#allocation13 + $0x100] sm:$0xff]
        %v1016 = vld [vmem:[#allocation13 + $0x108] sm:$0xff]
        %v1017 = vld [vmem:[#allocation13 + $0x110] sm:$0xff]
        %v1018 = vld [vmem:[#allocation13 + $0x118] sm:$0xff]
        %v1019 = vld [vmem:[#allocation13 + $0x120] sm:$0xff]
        %v1020 = vld [vmem:[#allocation13 + $0x128] sm:$0xff]
        %v1021 = vld [vmem:[#allocation13 + $0x130] sm:$0xff]
        %v1022 = vld [vmem:[#allocation13 + $0x138] sm:$0xff]
        %v1023 = vld [vmem:[#allocation13 + $0x140] sm:$0xff]
        %v1024 = vld [vmem:[#allocation13 + $0x148] sm:$0xff]
        %v1025 = vld [vmem:[#allocation13 + $0x150] sm:$0xff]
        %v1026 = vld [vmem:[#allocation13 + $0x158] sm:$0xff]
        %v1027 = vld [vmem:[#allocation13 + $0x160] sm:$0xff]
        %v1028 = vld [vmem:[#allocation13 + $0x168] sm:$0xff]
        %v1029 = vld [vmem:[#allocation13 + $0x170] sm:$0xff]
        %v1030 = vld [vmem:[#allocation13 + $0x178] sm:$0xff]
        %v1031 = vld [vmem:[#allocation13 + $0x180] sm:$0xff]
        %v1032 = vld [vmem:[#allocation13 + $0x188] sm:$0xff]
        %v1033 = vld [vmem:[#allocation13 + $0x190] sm:$0xff]
        %v1034 = vld [vmem:[#allocation13 + $0x198] sm:$0xff]
        %v1035 = vld [vmem:[#allocation13 + $0x1a0] sm:$0xff]
        %v1036 = vld [vmem:[#allocation13 + $0x1a8] sm:$0xff]
        %v1037 = vld [vmem:[#allocation13 + $0x1b0] sm:$0xff]
        %v1038 = vld [vmem:[#allocation13 + $0x1b8] sm:$0xff]
        %v1039 = vld [vmem:[#allocation13 + $0x1c0] sm:$0xff]
        %v1040 = vld [vmem:[#allocation13 + $0x1c8] sm:$0xff]
        %v1041 = vld [vmem:[#allocation13 + $0x1d0] sm:$0xff]
        %v1042 = vld [vmem:[#allocation13 + $0x1d8] sm:$0xff]
        %v1043 = vld [vmem:[#allocation13 + $0x1e0] sm:$0xff]
        %v1044 = vld [vmem:[#allocation13 + $0x1e8] sm:$0xff]
        %v1045 = vld [vmem:[#allocation13 + $0x1f0] sm:$0xff]
        %v1046 = vld [vmem:[#allocation13 + $0x1f8] sm:$0xff]
        %v1047 = vld [vmem:[#allocation13 + $0x200] sm:$0xff]
        %v1048 = vld [vmem:[#allocation13 + $0x208] sm:$0xff]
        %v1049 = vld [vmem:[#allocation13 + $0x210] sm:$0xff]
        %v1050 = vld [vmem:[#allocation13 + $0x218] sm:$0xff]
        %v1051 = vld [vmem:[#allocation13 + $0x220] sm:$0xff]
        %v1052 = vld [vmem:[#allocation13 + $0x228] sm:$0xff]
        %v1053 = vld [vmem:[#allocation13 + $0x230] sm:$0xff]
        %v1054 = vld [vmem:[#allocation13 + $0x238] sm:$0xff]
        %v1055 = vld [vmem:[#allocation13 + $0x240] sm:$0xff]
        %v1056 = vld [vmem:[#allocation13 + $0x248] sm:$0xff]
        %v1057 = vld [vmem:[#allocation13 + $0x250] sm:$0xff]
        %v1058 = vld [vmem:[#allocation13 + $0x258] sm:$0xff]
        %v1059 = vld [vmem:[#allocation13 + $0x260] sm:$0xff]
        %v1060 = vld [vmem:[#allocation13 + $0x268] sm:$0xff]
        %v1061 = vld [vmem:[#allocation13 + $0x270] sm:$0xff]
        %v1062 = vld [vmem:[#allocation13 + $0x278] sm:$0xff]
        %v1063 = vld [vmem:[#allocation13 + $0x280] sm:$0xff]
        %v1064 = vld [vmem:[#allocation13 + $0x288] sm:$0xff]
        %v1065 = vld [vmem:[#allocation13 + $0x290] sm:$0xff]
        %v1066 = vld [vmem:[#allocation13 + $0x298] sm:$0xff]
        %v1067 = vld [vmem:[#allocation13 + $0x2a0] sm:$0xff]
        %v1068 = vld [vmem:[#allocation13 + $0x2a8] sm:$0xff]
        %v1069 = vld [vmem:[#allocation13 + $0x2b0] sm:$0xff]
        %v1070 = vld [vmem:[#allocation13 + $0x2b8] sm:$0xff]
        %v1071 = vld [vmem:[#allocation13 + $0x2c0] sm:$0xff]
        %v1072 = vld [vmem:[#allocation13 + $0x2c8] sm:$0xff]
        %v1073 = vld [vmem:[#allocation13 + $0x2d0] sm:$0xff]
        %v1074 = vld [vmem:[#allocation13 + $0x2d8] sm:$0xff]
        %v1075 = vld [vmem:[#allocation13 + $0x2e0] sm:$0xff]
        %v1076 = vld [vmem:[#allocation13 + $0x2e8] sm:$0xff]
        %v1077 = vld [vmem:[#allocation13 + $0x2f0] sm:$0xff]
        %v1078 = vld [vmem:[#allocation13 + $0x2f8] sm:$0xff]
        %v1079 = vld [vmem:[#allocation13 + $0x300] sm:$0xff]
        %v1080 = vld [vmem:[#allocation13 + $0x308] sm:$0xff]
        %v1081 = vld [vmem:[#allocation13 + $0x310] sm:$0xff]
        %v1082 = vld [vmem:[#allocation13 + $0x318] sm:$0xff]
        %v1083 = vld [vmem:[#allocation13 + $0x320] sm:$0xff]
        %v1084 = vld [vmem:[#allocation13 + $0x328] sm:$0xff]
        %v1085 = vld [vmem:[#allocation13 + $0x330] sm:$0xff]
        %v1086 = vld [vmem:[#allocation13 + $0x338] sm:$0xff]
        %v1087 = vld [vmem:[#allocation13 + $0x340] sm:$0xff]
        %v1088 = vld [vmem:[#allocation13 + $0x348] sm:$0xff]
        %v1089 = vld [vmem:[#allocation13 + $0x350] sm:$0xff]
        %v1090 = vld [vmem:[#allocation13 + $0x358] sm:$0xff]
        %v1091 = vld [vmem:[#allocation13 + $0x360] sm:$0xff]
        %v1092 = vld [vmem:[#allocation13 + $0x368] sm:$0xff]
        %v1093 = vld [vmem:[#allocation13 + $0x370] sm:$0xff]
        %v1094 = vld [vmem:[#allocation13 + $0x378] sm:$0xff]
        %v1095 = vld [vmem:[#allocation13 + $0x380] sm:$0xff]
        %v1096 = vld [vmem:[#allocation13 + $0x388] sm:$0xff]
        %v1097 = vld [vmem:[#allocation13 + $0x390] sm:$0xff]
        %v1098 = vld [vmem:[#allocation13 + $0x398] sm:$0xff]
        %v1099 = vld [vmem:[#allocation13 + $0x3a0] sm:$0xff]
        %v1100 = vld [vmem:[#allocation13 + $0x3a8] sm:$0xff]
        %v1101 = vld [vmem:[#allocation13 + $0x3b0] sm:$0xff]
        %v1102 = vld [vmem:[#allocation13 + $0x3b8] sm:$0xff]
        %v1103 = vld [vmem:[#allocation13 + $0x3c0] sm:$0xff]
        %v1104 = vld [vmem:[#allocation13 + $0x3c8] sm:$0xff]
        %v1105 = vld [vmem:[#allocation13 + $0x3d0] sm:$0xff]
        %v1106 = vld [vmem:[#allocation13 + $0x3d8] sm:$0xff]
        %v1107 = vld [vmem:[#allocation13 + $0x3e0] sm:$0xff]
        %v1108 = vld [vmem:[#allocation13 + $0x3e8] sm:$0xff]
        %v1109 = vld [vmem:[#allocation13 + $0x3f0] sm:$0xff]
        %v1110 = vld [vmem:[#allocation13 + $0x3f8] sm:$0xff]
        %v1111 = vld [vmem:[%s11] sm:$0xf]
        %v1112 = vld [vmem:[%s506] sm:$0xff]
        %v1113 = vld [vmem:[%s506 + $0x8] sm:$0xff]
        %v1114 = vld [vmem:[%s506 + $0x10] sm:$0xff]
        %v1115 = vld [vmem:[%s506 + $0x18] sm:$0xff]
        %v1116 = vld [vmem:[%s506 + $0x20] sm:$0xff]
        %v1117 = vld [vmem:[%s506 + $0x28] sm:$0xff]
        %v1118 = vld [vmem:[%s506 + $0x30] sm:$0xff]
        %v1119 = vld [vmem:[%s506 + $0x38] sm:$0xff]
        %v1120 = vld [vmem:[%s506 + $0x40] sm:$0xff]
        %v1121 = vld [vmem:[%s506 + $0x48] sm:$0xff]
        %v1122 = vld [vmem:[%s506 + $0x50] sm:$0xff]
        %v1123 = vld [vmem:[%s506 + $0x58] sm:$0xff]
        %v1124 = vld [vmem:[%s506 + $0x60] sm:$0xff]
        %v1125 = vld [vmem:[%s506 + $0x68] sm:$0xff]
        %v1126 = vld [vmem:[%s506 + $0x70] sm:$0xff]
        %v1127 = vld [vmem:[%s506 + $0x78] sm:$0xff]
        %v1128 = vld [vmem:[%s506 + $0x80] sm:$0xff]
        %v1129 = vld [vmem:[%s506 + $0x88] sm:$0xff]
        %v1130 = vld [vmem:[%s506 + $0x90] sm:$0xff]
        %v1131 = vld [vmem:[%s506 + $0x98] sm:$0xff]
        %v1132 = vld [vmem:[%s506 + $0xa0] sm:$0xff]
        %v1133 = vld [vmem:[%s506 + $0xa8] sm:$0xff]
        %v1134 = vld [vmem:[%s506 + $0xb0] sm:$0xff]
        %v1135 = vld [vmem:[%s506 + $0xb8] sm:$0xff]
        %v1136 = vld [vmem:[%s506 + $0xc0] sm:$0xff]
        %v1137 = vld [vmem:[%s506 + $0xc8] sm:$0xff]
        %v1138 = vld [vmem:[%s506 + $0xd0] sm:$0xff]
        %v1139 = vld [vmem:[%s506 + $0xd8] sm:$0xff]
        %v1140 = vld [vmem:[%s506 + $0xe0] sm:$0xff]
        %v1141 = vld [vmem:[%s506 + $0xe8] sm:$0xff]
        %v1142 = vld [vmem:[%s506 + $0xf0] sm:$0xff]
        %v1143 = vld [vmem:[%s506 + $0xf8] sm:$0xff]
        %v1145 = vperm.slane %v724, 0
        %v1146 = vperm.slane %v724, 1
        %v1147 = vperm.slane %v724, 2
        %v1148 = vperm.slane %v724, 3
        %v1185 = vunpack.c.l.b16 %v1112
        %v1186 = vunpack.c.h.b16 %v1112
        %v1187 = vunpack.c.l.b16 %v1113
        %v1188 = vunpack.c.h.b16 %v1113
        %v1189 = vunpack.c.l.b16 %v1114
        %v1190 = vunpack.c.h.b16 %v1114
        %v1191 = vunpack.c.l.b16 %v1115
        %v1192 = vunpack.c.h.b16 %v1115
        %v1193 = vunpack.c.l.b16 %v1116
        %v1194 = vunpack.c.h.b16 %v1116
        %v1195 = vunpack.c.l.b16 %v1117
        %v1196 = vunpack.c.h.b16 %v1117
        %v1197 = vunpack.c.l.b16 %v1118
        %v1198 = vunpack.c.h.b16 %v1118
        %v1199 = vunpack.c.l.b16 %v1119
        %v1200 = vunpack.c.h.b16 %v1119
        %v1201 = vunpack.c.l.b16 %v1120
        %v1202 = vunpack.c.h.b16 %v1120
        %v1203 = vunpack.c.l.b16 %v1121
        %v1204 = vunpack.c.h.b16 %v1121
        %v1205 = vunpack.c.l.b16 %v1122
        %v1206 = vunpack.c.h.b16 %v1122
        %v1207 = vunpack.c.l.b16 %v1123
        %v1208 = vunpack.c.h.b16 %v1123
        %v1209 = vunpack.c.l.b16 %v1124
        %v1210 = vunpack.c.h.b16 %v1124
        %v1211 = vunpack.c.l.b16 %v1125
        %v1212 = vunpack.c.h.b16 %v1125
        %v1213 = vunpack.c.l.b16 %v1126
        %v1214 = vunpack.c.h.b16 %v1126
        %v1215 = vunpack.c.l.b16 %v1127
        %v1216 = vunpack.c.h.b16 %v1127
        %v1217 = vunpack.c.l.b16 %v1128
        %v1218 = vunpack.c.h.b16 %v1128
        %v1219 = vunpack.c.l.b16 %v1129
        %v1220 = vunpack.c.h.b16 %v1129
        %v1221 = vunpack.c.l.b16 %v1130
        %v1222 = vunpack.c.h.b16 %v1130
        %v1223 = vunpack.c.l.b16 %v1131
        %v1224 = vunpack.c.h.b16 %v1131
        %v1225 = vunpack.c.l.b16 %v1132
        %v1226 = vunpack.c.h.b16 %v1132
        %v1227 = vunpack.c.l.b16 %v1133
        %v1228 = vunpack.c.h.b16 %v1133
        %v1229 = vunpack.c.l.b16 %v1134
        %v1230 = vunpack.c.h.b16 %v1134
        %v1231 = vunpack.c.l.b16 %v1135
        %v1232 = vunpack.c.h.b16 %v1135
        %v1233 = vunpack.c.l.b16 %v1136
        %v1234 = vunpack.c.h.b16 %v1136
        %v1235 = vunpack.c.l.b16 %v1137
        %v1236 = vunpack.c.h.b16 %v1137
        %v1237 = vunpack.c.l.b16 %v1138
        %v1238 = vunpack.c.h.b16 %v1138
        %v1239 = vunpack.c.l.b16 %v1139
        %v1240 = vunpack.c.h.b16 %v1139
        %v1241 = vunpack.c.l.b16 %v1140
        %v1242 = vunpack.c.h.b16 %v1140
        %v1243 = vunpack.c.l.b16 %v1141
        %v1244 = vunpack.c.h.b16 %v1141
        %v1245 = vunpack.c.l.b16 %v1142
        %v1246 = vunpack.c.h.b16 %v1142
        %v1247 = vunpack.c.l.b16 %v1143
        %v1248 = vunpack.c.h.b16 %v1143
        %v1249 = vpack.c.b16 %v1189, %v1185
        %v1250 = vpack.c.b16 %v1190, %v1186
        %v1251 = vpack.c.b16 %v1191, %v1187
        %v1252 = vpack.c.b16 %v1192, %v1188
        %v1253 = vpack.c.b16 %v1197, %v1193
        %v1254 = vpack.c.b16 %v1198, %v1194
        %v1255 = vpack.c.b16 %v1199, %v1195
        %v1256 = vpack.c.b16 %v1200, %v1196
        %v1257 = vpack.c.b16 %v1205, %v1201
        %v1258 = vpack.c.b16 %v1206, %v1202
        %v1259 = vpack.c.b16 %v1207, %v1203
        %v1260 = vpack.c.b16 %v1208, %v1204
        %v1261 = vpack.c.b16 %v1213, %v1209
        %v1262 = vpack.c.b16 %v1214, %v1210
        %v1263 = vpack.c.b16 %v1215, %v1211
        %v1264 = vpack.c.b16 %v1216, %v1212
        %v1265 = vpack.c.b16 %v1221, %v1217
        %v1266 = vpack.c.b16 %v1222, %v1218
        %v1267 = vpack.c.b16 %v1223, %v1219
        %v1268 = vpack.c.b16 %v1224, %v1220
        %v1269 = vpack.c.b16 %v1229, %v1225
        %v1270 = vpack.c.b16 %v1230, %v1226
        %v1271 = vpack.c.b16 %v1231, %v1227
        %v1272 = vpack.c.b16 %v1232, %v1228
        %v1273 = vpack.c.b16 %v1237, %v1233
        %v1274 = vpack.c.b16 %v1238, %v1234
        %v1275 = vpack.c.b16 %v1239, %v1235
        %v1276 = vpack.c.b16 %v1240, %v1236
        %v1277 = vpack.c.b16 %v1245, %v1241
        %v1278 = vpack.c.b16 %v1246, %v1242
        %v1279 = vpack.c.b16 %v1247, %v1243
        %v1280 = vpack.c.b16 %v1248, %v1244
        %v1441 = vunpack.c.l.b16 %v596
        %v1442 = vunpack.c.h.b16 %v596
        %v1443 = vunpack.c.l.b16 %v597
        %v1444 = vunpack.c.h.b16 %v597
        %v1445 = vunpack.c.l.b16 %v598
        %v1446 = vunpack.c.h.b16 %v598
        %v1447 = vunpack.c.l.b16 %v599
        %v1448 = vunpack.c.h.b16 %v599
        %v1449 = vunpack.c.l.b16 %v600
        %v1450 = vunpack.c.h.b16 %v600
        %v1451 = vunpack.c.l.b16 %v601
        %v1452 = vunpack.c.h.b16 %v601
        %v1453 = vunpack.c.l.b16 %v602
        %v1454 = vunpack.c.h.b16 %v602
        %v1455 = vunpack.c.l.b16 %v603
        %v1456 = vunpack.c.h.b16 %v603
        %v1457 = vunpack.c.l.b16 %v604
        %v1458 = vunpack.c.h.b16 %v604
        %v1459 = vunpack.c.l.b16 %v605
        %v1460 = vunpack.c.h.b16 %v605
        %v1461 = vunpack.c.l.b16 %v606
        %v1462 = vunpack.c.h.b16 %v606
        %v1463 = vunpack.c.l.b16 %v607
        %v1464 = vunpack.c.h.b16 %v607
        %v1465 = vunpack.c.l.b16 %v608
        %v1466 = vunpack.c.h.b16 %v608
        %v1467 = vunpack.c.l.b16 %v609
        %v1468 = vunpack.c.h.b16 %v609
        %v1469 = vunpack.c.l.b16 %v610
        %v1470 = vunpack.c.h.b16 %v610
        %v1471 = vunpack.c.l.b16 %v611
        %v1472 = vunpack.c.h.b16 %v611
        %v1473 = vunpack.c.l.b16 %v612
        %v1474 = vunpack.c.h.b16 %v612
        %v1475 = vunpack.c.l.b16 %v613
        %v1476 = vunpack.c.h.b16 %v613
        %v1477 = vunpack.c.l.b16 %v614
        %v1478 = vunpack.c.h.b16 %v614
        %v1479 = vunpack.c.l.b16 %v615
        %v1480 = vunpack.c.h.b16 %v615
        %v1481 = vunpack.c.l.b16 %v616
        %v1482 = vunpack.c.h.b16 %v616
        %v1483 = vunpack.c.l.b16 %v617
        %v1484 = vunpack.c.h.b16 %v617
        %v1485 = vunpack.c.l.b16 %v618
        %v1486 = vunpack.c.h.b16 %v618
        %v1487 = vunpack.c.l.b16 %v619
        %v1488 = vunpack.c.h.b16 %v619
        %v1489 = vunpack.c.l.b16 %v620
        %v1490 = vunpack.c.h.b16 %v620
        %v1491 = vunpack.c.l.b16 %v621
        %v1492 = vunpack.c.h.b16 %v621
        %v1493 = vunpack.c.l.b16 %v622
        %v1494 = vunpack.c.h.b16 %v622
        %v1495 = vunpack.c.l.b16 %v623
        %v1496 = vunpack.c.h.b16 %v623
        %v1497 = vunpack.c.l.b16 %v624
        %v1498 = vunpack.c.h.b16 %v624
        %v1499 = vunpack.c.l.b16 %v625
        %v1500 = vunpack.c.h.b16 %v625
        %v1501 = vunpack.c.l.b16 %v626
        %v1502 = vunpack.c.h.b16 %v626
        %v1503 = vunpack.c.l.b16 %v627
        %v1504 = vunpack.c.h.b16 %v627
        %v1505 = vunpack.c.l.b16 %v628
        %v1506 = vunpack.c.h.b16 %v628
        %v1507 = vunpack.c.l.b16 %v629
        %v1508 = vunpack.c.h.b16 %v629
        %v1509 = vunpack.c.l.b16 %v630
        %v1510 = vunpack.c.h.b16 %v630
        %v1511 = vunpack.c.l.b16 %v631
        %v1512 = vunpack.c.h.b16 %v631
        %v1513 = vunpack.c.l.b16 %v632
        %v1514 = vunpack.c.h.b16 %v632
        %v1515 = vunpack.c.l.b16 %v633
        %v1516 = vunpack.c.h.b16 %v633
        %v1517 = vunpack.c.l.b16 %v634
        %v1518 = vunpack.c.h.b16 %v634
        %v1519 = vunpack.c.l.b16 %v635
        %v1520 = vunpack.c.h.b16 %v635
        %v1521 = vunpack.c.l.b16 %v636
        %v1522 = vunpack.c.h.b16 %v636
        %v1523 = vunpack.c.l.b16 %v637
        %v1524 = vunpack.c.h.b16 %v637
        %v1525 = vunpack.c.l.b16 %v638
        %v1526 = vunpack.c.h.b16 %v638
        %v1527 = vunpack.c.l.b16 %v639
        %v1528 = vunpack.c.h.b16 %v639
        %v1529 = vunpack.c.l.b16 %v640
        %v1530 = vunpack.c.h.b16 %v640
        %v1531 = vunpack.c.l.b16 %v641
        %v1532 = vunpack.c.h.b16 %v641
        %v1533 = vunpack.c.l.b16 %v642
        %v1534 = vunpack.c.h.b16 %v642
        %v1535 = vunpack.c.l.b16 %v643
        %v1536 = vunpack.c.h.b16 %v643
        %v1537 = vunpack.c.l.b16 %v644
        %v1538 = vunpack.c.h.b16 %v644
        %v1539 = vunpack.c.l.b16 %v645
        %v1540 = vunpack.c.h.b16 %v645
        %v1541 = vunpack.c.l.b16 %v646
        %v1542 = vunpack.c.h.b16 %v646
        %v1543 = vunpack.c.l.b16 %v647
        %v1544 = vunpack.c.h.b16 %v647
        %v1545 = vunpack.c.l.b16 %v648
        %v1546 = vunpack.c.h.b16 %v648
        %v1547 = vunpack.c.l.b16 %v649
        %v1548 = vunpack.c.h.b16 %v649
        %v1549 = vunpack.c.l.b16 %v650
        %v1550 = vunpack.c.h.b16 %v650
        %v1551 = vunpack.c.l.b16 %v651
        %v1552 = vunpack.c.h.b16 %v651
        %v1553 = vunpack.c.l.b16 %v652
        %v1554 = vunpack.c.h.b16 %v652
        %v1555 = vunpack.c.l.b16 %v653
        %v1556 = vunpack.c.h.b16 %v653
        %v1557 = vunpack.c.l.b16 %v654
        %v1558 = vunpack.c.h.b16 %v654
        %v1559 = vunpack.c.l.b16 %v655
        %v1560 = vunpack.c.h.b16 %v655
        %v1561 = vunpack.c.l.b16 %v656
        %v1562 = vunpack.c.h.b16 %v656
        %v1563 = vunpack.c.l.b16 %v657
        %v1564 = vunpack.c.h.b16 %v657
        %v1565 = vunpack.c.l.b16 %v658
        %v1566 = vunpack.c.h.b16 %v658
        %v1567 = vunpack.c.l.b16 %v659
        %v1568 = vunpack.c.h.b16 %v659
        %v1569 = vunpack.c.l.b16 %v660
        %v1570 = vunpack.c.h.b16 %v660
        %v1571 = vunpack.c.l.b16 %v661
        %v1572 = vunpack.c.h.b16 %v661
        %v1573 = vunpack.c.l.b16 %v662
        %v1574 = vunpack.c.h.b16 %v662
        %v1575 = vunpack.c.l.b16 %v663
        %v1576 = vunpack.c.h.b16 %v663
        %v1577 = vunpack.c.l.b16 %v664
        %v1578 = vunpack.c.h.b16 %v664
        %v1579 = vunpack.c.l.b16 %v665
        %v1580 = vunpack.c.h.b16 %v665
        %v1581 = vunpack.c.l.b16 %v666
        %v1582 = vunpack.c.h.b16 %v666
        %v1583 = vunpack.c.l.b16 %v667
        %v1584 = vunpack.c.h.b16 %v667
        %v1585 = vunpack.c.l.b16 %v668
        %v1586 = vunpack.c.h.b16 %v668
        %v1587 = vunpack.c.l.b16 %v669
        %v1588 = vunpack.c.h.b16 %v669
        %v1589 = vunpack.c.l.b16 %v670
        %v1590 = vunpack.c.h.b16 %v670
        %v1591 = vunpack.c.l.b16 %v671
        %v1592 = vunpack.c.h.b16 %v671
        %v1593 = vunpack.c.l.b16 %v672
        %v1594 = vunpack.c.h.b16 %v672
        %v1595 = vunpack.c.l.b16 %v673
        %v1596 = vunpack.c.h.b16 %v673
        %v1597 = vunpack.c.l.b16 %v674
        %v1598 = vunpack.c.h.b16 %v674
        %v1599 = vunpack.c.l.b16 %v675
        %v1600 = vunpack.c.h.b16 %v675
        %v1601 = vunpack.c.l.b16 %v676
        %v1602 = vunpack.c.h.b16 %v676
        %v1603 = vunpack.c.l.b16 %v677
        %v1604 = vunpack.c.h.b16 %v677
        %v1605 = vunpack.c.l.b16 %v678
        %v1606 = vunpack.c.h.b16 %v678
        %v1607 = vunpack.c.l.b16 %v679
        %v1608 = vunpack.c.h.b16 %v679
        %v1609 = vunpack.c.l.b16 %v680
        %v1610 = vunpack.c.h.b16 %v680
        %v1611 = vunpack.c.l.b16 %v681
        %v1612 = vunpack.c.h.b16 %v681
        %v1613 = vunpack.c.l.b16 %v682
        %v1614 = vunpack.c.h.b16 %v682
        %v1615 = vunpack.c.l.b16 %v683
        %v1616 = vunpack.c.h.b16 %v683
        %v1617 = vunpack.c.l.b16 %v684
        %v1618 = vunpack.c.h.b16 %v684
        %v1619 = vunpack.c.l.b16 %v685
        %v1620 = vunpack.c.h.b16 %v685
        %v1621 = vunpack.c.l.b16 %v686
        %v1622 = vunpack.c.h.b16 %v686
        %v1623 = vunpack.c.l.b16 %v687
        %v1624 = vunpack.c.h.b16 %v687
        %v1625 = vunpack.c.l.b16 %v688
        %v1626 = vunpack.c.h.b16 %v688
        %v1627 = vunpack.c.l.b16 %v689
        %v1628 = vunpack.c.h.b16 %v689
        %v1629 = vunpack.c.l.b16 %v690
        %v1630 = vunpack.c.h.b16 %v690
        %v1631 = vunpack.c.l.b16 %v691
        %v1632 = vunpack.c.h.b16 %v691
        %v1633 = vunpack.c.l.b16 %v692
        %v1634 = vunpack.c.h.b16 %v692
        %v1635 = vunpack.c.l.b16 %v693
        %v1636 = vunpack.c.h.b16 %v693
        %v1637 = vunpack.c.l.b16 %v694
        %v1638 = vunpack.c.h.b16 %v694
        %v1639 = vunpack.c.l.b16 %v695
        %v1640 = vunpack.c.h.b16 %v695
        %v1641 = vunpack.c.l.b16 %v696
        %v1642 = vunpack.c.h.b16 %v696
        %v1643 = vunpack.c.l.b16 %v697
        %v1644 = vunpack.c.h.b16 %v697
        %v1645 = vunpack.c.l.b16 %v698
        %v1646 = vunpack.c.h.b16 %v698
        %v1647 = vunpack.c.l.b16 %v699
        %v1648 = vunpack.c.h.b16 %v699
        %v1649 = vunpack.c.l.b16 %v700
        %v1650 = vunpack.c.h.b16 %v700
        %v1651 = vunpack.c.l.b16 %v701
        %v1652 = vunpack.c.h.b16 %v701
        %v1653 = vunpack.c.l.b16 %v702
        %v1654 = vunpack.c.h.b16 %v702
        %v1655 = vunpack.c.l.b16 %v703
        %v1656 = vunpack.c.h.b16 %v703
        %v1657 = vunpack.c.l.b16 %v704
        %v1658 = vunpack.c.h.b16 %v704
        %v1659 = vunpack.c.l.b16 %v705
        %v1660 = vunpack.c.h.b16 %v705
        %v1661 = vunpack.c.l.b16 %v706
        %v1662 = vunpack.c.h.b16 %v706
        %v1663 = vunpack.c.l.b16 %v707
        %v1664 = vunpack.c.h.b16 %v707
        %v1665 = vunpack.c.l.b16 %v708
        %v1666 = vunpack.c.h.b16 %v708
        %v1667 = vunpack.c.l.b16 %v709
        %v1668 = vunpack.c.h.b16 %v709
        %v1669 = vunpack.c.l.b16 %v710
        %v1670 = vunpack.c.h.b16 %v710
        %v1671 = vunpack.c.l.b16 %v711
        %v1672 = vunpack.c.h.b16 %v711
        %v1673 = vunpack.c.l.b16 %v712
        %v1674 = vunpack.c.h.b16 %v712
        %v1675 = vunpack.c.l.b16 %v713
        %v1676 = vunpack.c.h.b16 %v713
        %v1677 = vunpack.c.l.b16 %v714
        %v1678 = vunpack.c.h.b16 %v714
        %v1679 = vunpack.c.l.b16 %v715
        %v1680 = vunpack.c.h.b16 %v715
        %v1681 = vunpack.c.l.b16 %v716
        %v1682 = vunpack.c.h.b16 %v716
        %v1683 = vunpack.c.l.b16 %v717
        %v1684 = vunpack.c.h.b16 %v717
        %v1685 = vunpack.c.l.b16 %v718
        %v1686 = vunpack.c.h.b16 %v718
        %v1687 = vunpack.c.l.b16 %v719
        %v1688 = vunpack.c.h.b16 %v719
        %v1689 = vunpack.c.l.b16 %v720
        %v1690 = vunpack.c.h.b16 %v720
        %v1691 = vunpack.c.l.b16 %v721
        %v1692 = vunpack.c.h.b16 %v721
        %v1693 = vunpack.c.l.b16 %v722
        %v1694 = vunpack.c.h.b16 %v722
        %v1695 = vunpack.c.l.b16 %v723
        %v1696 = vunpack.c.h.b16 %v723
        %v1697 = vpack.c.b16 %v1445, %v1441
        %v1698 = vpack.c.b16 %v1446, %v1442
        %v1699 = vpack.c.b16 %v1447, %v1443
        %v1700 = vpack.c.b16 %v1448, %v1444
        %v1701 = vpack.c.b16 %v1453, %v1449
        %v1702 = vpack.c.b16 %v1454, %v1450
        %v1703 = vpack.c.b16 %v1455, %v1451
        %v1704 = vpack.c.b16 %v1456, %v1452
        %v1705 = vpack.c.b16 %v1461, %v1457
        %v1706 = vpack.c.b16 %v1462, %v1458
        %v1707 = vpack.c.b16 %v1463, %v1459
        %v1708 = vpack.c.b16 %v1464, %v1460
        %v1709 = vpack.c.b16 %v1469, %v1465
        %v1710 = vpack.c.b16 %v1470, %v1466
        %v1711 = vpack.c.b16 %v1471, %v1467
        %v1712 = vpack.c.b16 %v1472, %v1468
        %v1713 = vpack.c.b16 %v1477, %v1473
        %v1714 = vpack.c.b16 %v1478, %v1474
        %v1715 = vpack.c.b16 %v1479, %v1475
        %v1716 = vpack.c.b16 %v1480, %v1476
        %v1717 = vpack.c.b16 %v1485, %v1481
        %v1718 = vpack.c.b16 %v1486, %v1482
        %v1719 = vpack.c.b16 %v1487, %v1483
        %v1720 = vpack.c.b16 %v1488, %v1484
        %v1721 = vpack.c.b16 %v1493, %v1489
        %v1722 = vpack.c.b16 %v1494, %v1490
        %v1723 = vpack.c.b16 %v1495, %v1491
        %v1724 = vpack.c.b16 %v1496, %v1492
        %v1725 = vpack.c.b16 %v1501, %v1497
        %v1726 = vpack.c.b16 %v1502, %v1498
        %v1727 = vpack.c.b16 %v1503, %v1499
        %v1728 = vpack.c.b16 %v1504, %v1500
        %v1729 = vpack.c.b16 %v1509, %v1505
        %v1730 = vpack.c.b16 %v1510, %v1506
        %v1731 = vpack.c.b16 %v1511, %v1507
        %v1732 = vpack.c.b16 %v1512, %v1508
        %v1733 = vpack.c.b16 %v1517, %v1513
        %v1734 = vpack.c.b16 %v1518, %v1514
        %v1735 = vpack.c.b16 %v1519, %v1515
        %v1736 = vpack.c.b16 %v1520, %v1516
        %v1737 = vpack.c.b16 %v1525, %v1521
        %v1738 = vpack.c.b16 %v1526, %v1522
        %v1739 = vpack.c.b16 %v1527, %v1523
        %v1740 = vpack.c.b16 %v1528, %v1524
        %v1741 = vpack.c.b16 %v1533, %v1529
        %v1742 = vpack.c.b16 %v1534, %v1530
        %v1743 = vpack.c.b16 %v1535, %v1531
        %v1744 = vpack.c.b16 %v1536, %v1532
        %v1745 = vpack.c.b16 %v1541, %v1537
        %v1746 = vpack.c.b16 %v1542, %v1538
        %v1747 = vpack.c.b16 %v1543, %v1539
        %v1748 = vpack.c.b16 %v1544, %v1540
        %v1749 = vpack.c.b16 %v1549, %v1545
        %v1750 = vpack.c.b16 %v1550, %v1546
        %v1751 = vpack.c.b16 %v1551, %v1547
        %v1752 = vpack.c.b16 %v1552, %v1548
        %v1753 = vpack.c.b16 %v1557, %v1553
        %v1754 = vpack.c.b16 %v1558, %v1554
        %v1755 = vpack.c.b16 %v1559, %v1555
        %v1756 = vpack.c.b16 %v1560, %v1556
        %v1757 = vpack.c.b16 %v1565, %v1561
        %v1758 = vpack.c.b16 %v1566, %v1562
        %v1759 = vpack.c.b16 %v1567, %v1563
        %v1760 = vpack.c.b16 %v1568, %v1564
        %v1761 = vpack.c.b16 %v1573, %v1569
        %v1762 = vpack.c.b16 %v1574, %v1570
        %v1763 = vpack.c.b16 %v1575, %v1571
        %v1764 = vpack.c.b16 %v1576, %v1572
        %v1765 = vpack.c.b16 %v1581, %v1577
        %v1766 = vpack.c.b16 %v1582, %v1578
        %v1767 = vpack.c.b16 %v1583, %v1579
        %v1768 = vpack.c.b16 %v1584, %v1580
        %v1769 = vpack.c.b16 %v1589, %v1585
        %v1770 = vpack.c.b16 %v1590, %v1586
        %v1771 = vpack.c.b16 %v1591, %v1587
        %v1772 = vpack.c.b16 %v1592, %v1588
        %v1773 = vpack.c.b16 %v1597, %v1593
        %v1774 = vpack.c.b16 %v1598, %v1594
        %v1775 = vpack.c.b16 %v1599, %v1595
        %v1776 = vpack.c.b16 %v1600, %v1596
        %v1777 = vpack.c.b16 %v1605, %v1601
        %v1778 = vpack.c.b16 %v1606, %v1602
        %v1779 = vpack.c.b16 %v1607, %v1603
        %v1780 = vpack.c.b16 %v1608, %v1604
        %v1781 = vpack.c.b16 %v1613, %v1609
        %v1782 = vpack.c.b16 %v1614, %v1610
        %v1783 = vpack.c.b16 %v1615, %v1611
        %v1784 = vpack.c.b16 %v1616, %v1612
        %v1785 = vpack.c.b16 %v1621, %v1617
        %v1786 = vpack.c.b16 %v1622, %v1618
        %v1787 = vpack.c.b16 %v1623, %v1619
        %v1788 = vpack.c.b16 %v1624, %v1620
        %v1789 = vpack.c.b16 %v1629, %v1625
        %v1790 = vpack.c.b16 %v1630, %v1626
        %v1791 = vpack.c.b16 %v1631, %v1627
        %v1792 = vpack.c.b16 %v1632, %v1628
        %v1793 = vpack.c.b16 %v1637, %v1633
        %v1794 = vpack.c.b16 %v1638, %v1634
        %v1795 = vpack.c.b16 %v1639, %v1635
        %v1796 = vpack.c.b16 %v1640, %v1636
        %v1797 = vpack.c.b16 %v1645, %v1641
        %v1798 = vpack.c.b16 %v1646, %v1642
        %v1799 = vpack.c.b16 %v1647, %v1643
        %v1800 = vpack.c.b16 %v1648, %v1644
        %v1801 = vpack.c.b16 %v1653, %v1649
        %v1802 = vpack.c.b16 %v1654, %v1650
        %v1803 = vpack.c.b16 %v1655, %v1651
        %v1804 = vpack.c.b16 %v1656, %v1652
        %v1805 = vpack.c.b16 %v1661, %v1657
        %v1806 = vpack.c.b16 %v1662, %v1658
        %v1807 = vpack.c.b16 %v1663, %v1659
        %v1808 = vpack.c.b16 %v1664, %v1660
        %v1809 = vpack.c.b16 %v1669, %v1665
        %v1810 = vpack.c.b16 %v1670, %v1666
        %v1811 = vpack.c.b16 %v1671, %v1667
        %v1812 = vpack.c.b16 %v1672, %v1668
        %v1813 = vpack.c.b16 %v1677, %v1673
        %v1814 = vpack.c.b16 %v1678, %v1674
        %v1815 = vpack.c.b16 %v1679, %v1675
        %v1816 = vpack.c.b16 %v1680, %v1676
        %v1817 = vpack.c.b16 %v1685, %v1681
        %v1818 = vpack.c.b16 %v1686, %v1682
        %v1819 = vpack.c.b16 %v1687, %v1683
        %v1820 = vpack.c.b16 %v1688, %v1684
        %v1821 = vpack.c.b16 %v1693, %v1689
        %v1822 = vpack.c.b16 %v1694, %v1690
        %v1823 = vpack.c.b16 %v1695, %v1691
        %v1824 = vpack.c.b16 %v1696, %v1692
        %1953 = vmatpush.bf16.msra.mxu0 %v1725
        %1954 = vmatpush.bf16.msra.mxu0 %v1721
        %1955 = vmatpush.bf16.msra.mxu0 %v1717
        %1956 = vmatpush.bf16.msra.mxu0 %v1713
        %1957 = vmatpush.bf16.msra.mxu0 %v1709
        %1958 = vmatpush.bf16.msra.mxu0 %v1705
        %1959 = vmatpush.bf16.msra.mxu0 %v1701
        %1960 = vmatpush.bf16.msra.mxu0 %v1697
        %1961 = vmatmul.bf16.gmra.mxu0 %v1249
        %v1962 = vpop.f32.mrf.mxu0
        %v1963 = vadd.f32 %v1145, %v1962
        %v1964 = vpop.f32.mrf.mxu0
        %v1965 = vadd.f32 %v1145, %v1964
        %1966 = vmatmul.bf16.gmra.mxu0 %v1253
        %v1967 = vpop.f32.mrf.mxu0
        %v1968 = vadd.f32 %v1145, %v1967
        %v1969 = vpop.f32.mrf.mxu0
        %v1970 = vadd.f32 %v1145, %v1969
        %1971 = vmatmul.bf16.gmra.mxu0 %v1257
        %v1972 = vpop.f32.mrf.mxu0
        %v1973 = vadd.f32 %v1145, %v1972
        %v1974 = vpop.f32.mrf.mxu0
        %v1975 = vadd.f32 %v1145, %v1974
        %1976 = vmatmul.bf16.gmra.mxu0 %v1261
        %v1977 = vpop.f32.mrf.mxu0
        %v1978 = vadd.f32 %v1145, %v1977
        %v1979 = vpop.f32.mrf.mxu0
        %v1980 = vadd.f32 %v1145, %v1979
        %1981 = vmatmul.bf16.gmra.mxu0 %v1265
        %v1982 = vpop.f32.mrf.mxu0
        %v1983 = vadd.f32 %v1145, %v1982
        %v1984 = vpop.f32.mrf.mxu0
        %v1985 = vadd.f32 %v1145, %v1984
        %1986 = vmatmul.bf16.gmra.mxu0 %v1269
        %v1987 = vpop.f32.mrf.mxu0
        %v1988 = vadd.f32 %v1145, %v1987
        %v1989 = vpop.f32.mrf.mxu0
        %v1990 = vadd.f32 %v1145, %v1989
        %1991 = vmatmul.bf16.gmra.mxu0 %v1273
        %v1992 = vpop.f32.mrf.mxu0
        %v1993 = vadd.f32 %v1145, %v1992
        %v1994 = vpop.f32.mrf.mxu0
        %v1995 = vadd.f32 %v1145, %v1994
        %1996 = vmatmul.bf16.gmra.mxu0 %v1277
        %v1997 = vpop.f32.mrf.mxu0
        %v1998 = vadd.f32 %v1145, %v1997
        %v1999 = vpop.f32.mrf.mxu0
        %v2000 = vadd.f32 %v1145, %v1999
        %2001 = vdwg.mxu0
        %2002 = vmatpush.bf16.msra.mxu0 %v1757
        %2003 = vmatpush.bf16.msra.mxu0 %v1753
        %2004 = vmatpush.bf16.msra.mxu0 %v1749
        %2005 = vmatpush.bf16.msra.mxu0 %v1745
        %2006 = vmatpush.bf16.msra.mxu0 %v1741
        %2007 = vmatpush.bf16.msra.mxu0 %v1737
        %2008 = vmatpush.bf16.msra.mxu0 %v1733
        %2009 = vmatpush.bf16.msra.mxu0 %v1729
        %2010 = vmatmul.bf16.gmra.mxu0 %v1250
        %v2011 = vpop.f32.mrf.mxu0
        %v2012 = vadd.f32 %v1963, %v2011
        %v2013 = vpop.f32.mrf.mxu0
        %v2014 = vadd.f32 %v1965, %v2013
        %2015 = vmatmul.bf16.gmra.mxu0 %v1254
        %v2016 = vpop.f32.mrf.mxu0
        %v2017 = vadd.f32 %v1968, %v2016
        %v2018 = vpop.f32.mrf.mxu0
        %v2019 = vadd.f32 %v1970, %v2018
        %2020 = vmatmul.bf16.gmra.mxu0 %v1258
        %v2021 = vpop.f32.mrf.mxu0
        %v2022 = vadd.f32 %v1973, %v2021
        %v2023 = vpop.f32.mrf.mxu0
        %v2024 = vadd.f32 %v1975, %v2023
        %2025 = vmatmul.bf16.gmra.mxu0 %v1262
        %v2026 = vpop.f32.mrf.mxu0
        %v2027 = vadd.f32 %v1978, %v2026
        %v2028 = vpop.f32.mrf.mxu0
        %v2029 = vadd.f32 %v1980, %v2028
        %2030 = vmatmul.bf16.gmra.mxu0 %v1266
        %v2031 = vpop.f32.mrf.mxu0
        %v2032 = vadd.f32 %v1983, %v2031
        %v2033 = vpop.f32.mrf.mxu0
        %v2034 = vadd.f32 %v1985, %v2033
        %2035 = vmatmul.bf16.gmra.mxu0 %v1270
        %v2036 = vpop.f32.mrf.mxu0
        %v2037 = vadd.f32 %v1988, %v2036
        %v2038 = vpop.f32.mrf.mxu0
        %v2039 = vadd.f32 %v1990, %v2038
        %2040 = vmatmul.bf16.gmra.mxu0 %v1274
        %v2041 = vpop.f32.mrf.mxu0
        %v2042 = vadd.f32 %v1993, %v2041
        %v2043 = vpop.f32.mrf.mxu0
        %v2044 = vadd.f32 %v1995, %v2043
        %2045 = vmatmul.bf16.gmra.mxu0 %v1278
        %v2046 = vpop.f32.mrf.mxu0
        %v2047 = vadd.f32 %v1998, %v2046
        %v2048 = vpop.f32.mrf.mxu0
        %v2049 = vadd.f32 %v2000, %v2048
        %2050 = vdwg.mxu0
        %2051 = vmatpush.bf16.msra.mxu0 %v1789
        %2052 = vmatpush.bf16.msra.mxu0 %v1785
        %2053 = vmatpush.bf16.msra.mxu0 %v1781
        %2054 = vmatpush.bf16.msra.mxu0 %v1777
        %2055 = vmatpush.bf16.msra.mxu0 %v1773
        %2056 = vmatpush.bf16.msra.mxu0 %v1769
        %2057 = vmatpush.bf16.msra.mxu0 %v1765
        %2058 = vmatpush.bf16.msra.mxu0 %v1761
        %2059 = vmatmul.bf16.gmra.mxu0 %v1251
        %v2060 = vpop.f32.mrf.mxu0
        %v2061 = vadd.f32 %v2012, %v2060
        %v2062 = vpop.f32.mrf.mxu0
        %v2063 = vadd.f32 %v2014, %v2062
        %2064 = vmatmul.bf16.gmra.mxu0 %v1255
        %v2065 = vpop.f32.mrf.mxu0
        %v2066 = vadd.f32 %v2017, %v2065
        %v2067 = vpop.f32.mrf.mxu0
        %v2068 = vadd.f32 %v2019, %v2067
        %2069 = vmatmul.bf16.gmra.mxu0 %v1259
        %v2070 = vpop.f32.mrf.mxu0
        %v2071 = vadd.f32 %v2022, %v2070
        %v2072 = vpop.f32.mrf.mxu0
        %v2073 = vadd.f32 %v2024, %v2072
        %2074 = vmatmul.bf16.gmra.mxu0 %v1263
        %v2075 = vpop.f32.mrf.mxu0
        %v2076 = vadd.f32 %v2027, %v2075
        %v2077 = vpop.f32.mrf.mxu0
        %v2078 = vadd.f32 %v2029, %v2077
        %2079 = vmatmul.bf16.gmra.mxu0 %v1267
        %v2080 = vpop.f32.mrf.mxu0
        %v2081 = vadd.f32 %v2032, %v2080
        %v2082 = vpop.f32.mrf.mxu0
        %v2083 = vadd.f32 %v2034, %v2082
        %2084 = vmatmul.bf16.gmra.mxu0 %v1271
        %v2085 = vpop.f32.mrf.mxu0
        %v2086 = vadd.f32 %v2037, %v2085
        %v2087 = vpop.f32.mrf.mxu0
        %v2088 = vadd.f32 %v2039, %v2087
        %2089 = vmatmul.bf16.gmra.mxu0 %v1275
        %v2090 = vpop.f32.mrf.mxu0
        %v2091 = vadd.f32 %v2042, %v2090
        %v2092 = vpop.f32.mrf.mxu0
        %v2093 = vadd.f32 %v2044, %v2092
        %2094 = vmatmul.bf16.gmra.mxu0 %v1279
        %v2095 = vpop.f32.mrf.mxu0
        %v2096 = vadd.f32 %v2047, %v2095
        %v2097 = vpop.f32.mrf.mxu0
        %v2098 = vadd.f32 %v2049, %v2097
        %2099 = vdwg.mxu0
        %2100 = vmatpush.bf16.msra.mxu0 %v1821
        %2101 = vmatpush.bf16.msra.mxu0 %v1817
        %2102 = vmatpush.bf16.msra.mxu0 %v1813
        %2103 = vmatpush.bf16.msra.mxu0 %v1809
        %2104 = vmatpush.bf16.msra.mxu0 %v1805
        %2105 = vmatpush.bf16.msra.mxu0 %v1801
        %2106 = vmatpush.bf16.msra.mxu0 %v1797
        %2107 = vmatpush.bf16.msra.mxu0 %v1793
        %2108 = vmatmul.bf16.gmra.mxu0 %v1252
        %v2109 = vpop.f32.mrf.mxu0
        %v2110 = vadd.f32 %v2061, %v2109
        %v2111 = vpop.f32.mrf.mxu0
        %v2112 = vadd.f32 %v2063, %v2111
        %2113 = vmatmul.bf16.gmra.mxu0 %v1256
        %v2114 = vpop.f32.mrf.mxu0
        %v2115 = vadd.f32 %v2066, %v2114
        %v2116 = vpop.f32.mrf.mxu0
        %v2117 = vadd.f32 %v2068, %v2116
        %2118 = vmatmul.bf16.gmra.mxu0 %v1260
        %v2119 = vpop.f32.mrf.mxu0
        %v2120 = vadd.f32 %v2071, %v2119
        %v2121 = vpop.f32.mrf.mxu0
        %v2122 = vadd.f32 %v2073, %v2121
        %2123 = vmatmul.bf16.gmra.mxu0 %v1264
        %v2124 = vpop.f32.mrf.mxu0
        %v2125 = vadd.f32 %v2076, %v2124
        %v2126 = vpop.f32.mrf.mxu0
        %v2127 = vadd.f32 %v2078, %v2126
        %2128 = vmatmul.bf16.gmra.mxu0 %v1268
        %v2129 = vpop.f32.mrf.mxu0
        %v2130 = vadd.f32 %v2081, %v2129
        %v2131 = vpop.f32.mrf.mxu0
        %v2132 = vadd.f32 %v2083, %v2131
        %2133 = vmatmul.bf16.gmra.mxu0 %v1272
        %v2134 = vpop.f32.mrf.mxu0
        %v2135 = vadd.f32 %v2086, %v2134
        %v2136 = vpop.f32.mrf.mxu0
        %v2137 = vadd.f32 %v2088, %v2136
        %2138 = vmatmul.bf16.gmra.mxu0 %v1276
        %v2139 = vpop.f32.mrf.mxu0
        %v2140 = vadd.f32 %v2091, %v2139
        %v2141 = vpop.f32.mrf.mxu0
        %v2142 = vadd.f32 %v2093, %v2141
        %2143 = vmatmul.bf16.gmra.mxu0 %v1280
        %v2144 = vpop.f32.mrf.mxu0
        %v2145 = vadd.f32 %v2096, %v2144
        %v2146 = vpop.f32.mrf.mxu0
        %v2147 = vadd.f32 %v2098, %v2146
        %2148 = vdwg.mxu0
        %2149 = vmatpush.bf16.msra.mxu0 %v1726
        %2150 = vmatpush.bf16.msra.mxu0 %v1722
        %2151 = vmatpush.bf16.msra.mxu0 %v1718
        %2152 = vmatpush.bf16.msra.mxu0 %v1714
        %2153 = vmatpush.bf16.msra.mxu0 %v1710
        %2154 = vmatpush.bf16.msra.mxu0 %v1706
        %2155 = vmatpush.bf16.msra.mxu0 %v1702
        %2156 = vmatpush.bf16.msra.mxu0 %v1698
        %2157 = vmatmul.bf16.gmra.mxu0 %v1249
        %v2158 = vpop.f32.mrf.mxu0
        %v2159 = vadd.f32 %v1146, %v2158
        %v2160 = vpop.f32.mrf.mxu0
        %v2161 = vadd.f32 %v1146, %v2160
        %2162 = vmatmul.bf16.gmra.mxu0 %v1253
        %v2163 = vpop.f32.mrf.mxu0
        %v2164 = vadd.f32 %v1146, %v2163
        %v2165 = vpop.f32.mrf.mxu0
        %v2166 = vadd.f32 %v1146, %v2165
        %2167 = vmatmul.bf16.gmra.mxu0 %v1257
        %v2168 = vpop.f32.mrf.mxu0
        %v2169 = vadd.f32 %v1146, %v2168
        %v2170 = vpop.f32.mrf.mxu0
        %v2171 = vadd.f32 %v1146, %v2170
        %2172 = vmatmul.bf16.gmra.mxu0 %v1261
        %v2173 = vpop.f32.mrf.mxu0
        %v2174 = vadd.f32 %v1146, %v2173
        %v2175 = vpop.f32.mrf.mxu0
        %v2176 = vadd.f32 %v1146, %v2175
        %2177 = vmatmul.bf16.gmra.mxu0 %v1265
        %v2178 = vpop.f32.mrf.mxu0
        %v2179 = vadd.f32 %v1146, %v2178
        %v2180 = vpop.f32.mrf.mxu0
        %v2181 = vadd.f32 %v1146, %v2180
        %2182 = vmatmul.bf16.gmra.mxu0 %v1269
        %v2183 = vpop.f32.mrf.mxu0
        %v2184 = vadd.f32 %v1146, %v2183
        %v2185 = vpop.f32.mrf.mxu0
        %v2186 = vadd.f32 %v1146, %v2185
        %2187 = vmatmul.bf16.gmra.mxu0 %v1273
        %v2188 = vpop.f32.mrf.mxu0
        %v2189 = vadd.f32 %v1146, %v2188
        %v2190 = vpop.f32.mrf.mxu0
        %v2191 = vadd.f32 %v1146, %v2190
        %2192 = vmatmul.bf16.gmra.mxu0 %v1277
        %v2193 = vpop.f32.mrf.mxu0
        %v2194 = vadd.f32 %v1146, %v2193
        %v2195 = vpop.f32.mrf.mxu0
        %v2196 = vadd.f32 %v1146, %v2195
        %2197 = vdwg.mxu0
        %2198 = vmatpush.bf16.msra.mxu0 %v1758
        %2199 = vmatpush.bf16.msra.mxu0 %v1754
        %2200 = vmatpush.bf16.msra.mxu0 %v1750
        %2201 = vmatpush.bf16.msra.mxu0 %v1746
        %2202 = vmatpush.bf16.msra.mxu0 %v1742
        %2203 = vmatpush.bf16.msra.mxu0 %v1738
        %2204 = vmatpush.bf16.msra.mxu0 %v1734
        %2205 = vmatpush.bf16.msra.mxu0 %v1730
        %2206 = vmatmul.bf16.gmra.mxu0 %v1250
        %v2207 = vpop.f32.mrf.mxu0
        %v2208 = vadd.f32 %v2159, %v2207
        %v2209 = vpop.f32.mrf.mxu0
        %v2210 = vadd.f32 %v2161, %v2209
        %2211 = vmatmul.bf16.gmra.mxu0 %v1254
        %v2212 = vpop.f32.mrf.mxu0
        %v2213 = vadd.f32 %v2164, %v2212
        %v2214 = vpop.f32.mrf.mxu0
        %v2215 = vadd.f32 %v2166, %v2214
        %2216 = vmatmul.bf16.gmra.mxu0 %v1258
        %v2217 = vpop.f32.mrf.mxu0
        %v2218 = vadd.f32 %v2169, %v2217
        %v2219 = vpop.f32.mrf.mxu0
        %v2220 = vadd.f32 %v2171, %v2219
        %2221 = vmatmul.bf16.gmra.mxu0 %v1262
        %v2222 = vpop.f32.mrf.mxu0
        %v2223 = vadd.f32 %v2174, %v2222
        %v2224 = vpop.f32.mrf.mxu0
        %v2225 = vadd.f32 %v2176, %v2224
        %2226 = vmatmul.bf16.gmra.mxu0 %v1266
        %v2227 = vpop.f32.mrf.mxu0
        %v2228 = vadd.f32 %v2179, %v2227
        %v2229 = vpop.f32.mrf.mxu0
        %v2230 = vadd.f32 %v2181, %v2229
        %2231 = vmatmul.bf16.gmra.mxu0 %v1270
        %v2232 = vpop.f32.mrf.mxu0
        %v2233 = vadd.f32 %v2184, %v2232
        %v2234 = vpop.f32.mrf.mxu0
        %v2235 = vadd.f32 %v2186, %v2234
        %2236 = vmatmul.bf16.gmra.mxu0 %v1274
        %v2237 = vpop.f32.mrf.mxu0
        %v2238 = vadd.f32 %v2189, %v2237
        %v2239 = vpop.f32.mrf.mxu0
        %v2240 = vadd.f32 %v2191, %v2239
        %2241 = vmatmul.bf16.gmra.mxu0 %v1278
        %v2242 = vpop.f32.mrf.mxu0
        %v2243 = vadd.f32 %v2194, %v2242
        %v2244 = vpop.f32.mrf.mxu0
        %v2245 = vadd.f32 %v2196, %v2244
        %2246 = vdwg.mxu0
        %2247 = vmatpush.bf16.msra.mxu0 %v1790
        %2248 = vmatpush.bf16.msra.mxu0 %v1786
        %2249 = vmatpush.bf16.msra.mxu0 %v1782
        %2250 = vmatpush.bf16.msra.mxu0 %v1778
        %2251 = vmatpush.bf16.msra.mxu0 %v1774
        %2252 = vmatpush.bf16.msra.mxu0 %v1770
        %2253 = vmatpush.bf16.msra.mxu0 %v1766
        %2254 = vmatpush.bf16.msra.mxu0 %v1762
        %2255 = vmatmul.bf16.gmra.mxu0 %v1251
        %v2256 = vpop.f32.mrf.mxu0
        %v2257 = vadd.f32 %v2208, %v2256
        %v2258 = vpop.f32.mrf.mxu0
        %v2259 = vadd.f32 %v2210, %v2258
        %2260 = vmatmul.bf16.gmra.mxu0 %v1255
        %v2261 = vpop.f32.mrf.mxu0
        %v2262 = vadd.f32 %v2213, %v2261
        %v2263 = vpop.f32.mrf.mxu0
        %v2264 = vadd.f32 %v2215, %v2263
        %2265 = vmatmul.bf16.gmra.mxu0 %v1259
        %v2266 = vpop.f32.mrf.mxu0
        %v2267 = vadd.f32 %v2218, %v2266
        %v2268 = vpop.f32.mrf.mxu0
        %v2269 = vadd.f32 %v2220, %v2268
        %2270 = vmatmul.bf16.gmra.mxu0 %v1263
        %v2271 = vpop.f32.mrf.mxu0
        %v2272 = vadd.f32 %v2223, %v2271
        %v2273 = vpop.f32.mrf.mxu0
        %v2274 = vadd.f32 %v2225, %v2273
        %2275 = vmatmul.bf16.gmra.mxu0 %v1267
        %v2276 = vpop.f32.mrf.mxu0
        %v2277 = vadd.f32 %v2228, %v2276
        %v2278 = vpop.f32.mrf.mxu0
        %v2279 = vadd.f32 %v2230, %v2278
        %2280 = vmatmul.bf16.gmra.mxu0 %v1271
        %v2281 = vpop.f32.mrf.mxu0
        %v2282 = vadd.f32 %v2233, %v2281
        %v2283 = vpop.f32.mrf.mxu0
        %v2284 = vadd.f32 %v2235, %v2283
        %2285 = vmatmul.bf16.gmra.mxu0 %v1275
        %v2286 = vpop.f32.mrf.mxu0
        %v2287 = vadd.f32 %v2238, %v2286
        %v2288 = vpop.f32.mrf.mxu0
        %v2289 = vadd.f32 %v2240, %v2288
        %2290 = vmatmul.bf16.gmra.mxu0 %v1279
        %v2291 = vpop.f32.mrf.mxu0
        %v2292 = vadd.f32 %v2243, %v2291
        %v2293 = vpop.f32.mrf.mxu0
        %v2294 = vadd.f32 %v2245, %v2293
        %2295 = vdwg.mxu0
        %2296 = vmatpush.bf16.msra.mxu0 %v1822
        %2297 = vmatpush.bf16.msra.mxu0 %v1818
        %2298 = vmatpush.bf16.msra.mxu0 %v1814
        %2299 = vmatpush.bf16.msra.mxu0 %v1810
        %2300 = vmatpush.bf16.msra.mxu0 %v1806
        %2301 = vmatpush.bf16.msra.mxu0 %v1802
        %2302 = vmatpush.bf16.msra.mxu0 %v1798
        %2303 = vmatpush.bf16.msra.mxu0 %v1794
        %2304 = vmatmul.bf16.gmra.mxu0 %v1252
        %v2305 = vpop.f32.mrf.mxu0
        %v2306 = vadd.f32 %v2257, %v2305
        %v2307 = vpop.f32.mrf.mxu0
        %v2308 = vadd.f32 %v2259, %v2307
        %2309 = vmatmul.bf16.gmra.mxu0 %v1256
        %v2310 = vpop.f32.mrf.mxu0
        %v2311 = vadd.f32 %v2262, %v2310
        %v2312 = vpop.f32.mrf.mxu0
        %v2313 = vadd.f32 %v2264, %v2312
        %2314 = vmatmul.bf16.gmra.mxu0 %v1260
        %v2315 = vpop.f32.mrf.mxu0
        %v2316 = vadd.f32 %v2267, %v2315
        %v2317 = vpop.f32.mrf.mxu0
        %v2318 = vadd.f32 %v2269, %v2317
        %2319 = vmatmul.bf16.gmra.mxu0 %v1264
        %v2320 = vpop.f32.mrf.mxu0
        %v2321 = vadd.f32 %v2272, %v2320
        %v2322 = vpop.f32.mrf.mxu0
        %v2323 = vadd.f32 %v2274, %v2322
        %2324 = vmatmul.bf16.gmra.mxu0 %v1268
        %v2325 = vpop.f32.mrf.mxu0
        %v2326 = vadd.f32 %v2277, %v2325
        %v2327 = vpop.f32.mrf.mxu0
        %v2328 = vadd.f32 %v2279, %v2327
        %2329 = vmatmul.bf16.gmra.mxu0 %v1272
        %v2330 = vpop.f32.mrf.mxu0
        %v2331 = vadd.f32 %v2282, %v2330
        %v2332 = vpop.f32.mrf.mxu0
        %v2333 = vadd.f32 %v2284, %v2332
        %2334 = vmatmul.bf16.gmra.mxu0 %v1276
        %v2335 = vpop.f32.mrf.mxu0
        %v2336 = vadd.f32 %v2287, %v2335
        %v2337 = vpop.f32.mrf.mxu0
        %v2338 = vadd.f32 %v2289, %v2337
        %2339 = vmatmul.bf16.gmra.mxu0 %v1280
        %v2340 = vpop.f32.mrf.mxu0
        %v2341 = vadd.f32 %v2292, %v2340
        %v2342 = vpop.f32.mrf.mxu0
        %v2343 = vadd.f32 %v2294, %v2342
        %2344 = vdwg.mxu0
        %2345 = vmatpush.bf16.msra.mxu0 %v1727
        %2346 = vmatpush.bf16.msra.mxu0 %v1723
        %2347 = vmatpush.bf16.msra.mxu0 %v1719
        %2348 = vmatpush.bf16.msra.mxu0 %v1715
        %2349 = vmatpush.bf16.msra.mxu0 %v1711
        %2350 = vmatpush.bf16.msra.mxu0 %v1707
        %2351 = vmatpush.bf16.msra.mxu0 %v1703
        %2352 = vmatpush.bf16.msra.mxu0 %v1699
        %2353 = vmatmul.bf16.gmra.mxu0 %v1249
        %v2354 = vpop.f32.mrf.mxu0
        %v2355 = vadd.f32 %v1147, %v2354
        %v2356 = vpop.f32.mrf.mxu0
        %v2357 = vadd.f32 %v1147, %v2356
        %2358 = vmatmul.bf16.gmra.mxu0 %v1253
        %v2359 = vpop.f32.mrf.mxu0
        %v2360 = vadd.f32 %v1147, %v2359
        %v2361 = vpop.f32.mrf.mxu0
        %v2362 = vadd.f32 %v1147, %v2361
        %2363 = vmatmul.bf16.gmra.mxu0 %v1257
        %v2364 = vpop.f32.mrf.mxu0
        %v2365 = vadd.f32 %v1147, %v2364
        %v2366 = vpop.f32.mrf.mxu0
        %v2367 = vadd.f32 %v1147, %v2366
        %2368 = vmatmul.bf16.gmra.mxu0 %v1261
        %v2369 = vpop.f32.mrf.mxu0
        %v2370 = vadd.f32 %v1147, %v2369
        %v2371 = vpop.f32.mrf.mxu0
        %v2372 = vadd.f32 %v1147, %v2371
        %2373 = vmatmul.bf16.gmra.mxu0 %v1265
        %v2374 = vpop.f32.mrf.mxu0
        %v2375 = vadd.f32 %v1147, %v2374
        %v2376 = vpop.f32.mrf.mxu0
        %v2377 = vadd.f32 %v1147, %v2376
        %2378 = vmatmul.bf16.gmra.mxu0 %v1269
        %v2379 = vpop.f32.mrf.mxu0
        %v2380 = vadd.f32 %v1147, %v2379
        %v2381 = vpop.f32.mrf.mxu0
        %v2382 = vadd.f32 %v1147, %v2381
        %2383 = vmatmul.bf16.gmra.mxu0 %v1273
        %v2384 = vpop.f32.mrf.mxu0
        %v2385 = vadd.f32 %v1147, %v2384
        %v2386 = vpop.f32.mrf.mxu0
        %v2387 = vadd.f32 %v1147, %v2386
        %2388 = vmatmul.bf16.gmra.mxu0 %v1277
        %v2389 = vpop.f32.mrf.mxu0
        %v2390 = vadd.f32 %v1147, %v2389
        %v2391 = vpop.f32.mrf.mxu0
        %v2392 = vadd.f32 %v1147, %v2391
        %2393 = vdwg.mxu0
        %2394 = vmatpush.bf16.msra.mxu0 %v1759
        %2395 = vmatpush.bf16.msra.mxu0 %v1755
        %2396 = vmatpush.bf16.msra.mxu0 %v1751
        %2397 = vmatpush.bf16.msra.mxu0 %v1747
        %2398 = vmatpush.bf16.msra.mxu0 %v1743
        %2399 = vmatpush.bf16.msra.mxu0 %v1739
        %2400 = vmatpush.bf16.msra.mxu0 %v1735
        %2401 = vmatpush.bf16.msra.mxu0 %v1731
        %2402 = vmatmul.bf16.gmra.mxu0 %v1250
        %v2403 = vpop.f32.mrf.mxu0
        %v2404 = vadd.f32 %v2355, %v2403
        %v2405 = vpop.f32.mrf.mxu0
        %v2406 = vadd.f32 %v2357, %v2405
        %2407 = vmatmul.bf16.gmra.mxu0 %v1254
        %v2408 = vpop.f32.mrf.mxu0
        %v2409 = vadd.f32 %v2360, %v2408
        %v2410 = vpop.f32.mrf.mxu0
        %v2411 = vadd.f32 %v2362, %v2410
        %2412 = vmatmul.bf16.gmra.mxu0 %v1258
        %v2413 = vpop.f32.mrf.mxu0
        %v2414 = vadd.f32 %v2365, %v2413
        %v2415 = vpop.f32.mrf.mxu0
        %v2416 = vadd.f32 %v2367, %v2415
        %2417 = vmatmul.bf16.gmra.mxu0 %v1262
        %v2418 = vpop.f32.mrf.mxu0
        %v2419 = vadd.f32 %v2370, %v2418
        %v2420 = vpop.f32.mrf.mxu0
        %v2421 = vadd.f32 %v2372, %v2420
        %2422 = vmatmul.bf16.gmra.mxu0 %v1266
        %v2423 = vpop.f32.mrf.mxu0
        %v2424 = vadd.f32 %v2375, %v2423
        %v2425 = vpop.f32.mrf.mxu0
        %v2426 = vadd.f32 %v2377, %v2425
        %2427 = vmatmul.bf16.gmra.mxu0 %v1270
        %v2428 = vpop.f32.mrf.mxu0
        %v2429 = vadd.f32 %v2380, %v2428
        %v2430 = vpop.f32.mrf.mxu0
        %v2431 = vadd.f32 %v2382, %v2430
        %2432 = vmatmul.bf16.gmra.mxu0 %v1274
        %v2433 = vpop.f32.mrf.mxu0
        %v2434 = vadd.f32 %v2385, %v2433
        %v2435 = vpop.f32.mrf.mxu0
        %v2436 = vadd.f32 %v2387, %v2435
        %2437 = vmatmul.bf16.gmra.mxu0 %v1278
        %v2438 = vpop.f32.mrf.mxu0
        %v2439 = vadd.f32 %v2390, %v2438
        %v2440 = vpop.f32.mrf.mxu0
        %v2441 = vadd.f32 %v2392, %v2440
        %2442 = vdwg.mxu0
        %2443 = vmatpush.bf16.msra.mxu0 %v1791
        %2444 = vmatpush.bf16.msra.mxu0 %v1787
        %2445 = vmatpush.bf16.msra.mxu0 %v1783
        %2446 = vmatpush.bf16.msra.mxu0 %v1779
        %2447 = vmatpush.bf16.msra.mxu0 %v1775
        %2448 = vmatpush.bf16.msra.mxu0 %v1771
        %2449 = vmatpush.bf16.msra.mxu0 %v1767
        %2450 = vmatpush.bf16.msra.mxu0 %v1763
        %2451 = vmatmul.bf16.gmra.mxu0 %v1251
        %v2452 = vpop.f32.mrf.mxu0
        %v2453 = vadd.f32 %v2404, %v2452
        %v2454 = vpop.f32.mrf.mxu0
        %v2455 = vadd.f32 %v2406, %v2454
        %2456 = vmatmul.bf16.gmra.mxu0 %v1255
        %v2457 = vpop.f32.mrf.mxu0
        %v2458 = vadd.f32 %v2409, %v2457
        %v2459 = vpop.f32.mrf.mxu0
        %v2460 = vadd.f32 %v2411, %v2459
        %2461 = vmatmul.bf16.gmra.mxu0 %v1259
        %v2462 = vpop.f32.mrf.mxu0
        %v2463 = vadd.f32 %v2414, %v2462
        %v2464 = vpop.f32.mrf.mxu0
        %v2465 = vadd.f32 %v2416, %v2464
        %2466 = vmatmul.bf16.gmra.mxu0 %v1263
        %v2467 = vpop.f32.mrf.mxu0
        %v2468 = vadd.f32 %v2419, %v2467
        %v2469 = vpop.f32.mrf.mxu0
        %v2470 = vadd.f32 %v2421, %v2469
        %2471 = vmatmul.bf16.gmra.mxu0 %v1267
        %v2472 = vpop.f32.mrf.mxu0
        %v2473 = vadd.f32 %v2424, %v2472
        %v2474 = vpop.f32.mrf.mxu0
        %v2475 = vadd.f32 %v2426, %v2474
        %2476 = vmatmul.bf16.gmra.mxu0 %v1271
        %v2477 = vpop.f32.mrf.mxu0
        %v2478 = vadd.f32 %v2429, %v2477
        %v2479 = vpop.f32.mrf.mxu0
        %v2480 = vadd.f32 %v2431, %v2479
        %2481 = vmatmul.bf16.gmra.mxu0 %v1275
        %v2482 = vpop.f32.mrf.mxu0
        %v2483 = vadd.f32 %v2434, %v2482
        %v2484 = vpop.f32.mrf.mxu0
        %v2485 = vadd.f32 %v2436, %v2484
        %2486 = vmatmul.bf16.gmra.mxu0 %v1279
        %v2487 = vpop.f32.mrf.mxu0
        %v2488 = vadd.f32 %v2439, %v2487
        %v2489 = vpop.f32.mrf.mxu0
        %v2490 = vadd.f32 %v2441, %v2489
        %2491 = vdwg.mxu0
        %2492 = vmatpush.bf16.msra.mxu0 %v1823
        %2493 = vmatpush.bf16.msra.mxu0 %v1819
        %2494 = vmatpush.bf16.msra.mxu0 %v1815
        %2495 = vmatpush.bf16.msra.mxu0 %v1811
        %2496 = vmatpush.bf16.msra.mxu0 %v1807
        %2497 = vmatpush.bf16.msra.mxu0 %v1803
        %2498 = vmatpush.bf16.msra.mxu0 %v1799
        %2499 = vmatpush.bf16.msra.mxu0 %v1795
        %2500 = vmatmul.bf16.gmra.mxu0 %v1252
        %v2501 = vpop.f32.mrf.mxu0
        %v2502 = vadd.f32 %v2453, %v2501
        %v2503 = vpop.f32.mrf.mxu0
        %v2504 = vadd.f32 %v2455, %v2503
        %2505 = vmatmul.bf16.gmra.mxu0 %v1256
        %v2506 = vpop.f32.mrf.mxu0
        %v2507 = vadd.f32 %v2458, %v2506
        %v2508 = vpop.f32.mrf.mxu0
        %v2509 = vadd.f32 %v2460, %v2508
        %2510 = vmatmul.bf16.gmra.mxu0 %v1260
        %v2511 = vpop.f32.mrf.mxu0
        %v2512 = vadd.f32 %v2463, %v2511
        %v2513 = vpop.f32.mrf.mxu0
        %v2514 = vadd.f32 %v2465, %v2513
        %2515 = vmatmul.bf16.gmra.mxu0 %v1264
        %v2516 = vpop.f32.mrf.mxu0
        %v2517 = vadd.f32 %v2468, %v2516
        %v2518 = vpop.f32.mrf.mxu0
        %v2519 = vadd.f32 %v2470, %v2518
        %2520 = vmatmul.bf16.gmra.mxu0 %v1268
        %v2521 = vpop.f32.mrf.mxu0
        %v2522 = vadd.f32 %v2473, %v2521
        %v2523 = vpop.f32.mrf.mxu0
        %v2524 = vadd.f32 %v2475, %v2523
        %2525 = vmatmul.bf16.gmra.mxu0 %v1272
        %v2526 = vpop.f32.mrf.mxu0
        %v2527 = vadd.f32 %v2478, %v2526
        %v2528 = vpop.f32.mrf.mxu0
        %v2529 = vadd.f32 %v2480, %v2528
        %2530 = vmatmul.bf16.gmra.mxu0 %v1276
        %v2531 = vpop.f32.mrf.mxu0
        %v2532 = vadd.f32 %v2483, %v2531
        %v2533 = vpop.f32.mrf.mxu0
        %v2534 = vadd.f32 %v2485, %v2533
        %2535 = vmatmul.bf16.gmra.mxu0 %v1280
        %v2536 = vpop.f32.mrf.mxu0
        %v2537 = vadd.f32 %v2488, %v2536
        %v2538 = vpop.f32.mrf.mxu0
        %v2539 = vadd.f32 %v2490, %v2538
        %2540 = vdwg.mxu0
        %2541 = vmatpush.bf16.msra.mxu0 %v1728
        %2542 = vmatpush.bf16.msra.mxu0 %v1724
        %2543 = vmatpush.bf16.msra.mxu0 %v1720
        %2544 = vmatpush.bf16.msra.mxu0 %v1716
        %2545 = vmatpush.bf16.msra.mxu0 %v1712
        %2546 = vmatpush.bf16.msra.mxu0 %v1708
        %2547 = vmatpush.bf16.msra.mxu0 %v1704
        %2548 = vmatpush.bf16.msra.mxu0 %v1700
        %2549 = vmatmul.bf16.gmra.mxu0 %v1249
        %v2550 = vpop.f32.mrf.mxu0
        %v2551 = vadd.f32 %v1148, %v2550
        %v2552 = vpop.f32.mrf.mxu0
        %v2553 = vadd.f32 %v1148, %v2552
        %2554 = vmatmul.bf16.gmra.mxu0 %v1253
        %v2555 = vpop.f32.mrf.mxu0
        %v2556 = vadd.f32 %v1148, %v2555
        %v2557 = vpop.f32.mrf.mxu0
        %v2558 = vadd.f32 %v1148, %v2557
        %2559 = vmatmul.bf16.gmra.mxu0 %v1257
        %v2560 = vpop.f32.mrf.mxu0
        %v2561 = vadd.f32 %v1148, %v2560
        %v2562 = vpop.f32.mrf.mxu0
        %v2563 = vadd.f32 %v1148, %v2562
        %2564 = vmatmul.bf16.gmra.mxu0 %v1261
        %v2565 = vpop.f32.mrf.mxu0
        %v2566 = vadd.f32 %v1148, %v2565
        %v2567 = vpop.f32.mrf.mxu0
        %v2568 = vadd.f32 %v1148, %v2567
        %2569 = vmatmul.bf16.gmra.mxu0 %v1265
        %v2570 = vpop.f32.mrf.mxu0
        %v2571 = vadd.f32 %v1148, %v2570
        %v2572 = vpop.f32.mrf.mxu0
        %v2573 = vadd.f32 %v1148, %v2572
        %2574 = vmatmul.bf16.gmra.mxu0 %v1269
        %v2575 = vpop.f32.mrf.mxu0
        %v2576 = vadd.f32 %v1148, %v2575
        %v2577 = vpop.f32.mrf.mxu0
        %v2578 = vadd.f32 %v1148, %v2577
        %2579 = vmatmul.bf16.gmra.mxu0 %v1273
        %v2580 = vpop.f32.mrf.mxu0
        %v2581 = vadd.f32 %v1148, %v2580
        %v2582 = vpop.f32.mrf.mxu0
        %v2583 = vadd.f32 %v1148, %v2582
        %2584 = vmatmul.bf16.gmra.mxu0 %v1277
        %v2585 = vpop.f32.mrf.mxu0
        %v2586 = vadd.f32 %v1148, %v2585
        %v2587 = vpop.f32.mrf.mxu0
        %v2588 = vadd.f32 %v1148, %v2587
        %2589 = vdwg.mxu0
        %2590 = vmatpush.bf16.msra.mxu0 %v1760
        %2591 = vmatpush.bf16.msra.mxu0 %v1756
        %2592 = vmatpush.bf16.msra.mxu0 %v1752
        %2593 = vmatpush.bf16.msra.mxu0 %v1748
        %2594 = vmatpush.bf16.msra.mxu0 %v1744
        %2595 = vmatpush.bf16.msra.mxu0 %v1740
        %2596 = vmatpush.bf16.msra.mxu0 %v1736
        %2597 = vmatpush.bf16.msra.mxu0 %v1732
        %2598 = vmatmul.bf16.gmra.mxu0 %v1250
        %v2599 = vpop.f32.mrf.mxu0
        %v2600 = vadd.f32 %v2551, %v2599
        %v2601 = vpop.f32.mrf.mxu0
        %v2602 = vadd.f32 %v2553, %v2601
        %2603 = vmatmul.bf16.gmra.mxu0 %v1254
        %v2604 = vpop.f32.mrf.mxu0
        %v2605 = vadd.f32 %v2556, %v2604
        %v2606 = vpop.f32.mrf.mxu0
        %v2607 = vadd.f32 %v2558, %v2606
        %2608 = vmatmul.bf16.gmra.mxu0 %v1258
        %v2609 = vpop.f32.mrf.mxu0
        %v2610 = vadd.f32 %v2561, %v2609
        %v2611 = vpop.f32.mrf.mxu0
        %v2612 = vadd.f32 %v2563, %v2611
        %2613 = vmatmul.bf16.gmra.mxu0 %v1262
        %v2614 = vpop.f32.mrf.mxu0
        %v2615 = vadd.f32 %v2566, %v2614
        %v2616 = vpop.f32.mrf.mxu0
        %v2617 = vadd.f32 %v2568, %v2616
        %2618 = vmatmul.bf16.gmra.mxu0 %v1266
        %v2619 = vpop.f32.mrf.mxu0
        %v2620 = vadd.f32 %v2571, %v2619
        %v2621 = vpop.f32.mrf.mxu0
        %v2622 = vadd.f32 %v2573, %v2621
        %2623 = vmatmul.bf16.gmra.mxu0 %v1270
        %v2624 = vpop.f32.mrf.mxu0
        %v2625 = vadd.f32 %v2576, %v2624
        %v2626 = vpop.f32.mrf.mxu0
        %v2627 = vadd.f32 %v2578, %v2626
        %2628 = vmatmul.bf16.gmra.mxu0 %v1274
        %v2629 = vpop.f32.mrf.mxu0
        %v2630 = vadd.f32 %v2581, %v2629
        %v2631 = vpop.f32.mrf.mxu0
        %v2632 = vadd.f32 %v2583, %v2631
        %2633 = vmatmul.bf16.gmra.mxu0 %v1278
        %v2634 = vpop.f32.mrf.mxu0
        %v2635 = vadd.f32 %v2586, %v2634
        %v2636 = vpop.f32.mrf.mxu0
        %v2637 = vadd.f32 %v2588, %v2636
        %2638 = vdwg.mxu0
        %2639 = vmatpush.bf16.msra.mxu0 %v1792
        %2640 = vmatpush.bf16.msra.mxu0 %v1788
        %2641 = vmatpush.bf16.msra.mxu0 %v1784
        %2642 = vmatpush.bf16.msra.mxu0 %v1780
        %2643 = vmatpush.bf16.msra.mxu0 %v1776
        %2644 = vmatpush.bf16.msra.mxu0 %v1772
        %2645 = vmatpush.bf16.msra.mxu0 %v1768
        %2646 = vmatpush.bf16.msra.mxu0 %v1764
        %2647 = vmatmul.bf16.gmra.mxu0 %v1251
        %v2648 = vpop.f32.mrf.mxu0
        %v2649 = vadd.f32 %v2600, %v2648
        %v2650 = vpop.f32.mrf.mxu0
        %v2651 = vadd.f32 %v2602, %v2650
        %2652 = vmatmul.bf16.gmra.mxu0 %v1255
        %v2653 = vpop.f32.mrf.mxu0
        %v2654 = vadd.f32 %v2605, %v2653
        %v2655 = vpop.f32.mrf.mxu0
        %v2656 = vadd.f32 %v2607, %v2655
        %2657 = vmatmul.bf16.gmra.mxu0 %v1259
        %v2658 = vpop.f32.mrf.mxu0
        %v2659 = vadd.f32 %v2610, %v2658
        %v2660 = vpop.f32.mrf.mxu0
        %v2661 = vadd.f32 %v2612, %v2660
        %2662 = vmatmul.bf16.gmra.mxu0 %v1263
        %v2663 = vpop.f32.mrf.mxu0
        %v2664 = vadd.f32 %v2615, %v2663
        %v2665 = vpop.f32.mrf.mxu0
        %v2666 = vadd.f32 %v2617, %v2665
        %2667 = vmatmul.bf16.gmra.mxu0 %v1267
        %v2668 = vpop.f32.mrf.mxu0
        %v2669 = vadd.f32 %v2620, %v2668
        %v2670 = vpop.f32.mrf.mxu0
        %v2671 = vadd.f32 %v2622, %v2670
        %2672 = vmatmul.bf16.gmra.mxu0 %v1271
        %v2673 = vpop.f32.mrf.mxu0
        %v2674 = vadd.f32 %v2625, %v2673
        %v2675 = vpop.f32.mrf.mxu0
        %v2676 = vadd.f32 %v2627, %v2675
        %2677 = vmatmul.bf16.gmra.mxu0 %v1275
        %v2678 = vpop.f32.mrf.mxu0
        %v2679 = vadd.f32 %v2630, %v2678
        %v2680 = vpop.f32.mrf.mxu0
        %v2681 = vadd.f32 %v2632, %v2680
        %2682 = vmatmul.bf16.gmra.mxu0 %v1279
        %v2683 = vpop.f32.mrf.mxu0
        %v2684 = vadd.f32 %v2635, %v2683
        %v2685 = vpop.f32.mrf.mxu0
        %v2686 = vadd.f32 %v2637, %v2685
        %2687 = vdwg.mxu0
        %2688 = vmatpush.bf16.msra.mxu0 %v1824
        %2689 = vmatpush.bf16.msra.mxu0 %v1820
        %2690 = vmatpush.bf16.msra.mxu0 %v1816
        %2691 = vmatpush.bf16.msra.mxu0 %v1812
        %2692 = vmatpush.bf16.msra.mxu0 %v1808
        %2693 = vmatpush.bf16.msra.mxu0 %v1804
        %2694 = vmatpush.bf16.msra.mxu0 %v1800
        %2695 = vmatpush.bf16.msra.mxu0 %v1796
        %2696 = vmatmul.bf16.gmra.mxu0 %v1252
        %v2697 = vpop.f32.mrf.mxu0
        %v2698 = vadd.f32 %v2649, %v2697
        %v2699 = vpop.f32.mrf.mxu0
        %v2700 = vadd.f32 %v2651, %v2699
        %2701 = vmatmul.bf16.gmra.mxu0 %v1256
        %v2702 = vpop.f32.mrf.mxu0
        %v2703 = vadd.f32 %v2654, %v2702
        %v2704 = vpop.f32.mrf.mxu0
        %v2705 = vadd.f32 %v2656, %v2704
        %2706 = vmatmul.bf16.gmra.mxu0 %v1260
        %v2707 = vpop.f32.mrf.mxu0
        %v2708 = vadd.f32 %v2659, %v2707
        %v2709 = vpop.f32.mrf.mxu0
        %v2710 = vadd.f32 %v2661, %v2709
        %2711 = vmatmul.bf16.gmra.mxu0 %v1264
        %v2712 = vpop.f32.mrf.mxu0
        %v2713 = vadd.f32 %v2664, %v2712
        %v2714 = vpop.f32.mrf.mxu0
        %v2715 = vadd.f32 %v2666, %v2714
        %2716 = vmatmul.bf16.gmra.mxu0 %v1268
        %v2717 = vpop.f32.mrf.mxu0
        %v2718 = vadd.f32 %v2669, %v2717
        %v2719 = vpop.f32.mrf.mxu0
        %v2720 = vadd.f32 %v2671, %v2719
        %2721 = vmatmul.bf16.gmra.mxu0 %v1272
        %v2722 = vpop.f32.mrf.mxu0
        %v2723 = vadd.f32 %v2674, %v2722
        %v2724 = vpop.f32.mrf.mxu0
        %v2725 = vadd.f32 %v2676, %v2724
        %2726 = vmatmul.bf16.gmra.mxu0 %v1276
        %v2727 = vpop.f32.mrf.mxu0
        %v2728 = vadd.f32 %v2679, %v2727
        %v2729 = vpop.f32.mrf.mxu0
        %v2730 = vadd.f32 %v2681, %v2729
        %2731 = vmatmul.bf16.gmra.mxu0 %v1280
        %v2732 = vpop.f32.mrf.mxu0
        %v2733 = vadd.f32 %v2684, %v2732
        %v2734 = vpop.f32.mrf.mxu0
        %v2735 = vadd.f32 %v2686, %v2734
        %2736 = vdwg.mxu0
        %v2737 = vtanh.pop %v2110
        %v2738 = vtanh.pop %v2306
        %v2739 = vtanh.pop %v2502
        %v2740 = vtanh.pop %v2698
        %v2741 = vtanh.pop %v2112
        %v2742 = vtanh.pop %v2308
        %v2743 = vtanh.pop %v2504
        %v2744 = vtanh.pop %v2700
        %v2745 = vtanh.pop %v2115
        %v2746 = vtanh.pop %v2311
        %v2747 = vtanh.pop %v2507
        %v2748 = vtanh.pop %v2703
        %v2749 = vtanh.pop %v2117
        %v2750 = vtanh.pop %v2313
        %v2751 = vtanh.pop %v2509
        %v2752 = vtanh.pop %v2705
        %v2753 = vtanh.pop %v2120
        %v2754 = vtanh.pop %v2316
        %v2755 = vtanh.pop %v2512
        %v2756 = vtanh.pop %v2708
        %v2757 = vtanh.pop %v2122
        %v2758 = vtanh.pop %v2318
        %v2759 = vtanh.pop %v2514
        %v2760 = vtanh.pop %v2710
        %v2761 = vtanh.pop %v2125
        %v2762 = vtanh.pop %v2321
        %v2763 = vtanh.pop %v2517
        %v2764 = vtanh.pop %v2713
        %v2765 = vtanh.pop %v2127
        %v2766 = vtanh.pop %v2323
        %v2767 = vtanh.pop %v2519
        %v2768 = vtanh.pop %v2715
        %v2769 = vtanh.pop %v2130
        %v2770 = vtanh.pop %v2326
        %v2771 = vtanh.pop %v2522
        %v2772 = vtanh.pop %v2718
        %v2773 = vtanh.pop %v2132
        %v2774 = vtanh.pop %v2328
        %v2775 = vtanh.pop %v2524
        %v2776 = vtanh.pop %v2720
        %v2777 = vtanh.pop %v2135
        %v2778 = vtanh.pop %v2331
        %v2779 = vtanh.pop %v2527
        %v2780 = vtanh.pop %v2723
        %v2781 = vtanh.pop %v2137
        %v2782 = vtanh.pop %v2333
        %v2783 = vtanh.pop %v2529
        %v2784 = vtanh.pop %v2725
        %v2785 = vtanh.pop %v2140
        %v2786 = vtanh.pop %v2336
        %v2787 = vtanh.pop %v2532
        %v2788 = vtanh.pop %v2728
        %v2789 = vtanh.pop %v2142
        %v2790 = vtanh.pop %v2338
        %v2791 = vtanh.pop %v2534
        %v2792 = vtanh.pop %v2730
        %v2793 = vtanh.pop %v2145
        %v2794 = vtanh.pop %v2341
        %v2795 = vtanh.pop %v2537
        %v2796 = vtanh.pop %v2733
        %v2797 = vtanh.pop %v2147
        %v2798 = vtanh.pop %v2343
        %v2799 = vtanh.pop %v2539
        %v2800 = vtanh.pop %v2735
        %v2801 = vpack.c.bf16 %v2741, %v2737
        %v2802 = vpack.c.bf16 %v2742, %v2738
        %v2803 = vpack.c.bf16 %v2743, %v2739
        %v2804 = vpack.c.bf16 %v2744, %v2740
        %v2805 = vpack.c.bf16 %v2749, %v2745
        %v2806 = vpack.c.bf16 %v2750, %v2746
        %v2807 = vpack.c.bf16 %v2751, %v2747
        %v2808 = vpack.c.bf16 %v2752, %v2748
        %v2809 = vpack.c.bf16 %v2757, %v2753
        %v2810 = vpack.c.bf16 %v2758, %v2754
        %v2811 = vpack.c.bf16 %v2759, %v2755
        %v2812 = vpack.c.bf16 %v2760, %v2756
        %v2813 = vpack.c.bf16 %v2765, %v2761
        %v2814 = vpack.c.bf16 %v2766, %v2762
        %v2815 = vpack.c.bf16 %v2767, %v2763
        %v2816 = vpack.c.bf16 %v2768, %v2764
        %v2817 = vpack.c.bf16 %v2773, %v2769
        %v2818 = vpack.c.bf16 %v2774, %v2770
        %v2819 = vpack.c.bf16 %v2775, %v2771
        %v2820 = vpack.c.bf16 %v2776, %v2772
        %v2821 = vpack.c.bf16 %v2781, %v2777
        %v2822 = vpack.c.bf16 %v2782, %v2778
        %v2823 = vpack.c.bf16 %v2783, %v2779
        %v2824 = vpack.c.bf16 %v2784, %v2780
        %v2825 = vpack.c.bf16 %v2789, %v2785
        %v2826 = vpack.c.bf16 %v2790, %v2786
        %v2827 = vpack.c.bf16 %v2791, %v2787
        %v2828 = vpack.c.bf16 %v2792, %v2788
        %v2829 = vpack.c.bf16 %v2797, %v2793
        %v2830 = vpack.c.bf16 %v2798, %v2794
        %v2831 = vpack.c.bf16 %v2799, %v2795
        %v2832 = vpack.c.bf16 %v2800, %v2796
        %v2834 = vperm.slane %v853, 0
        %v2835 = vperm.slane %v853, 1
        %v2836 = vperm.slane %v853, 2
        %v2837 = vperm.slane %v853, 3
        %v2970 = vunpack.c.l.b16 %v725
        %v2971 = vunpack.c.h.b16 %v725
        %v2972 = vunpack.c.l.b16 %v726
        %v2973 = vunpack.c.h.b16 %v726
        %v2974 = vunpack.c.l.b16 %v727
        %v2975 = vunpack.c.h.b16 %v727
        %v2976 = vunpack.c.l.b16 %v728
        %v2977 = vunpack.c.h.b16 %v728
        %v2978 = vunpack.c.l.b16 %v729
        %v2979 = vunpack.c.h.b16 %v729
        %v2980 = vunpack.c.l.b16 %v730
        %v2981 = vunpack.c.h.b16 %v730
        %v2982 = vunpack.c.l.b16 %v731
        %v2983 = vunpack.c.h.b16 %v731
        %v2984 = vunpack.c.l.b16 %v732
        %v2985 = vunpack.c.h.b16 %v732
        %v2986 = vunpack.c.l.b16 %v733
        %v2987 = vunpack.c.h.b16 %v733
        %v2988 = vunpack.c.l.b16 %v734
        %v2989 = vunpack.c.h.b16 %v734
        %v2990 = vunpack.c.l.b16 %v735
        %v2991 = vunpack.c.h.b16 %v735
        %v2992 = vunpack.c.l.b16 %v736
        %v2993 = vunpack.c.h.b16 %v736
        %v2994 = vunpack.c.l.b16 %v737
        %v2995 = vunpack.c.h.b16 %v737
        %v2996 = vunpack.c.l.b16 %v738
        %v2997 = vunpack.c.h.b16 %v738
        %v2998 = vunpack.c.l.b16 %v739
        %v2999 = vunpack.c.h.b16 %v739
        %v3000 = vunpack.c.l.b16 %v740
        %v3001 = vunpack.c.h.b16 %v740
        %v3002 = vunpack.c.l.b16 %v741
        %v3003 = vunpack.c.h.b16 %v741
        %v3004 = vunpack.c.l.b16 %v742
        %v3005 = vunpack.c.h.b16 %v742
        %v3006 = vunpack.c.l.b16 %v743
        %v3007 = vunpack.c.h.b16 %v743
        %v3008 = vunpack.c.l.b16 %v744
        %v3009 = vunpack.c.h.b16 %v744
        %v3010 = vunpack.c.l.b16 %v745
        %v3011 = vunpack.c.h.b16 %v745
        %v3012 = vunpack.c.l.b16 %v746
        %v3013 = vunpack.c.h.b16 %v746
        %v3014 = vunpack.c.l.b16 %v747
        %v3015 = vunpack.c.h.b16 %v747
        %v3016 = vunpack.c.l.b16 %v748
        %v3017 = vunpack.c.h.b16 %v748
        %v3018 = vunpack.c.l.b16 %v749
        %v3019 = vunpack.c.h.b16 %v749
        %v3020 = vunpack.c.l.b16 %v750
        %v3021 = vunpack.c.h.b16 %v750
        %v3022 = vunpack.c.l.b16 %v751
        %v3023 = vunpack.c.h.b16 %v751
        %v3024 = vunpack.c.l.b16 %v752
        %v3025 = vunpack.c.h.b16 %v752
        %v3026 = vunpack.c.l.b16 %v753
        %v3027 = vunpack.c.h.b16 %v753
        %v3028 = vunpack.c.l.b16 %v754
        %v3029 = vunpack.c.h.b16 %v754
        %v3030 = vunpack.c.l.b16 %v755
        %v3031 = vunpack.c.h.b16 %v755
        %v3032 = vunpack.c.l.b16 %v756
        %v3033 = vunpack.c.h.b16 %v756
        %v3034 = vunpack.c.l.b16 %v757
        %v3035 = vunpack.c.h.b16 %v757
        %v3036 = vunpack.c.l.b16 %v758
        %v3037 = vunpack.c.h.b16 %v758
        %v3038 = vunpack.c.l.b16 %v759
        %v3039 = vunpack.c.h.b16 %v759
        %v3040 = vunpack.c.l.b16 %v760
        %v3041 = vunpack.c.h.b16 %v760
        %v3042 = vunpack.c.l.b16 %v761
        %v3043 = vunpack.c.h.b16 %v761
        %v3044 = vunpack.c.l.b16 %v762
        %v3045 = vunpack.c.h.b16 %v762
        %v3046 = vunpack.c.l.b16 %v763
        %v3047 = vunpack.c.h.b16 %v763
        %v3048 = vunpack.c.l.b16 %v764
        %v3049 = vunpack.c.h.b16 %v764
        %v3050 = vunpack.c.l.b16 %v765
        %v3051 = vunpack.c.h.b16 %v765
        %v3052 = vunpack.c.l.b16 %v766
        %v3053 = vunpack.c.h.b16 %v766
        %v3054 = vunpack.c.l.b16 %v767
        %v3055 = vunpack.c.h.b16 %v767
        %v3056 = vunpack.c.l.b16 %v768
        %v3057 = vunpack.c.h.b16 %v768
        %v3058 = vunpack.c.l.b16 %v769
        %v3059 = vunpack.c.h.b16 %v769
        %v3060 = vunpack.c.l.b16 %v770
        %v3061 = vunpack.c.h.b16 %v770
        %v3062 = vunpack.c.l.b16 %v771
        %v3063 = vunpack.c.h.b16 %v771
        %v3064 = vunpack.c.l.b16 %v772
        %v3065 = vunpack.c.h.b16 %v772
        %v3066 = vunpack.c.l.b16 %v773
        %v3067 = vunpack.c.h.b16 %v773
        %v3068 = vunpack.c.l.b16 %v774
        %v3069 = vunpack.c.h.b16 %v774
        %v3070 = vunpack.c.l.b16 %v775
        %v3071 = vunpack.c.h.b16 %v775
        %v3072 = vunpack.c.l.b16 %v776
        %v3073 = vunpack.c.h.b16 %v776
        %v3074 = vunpack.c.l.b16 %v777
        %v3075 = vunpack.c.h.b16 %v777
        %v3076 = vunpack.c.l.b16 %v778
        %v3077 = vunpack.c.h.b16 %v778
        %v3078 = vunpack.c.l.b16 %v779
        %v3079 = vunpack.c.h.b16 %v779
        %v3080 = vunpack.c.l.b16 %v780
        %v3081 = vunpack.c.h.b16 %v780
        %v3082 = vunpack.c.l.b16 %v781
        %v3083 = vunpack.c.h.b16 %v781
        %v3084 = vunpack.c.l.b16 %v782
        %v3085 = vunpack.c.h.b16 %v782
        %v3086 = vunpack.c.l.b16 %v783
        %v3087 = vunpack.c.h.b16 %v783
        %v3088 = vunpack.c.l.b16 %v784
        %v3089 = vunpack.c.h.b16 %v784
        %v3090 = vunpack.c.l.b16 %v785
        %v3091 = vunpack.c.h.b16 %v785
        %v3092 = vunpack.c.l.b16 %v786
        %v3093 = vunpack.c.h.b16 %v786
        %v3094 = vunpack.c.l.b16 %v787
        %v3095 = vunpack.c.h.b16 %v787
        %v3096 = vunpack.c.l.b16 %v788
        %v3097 = vunpack.c.h.b16 %v788
        %v3098 = vunpack.c.l.b16 %v789
        %v3099 = vunpack.c.h.b16 %v789
        %v3100 = vunpack.c.l.b16 %v790
        %v3101 = vunpack.c.h.b16 %v790
        %v3102 = vunpack.c.l.b16 %v791
        %v3103 = vunpack.c.h.b16 %v791
        %v3104 = vunpack.c.l.b16 %v792
        %v3105 = vunpack.c.h.b16 %v792
        %v3106 = vunpack.c.l.b16 %v793
        %v3107 = vunpack.c.h.b16 %v793
        %v3108 = vunpack.c.l.b16 %v794
        %v3109 = vunpack.c.h.b16 %v794
        %v3110 = vunpack.c.l.b16 %v795
        %v3111 = vunpack.c.h.b16 %v795
        %v3112 = vunpack.c.l.b16 %v796
        %v3113 = vunpack.c.h.b16 %v796
        %v3114 = vunpack.c.l.b16 %v797
        %v3115 = vunpack.c.h.b16 %v797
        %v3116 = vunpack.c.l.b16 %v798
        %v3117 = vunpack.c.h.b16 %v798
        %v3118 = vunpack.c.l.b16 %v799
        %v3119 = vunpack.c.h.b16 %v799
        %v3120 = vunpack.c.l.b16 %v800
        %v3121 = vunpack.c.h.b16 %v800
        %v3122 = vunpack.c.l.b16 %v801
        %v3123 = vunpack.c.h.b16 %v801
        %v3124 = vunpack.c.l.b16 %v802
        %v3125 = vunpack.c.h.b16 %v802
        %v3126 = vunpack.c.l.b16 %v803
        %v3127 = vunpack.c.h.b16 %v803
        %v3128 = vunpack.c.l.b16 %v804
        %v3129 = vunpack.c.h.b16 %v804
        %v3130 = vunpack.c.l.b16 %v805
        %v3131 = vunpack.c.h.b16 %v805
        %v3132 = vunpack.c.l.b16 %v806
        %v3133 = vunpack.c.h.b16 %v806
        %v3134 = vunpack.c.l.b16 %v807
        %v3135 = vunpack.c.h.b16 %v807
        %v3136 = vunpack.c.l.b16 %v808
        %v3137 = vunpack.c.h.b16 %v808
        %v3138 = vunpack.c.l.b16 %v809
        %v3139 = vunpack.c.h.b16 %v809
        %v3140 = vunpack.c.l.b16 %v810
        %v3141 = vunpack.c.h.b16 %v810
        %v3142 = vunpack.c.l.b16 %v811
        %v3143 = vunpack.c.h.b16 %v811
        %v3144 = vunpack.c.l.b16 %v812
        %v3145 = vunpack.c.h.b16 %v812
        %v3146 = vunpack.c.l.b16 %v813
        %v3147 = vunpack.c.h.b16 %v813
        %v3148 = vunpack.c.l.b16 %v814
        %v3149 = vunpack.c.h.b16 %v814
        %v3150 = vunpack.c.l.b16 %v815
        %v3151 = vunpack.c.h.b16 %v815
        %v3152 = vunpack.c.l.b16 %v816
        %v3153 = vunpack.c.h.b16 %v816
        %v3154 = vunpack.c.l.b16 %v817
        %v3155 = vunpack.c.h.b16 %v817
        %v3156 = vunpack.c.l.b16 %v818
        %v3157 = vunpack.c.h.b16 %v818
        %v3158 = vunpack.c.l.b16 %v819
        %v3159 = vunpack.c.h.b16 %v819
        %v3160 = vunpack.c.l.b16 %v820
        %v3161 = vunpack.c.h.b16 %v820
        %v3162 = vunpack.c.l.b16 %v821
        %v3163 = vunpack.c.h.b16 %v821
        %v3164 = vunpack.c.l.b16 %v822
        %v3165 = vunpack.c.h.b16 %v822
        %v3166 = vunpack.c.l.b16 %v823
        %v3167 = vunpack.c.h.b16 %v823
        %v3168 = vunpack.c.l.b16 %v824
        %v3169 = vunpack.c.h.b16 %v824
        %v3170 = vunpack.c.l.b16 %v825
        %v3171 = vunpack.c.h.b16 %v825
        %v3172 = vunpack.c.l.b16 %v826
        %v3173 = vunpack.c.h.b16 %v826
        %v3174 = vunpack.c.l.b16 %v827
        %v3175 = vunpack.c.h.b16 %v827
        %v3176 = vunpack.c.l.b16 %v828
        %v3177 = vunpack.c.h.b16 %v828
        %v3178 = vunpack.c.l.b16 %v829
        %v3179 = vunpack.c.h.b16 %v829
        %v3180 = vunpack.c.l.b16 %v830
        %v3181 = vunpack.c.h.b16 %v830
        %v3182 = vunpack.c.l.b16 %v831
        %v3183 = vunpack.c.h.b16 %v831
        %v3184 = vunpack.c.l.b16 %v832
        %v3185 = vunpack.c.h.b16 %v832
        %v3186 = vunpack.c.l.b16 %v833
        %v3187 = vunpack.c.h.b16 %v833
        %v3188 = vunpack.c.l.b16 %v834
        %v3189 = vunpack.c.h.b16 %v834
        %v3190 = vunpack.c.l.b16 %v835
        %v3191 = vunpack.c.h.b16 %v835
        %v3192 = vunpack.c.l.b16 %v836
        %v3193 = vunpack.c.h.b16 %v836
        %v3194 = vunpack.c.l.b16 %v837
        %v3195 = vunpack.c.h.b16 %v837
        %v3196 = vunpack.c.l.b16 %v838
        %v3197 = vunpack.c.h.b16 %v838
        %v3198 = vunpack.c.l.b16 %v839
        %v3199 = vunpack.c.h.b16 %v839
        %v3200 = vunpack.c.l.b16 %v840
        %v3201 = vunpack.c.h.b16 %v840
        %v3202 = vunpack.c.l.b16 %v841
        %v3203 = vunpack.c.h.b16 %v841
        %v3204 = vunpack.c.l.b16 %v842
        %v3205 = vunpack.c.h.b16 %v842
        %v3206 = vunpack.c.l.b16 %v843
        %v3207 = vunpack.c.h.b16 %v843
        %v3208 = vunpack.c.l.b16 %v844
        %v3209 = vunpack.c.h.b16 %v844
        %v3210 = vunpack.c.l.b16 %v845
        %v3211 = vunpack.c.h.b16 %v845
        %v3212 = vunpack.c.l.b16 %v846
        %v3213 = vunpack.c.h.b16 %v846
        %v3214 = vunpack.c.l.b16 %v847
        %v3215 = vunpack.c.h.b16 %v847
        %v3216 = vunpack.c.l.b16 %v848
        %v3217 = vunpack.c.h.b16 %v848
        %v3218 = vunpack.c.l.b16 %v849
        %v3219 = vunpack.c.h.b16 %v849
        %v3220 = vunpack.c.l.b16 %v850
        %v3221 = vunpack.c.h.b16 %v850
        %v3222 = vunpack.c.l.b16 %v851
        %v3223 = vunpack.c.h.b16 %v851
        %v3224 = vunpack.c.l.b16 %v852
        %v3225 = vunpack.c.h.b16 %v852
        %v3226 = vpack.c.b16 %v2974, %v2970
        %v3227 = vpack.c.b16 %v2975, %v2971
        %v3228 = vpack.c.b16 %v2976, %v2972
        %v3229 = vpack.c.b16 %v2977, %v2973
        %v3230 = vpack.c.b16 %v2982, %v2978
        %v3231 = vpack.c.b16 %v2983, %v2979
        %v3232 = vpack.c.b16 %v2984, %v2980
        %v3233 = vpack.c.b16 %v2985, %v2981
        %v3234 = vpack.c.b16 %v2990, %v2986
        %v3235 = vpack.c.b16 %v2991, %v2987
        %v3236 = vpack.c.b16 %v2992, %v2988
        %v3237 = vpack.c.b16 %v2993, %v2989
        %v3238 = vpack.c.b16 %v2998, %v2994
        %v3239 = vpack.c.b16 %v2999, %v2995
        %v3240 = vpack.c.b16 %v3000, %v2996
        %v3241 = vpack.c.b16 %v3001, %v2997
        %v3242 = vpack.c.b16 %v3006, %v3002
        %v3243 = vpack.c.b16 %v3007, %v3003
        %v3244 = vpack.c.b16 %v3008, %v3004
        %v3245 = vpack.c.b16 %v3009, %v3005
        %v3246 = vpack.c.b16 %v3014, %v3010
        %v3247 = vpack.c.b16 %v3015, %v3011
        %v3248 = vpack.c.b16 %v3016, %v3012
        %v3249 = vpack.c.b16 %v3017, %v3013
        %v3250 = vpack.c.b16 %v3022, %v3018
        %v3251 = vpack.c.b16 %v3023, %v3019
        %v3252 = vpack.c.b16 %v3024, %v3020
        %v3253 = vpack.c.b16 %v3025, %v3021
        %v3254 = vpack.c.b16 %v3030, %v3026
        %v3255 = vpack.c.b16 %v3031, %v3027
        %v3256 = vpack.c.b16 %v3032, %v3028
        %v3257 = vpack.c.b16 %v3033, %v3029
        %v3258 = vpack.c.b16 %v3038, %v3034
        %v3259 = vpack.c.b16 %v3039, %v3035
        %v3260 = vpack.c.b16 %v3040, %v3036
        %v3261 = vpack.c.b16 %v3041, %v3037
        %v3262 = vpack.c.b16 %v3046, %v3042
        %v3263 = vpack.c.b16 %v3047, %v3043
        %v3264 = vpack.c.b16 %v3048, %v3044
        %v3265 = vpack.c.b16 %v3049, %v3045
        %v3266 = vpack.c.b16 %v3054, %v3050
        %v3267 = vpack.c.b16 %v3055, %v3051
        %v3268 = vpack.c.b16 %v3056, %v3052
        %v3269 = vpack.c.b16 %v3057, %v3053
        %v3270 = vpack.c.b16 %v3062, %v3058
        %v3271 = vpack.c.b16 %v3063, %v3059
        %v3272 = vpack.c.b16 %v3064, %v3060
        %v3273 = vpack.c.b16 %v3065, %v3061
        %v3274 = vpack.c.b16 %v3070, %v3066
        %v3275 = vpack.c.b16 %v3071, %v3067
        %v3276 = vpack.c.b16 %v3072, %v3068
        %v3277 = vpack.c.b16 %v3073, %v3069
        %v3278 = vpack.c.b16 %v3078, %v3074
        %v3279 = vpack.c.b16 %v3079, %v3075
        %v3280 = vpack.c.b16 %v3080, %v3076
        %v3281 = vpack.c.b16 %v3081, %v3077
        %v3282 = vpack.c.b16 %v3086, %v3082
        %v3283 = vpack.c.b16 %v3087, %v3083
        %v3284 = vpack.c.b16 %v3088, %v3084
        %v3285 = vpack.c.b16 %v3089, %v3085
        %v3286 = vpack.c.b16 %v3094, %v3090
        %v3287 = vpack.c.b16 %v3095, %v3091
        %v3288 = vpack.c.b16 %v3096, %v3092
        %v3289 = vpack.c.b16 %v3097, %v3093
        %v3290 = vpack.c.b16 %v3102, %v3098
        %v3291 = vpack.c.b16 %v3103, %v3099
        %v3292 = vpack.c.b16 %v3104, %v3100
        %v3293 = vpack.c.b16 %v3105, %v3101
        %v3294 = vpack.c.b16 %v3110, %v3106
        %v3295 = vpack.c.b16 %v3111, %v3107
        %v3296 = vpack.c.b16 %v3112, %v3108
        %v3297 = vpack.c.b16 %v3113, %v3109
        %v3298 = vpack.c.b16 %v3118, %v3114
        %v3299 = vpack.c.b16 %v3119, %v3115
        %v3300 = vpack.c.b16 %v3120, %v3116
        %v3301 = vpack.c.b16 %v3121, %v3117
        %v3302 = vpack.c.b16 %v3126, %v3122
        %v3303 = vpack.c.b16 %v3127, %v3123
        %v3304 = vpack.c.b16 %v3128, %v3124
        %v3305 = vpack.c.b16 %v3129, %v3125
        %v3306 = vpack.c.b16 %v3134, %v3130
        %v3307 = vpack.c.b16 %v3135, %v3131
        %v3308 = vpack.c.b16 %v3136, %v3132
        %v3309 = vpack.c.b16 %v3137, %v3133
        %v3310 = vpack.c.b16 %v3142, %v3138
        %v3311 = vpack.c.b16 %v3143, %v3139
        %v3312 = vpack.c.b16 %v3144, %v3140
        %v3313 = vpack.c.b16 %v3145, %v3141
        %v3314 = vpack.c.b16 %v3150, %v3146
        %v3315 = vpack.c.b16 %v3151, %v3147
        %v3316 = vpack.c.b16 %v3152, %v3148
        %v3317 = vpack.c.b16 %v3153, %v3149
        %v3318 = vpack.c.b16 %v3158, %v3154
        %v3319 = vpack.c.b16 %v3159, %v3155
        %v3320 = vpack.c.b16 %v3160, %v3156
        %v3321 = vpack.c.b16 %v3161, %v3157
        %v3322 = vpack.c.b16 %v3166, %v3162
        %v3323 = vpack.c.b16 %v3167, %v3163
        %v3324 = vpack.c.b16 %v3168, %v3164
        %v3325 = vpack.c.b16 %v3169, %v3165
        %v3326 = vpack.c.b16 %v3174, %v3170
        %v3327 = vpack.c.b16 %v3175, %v3171
        %v3328 = vpack.c.b16 %v3176, %v3172
        %v3329 = vpack.c.b16 %v3177, %v3173
        %v3330 = vpack.c.b16 %v3182, %v3178
        %v3331 = vpack.c.b16 %v3183, %v3179
        %v3332 = vpack.c.b16 %v3184, %v3180
        %v3333 = vpack.c.b16 %v3185, %v3181
        %v3334 = vpack.c.b16 %v3190, %v3186
        %v3335 = vpack.c.b16 %v3191, %v3187
        %v3336 = vpack.c.b16 %v3192, %v3188
        %v3337 = vpack.c.b16 %v3193, %v3189
        %v3338 = vpack.c.b16 %v3198, %v3194
        %v3339 = vpack.c.b16 %v3199, %v3195
        %v3340 = vpack.c.b16 %v3200, %v3196
        %v3341 = vpack.c.b16 %v3201, %v3197
        %v3342 = vpack.c.b16 %v3206, %v3202
        %v3343 = vpack.c.b16 %v3207, %v3203
        %v3344 = vpack.c.b16 %v3208, %v3204
        %v3345 = vpack.c.b16 %v3209, %v3205
        %v3346 = vpack.c.b16 %v3214, %v3210
        %v3347 = vpack.c.b16 %v3215, %v3211
        %v3348 = vpack.c.b16 %v3216, %v3212
        %v3349 = vpack.c.b16 %v3217, %v3213
        %v3350 = vpack.c.b16 %v3222, %v3218
        %v3351 = vpack.c.b16 %v3223, %v3219
        %v3352 = vpack.c.b16 %v3224, %v3220
        %v3353 = vpack.c.b16 %v3225, %v3221
        %3482 = vmatpush.bf16.msra.mxu0 %v3254
        %3483 = vmatpush.bf16.msra.mxu0 %v3250
        %3484 = vmatpush.bf16.msra.mxu0 %v3246
        %3485 = vmatpush.bf16.msra.mxu0 %v3242
        %3486 = vmatpush.bf16.msra.mxu0 %v3238
        %3487 = vmatpush.bf16.msra.mxu0 %v3234
        %3488 = vmatpush.bf16.msra.mxu0 %v3230
        %3489 = vmatpush.bf16.msra.mxu0 %v3226
        %3490 = vmatmul.bf16.gmra.mxu0 %v2801
        %v3491 = vpop.f32.mrf.mxu0
        %v3492 = vadd.f32 %v2834, %v3491
        %v3493 = vpop.f32.mrf.mxu0
        %v3494 = vadd.f32 %v2834, %v3493
        %3495 = vmatmul.bf16.gmra.mxu0 %v2805
        %v3496 = vpop.f32.mrf.mxu0
        %v3497 = vadd.f32 %v2834, %v3496
        %v3498 = vpop.f32.mrf.mxu0
        %v3499 = vadd.f32 %v2834, %v3498
        %3500 = vmatmul.bf16.gmra.mxu0 %v2809
        %v3501 = vpop.f32.mrf.mxu0
        %v3502 = vadd.f32 %v2834, %v3501
        %v3503 = vpop.f32.mrf.mxu0
        %v3504 = vadd.f32 %v2834, %v3503
        %3505 = vmatmul.bf16.gmra.mxu0 %v2813
        %v3506 = vpop.f32.mrf.mxu0
        %v3507 = vadd.f32 %v2834, %v3506
        %v3508 = vpop.f32.mrf.mxu0
        %v3509 = vadd.f32 %v2834, %v3508
        %3510 = vmatmul.bf16.gmra.mxu0 %v2817
        %v3511 = vpop.f32.mrf.mxu0
        %v3512 = vadd.f32 %v2834, %v3511
        %v3513 = vpop.f32.mrf.mxu0
        %v3514 = vadd.f32 %v2834, %v3513
        %3515 = vmatmul.bf16.gmra.mxu0 %v2821
        %v3516 = vpop.f32.mrf.mxu0
        %v3517 = vadd.f32 %v2834, %v3516
        %v3518 = vpop.f32.mrf.mxu0
        %v3519 = vadd.f32 %v2834, %v3518
        %3520 = vmatmul.bf16.gmra.mxu0 %v2825
        %v3521 = vpop.f32.mrf.mxu0
        %v3522 = vadd.f32 %v2834, %v3521
        %v3523 = vpop.f32.mrf.mxu0
        %v3524 = vadd.f32 %v2834, %v3523
        %3525 = vmatmul.bf16.gmra.mxu0 %v2829
        %v3526 = vpop.f32.mrf.mxu0
        %v3527 = vadd.f32 %v2834, %v3526
        %v3528 = vpop.f32.mrf.mxu0
        %v3529 = vadd.f32 %v2834, %v3528
        %3530 = vdwg.mxu0
        %3531 = vmatpush.bf16.msra.mxu0 %v3286
        %3532 = vmatpush.bf16.msra.mxu0 %v3282
        %3533 = vmatpush.bf16.msra.mxu0 %v3278
        %3534 = vmatpush.bf16.msra.mxu0 %v3274
        %3535 = vmatpush.bf16.msra.mxu0 %v3270
        %3536 = vmatpush.bf16.msra.mxu0 %v3266
        %3537 = vmatpush.bf16.msra.mxu0 %v3262
        %3538 = vmatpush.bf16.msra.mxu0 %v3258
        %3539 = vmatmul.bf16.gmra.mxu0 %v2802
        %v3540 = vpop.f32.mrf.mxu0
        %v3541 = vadd.f32 %v3492, %v3540
        %v3542 = vpop.f32.mrf.mxu0
        %v3543 = vadd.f32 %v3494, %v3542
        %3544 = vmatmul.bf16.gmra.mxu0 %v2806
        %v3545 = vpop.f32.mrf.mxu0
        %v3546 = vadd.f32 %v3497, %v3545
        %v3547 = vpop.f32.mrf.mxu0
        %v3548 = vadd.f32 %v3499, %v3547
        %3549 = vmatmul.bf16.gmra.mxu0 %v2810
        %v3550 = vpop.f32.mrf.mxu0
        %v3551 = vadd.f32 %v3502, %v3550
        %v3552 = vpop.f32.mrf.mxu0
        %v3553 = vadd.f32 %v3504, %v3552
        %3554 = vmatmul.bf16.gmra.mxu0 %v2814
        %v3555 = vpop.f32.mrf.mxu0
        %v3556 = vadd.f32 %v3507, %v3555
        %v3557 = vpop.f32.mrf.mxu0
        %v3558 = vadd.f32 %v3509, %v3557
        %3559 = vmatmul.bf16.gmra.mxu0 %v2818
        %v3560 = vpop.f32.mrf.mxu0
        %v3561 = vadd.f32 %v3512, %v3560
        %v3562 = vpop.f32.mrf.mxu0
        %v3563 = vadd.f32 %v3514, %v3562
        %3564 = vmatmul.bf16.gmra.mxu0 %v2822
        %v3565 = vpop.f32.mrf.mxu0
        %v3566 = vadd.f32 %v3517, %v3565
        %v3567 = vpop.f32.mrf.mxu0
        %v3568 = vadd.f32 %v3519, %v3567
        %3569 = vmatmul.bf16.gmra.mxu0 %v2826
        %v3570 = vpop.f32.mrf.mxu0
        %v3571 = vadd.f32 %v3522, %v3570
        %v3572 = vpop.f32.mrf.mxu0
        %v3573 = vadd.f32 %v3524, %v3572
        %3574 = vmatmul.bf16.gmra.mxu0 %v2830
        %v3575 = vpop.f32.mrf.mxu0
        %v3576 = vadd.f32 %v3527, %v3575
        %v3577 = vpop.f32.mrf.mxu0
        %v3578 = vadd.f32 %v3529, %v3577
        %3579 = vdwg.mxu0
        %3580 = vmatpush.bf16.msra.mxu0 %v3318
        %3581 = vmatpush.bf16.msra.mxu0 %v3314
        %3582 = vmatpush.bf16.msra.mxu0 %v3310
        %3583 = vmatpush.bf16.msra.mxu0 %v3306
        %3584 = vmatpush.bf16.msra.mxu0 %v3302
        %3585 = vmatpush.bf16.msra.mxu0 %v3298
        %3586 = vmatpush.bf16.msra.mxu0 %v3294
        %3587 = vmatpush.bf16.msra.mxu0 %v3290
        %3588 = vmatmul.bf16.gmra.mxu0 %v2803
        %v3589 = vpop.f32.mrf.mxu0
        %v3590 = vadd.f32 %v3541, %v3589
        %v3591 = vpop.f32.mrf.mxu0
        %v3592 = vadd.f32 %v3543, %v3591
        %3593 = vmatmul.bf16.gmra.mxu0 %v2807
        %v3594 = vpop.f32.mrf.mxu0
        %v3595 = vadd.f32 %v3546, %v3594
        %v3596 = vpop.f32.mrf.mxu0
        %v3597 = vadd.f32 %v3548, %v3596
        %3598 = vmatmul.bf16.gmra.mxu0 %v2811
        %v3599 = vpop.f32.mrf.mxu0
        %v3600 = vadd.f32 %v3551, %v3599
        %v3601 = vpop.f32.mrf.mxu0
        %v3602 = vadd.f32 %v3553, %v3601
        %3603 = vmatmul.bf16.gmra.mxu0 %v2815
        %v3604 = vpop.f32.mrf.mxu0
        %v3605 = vadd.f32 %v3556, %v3604
        %v3606 = vpop.f32.mrf.mxu0
        %v3607 = vadd.f32 %v3558, %v3606
        %3608 = vmatmul.bf16.gmra.mxu0 %v2819
        %v3609 = vpop.f32.mrf.mxu0
        %v3610 = vadd.f32 %v3561, %v3609
        %v3611 = vpop.f32.mrf.mxu0
        %v3612 = vadd.f32 %v3563, %v3611
        %3613 = vmatmul.bf16.gmra.mxu0 %v2823
        %v3614 = vpop.f32.mrf.mxu0
        %v3615 = vadd.f32 %v3566, %v3614
        %v3616 = vpop.f32.mrf.mxu0
        %v3617 = vadd.f32 %v3568, %v3616
        %3618 = vmatmul.bf16.gmra.mxu0 %v2827
        %v3619 = vpop.f32.mrf.mxu0
        %v3620 = vadd.f32 %v3571, %v3619
        %v3621 = vpop.f32.mrf.mxu0
        %v3622 = vadd.f32 %v3573, %v3621
        %3623 = vmatmul.bf16.gmra.mxu0 %v2831
        %v3624 = vpop.f32.mrf.mxu0
        %v3625 = vadd.f32 %v3576, %v3624
        %v3626 = vpop.f32.mrf.mxu0
        %v3627 = vadd.f32 %v3578, %v3626
        %3628 = vdwg.mxu0
        %3629 = vmatpush.bf16.msra.mxu0 %v3350
        %3630 = vmatpush.bf16.msra.mxu0 %v3346
        %3631 = vmatpush.bf16.msra.mxu0 %v3342
        %3632 = vmatpush.bf16.msra.mxu0 %v3338
        %3633 = vmatpush.bf16.msra.mxu0 %v3334
        %3634 = vmatpush.bf16.msra.mxu0 %v3330
        %3635 = vmatpush.bf16.msra.mxu0 %v3326
        %3636 = vmatpush.bf16.msra.mxu0 %v3322
        %3637 = vmatmul.bf16.gmra.mxu0 %v2804
        %v3638 = vpop.f32.mrf.mxu0
        %v3639 = vadd.f32 %v3590, %v3638
        %v3640 = vpop.f32.mrf.mxu0
        %v3641 = vadd.f32 %v3592, %v3640
        %3642 = vmatmul.bf16.gmra.mxu0 %v2808
        %v3643 = vpop.f32.mrf.mxu0
        %v3644 = vadd.f32 %v3595, %v3643
        %v3645 = vpop.f32.mrf.mxu0
        %v3646 = vadd.f32 %v3597, %v3645
        %3647 = vmatmul.bf16.gmra.mxu0 %v2812
        %v3648 = vpop.f32.mrf.mxu0
        %v3649 = vadd.f32 %v3600, %v3648
        %v3650 = vpop.f32.mrf.mxu0
        %v3651 = vadd.f32 %v3602, %v3650
        %3652 = vmatmul.bf16.gmra.mxu0 %v2816
        %v3653 = vpop.f32.mrf.mxu0
        %v3654 = vadd.f32 %v3605, %v3653
        %v3655 = vpop.f32.mrf.mxu0
        %v3656 = vadd.f32 %v3607, %v3655
        %3657 = vmatmul.bf16.gmra.mxu0 %v2820
        %v3658 = vpop.f32.mrf.mxu0
        %v3659 = vadd.f32 %v3610, %v3658
        %v3660 = vpop.f32.mrf.mxu0
        %v3661 = vadd.f32 %v3612, %v3660
        %3662 = vmatmul.bf16.gmra.mxu0 %v2824
        %v3663 = vpop.f32.mrf.mxu0
        %v3664 = vadd.f32 %v3615, %v3663
        %v3665 = vpop.f32.mrf.mxu0
        %v3666 = vadd.f32 %v3617, %v3665
        %3667 = vmatmul.bf16.gmra.mxu0 %v2828
        %v3668 = vpop.f32.mrf.mxu0
        %v3669 = vadd.f32 %v3620, %v3668
        %v3670 = vpop.f32.mrf.mxu0
        %v3671 = vadd.f32 %v3622, %v3670
        %3672 = vmatmul.bf16.gmra.mxu0 %v2832
        %v3673 = vpop.f32.mrf.mxu0
        %v3674 = vadd.f32 %v3625, %v3673
        %v3675 = vpop.f32.mrf.mxu0
        %v3676 = vadd.f32 %v3627, %v3675
        %3677 = vdwg.mxu0
        %3678 = vmatpush.bf16.msra.mxu0 %v3255
        %3679 = vmatpush.bf16.msra.mxu0 %v3251
        %3680 = vmatpush.bf16.msra.mxu0 %v3247
        %3681 = vmatpush.bf16.msra.mxu0 %v3243
        %3682 = vmatpush.bf16.msra.mxu0 %v3239
        %3683 = vmatpush.bf16.msra.mxu0 %v3235
        %3684 = vmatpush.bf16.msra.mxu0 %v3231
        %3685 = vmatpush.bf16.msra.mxu0 %v3227
        %3686 = vmatmul.bf16.gmra.mxu0 %v2801
        %v3687 = vpop.f32.mrf.mxu0
        %v3688 = vadd.f32 %v2835, %v3687
        %v3689 = vpop.f32.mrf.mxu0
        %v3690 = vadd.f32 %v2835, %v3689
        %3691 = vmatmul.bf16.gmra.mxu0 %v2805
        %v3692 = vpop.f32.mrf.mxu0
        %v3693 = vadd.f32 %v2835, %v3692
        %v3694 = vpop.f32.mrf.mxu0
        %v3695 = vadd.f32 %v2835, %v3694
        %3696 = vmatmul.bf16.gmra.mxu0 %v2809
        %v3697 = vpop.f32.mrf.mxu0
        %v3698 = vadd.f32 %v2835, %v3697
        %v3699 = vpop.f32.mrf.mxu0
        %v3700 = vadd.f32 %v2835, %v3699
        %3701 = vmatmul.bf16.gmra.mxu0 %v2813
        %v3702 = vpop.f32.mrf.mxu0
        %v3703 = vadd.f32 %v2835, %v3702
        %v3704 = vpop.f32.mrf.mxu0
        %v3705 = vadd.f32 %v2835, %v3704
        %3706 = vmatmul.bf16.gmra.mxu0 %v2817
        %v3707 = vpop.f32.mrf.mxu0
        %v3708 = vadd.f32 %v2835, %v3707
        %v3709 = vpop.f32.mrf.mxu0
        %v3710 = vadd.f32 %v2835, %v3709
        %3711 = vmatmul.bf16.gmra.mxu0 %v2821
        %v3712 = vpop.f32.mrf.mxu0
        %v3713 = vadd.f32 %v2835, %v3712
        %v3714 = vpop.f32.mrf.mxu0
        %v3715 = vadd.f32 %v2835, %v3714
        %3716 = vmatmul.bf16.gmra.mxu0 %v2825
        %v3717 = vpop.f32.mrf.mxu0
        %v3718 = vadd.f32 %v2835, %v3717
        %v3719 = vpop.f32.mrf.mxu0
        %v3720 = vadd.f32 %v2835, %v3719
        %3721 = vmatmul.bf16.gmra.mxu0 %v2829
        %v3722 = vpop.f32.mrf.mxu0
        %v3723 = vadd.f32 %v2835, %v3722
        %v3724 = vpop.f32.mrf.mxu0
        %v3725 = vadd.f32 %v2835, %v3724
        %3726 = vdwg.mxu0
        %3727 = vmatpush.bf16.msra.mxu0 %v3287
        %3728 = vmatpush.bf16.msra.mxu0 %v3283
        %3729 = vmatpush.bf16.msra.mxu0 %v3279
        %3730 = vmatpush.bf16.msra.mxu0 %v3275
        %3731 = vmatpush.bf16.msra.mxu0 %v3271
        %3732 = vmatpush.bf16.msra.mxu0 %v3267
        %3733 = vmatpush.bf16.msra.mxu0 %v3263
        %3734 = vmatpush.bf16.msra.mxu0 %v3259
        %3735 = vmatmul.bf16.gmra.mxu0 %v2802
        %v3736 = vpop.f32.mrf.mxu0
        %v3737 = vadd.f32 %v3688, %v3736
        %v3738 = vpop.f32.mrf.mxu0
        %v3739 = vadd.f32 %v3690, %v3738
        %3740 = vmatmul.bf16.gmra.mxu0 %v2806
        %v3741 = vpop.f32.mrf.mxu0
        %v3742 = vadd.f32 %v3693, %v3741
        %v3743 = vpop.f32.mrf.mxu0
        %v3744 = vadd.f32 %v3695, %v3743
        %3745 = vmatmul.bf16.gmra.mxu0 %v2810
        %v3746 = vpop.f32.mrf.mxu0
        %v3747 = vadd.f32 %v3698, %v3746
        %v3748 = vpop.f32.mrf.mxu0
        %v3749 = vadd.f32 %v3700, %v3748
        %3750 = vmatmul.bf16.gmra.mxu0 %v2814
        %v3751 = vpop.f32.mrf.mxu0
        %v3752 = vadd.f32 %v3703, %v3751
        %v3753 = vpop.f32.mrf.mxu0
        %v3754 = vadd.f32 %v3705, %v3753
        %3755 = vmatmul.bf16.gmra.mxu0 %v2818
        %v3756 = vpop.f32.mrf.mxu0
        %v3757 = vadd.f32 %v3708, %v3756
        %v3758 = vpop.f32.mrf.mxu0
        %v3759 = vadd.f32 %v3710, %v3758
        %3760 = vmatmul.bf16.gmra.mxu0 %v2822
        %v3761 = vpop.f32.mrf.mxu0
        %v3762 = vadd.f32 %v3713, %v3761
        %v3763 = vpop.f32.mrf.mxu0
        %v3764 = vadd.f32 %v3715, %v3763
        %3765 = vmatmul.bf16.gmra.mxu0 %v2826
        %v3766 = vpop.f32.mrf.mxu0
        %v3767 = vadd.f32 %v3718, %v3766
        %v3768 = vpop.f32.mrf.mxu0
        %v3769 = vadd.f32 %v3720, %v3768
        %3770 = vmatmul.bf16.gmra.mxu0 %v2830
        %v3771 = vpop.f32.mrf.mxu0
        %v3772 = vadd.f32 %v3723, %v3771
        %v3773 = vpop.f32.mrf.mxu0
        %v3774 = vadd.f32 %v3725, %v3773
        %3775 = vdwg.mxu0
        %3776 = vmatpush.bf16.msra.mxu0 %v3319
        %3777 = vmatpush.bf16.msra.mxu0 %v3315
        %3778 = vmatpush.bf16.msra.mxu0 %v3311
        %3779 = vmatpush.bf16.msra.mxu0 %v3307
        %3780 = vmatpush.bf16.msra.mxu0 %v3303
        %3781 = vmatpush.bf16.msra.mxu0 %v3299
        %3782 = vmatpush.bf16.msra.mxu0 %v3295
        %3783 = vmatpush.bf16.msra.mxu0 %v3291
        %3784 = vmatmul.bf16.gmra.mxu0 %v2803
        %v3785 = vpop.f32.mrf.mxu0
        %v3786 = vadd.f32 %v3737, %v3785
        %v3787 = vpop.f32.mrf.mxu0
        %v3788 = vadd.f32 %v3739, %v3787
        %3789 = vmatmul.bf16.gmra.mxu0 %v2807
        %v3790 = vpop.f32.mrf.mxu0
        %v3791 = vadd.f32 %v3742, %v3790
        %v3792 = vpop.f32.mrf.mxu0
        %v3793 = vadd.f32 %v3744, %v3792
        %3794 = vmatmul.bf16.gmra.mxu0 %v2811
        %v3795 = vpop.f32.mrf.mxu0
        %v3796 = vadd.f32 %v3747, %v3795
        %v3797 = vpop.f32.mrf.mxu0
        %v3798 = vadd.f32 %v3749, %v3797
        %3799 = vmatmul.bf16.gmra.mxu0 %v2815
        %v3800 = vpop.f32.mrf.mxu0
        %v3801 = vadd.f32 %v3752, %v3800
        %v3802 = vpop.f32.mrf.mxu0
        %v3803 = vadd.f32 %v3754, %v3802
        %3804 = vmatmul.bf16.gmra.mxu0 %v2819
        %v3805 = vpop.f32.mrf.mxu0
        %v3806 = vadd.f32 %v3757, %v3805
        %v3807 = vpop.f32.mrf.mxu0
        %v3808 = vadd.f32 %v3759, %v3807
        %3809 = vmatmul.bf16.gmra.mxu0 %v2823
        %v3810 = vpop.f32.mrf.mxu0
        %v3811 = vadd.f32 %v3762, %v3810
        %v3812 = vpop.f32.mrf.mxu0
        %v3813 = vadd.f32 %v3764, %v3812
        %3814 = vmatmul.bf16.gmra.mxu0 %v2827
        %v3815 = vpop.f32.mrf.mxu0
        %v3816 = vadd.f32 %v3767, %v3815
        %v3817 = vpop.f32.mrf.mxu0
        %v3818 = vadd.f32 %v3769, %v3817
        %3819 = vmatmul.bf16.gmra.mxu0 %v2831
        %v3820 = vpop.f32.mrf.mxu0
        %v3821 = vadd.f32 %v3772, %v3820
        %v3822 = vpop.f32.mrf.mxu0
        %v3823 = vadd.f32 %v3774, %v3822
        %3824 = vdwg.mxu0
        %3825 = vmatpush.bf16.msra.mxu0 %v3351
        %3826 = vmatpush.bf16.msra.mxu0 %v3347
        %3827 = vmatpush.bf16.msra.mxu0 %v3343
        %3828 = vmatpush.bf16.msra.mxu0 %v3339
        %3829 = vmatpush.bf16.msra.mxu0 %v3335
        %3830 = vmatpush.bf16.msra.mxu0 %v3331
        %3831 = vmatpush.bf16.msra.mxu0 %v3327
        %3832 = vmatpush.bf16.msra.mxu0 %v3323
        %3833 = vmatmul.bf16.gmra.mxu0 %v2804
        %v3834 = vpop.f32.mrf.mxu0
        %v3835 = vadd.f32 %v3786, %v3834
        %v3836 = vpop.f32.mrf.mxu0
        %v3837 = vadd.f32 %v3788, %v3836
        %3838 = vmatmul.bf16.gmra.mxu0 %v2808
        %v3839 = vpop.f32.mrf.mxu0
        %v3840 = vadd.f32 %v3791, %v3839
        %v3841 = vpop.f32.mrf.mxu0
        %v3842 = vadd.f32 %v3793, %v3841
        %3843 = vmatmul.bf16.gmra.mxu0 %v2812
        %v3844 = vpop.f32.mrf.mxu0
        %v3845 = vadd.f32 %v3796, %v3844
        %v3846 = vpop.f32.mrf.mxu0
        %v3847 = vadd.f32 %v3798, %v3846
        %3848 = vmatmul.bf16.gmra.mxu0 %v2816
        %v3849 = vpop.f32.mrf.mxu0
        %v3850 = vadd.f32 %v3801, %v3849
        %v3851 = vpop.f32.mrf.mxu0
        %v3852 = vadd.f32 %v3803, %v3851
        %3853 = vmatmul.bf16.gmra.mxu0 %v2820
        %v3854 = vpop.f32.mrf.mxu0
        %v3855 = vadd.f32 %v3806, %v3854
        %v3856 = vpop.f32.mrf.mxu0
        %v3857 = vadd.f32 %v3808, %v3856
        %3858 = vmatmul.bf16.gmra.mxu0 %v2824
        %v3859 = vpop.f32.mrf.mxu0
        %v3860 = vadd.f32 %v3811, %v3859
        %v3861 = vpop.f32.mrf.mxu0
        %v3862 = vadd.f32 %v3813, %v3861
        %3863 = vmatmul.bf16.gmra.mxu0 %v2828
        %v3864 = vpop.f32.mrf.mxu0
        %v3865 = vadd.f32 %v3816, %v3864
        %v3866 = vpop.f32.mrf.mxu0
        %v3867 = vadd.f32 %v3818, %v3866
        %3868 = vmatmul.bf16.gmra.mxu0 %v2832
        %v3869 = vpop.f32.mrf.mxu0
        %v3870 = vadd.f32 %v3821, %v3869
        %v3871 = vpop.f32.mrf.mxu0
        %v3872 = vadd.f32 %v3823, %v3871
        %3873 = vdwg.mxu0
        %3874 = vmatpush.bf16.msra.mxu0 %v3256
        %3875 = vmatpush.bf16.msra.mxu0 %v3252
        %3876 = vmatpush.bf16.msra.mxu0 %v3248
        %3877 = vmatpush.bf16.msra.mxu0 %v3244
        %3878 = vmatpush.bf16.msra.mxu0 %v3240
        %3879 = vmatpush.bf16.msra.mxu0 %v3236
        %3880 = vmatpush.bf16.msra.mxu0 %v3232
        %3881 = vmatpush.bf16.msra.mxu0 %v3228
        %3882 = vmatmul.bf16.gmra.mxu0 %v2801
        %v3883 = vpop.f32.mrf.mxu0
        %v3884 = vadd.f32 %v2836, %v3883
        %v3885 = vpop.f32.mrf.mxu0
        %v3886 = vadd.f32 %v2836, %v3885
        %3887 = vmatmul.bf16.gmra.mxu0 %v2805
        %v3888 = vpop.f32.mrf.mxu0
        %v3889 = vadd.f32 %v2836, %v3888
        %v3890 = vpop.f32.mrf.mxu0
        %v3891 = vadd.f32 %v2836, %v3890
        %3892 = vmatmul.bf16.gmra.mxu0 %v2809
        %v3893 = vpop.f32.mrf.mxu0
        %v3894 = vadd.f32 %v2836, %v3893
        %v3895 = vpop.f32.mrf.mxu0
        %v3896 = vadd.f32 %v2836, %v3895
        %3897 = vmatmul.bf16.gmra.mxu0 %v2813
        %v3898 = vpop.f32.mrf.mxu0
        %v3899 = vadd.f32 %v2836, %v3898
        %v3900 = vpop.f32.mrf.mxu0
        %v3901 = vadd.f32 %v2836, %v3900
        %3902 = vmatmul.bf16.gmra.mxu0 %v2817
        %v3903 = vpop.f32.mrf.mxu0
        %v3904 = vadd.f32 %v2836, %v3903
        %v3905 = vpop.f32.mrf.mxu0
        %v3906 = vadd.f32 %v2836, %v3905
        %3907 = vmatmul.bf16.gmra.mxu0 %v2821
        %v3908 = vpop.f32.mrf.mxu0
        %v3909 = vadd.f32 %v2836, %v3908
        %v3910 = vpop.f32.mrf.mxu0
        %v3911 = vadd.f32 %v2836, %v3910
        %3912 = vmatmul.bf16.gmra.mxu0 %v2825
        %v3913 = vpop.f32.mrf.mxu0
        %v3914 = vadd.f32 %v2836, %v3913
        %v3915 = vpop.f32.mrf.mxu0
        %v3916 = vadd.f32 %v2836, %v3915
        %3917 = vmatmul.bf16.gmra.mxu0 %v2829
        %v3918 = vpop.f32.mrf.mxu0
        %v3919 = vadd.f32 %v2836, %v3918
        %v3920 = vpop.f32.mrf.mxu0
        %v3921 = vadd.f32 %v2836, %v3920
        %3922 = vdwg.mxu0
        %3923 = vmatpush.bf16.msra.mxu0 %v3288
        %3924 = vmatpush.bf16.msra.mxu0 %v3284
        %3925 = vmatpush.bf16.msra.mxu0 %v3280
        %3926 = vmatpush.bf16.msra.mxu0 %v3276
        %3927 = vmatpush.bf16.msra.mxu0 %v3272
        %3928 = vmatpush.bf16.msra.mxu0 %v3268
        %3929 = vmatpush.bf16.msra.mxu0 %v3264
        %3930 = vmatpush.bf16.msra.mxu0 %v3260
        %3931 = vmatmul.bf16.gmra.mxu0 %v2802
        %v3932 = vpop.f32.mrf.mxu0
        %v3933 = vadd.f32 %v3884, %v3932
        %v3934 = vpop.f32.mrf.mxu0
        %v3935 = vadd.f32 %v3886, %v3934
        %3936 = vmatmul.bf16.gmra.mxu0 %v2806
        %v3937 = vpop.f32.mrf.mxu0
        %v3938 = vadd.f32 %v3889, %v3937
        %v3939 = vpop.f32.mrf.mxu0
        %v3940 = vadd.f32 %v3891, %v3939
        %3941 = vmatmul.bf16.gmra.mxu0 %v2810
        %v3942 = vpop.f32.mrf.mxu0
        %v3943 = vadd.f32 %v3894, %v3942
        %v3944 = vpop.f32.mrf.mxu0
        %v3945 = vadd.f32 %v3896, %v3944
        %3946 = vmatmul.bf16.gmra.mxu0 %v2814
        %v3947 = vpop.f32.mrf.mxu0
        %v3948 = vadd.f32 %v3899, %v3947
        %v3949 = vpop.f32.mrf.mxu0
        %v3950 = vadd.f32 %v3901, %v3949
        %3951 = vmatmul.bf16.gmra.mxu0 %v2818
        %v3952 = vpop.f32.mrf.mxu0
        %v3953 = vadd.f32 %v3904, %v3952
        %v3954 = vpop.f32.mrf.mxu0
        %v3955 = vadd.f32 %v3906, %v3954
        %3956 = vmatmul.bf16.gmra.mxu0 %v2822
        %v3957 = vpop.f32.mrf.mxu0
        %v3958 = vadd.f32 %v3909, %v3957
        %v3959 = vpop.f32.mrf.mxu0
        %v3960 = vadd.f32 %v3911, %v3959
        %3961 = vmatmul.bf16.gmra.mxu0 %v2826
        %v3962 = vpop.f32.mrf.mxu0
        %v3963 = vadd.f32 %v3914, %v3962
        %v3964 = vpop.f32.mrf.mxu0
        %v3965 = vadd.f32 %v3916, %v3964
        %3966 = vmatmul.bf16.gmra.mxu0 %v2830
        %v3967 = vpop.f32.mrf.mxu0
        %v3968 = vadd.f32 %v3919, %v3967
        %v3969 = vpop.f32.mrf.mxu0
        %v3970 = vadd.f32 %v3921, %v3969
        %3971 = vdwg.mxu0
        %3972 = vmatpush.bf16.msra.mxu0 %v3320
        %3973 = vmatpush.bf16.msra.mxu0 %v3316
        %3974 = vmatpush.bf16.msra.mxu0 %v3312
        %3975 = vmatpush.bf16.msra.mxu0 %v3308
        %3976 = vmatpush.bf16.msra.mxu0 %v3304
        %3977 = vmatpush.bf16.msra.mxu0 %v3300
        %3978 = vmatpush.bf16.msra.mxu0 %v3296
        %3979 = vmatpush.bf16.msra.mxu0 %v3292
        %3980 = vmatmul.bf16.gmra.mxu0 %v2803
        %v3981 = vpop.f32.mrf.mxu0
        %v3982 = vadd.f32 %v3933, %v3981
        %v3983 = vpop.f32.mrf.mxu0
        %v3984 = vadd.f32 %v3935, %v3983
        %3985 = vmatmul.bf16.gmra.mxu0 %v2807
        %v3986 = vpop.f32.mrf.mxu0
        %v3987 = vadd.f32 %v3938, %v3986
        %v3988 = vpop.f32.mrf.mxu0
        %v3989 = vadd.f32 %v3940, %v3988
        %3990 = vmatmul.bf16.gmra.mxu0 %v2811
        %v3991 = vpop.f32.mrf.mxu0
        %v3992 = vadd.f32 %v3943, %v3991
        %v3993 = vpop.f32.mrf.mxu0
        %v3994 = vadd.f32 %v3945, %v3993
        %3995 = vmatmul.bf16.gmra.mxu0 %v2815
        %v3996 = vpop.f32.mrf.mxu0
        %v3997 = vadd.f32 %v3948, %v3996
        %v3998 = vpop.f32.mrf.mxu0
        %v3999 = vadd.f32 %v3950, %v3998
        %4000 = vmatmul.bf16.gmra.mxu0 %v2819
        %v4001 = vpop.f32.mrf.mxu0
        %v4002 = vadd.f32 %v3953, %v4001
        %v4003 = vpop.f32.mrf.mxu0
        %v4004 = vadd.f32 %v3955, %v4003
        %4005 = vmatmul.bf16.gmra.mxu0 %v2823
        %v4006 = vpop.f32.mrf.mxu0
        %v4007 = vadd.f32 %v3958, %v4006
        %v4008 = vpop.f32.mrf.mxu0
        %v4009 = vadd.f32 %v3960, %v4008
        %4010 = vmatmul.bf16.gmra.mxu0 %v2827
        %v4011 = vpop.f32.mrf.mxu0
        %v4012 = vadd.f32 %v3963, %v4011
        %v4013 = vpop.f32.mrf.mxu0
        %v4014 = vadd.f32 %v3965, %v4013
        %4015 = vmatmul.bf16.gmra.mxu0 %v2831
        %v4016 = vpop.f32.mrf.mxu0
        %v4017 = vadd.f32 %v3968, %v4016
        %v4018 = vpop.f32.mrf.mxu0
        %v4019 = vadd.f32 %v3970, %v4018
        %4020 = vdwg.mxu0
        %4021 = vmatpush.bf16.msra.mxu0 %v3352
        %4022 = vmatpush.bf16.msra.mxu0 %v3348
        %4023 = vmatpush.bf16.msra.mxu0 %v3344
        %4024 = vmatpush.bf16.msra.mxu0 %v3340
        %4025 = vmatpush.bf16.msra.mxu0 %v3336
        %4026 = vmatpush.bf16.msra.mxu0 %v3332
        %4027 = vmatpush.bf16.msra.mxu0 %v3328
        %4028 = vmatpush.bf16.msra.mxu0 %v3324
        %4029 = vmatmul.bf16.gmra.mxu0 %v2804
        %v4030 = vpop.f32.mrf.mxu0
        %v4031 = vadd.f32 %v3982, %v4030
        %v4032 = vpop.f32.mrf.mxu0
        %v4033 = vadd.f32 %v3984, %v4032
        %4034 = vmatmul.bf16.gmra.mxu0 %v2808
        %v4035 = vpop.f32.mrf.mxu0
        %v4036 = vadd.f32 %v3987, %v4035
        %v4037 = vpop.f32.mrf.mxu0
        %v4038 = vadd.f32 %v3989, %v4037
        %4039 = vmatmul.bf16.gmra.mxu0 %v2812
        %v4040 = vpop.f32.mrf.mxu0
        %v4041 = vadd.f32 %v3992, %v4040
        %v4042 = vpop.f32.mrf.mxu0
        %v4043 = vadd.f32 %v3994, %v4042
        %4044 = vmatmul.bf16.gmra.mxu0 %v2816
        %v4045 = vpop.f32.mrf.mxu0
        %v4046 = vadd.f32 %v3997, %v4045
        %v4047 = vpop.f32.mrf.mxu0
        %v4048 = vadd.f32 %v3999, %v4047
        %4049 = vmatmul.bf16.gmra.mxu0 %v2820
        %v4050 = vpop.f32.mrf.mxu0
        %v4051 = vadd.f32 %v4002, %v4050
        %v4052 = vpop.f32.mrf.mxu0
        %v4053 = vadd.f32 %v4004, %v4052
        %4054 = vmatmul.bf16.gmra.mxu0 %v2824
        %v4055 = vpop.f32.mrf.mxu0
        %v4056 = vadd.f32 %v4007, %v4055
        %v4057 = vpop.f32.mrf.mxu0
        %v4058 = vadd.f32 %v4009, %v4057
        %4059 = vmatmul.bf16.gmra.mxu0 %v2828
        %v4060 = vpop.f32.mrf.mxu0
        %v4061 = vadd.f32 %v4012, %v4060
        %v4062 = vpop.f32.mrf.mxu0
        %v4063 = vadd.f32 %v4014, %v4062
        %4064 = vmatmul.bf16.gmra.mxu0 %v2832
        %v4065 = vpop.f32.mrf.mxu0
        %v4066 = vadd.f32 %v4017, %v4065
        %v4067 = vpop.f32.mrf.mxu0
        %v4068 = vadd.f32 %v4019, %v4067
        %4069 = vdwg.mxu0
        %4070 = vmatpush.bf16.msra.mxu0 %v3257
        %4071 = vmatpush.bf16.msra.mxu0 %v3253
        %4072 = vmatpush.bf16.msra.mxu0 %v3249
        %4073 = vmatpush.bf16.msra.mxu0 %v3245
        %4074 = vmatpush.bf16.msra.mxu0 %v3241
        %4075 = vmatpush.bf16.msra.mxu0 %v3237
        %4076 = vmatpush.bf16.msra.mxu0 %v3233
        %4077 = vmatpush.bf16.msra.mxu0 %v3229
        %4078 = vmatmul.bf16.gmra.mxu0 %v2801
        %v4079 = vpop.f32.mrf.mxu0
        %v4080 = vadd.f32 %v2837, %v4079
        %v4081 = vpop.f32.mrf.mxu0
        %v4082 = vadd.f32 %v2837, %v4081
        %4083 = vmatmul.bf16.gmra.mxu0 %v2805
        %v4084 = vpop.f32.mrf.mxu0
        %v4085 = vadd.f32 %v2837, %v4084
        %v4086 = vpop.f32.mrf.mxu0
        %v4087 = vadd.f32 %v2837, %v4086
        %4088 = vmatmul.bf16.gmra.mxu0 %v2809
        %v4089 = vpop.f32.mrf.mxu0
        %v4090 = vadd.f32 %v2837, %v4089
        %v4091 = vpop.f32.mrf.mxu0
        %v4092 = vadd.f32 %v2837, %v4091
        %4093 = vmatmul.bf16.gmra.mxu0 %v2813
        %v4094 = vpop.f32.mrf.mxu0
        %v4095 = vadd.f32 %v2837, %v4094
        %v4096 = vpop.f32.mrf.mxu0
        %v4097 = vadd.f32 %v2837, %v4096
        %4098 = vmatmul.bf16.gmra.mxu0 %v2817
        %v4099 = vpop.f32.mrf.mxu0
        %v4100 = vadd.f32 %v2837, %v4099
        %v4101 = vpop.f32.mrf.mxu0
        %v4102 = vadd.f32 %v2837, %v4101
        %4103 = vmatmul.bf16.gmra.mxu0 %v2821
        %v4104 = vpop.f32.mrf.mxu0
        %v4105 = vadd.f32 %v2837, %v4104
        %v4106 = vpop.f32.mrf.mxu0
        %v4107 = vadd.f32 %v2837, %v4106
        %4108 = vmatmul.bf16.gmra.mxu0 %v2825
        %v4109 = vpop.f32.mrf.mxu0
        %v4110 = vadd.f32 %v2837, %v4109
        %v4111 = vpop.f32.mrf.mxu0
        %v4112 = vadd.f32 %v2837, %v4111
        %4113 = vmatmul.bf16.gmra.mxu0 %v2829
        %v4114 = vpop.f32.mrf.mxu0
        %v4115 = vadd.f32 %v2837, %v4114
        %v4116 = vpop.f32.mrf.mxu0
        %v4117 = vadd.f32 %v2837, %v4116
        %4118 = vdwg.mxu0
        %4119 = vmatpush.bf16.msra.mxu0 %v3289
        %4120 = vmatpush.bf16.msra.mxu0 %v3285
        %4121 = vmatpush.bf16.msra.mxu0 %v3281
        %4122 = vmatpush.bf16.msra.mxu0 %v3277
        %4123 = vmatpush.bf16.msra.mxu0 %v3273
        %4124 = vmatpush.bf16.msra.mxu0 %v3269
        %4125 = vmatpush.bf16.msra.mxu0 %v3265
        %4126 = vmatpush.bf16.msra.mxu0 %v3261
        %4127 = vmatmul.bf16.gmra.mxu0 %v2802
        %v4128 = vpop.f32.mrf.mxu0
        %v4129 = vadd.f32 %v4080, %v4128
        %v4130 = vpop.f32.mrf.mxu0
        %v4131 = vadd.f32 %v4082, %v4130
        %4132 = vmatmul.bf16.gmra.mxu0 %v2806
        %v4133 = vpop.f32.mrf.mxu0
        %v4134 = vadd.f32 %v4085, %v4133
        %v4135 = vpop.f32.mrf.mxu0
        %v4136 = vadd.f32 %v4087, %v4135
        %4137 = vmatmul.bf16.gmra.mxu0 %v2810
        %v4138 = vpop.f32.mrf.mxu0
        %v4139 = vadd.f32 %v4090, %v4138
        %v4140 = vpop.f32.mrf.mxu0
        %v4141 = vadd.f32 %v4092, %v4140
        %4142 = vmatmul.bf16.gmra.mxu0 %v2814
        %v4143 = vpop.f32.mrf.mxu0
        %v4144 = vadd.f32 %v4095, %v4143
        %v4145 = vpop.f32.mrf.mxu0
        %v4146 = vadd.f32 %v4097, %v4145
        %4147 = vmatmul.bf16.gmra.mxu0 %v2818
        %v4148 = vpop.f32.mrf.mxu0
        %v4149 = vadd.f32 %v4100, %v4148
        %v4150 = vpop.f32.mrf.mxu0
        %v4151 = vadd.f32 %v4102, %v4150
        %4152 = vmatmul.bf16.gmra.mxu0 %v2822
        %v4153 = vpop.f32.mrf.mxu0
        %v4154 = vadd.f32 %v4105, %v4153
        %v4155 = vpop.f32.mrf.mxu0
        %v4156 = vadd.f32 %v4107, %v4155
        %4157 = vmatmul.bf16.gmra.mxu0 %v2826
        %v4158 = vpop.f32.mrf.mxu0
        %v4159 = vadd.f32 %v4110, %v4158
        %v4160 = vpop.f32.mrf.mxu0
        %v4161 = vadd.f32 %v4112, %v4160
        %4162 = vmatmul.bf16.gmra.mxu0 %v2830
        %v4163 = vpop.f32.mrf.mxu0
        %v4164 = vadd.f32 %v4115, %v4163
        %v4165 = vpop.f32.mrf.mxu0
        %v4166 = vadd.f32 %v4117, %v4165
        %4167 = vdwg.mxu0
        %4168 = vmatpush.bf16.msra.mxu0 %v3321
        %4169 = vmatpush.bf16.msra.mxu0 %v3317
        %4170 = vmatpush.bf16.msra.mxu0 %v3313
        %4171 = vmatpush.bf16.msra.mxu0 %v3309
        %4172 = vmatpush.bf16.msra.mxu0 %v3305
        %4173 = vmatpush.bf16.msra.mxu0 %v3301
        %4174 = vmatpush.bf16.msra.mxu0 %v3297
        %4175 = vmatpush.bf16.msra.mxu0 %v3293
        %4176 = vmatmul.bf16.gmra.mxu0 %v2803
        %v4177 = vpop.f32.mrf.mxu0
        %v4178 = vadd.f32 %v4129, %v4177
        %v4179 = vpop.f32.mrf.mxu0
        %v4180 = vadd.f32 %v4131, %v4179
        %4181 = vmatmul.bf16.gmra.mxu0 %v2807
        %v4182 = vpop.f32.mrf.mxu0
        %v4183 = vadd.f32 %v4134, %v4182
        %v4184 = vpop.f32.mrf.mxu0
        %v4185 = vadd.f32 %v4136, %v4184
        %4186 = vmatmul.bf16.gmra.mxu0 %v2811
        %v4187 = vpop.f32.mrf.mxu0
        %v4188 = vadd.f32 %v4139, %v4187
        %v4189 = vpop.f32.mrf.mxu0
        %v4190 = vadd.f32 %v4141, %v4189
        %4191 = vmatmul.bf16.gmra.mxu0 %v2815
        %v4192 = vpop.f32.mrf.mxu0
        %v4193 = vadd.f32 %v4144, %v4192
        %v4194 = vpop.f32.mrf.mxu0
        %v4195 = vadd.f32 %v4146, %v4194
        %4196 = vmatmul.bf16.gmra.mxu0 %v2819
        %v4197 = vpop.f32.mrf.mxu0
        %v4198 = vadd.f32 %v4149, %v4197
        %v4199 = vpop.f32.mrf.mxu0
        %v4200 = vadd.f32 %v4151, %v4199
        %4201 = vmatmul.bf16.gmra.mxu0 %v2823
        %v4202 = vpop.f32.mrf.mxu0
        %v4203 = vadd.f32 %v4154, %v4202
        %v4204 = vpop.f32.mrf.mxu0
        %v4205 = vadd.f32 %v4156, %v4204
        %4206 = vmatmul.bf16.gmra.mxu0 %v2827
        %v4207 = vpop.f32.mrf.mxu0
        %v4208 = vadd.f32 %v4159, %v4207
        %v4209 = vpop.f32.mrf.mxu0
        %v4210 = vadd.f32 %v4161, %v4209
        %4211 = vmatmul.bf16.gmra.mxu0 %v2831
        %v4212 = vpop.f32.mrf.mxu0
        %v4213 = vadd.f32 %v4164, %v4212
        %v4214 = vpop.f32.mrf.mxu0
        %v4215 = vadd.f32 %v4166, %v4214
        %4216 = vdwg.mxu0
        %4217 = vmatpush.bf16.msra.mxu0 %v3353
        %4218 = vmatpush.bf16.msra.mxu0 %v3349
        %4219 = vmatpush.bf16.msra.mxu0 %v3345
        %4220 = vmatpush.bf16.msra.mxu0 %v3341
        %4221 = vmatpush.bf16.msra.mxu0 %v3337
        %4222 = vmatpush.bf16.msra.mxu0 %v3333
        %4223 = vmatpush.bf16.msra.mxu0 %v3329
        %4224 = vmatpush.bf16.msra.mxu0 %v3325
        %4225 = vmatmul.bf16.gmra.mxu0 %v2804
        %v4226 = vpop.f32.mrf.mxu0
        %v4227 = vadd.f32 %v4178, %v4226
        %v4228 = vpop.f32.mrf.mxu0
        %v4229 = vadd.f32 %v4180, %v4228
        %4230 = vmatmul.bf16.gmra.mxu0 %v2808
        %v4231 = vpop.f32.mrf.mxu0
        %v4232 = vadd.f32 %v4183, %v4231
        %v4233 = vpop.f32.mrf.mxu0
        %v4234 = vadd.f32 %v4185, %v4233
        %4235 = vmatmul.bf16.gmra.mxu0 %v2812
        %v4236 = vpop.f32.mrf.mxu0
        %v4237 = vadd.f32 %v4188, %v4236
        %v4238 = vpop.f32.mrf.mxu0
        %v4239 = vadd.f32 %v4190, %v4238
        %4240 = vmatmul.bf16.gmra.mxu0 %v2816
        %v4241 = vpop.f32.mrf.mxu0
        %v4242 = vadd.f32 %v4193, %v4241
        %v4243 = vpop.f32.mrf.mxu0
        %v4244 = vadd.f32 %v4195, %v4243
        %4245 = vmatmul.bf16.gmra.mxu0 %v2820
        %v4246 = vpop.f32.mrf.mxu0
        %v4247 = vadd.f32 %v4198, %v4246
        %v4248 = vpop.f32.mrf.mxu0
        %v4249 = vadd.f32 %v4200, %v4248
        %4250 = vmatmul.bf16.gmra.mxu0 %v2824
        %v4251 = vpop.f32.mrf.mxu0
        %v4252 = vadd.f32 %v4203, %v4251
        %v4253 = vpop.f32.mrf.mxu0
        %v4254 = vadd.f32 %v4205, %v4253
        %4255 = vmatmul.bf16.gmra.mxu0 %v2828
        %v4256 = vpop.f32.mrf.mxu0
        %v4257 = vadd.f32 %v4208, %v4256
        %v4258 = vpop.f32.mrf.mxu0
        %v4259 = vadd.f32 %v4210, %v4258
        %4260 = vmatmul.bf16.gmra.mxu0 %v2832
        %v4261 = vpop.f32.mrf.mxu0
        %v4262 = vadd.f32 %v4213, %v4261
        %v4263 = vpop.f32.mrf.mxu0
        %v4264 = vadd.f32 %v4215, %v4263
        %4265 = vdwg.mxu0
        %v4266 = vpack.c.bf16 %v3835, %v3639
        %v4267 = vpack.c.bf16 %v4227, %v4031
        %v4268 = vpack.c.bf16 %v3837, %v3641
        %v4269 = vpack.c.bf16 %v4229, %v4033
        %v4270 = vpack.c.bf16 %v3840, %v3644
        %v4271 = vpack.c.bf16 %v4232, %v4036
        %v4272 = vpack.c.bf16 %v3842, %v3646
        %v4273 = vpack.c.bf16 %v4234, %v4038
        %v4274 = vpack.c.bf16 %v3845, %v3649
        %v4275 = vpack.c.bf16 %v4237, %v4041
        %v4276 = vpack.c.bf16 %v3847, %v3651
        %v4277 = vpack.c.bf16 %v4239, %v4043
        %v4278 = vpack.c.bf16 %v3850, %v3654
        %v4279 = vpack.c.bf16 %v4242, %v4046
        %v4280 = vpack.c.bf16 %v3852, %v3656
        %v4281 = vpack.c.bf16 %v4244, %v4048
        %v4282 = vpack.c.bf16 %v3855, %v3659
        %v4283 = vpack.c.bf16 %v4247, %v4051
        %v4284 = vpack.c.bf16 %v3857, %v3661
        %v4285 = vpack.c.bf16 %v4249, %v4053
        %v4286 = vpack.c.bf16 %v3860, %v3664
        %v4287 = vpack.c.bf16 %v4252, %v4056
        %v4288 = vpack.c.bf16 %v3862, %v3666
        %v4289 = vpack.c.bf16 %v4254, %v4058
        %v4290 = vpack.c.bf16 %v3865, %v3669
        %v4291 = vpack.c.bf16 %v4257, %v4061
        %v4292 = vpack.c.bf16 %v3867, %v3671
        %v4293 = vpack.c.bf16 %v4259, %v4063
        %v4294 = vpack.c.bf16 %v3870, %v3674
        %v4295 = vpack.c.bf16 %v4262, %v4066
        %v4296 = vpack.c.bf16 %v3872, %v3676
        %v4297 = vpack.c.bf16 %v4264, %v4068
        %v4298 = vld [vmem:[%s516] sm:$0xff]
        %v4299 = vld [vmem:[%s516 + $0x8] sm:$0xff]
        %v4300 = vld [vmem:[%s516 + $0x10] sm:$0xff]
        %v4301 = vld [vmem:[%s516 + $0x18] sm:$0xff]
        %v4302 = vld [vmem:[%s516 + $0x20] sm:$0xff]
        %v4303 = vld [vmem:[%s516 + $0x28] sm:$0xff]
        %v4304 = vld [vmem:[%s516 + $0x30] sm:$0xff]
        %v4305 = vld [vmem:[%s516 + $0x38] sm:$0xff]
        %v4306 = vld [vmem:[%s516 + $0x40] sm:$0xff]
        %v4307 = vld [vmem:[%s516 + $0x48] sm:$0xff]
        %v4308 = vld [vmem:[%s516 + $0x50] sm:$0xff]
        %v4309 = vld [vmem:[%s516 + $0x58] sm:$0xff]
        %v4310 = vld [vmem:[%s516 + $0x60] sm:$0xff]
        %v4311 = vld [vmem:[%s516 + $0x68] sm:$0xff]
        %v4312 = vld [vmem:[%s516 + $0x70] sm:$0xff]
        %v4313 = vld [vmem:[%s516 + $0x78] sm:$0xff]
        %v4314 = vld [vmem:[%s516 + $0x80] sm:$0xff]
        %v4315 = vld [vmem:[%s516 + $0x88] sm:$0xff]
        %v4316 = vld [vmem:[%s516 + $0x90] sm:$0xff]
        %v4317 = vld [vmem:[%s516 + $0x98] sm:$0xff]
        %v4318 = vld [vmem:[%s516 + $0xa0] sm:$0xff]
        %v4319 = vld [vmem:[%s516 + $0xa8] sm:$0xff]
        %v4320 = vld [vmem:[%s516 + $0xb0] sm:$0xff]
        %v4321 = vld [vmem:[%s516 + $0xb8] sm:$0xff]
        %v4322 = vld [vmem:[%s516 + $0xc0] sm:$0xff]
        %v4323 = vld [vmem:[%s516 + $0xc8] sm:$0xff]
        %v4324 = vld [vmem:[%s516 + $0xd0] sm:$0xff]
        %v4325 = vld [vmem:[%s516 + $0xd8] sm:$0xff]
        %v4326 = vld [vmem:[%s516 + $0xe0] sm:$0xff]
        %v4327 = vld [vmem:[%s516 + $0xe8] sm:$0xff]
        %v4328 = vld [vmem:[%s516 + $0xf0] sm:$0xff]
        %v4329 = vld [vmem:[%s516 + $0xf8] sm:$0xff]
        %v4331 = vperm.slane %v982, 0
        %v4332 = vperm.slane %v982, 1
        %v4333 = vperm.slane %v982, 2
        %v4334 = vperm.slane %v982, 3
        %v4371 = vunpack.c.l.b16 %v4298
        %v4372 = vunpack.c.h.b16 %v4298
        %v4373 = vunpack.c.l.b16 %v4299
        %v4374 = vunpack.c.h.b16 %v4299
        %v4375 = vunpack.c.l.b16 %v4300
        %v4376 = vunpack.c.h.b16 %v4300
        %v4377 = vunpack.c.l.b16 %v4301
        %v4378 = vunpack.c.h.b16 %v4301
        %v4379 = vunpack.c.l.b16 %v4302
        %v4380 = vunpack.c.h.b16 %v4302
        %v4381 = vunpack.c.l.b16 %v4303
        %v4382 = vunpack.c.h.b16 %v4303
        %v4383 = vunpack.c.l.b16 %v4304
        %v4384 = vunpack.c.h.b16 %v4304
        %v4385 = vunpack.c.l.b16 %v4305
        %v4386 = vunpack.c.h.b16 %v4305
        %v4387 = vunpack.c.l.b16 %v4306
        %v4388 = vunpack.c.h.b16 %v4306
        %v4389 = vunpack.c.l.b16 %v4307
        %v4390 = vunpack.c.h.b16 %v4307
        %v4391 = vunpack.c.l.b16 %v4308
        %v4392 = vunpack.c.h.b16 %v4308
        %v4393 = vunpack.c.l.b16 %v4309
        %v4394 = vunpack.c.h.b16 %v4309
        %v4395 = vunpack.c.l.b16 %v4310
        %v4396 = vunpack.c.h.b16 %v4310
        %v4397 = vunpack.c.l.b16 %v4311
        %v4398 = vunpack.c.h.b16 %v4311
        %v4399 = vunpack.c.l.b16 %v4312
        %v4400 = vunpack.c.h.b16 %v4312
        %v4401 = vunpack.c.l.b16 %v4313
        %v4402 = vunpack.c.h.b16 %v4313
        %v4403 = vunpack.c.l.b16 %v4314
        %v4404 = vunpack.c.h.b16 %v4314
        %v4405 = vunpack.c.l.b16 %v4315
        %v4406 = vunpack.c.h.b16 %v4315
        %v4407 = vunpack.c.l.b16 %v4316
        %v4408 = vunpack.c.h.b16 %v4316
        %v4409 = vunpack.c.l.b16 %v4317
        %v4410 = vunpack.c.h.b16 %v4317
        %v4411 = vunpack.c.l.b16 %v4318
        %v4412 = vunpack.c.h.b16 %v4318
        %v4413 = vunpack.c.l.b16 %v4319
        %v4414 = vunpack.c.h.b16 %v4319
        %v4415 = vunpack.c.l.b16 %v4320
        %v4416 = vunpack.c.h.b16 %v4320
        %v4417 = vunpack.c.l.b16 %v4321
        %v4418 = vunpack.c.h.b16 %v4321
        %v4419 = vunpack.c.l.b16 %v4322
        %v4420 = vunpack.c.h.b16 %v4322
        %v4421 = vunpack.c.l.b16 %v4323
        %v4422 = vunpack.c.h.b16 %v4323
        %v4423 = vunpack.c.l.b16 %v4324
        %v4424 = vunpack.c.h.b16 %v4324
        %v4425 = vunpack.c.l.b16 %v4325
        %v4426 = vunpack.c.h.b16 %v4325
        %v4427 = vunpack.c.l.b16 %v4326
        %v4428 = vunpack.c.h.b16 %v4326
        %v4429 = vunpack.c.l.b16 %v4327
        %v4430 = vunpack.c.h.b16 %v4327
        %v4431 = vunpack.c.l.b16 %v4328
        %v4432 = vunpack.c.h.b16 %v4328
        %v4433 = vunpack.c.l.b16 %v4329
        %v4434 = vunpack.c.h.b16 %v4329
        %v4435 = vpack.c.b16 %v4375, %v4371
        %v4436 = vpack.c.b16 %v4376, %v4372
        %v4437 = vpack.c.b16 %v4377, %v4373
        %v4438 = vpack.c.b16 %v4378, %v4374
        %v4439 = vpack.c.b16 %v4383, %v4379
        %v4440 = vpack.c.b16 %v4384, %v4380
        %v4441 = vpack.c.b16 %v4385, %v4381
        %v4442 = vpack.c.b16 %v4386, %v4382
        %v4443 = vpack.c.b16 %v4391, %v4387
        %v4444 = vpack.c.b16 %v4392, %v4388
        %v4445 = vpack.c.b16 %v4393, %v4389
        %v4446 = vpack.c.b16 %v4394, %v4390
        %v4447 = vpack.c.b16 %v4399, %v4395
        %v4448 = vpack.c.b16 %v4400, %v4396
        %v4449 = vpack.c.b16 %v4401, %v4397
        %v4450 = vpack.c.b16 %v4402, %v4398
        %v4451 = vpack.c.b16 %v4407, %v4403
        %v4452 = vpack.c.b16 %v4408, %v4404
        %v4453 = vpack.c.b16 %v4409, %v4405
        %v4454 = vpack.c.b16 %v4410, %v4406
        %v4455 = vpack.c.b16 %v4415, %v4411
        %v4456 = vpack.c.b16 %v4416, %v4412
        %v4457 = vpack.c.b16 %v4417, %v4413
        %v4458 = vpack.c.b16 %v4418, %v4414
        %v4459 = vpack.c.b16 %v4423, %v4419
        %v4460 = vpack.c.b16 %v4424, %v4420
        %v4461 = vpack.c.b16 %v4425, %v4421
        %v4462 = vpack.c.b16 %v4426, %v4422
        %v4463 = vpack.c.b16 %v4431, %v4427
        %v4464 = vpack.c.b16 %v4432, %v4428
        %v4465 = vpack.c.b16 %v4433, %v4429
        %v4466 = vpack.c.b16 %v4434, %v4430
        %v4627 = vunpack.c.l.b16 %v854
        %v4628 = vunpack.c.h.b16 %v854
        %v4629 = vunpack.c.l.b16 %v855
        %v4630 = vunpack.c.h.b16 %v855
        %v4631 = vunpack.c.l.b16 %v856
        %v4632 = vunpack.c.h.b16 %v856
        %v4633 = vunpack.c.l.b16 %v857
        %v4634 = vunpack.c.h.b16 %v857
        %v4635 = vunpack.c.l.b16 %v858
        %v4636 = vunpack.c.h.b16 %v858
        %v4637 = vunpack.c.l.b16 %v859
        %v4638 = vunpack.c.h.b16 %v859
        %v4639 = vunpack.c.l.b16 %v860
        %v4640 = vunpack.c.h.b16 %v860
        %v4641 = vunpack.c.l.b16 %v861
        %v4642 = vunpack.c.h.b16 %v861
        %v4643 = vunpack.c.l.b16 %v862
        %v4644 = vunpack.c.h.b16 %v862
        %v4645 = vunpack.c.l.b16 %v863
        %v4646 = vunpack.c.h.b16 %v863
        %v4647 = vunpack.c.l.b16 %v864
        %v4648 = vunpack.c.h.b16 %v864
        %v4649 = vunpack.c.l.b16 %v865
        %v4650 = vunpack.c.h.b16 %v865
        %v4651 = vunpack.c.l.b16 %v866
        %v4652 = vunpack.c.h.b16 %v866
        %v4653 = vunpack.c.l.b16 %v867
        %v4654 = vunpack.c.h.b16 %v867
        %v4655 = vunpack.c.l.b16 %v868
        %v4656 = vunpack.c.h.b16 %v868
        %v4657 = vunpack.c.l.b16 %v869
        %v4658 = vunpack.c.h.b16 %v869
        %v4659 = vunpack.c.l.b16 %v870
        %v4660 = vunpack.c.h.b16 %v870
        %v4661 = vunpack.c.l.b16 %v871
        %v4662 = vunpack.c.h.b16 %v871
        %v4663 = vunpack.c.l.b16 %v872
        %v4664 = vunpack.c.h.b16 %v872
        %v4665 = vunpack.c.l.b16 %v873
        %v4666 = vunpack.c.h.b16 %v873
        %v4667 = vunpack.c.l.b16 %v874
        %v4668 = vunpack.c.h.b16 %v874
        %v4669 = vunpack.c.l.b16 %v875
        %v4670 = vunpack.c.h.b16 %v875
        %v4671 = vunpack.c.l.b16 %v876
        %v4672 = vunpack.c.h.b16 %v876
        %v4673 = vunpack.c.l.b16 %v877
        %v4674 = vunpack.c.h.b16 %v877
        %v4675 = vunpack.c.l.b16 %v878
        %v4676 = vunpack.c.h.b16 %v878
        %v4677 = vunpack.c.l.b16 %v879
        %v4678 = vunpack.c.h.b16 %v879
        %v4679 = vunpack.c.l.b16 %v880
        %v4680 = vunpack.c.h.b16 %v880
        %v4681 = vunpack.c.l.b16 %v881
        %v4682 = vunpack.c.h.b16 %v881
        %v4683 = vunpack.c.l.b16 %v882
        %v4684 = vunpack.c.h.b16 %v882
        %v4685 = vunpack.c.l.b16 %v883
        %v4686 = vunpack.c.h.b16 %v883
        %v4687 = vunpack.c.l.b16 %v884
        %v4688 = vunpack.c.h.b16 %v884
        %v4689 = vunpack.c.l.b16 %v885
        %v4690 = vunpack.c.h.b16 %v885
        %v4691 = vunpack.c.l.b16 %v886
        %v4692 = vunpack.c.h.b16 %v886
        %v4693 = vunpack.c.l.b16 %v887
        %v4694 = vunpack.c.h.b16 %v887
        %v4695 = vunpack.c.l.b16 %v888
        %v4696 = vunpack.c.h.b16 %v888
        %v4697 = vunpack.c.l.b16 %v889
        %v4698 = vunpack.c.h.b16 %v889
        %v4699 = vunpack.c.l.b16 %v890
        %v4700 = vunpack.c.h.b16 %v890
        %v4701 = vunpack.c.l.b16 %v891
        %v4702 = vunpack.c.h.b16 %v891
        %v4703 = vunpack.c.l.b16 %v892
        %v4704 = vunpack.c.h.b16 %v892
        %v4705 = vunpack.c.l.b16 %v893
        %v4706 = vunpack.c.h.b16 %v893
        %v4707 = vunpack.c.l.b16 %v894
        %v4708 = vunpack.c.h.b16 %v894
        %v4709 = vunpack.c.l.b16 %v895
        %v4710 = vunpack.c.h.b16 %v895
        %v4711 = vunpack.c.l.b16 %v896
        %v4712 = vunpack.c.h.b16 %v896
        %v4713 = vunpack.c.l.b16 %v897
        %v4714 = vunpack.c.h.b16 %v897
        %v4715 = vunpack.c.l.b16 %v898
        %v4716 = vunpack.c.h.b16 %v898
        %v4717 = vunpack.c.l.b16 %v899
        %v4718 = vunpack.c.h.b16 %v899
        %v4719 = vunpack.c.l.b16 %v900
        %v4720 = vunpack.c.h.b16 %v900
        %v4721 = vunpack.c.l.b16 %v901
        %v4722 = vunpack.c.h.b16 %v901
        %v4723 = vunpack.c.l.b16 %v902
        %v4724 = vunpack.c.h.b16 %v902
        %v4725 = vunpack.c.l.b16 %v903
        %v4726 = vunpack.c.h.b16 %v903
        %v4727 = vunpack.c.l.b16 %v904
        %v4728 = vunpack.c.h.b16 %v904
        %v4729 = vunpack.c.l.b16 %v905
        %v4730 = vunpack.c.h.b16 %v905
        %v4731 = vunpack.c.l.b16 %v906
        %v4732 = vunpack.c.h.b16 %v906
        %v4733 = vunpack.c.l.b16 %v907
        %v4734 = vunpack.c.h.b16 %v907
        %v4735 = vunpack.c.l.b16 %v908
        %v4736 = vunpack.c.h.b16 %v908
        %v4737 = vunpack.c.l.b16 %v909
        %v4738 = vunpack.c.h.b16 %v909
        %v4739 = vunpack.c.l.b16 %v910
        %v4740 = vunpack.c.h.b16 %v910
        %v4741 = vunpack.c.l.b16 %v911
        %v4742 = vunpack.c.h.b16 %v911
        %v4743 = vunpack.c.l.b16 %v912
        %v4744 = vunpack.c.h.b16 %v912
        %v4745 = vunpack.c.l.b16 %v913
        %v4746 = vunpack.c.h.b16 %v913
        %v4747 = vunpack.c.l.b16 %v914
        %v4748 = vunpack.c.h.b16 %v914
        %v4749 = vunpack.c.l.b16 %v915
        %v4750 = vunpack.c.h.b16 %v915
        %v4751 = vunpack.c.l.b16 %v916
        %v4752 = vunpack.c.h.b16 %v916
        %v4753 = vunpack.c.l.b16 %v917
        %v4754 = vunpack.c.h.b16 %v917
        %v4755 = vunpack.c.l.b16 %v918
        %v4756 = vunpack.c.h.b16 %v918
        %v4757 = vunpack.c.l.b16 %v919
        %v4758 = vunpack.c.h.b16 %v919
        %v4759 = vunpack.c.l.b16 %v920
        %v4760 = vunpack.c.h.b16 %v920
        %v4761 = vunpack.c.l.b16 %v921
        %v4762 = vunpack.c.h.b16 %v921
        %v4763 = vunpack.c.l.b16 %v922
        %v4764 = vunpack.c.h.b16 %v922
        %v4765 = vunpack.c.l.b16 %v923
        %v4766 = vunpack.c.h.b16 %v923
        %v4767 = vunpack.c.l.b16 %v924
        %v4768 = vunpack.c.h.b16 %v924
        %v4769 = vunpack.c.l.b16 %v925
        %v4770 = vunpack.c.h.b16 %v925
        %v4771 = vunpack.c.l.b16 %v926
        %v4772 = vunpack.c.h.b16 %v926
        %v4773 = vunpack.c.l.b16 %v927
        %v4774 = vunpack.c.h.b16 %v927
        %v4775 = vunpack.c.l.b16 %v928
        %v4776 = vunpack.c.h.b16 %v928
        %v4777 = vunpack.c.l.b16 %v929
        %v4778 = vunpack.c.h.b16 %v929
        %v4779 = vunpack.c.l.b16 %v930
        %v4780 = vunpack.c.h.b16 %v930
        %v4781 = vunpack.c.l.b16 %v931
        %v4782 = vunpack.c.h.b16 %v931
        %v4783 = vunpack.c.l.b16 %v932
        %v4784 = vunpack.c.h.b16 %v932
        %v4785 = vunpack.c.l.b16 %v933
        %v4786 = vunpack.c.h.b16 %v933
        %v4787 = vunpack.c.l.b16 %v934
        %v4788 = vunpack.c.h.b16 %v934
        %v4789 = vunpack.c.l.b16 %v935
        %v4790 = vunpack.c.h.b16 %v935
        %v4791 = vunpack.c.l.b16 %v936
        %v4792 = vunpack.c.h.b16 %v936
        %v4793 = vunpack.c.l.b16 %v937
        %v4794 = vunpack.c.h.b16 %v937
        %v4795 = vunpack.c.l.b16 %v938
        %v4796 = vunpack.c.h.b16 %v938
        %v4797 = vunpack.c.l.b16 %v939
        %v4798 = vunpack.c.h.b16 %v939
        %v4799 = vunpack.c.l.b16 %v940
        %v4800 = vunpack.c.h.b16 %v940
        %v4801 = vunpack.c.l.b16 %v941
        %v4802 = vunpack.c.h.b16 %v941
        %v4803 = vunpack.c.l.b16 %v942
        %v4804 = vunpack.c.h.b16 %v942
        %v4805 = vunpack.c.l.b16 %v943
        %v4806 = vunpack.c.h.b16 %v943
        %v4807 = vunpack.c.l.b16 %v944
        %v4808 = vunpack.c.h.b16 %v944
        %v4809 = vunpack.c.l.b16 %v945
        %v4810 = vunpack.c.h.b16 %v945
        %v4811 = vunpack.c.l.b16 %v946
        %v4812 = vunpack.c.h.b16 %v946
        %v4813 = vunpack.c.l.b16 %v947
        %v4814 = vunpack.c.h.b16 %v947
        %v4815 = vunpack.c.l.b16 %v948
        %v4816 = vunpack.c.h.b16 %v948
        %v4817 = vunpack.c.l.b16 %v949
        %v4818 = vunpack.c.h.b16 %v949
        %v4819 = vunpack.c.l.b16 %v950
        %v4820 = vunpack.c.h.b16 %v950
        %v4821 = vunpack.c.l.b16 %v951
        %v4822 = vunpack.c.h.b16 %v951
        %v4823 = vunpack.c.l.b16 %v952
        %v4824 = vunpack.c.h.b16 %v952
        %v4825 = vunpack.c.l.b16 %v953
        %v4826 = vunpack.c.h.b16 %v953
        %v4827 = vunpack.c.l.b16 %v954
        %v4828 = vunpack.c.h.b16 %v954
        %v4829 = vunpack.c.l.b16 %v955
        %v4830 = vunpack.c.h.b16 %v955
        %v4831 = vunpack.c.l.b16 %v956
        %v4832 = vunpack.c.h.b16 %v956
        %v4833 = vunpack.c.l.b16 %v957
        %v4834 = vunpack.c.h.b16 %v957
        %v4835 = vunpack.c.l.b16 %v958
        %v4836 = vunpack.c.h.b16 %v958
        %v4837 = vunpack.c.l.b16 %v959
        %v4838 = vunpack.c.h.b16 %v959
        %v4839 = vunpack.c.l.b16 %v960
        %v4840 = vunpack.c.h.b16 %v960
        %v4841 = vunpack.c.l.b16 %v961
        %v4842 = vunpack.c.h.b16 %v961
        %v4843 = vunpack.c.l.b16 %v962
        %v4844 = vunpack.c.h.b16 %v962
        %v4845 = vunpack.c.l.b16 %v963
        %v4846 = vunpack.c.h.b16 %v963
        %v4847 = vunpack.c.l.b16 %v964
        %v4848 = vunpack.c.h.b16 %v964
        %v4849 = vunpack.c.l.b16 %v965
        %v4850 = vunpack.c.h.b16 %v965
        %v4851 = vunpack.c.l.b16 %v966
        %v4852 = vunpack.c.h.b16 %v966
        %v4853 = vunpack.c.l.b16 %v967
        %v4854 = vunpack.c.h.b16 %v967
        %v4855 = vunpack.c.l.b16 %v968
        %v4856 = vunpack.c.h.b16 %v968
        %v4857 = vunpack.c.l.b16 %v969
        %v4858 = vunpack.c.h.b16 %v969
        %v4859 = vunpack.c.l.b16 %v970
        %v4860 = vunpack.c.h.b16 %v970
        %v4861 = vunpack.c.l.b16 %v971
        %v4862 = vunpack.c.h.b16 %v971
        %v4863 = vunpack.c.l.b16 %v972
        %v4864 = vunpack.c.h.b16 %v972
        %v4865 = vunpack.c.l.b16 %v973
        %v4866 = vunpack.c.h.b16 %v973
        %v4867 = vunpack.c.l.b16 %v974
        %v4868 = vunpack.c.h.b16 %v974
        %v4869 = vunpack.c.l.b16 %v975
        %v4870 = vunpack.c.h.b16 %v975
        %v4871 = vunpack.c.l.b16 %v976
        %v4872 = vunpack.c.h.b16 %v976
        %v4873 = vunpack.c.l.b16 %v977
        %v4874 = vunpack.c.h.b16 %v977
        %v4875 = vunpack.c.l.b16 %v978
        %v4876 = vunpack.c.h.b16 %v978
        %v4877 = vunpack.c.l.b16 %v979
        %v4878 = vunpack.c.h.b16 %v979
        %v4879 = vunpack.c.l.b16 %v980
        %v4880 = vunpack.c.h.b16 %v980
        %v4881 = vunpack.c.l.b16 %v981
        %v4882 = vunpack.c.h.b16 %v981
        %v4883 = vpack.c.b16 %v4631, %v4627
        %v4884 = vpack.c.b16 %v4632, %v4628
        %v4885 = vpack.c.b16 %v4633, %v4629
        %v4886 = vpack.c.b16 %v4634, %v4630
        %v4887 = vpack.c.b16 %v4639, %v4635
        %v4888 = vpack.c.b16 %v4640, %v4636
        %v4889 = vpack.c.b16 %v4641, %v4637
        %v4890 = vpack.c.b16 %v4642, %v4638
        %v4891 = vpack.c.b16 %v4647, %v4643
        %v4892 = vpack.c.b16 %v4648, %v4644
        %v4893 = vpack.c.b16 %v4649, %v4645
        %v4894 = vpack.c.b16 %v4650, %v4646
        %v4895 = vpack.c.b16 %v4655, %v4651
        %v4896 = vpack.c.b16 %v4656, %v4652
        %v4897 = vpack.c.b16 %v4657, %v4653
        %v4898 = vpack.c.b16 %v4658, %v4654
        %v4899 = vpack.c.b16 %v4663, %v4659
        %v4900 = vpack.c.b16 %v4664, %v4660
        %v4901 = vpack.c.b16 %v4665, %v4661
        %v4902 = vpack.c.b16 %v4666, %v4662
        %v4903 = vpack.c.b16 %v4671, %v4667
        %v4904 = vpack.c.b16 %v4672, %v4668
        %v4905 = vpack.c.b16 %v4673, %v4669
        %v4906 = vpack.c.b16 %v4674, %v4670
        %v4907 = vpack.c.b16 %v4679, %v4675
        %v4908 = vpack.c.b16 %v4680, %v4676
        %v4909 = vpack.c.b16 %v4681, %v4677
        %v4910 = vpack.c.b16 %v4682, %v4678
        %v4911 = vpack.c.b16 %v4687, %v4683
        %v4912 = vpack.c.b16 %v4688, %v4684
        %v4913 = vpack.c.b16 %v4689, %v4685
        %v4914 = vpack.c.b16 %v4690, %v4686
        %v4915 = vpack.c.b16 %v4695, %v4691
        %v4916 = vpack.c.b16 %v4696, %v4692
        %v4917 = vpack.c.b16 %v4697, %v4693
        %v4918 = vpack.c.b16 %v4698, %v4694
        %v4919 = vpack.c.b16 %v4703, %v4699
        %v4920 = vpack.c.b16 %v4704, %v4700
        %v4921 = vpack.c.b16 %v4705, %v4701
        %v4922 = vpack.c.b16 %v4706, %v4702
        %v4923 = vpack.c.b16 %v4711, %v4707
        %v4924 = vpack.c.b16 %v4712, %v4708
        %v4925 = vpack.c.b16 %v4713, %v4709
        %v4926 = vpack.c.b16 %v4714, %v4710
        %v4927 = vpack.c.b16 %v4719, %v4715
        %v4928 = vpack.c.b16 %v4720, %v4716
        %v4929 = vpack.c.b16 %v4721, %v4717
        %v4930 = vpack.c.b16 %v4722, %v4718
        %v4931 = vpack.c.b16 %v4727, %v4723
        %v4932 = vpack.c.b16 %v4728, %v4724
        %v4933 = vpack.c.b16 %v4729, %v4725
        %v4934 = vpack.c.b16 %v4730, %v4726
        %v4935 = vpack.c.b16 %v4735, %v4731
        %v4936 = vpack.c.b16 %v4736, %v4732
        %v4937 = vpack.c.b16 %v4737, %v4733
        %v4938 = vpack.c.b16 %v4738, %v4734
        %v4939 = vpack.c.b16 %v4743, %v4739
        %v4940 = vpack.c.b16 %v4744, %v4740
        %v4941 = vpack.c.b16 %v4745, %v4741
        %v4942 = vpack.c.b16 %v4746, %v4742
        %v4943 = vpack.c.b16 %v4751, %v4747
        %v4944 = vpack.c.b16 %v4752, %v4748
        %v4945 = vpack.c.b16 %v4753, %v4749
        %v4946 = vpack.c.b16 %v4754, %v4750
        %v4947 = vpack.c.b16 %v4759, %v4755
        %v4948 = vpack.c.b16 %v4760, %v4756
        %v4949 = vpack.c.b16 %v4761, %v4757
        %v4950 = vpack.c.b16 %v4762, %v4758
        %v4951 = vpack.c.b16 %v4767, %v4763
        %v4952 = vpack.c.b16 %v4768, %v4764
        %v4953 = vpack.c.b16 %v4769, %v4765
        %v4954 = vpack.c.b16 %v4770, %v4766
        %v4955 = vpack.c.b16 %v4775, %v4771
        %v4956 = vpack.c.b16 %v4776, %v4772
        %v4957 = vpack.c.b16 %v4777, %v4773
        %v4958 = vpack.c.b16 %v4778, %v4774
        %v4959 = vpack.c.b16 %v4783, %v4779
        %v4960 = vpack.c.b16 %v4784, %v4780
        %v4961 = vpack.c.b16 %v4785, %v4781
        %v4962 = vpack.c.b16 %v4786, %v4782
        %v4963 = vpack.c.b16 %v4791, %v4787
        %v4964 = vpack.c.b16 %v4792, %v4788
        %v4965 = vpack.c.b16 %v4793, %v4789
        %v4966 = vpack.c.b16 %v4794, %v4790
        %v4967 = vpack.c.b16 %v4799, %v4795
        %v4968 = vpack.c.b16 %v4800, %v4796
        %v4969 = vpack.c.b16 %v4801, %v4797
        %v4970 = vpack.c.b16 %v4802, %v4798
        %v4971 = vpack.c.b16 %v4807, %v4803
        %v4972 = vpack.c.b16 %v4808, %v4804
        %v4973 = vpack.c.b16 %v4809, %v4805
        %v4974 = vpack.c.b16 %v4810, %v4806
        %v4975 = vpack.c.b16 %v4815, %v4811
        %v4976 = vpack.c.b16 %v4816, %v4812
        %v4977 = vpack.c.b16 %v4817, %v4813
        %v4978 = vpack.c.b16 %v4818, %v4814
        %v4979 = vpack.c.b16 %v4823, %v4819
        %v4980 = vpack.c.b16 %v4824, %v4820
        %v4981 = vpack.c.b16 %v4825, %v4821
        %v4982 = vpack.c.b16 %v4826, %v4822
        %v4983 = vpack.c.b16 %v4831, %v4827
        %v4984 = vpack.c.b16 %v4832, %v4828
        %v4985 = vpack.c.b16 %v4833, %v4829
        %v4986 = vpack.c.b16 %v4834, %v4830
        %v4987 = vpack.c.b16 %v4839, %v4835
        %v4988 = vpack.c.b16 %v4840, %v4836
        %v4989 = vpack.c.b16 %v4841, %v4837
        %v4990 = vpack.c.b16 %v4842, %v4838
        %v4991 = vpack.c.b16 %v4847, %v4843
        %v4992 = vpack.c.b16 %v4848, %v4844
        %v4993 = vpack.c.b16 %v4849, %v4845
        %v4994 = vpack.c.b16 %v4850, %v4846
        %v4995 = vpack.c.b16 %v4855, %v4851
        %v4996 = vpack.c.b16 %v4856, %v4852
        %v4997 = vpack.c.b16 %v4857, %v4853
        %v4998 = vpack.c.b16 %v4858, %v4854
        %v4999 = vpack.c.b16 %v4863, %v4859
        %v5000 = vpack.c.b16 %v4864, %v4860
        %v5001 = vpack.c.b16 %v4865, %v4861
        %v5002 = vpack.c.b16 %v4866, %v4862
        %v5003 = vpack.c.b16 %v4871, %v4867
        %v5004 = vpack.c.b16 %v4872, %v4868
        %v5005 = vpack.c.b16 %v4873, %v4869
        %v5006 = vpack.c.b16 %v4874, %v4870
        %v5007 = vpack.c.b16 %v4879, %v4875
        %v5008 = vpack.c.b16 %v4880, %v4876
        %v5009 = vpack.c.b16 %v4881, %v4877
        %v5010 = vpack.c.b16 %v4882, %v4878
        %5139 = vmatpush.bf16.msra.mxu0 %v4911
        %5140 = vmatpush.bf16.msra.mxu0 %v4907
        %5141 = vmatpush.bf16.msra.mxu0 %v4903
        %5142 = vmatpush.bf16.msra.mxu0 %v4899
        %5143 = vmatpush.bf16.msra.mxu0 %v4895
        %5144 = vmatpush.bf16.msra.mxu0 %v4891
        %5145 = vmatpush.bf16.msra.mxu0 %v4887
        %5146 = vmatpush.bf16.msra.mxu0 %v4883
        %5147 = vmatmul.bf16.gmra.mxu0 %v4435
        %v5148 = vpop.f32.mrf.mxu0
        %v5149 = vadd.f32 %v4331, %v5148
        %v5150 = vpop.f32.mrf.mxu0
        %v5151 = vadd.f32 %v4331, %v5150
        %5152 = vmatmul.bf16.gmra.mxu0 %v4439
        %v5153 = vpop.f32.mrf.mxu0
        %v5154 = vadd.f32 %v4331, %v5153
        %v5155 = vpop.f32.mrf.mxu0
        %v5156 = vadd.f32 %v4331, %v5155
        %5157 = vmatmul.bf16.gmra.mxu0 %v4443
        %v5158 = vpop.f32.mrf.mxu0
        %v5159 = vadd.f32 %v4331, %v5158
        %v5160 = vpop.f32.mrf.mxu0
        %v5161 = vadd.f32 %v4331, %v5160
        %5162 = vmatmul.bf16.gmra.mxu0 %v4447
        %v5163 = vpop.f32.mrf.mxu0
        %v5164 = vadd.f32 %v4331, %v5163
        %v5165 = vpop.f32.mrf.mxu0
        %v5166 = vadd.f32 %v4331, %v5165
        %5167 = vmatmul.bf16.gmra.mxu0 %v4451
        %v5168 = vpop.f32.mrf.mxu0
        %v5169 = vadd.f32 %v4331, %v5168
        %v5170 = vpop.f32.mrf.mxu0
        %v5171 = vadd.f32 %v4331, %v5170
        %5172 = vmatmul.bf16.gmra.mxu0 %v4455
        %v5173 = vpop.f32.mrf.mxu0
        %v5174 = vadd.f32 %v4331, %v5173
        %v5175 = vpop.f32.mrf.mxu0
        %v5176 = vadd.f32 %v4331, %v5175
        %5177 = vmatmul.bf16.gmra.mxu0 %v4459
        %v5178 = vpop.f32.mrf.mxu0
        %v5179 = vadd.f32 %v4331, %v5178
        %v5180 = vpop.f32.mrf.mxu0
        %v5181 = vadd.f32 %v4331, %v5180
        %5182 = vmatmul.bf16.gmra.mxu0 %v4463
        %v5183 = vpop.f32.mrf.mxu0
        %v5184 = vadd.f32 %v4331, %v5183
        %v5185 = vpop.f32.mrf.mxu0
        %v5186 = vadd.f32 %v4331, %v5185
        %5187 = vdwg.mxu0
        %5188 = vmatpush.bf16.msra.mxu0 %v4943
        %5189 = vmatpush.bf16.msra.mxu0 %v4939
        %5190 = vmatpush.bf16.msra.mxu0 %v4935
        %5191 = vmatpush.bf16.msra.mxu0 %v4931
        %5192 = vmatpush.bf16.msra.mxu0 %v4927
        %5193 = vmatpush.bf16.msra.mxu0 %v4923
        %5194 = vmatpush.bf16.msra.mxu0 %v4919
        %5195 = vmatpush.bf16.msra.mxu0 %v4915
        %5196 = vmatmul.bf16.gmra.mxu0 %v4436
        %v5197 = vpop.f32.mrf.mxu0
        %v5198 = vadd.f32 %v5149, %v5197
        %v5199 = vpop.f32.mrf.mxu0
        %v5200 = vadd.f32 %v5151, %v5199
        %5201 = vmatmul.bf16.gmra.mxu0 %v4440
        %v5202 = vpop.f32.mrf.mxu0
        %v5203 = vadd.f32 %v5154, %v5202
        %v5204 = vpop.f32.mrf.mxu0
        %v5205 = vadd.f32 %v5156, %v5204
        %5206 = vmatmul.bf16.gmra.mxu0 %v4444
        %v5207 = vpop.f32.mrf.mxu0
        %v5208 = vadd.f32 %v5159, %v5207
        %v5209 = vpop.f32.mrf.mxu0
        %v5210 = vadd.f32 %v5161, %v5209
        %5211 = vmatmul.bf16.gmra.mxu0 %v4448
        %v5212 = vpop.f32.mrf.mxu0
        %v5213 = vadd.f32 %v5164, %v5212
        %v5214 = vpop.f32.mrf.mxu0
        %v5215 = vadd.f32 %v5166, %v5214
        %5216 = vmatmul.bf16.gmra.mxu0 %v4452
        %v5217 = vpop.f32.mrf.mxu0
        %v5218 = vadd.f32 %v5169, %v5217
        %v5219 = vpop.f32.mrf.mxu0
        %v5220 = vadd.f32 %v5171, %v5219
        %5221 = vmatmul.bf16.gmra.mxu0 %v4456
        %v5222 = vpop.f32.mrf.mxu0
        %v5223 = vadd.f32 %v5174, %v5222
        %v5224 = vpop.f32.mrf.mxu0
        %v5225 = vadd.f32 %v5176, %v5224
        %5226 = vmatmul.bf16.gmra.mxu0 %v4460
        %v5227 = vpop.f32.mrf.mxu0
        %v5228 = vadd.f32 %v5179, %v5227
        %v5229 = vpop.f32.mrf.mxu0
        %v5230 = vadd.f32 %v5181, %v5229
        %5231 = vmatmul.bf16.gmra.mxu0 %v4464
        %v5232 = vpop.f32.mrf.mxu0
        %v5233 = vadd.f32 %v5184, %v5232
        %v5234 = vpop.f32.mrf.mxu0
        %v5235 = vadd.f32 %v5186, %v5234
        %5236 = vdwg.mxu0
        %5237 = vmatpush.bf16.msra.mxu0 %v4975
        %5238 = vmatpush.bf16.msra.mxu0 %v4971
        %5239 = vmatpush.bf16.msra.mxu0 %v4967
        %5240 = vmatpush.bf16.msra.mxu0 %v4963
        %5241 = vmatpush.bf16.msra.mxu0 %v4959
        %5242 = vmatpush.bf16.msra.mxu0 %v4955
        %5243 = vmatpush.bf16.msra.mxu0 %v4951
        %5244 = vmatpush.bf16.msra.mxu0 %v4947
        %5245 = vmatmul.bf16.gmra.mxu0 %v4437
        %v5246 = vpop.f32.mrf.mxu0
        %v5247 = vadd.f32 %v5198, %v5246
        %v5248 = vpop.f32.mrf.mxu0
        %v5249 = vadd.f32 %v5200, %v5248
        %5250 = vmatmul.bf16.gmra.mxu0 %v4441
        %v5251 = vpop.f32.mrf.mxu0
        %v5252 = vadd.f32 %v5203, %v5251
        %v5253 = vpop.f32.mrf.mxu0
        %v5254 = vadd.f32 %v5205, %v5253
        %5255 = vmatmul.bf16.gmra.mxu0 %v4445
        %v5256 = vpop.f32.mrf.mxu0
        %v5257 = vadd.f32 %v5208, %v5256
        %v5258 = vpop.f32.mrf.mxu0
        %v5259 = vadd.f32 %v5210, %v5258
        %5260 = vmatmul.bf16.gmra.mxu0 %v4449
        %v5261 = vpop.f32.mrf.mxu0
        %v5262 = vadd.f32 %v5213, %v5261
        %v5263 = vpop.f32.mrf.mxu0
        %v5264 = vadd.f32 %v5215, %v5263
        %5265 = vmatmul.bf16.gmra.mxu0 %v4453
        %v5266 = vpop.f32.mrf.mxu0
        %v5267 = vadd.f32 %v5218, %v5266
        %v5268 = vpop.f32.mrf.mxu0
        %v5269 = vadd.f32 %v5220, %v5268
        %5270 = vmatmul.bf16.gmra.mxu0 %v4457
        %v5271 = vpop.f32.mrf.mxu0
        %v5272 = vadd.f32 %v5223, %v5271
        %v5273 = vpop.f32.mrf.mxu0
        %v5274 = vadd.f32 %v5225, %v5273
        %5275 = vmatmul.bf16.gmra.mxu0 %v4461
        %v5276 = vpop.f32.mrf.mxu0
        %v5277 = vadd.f32 %v5228, %v5276
        %v5278 = vpop.f32.mrf.mxu0
        %v5279 = vadd.f32 %v5230, %v5278
        %5280 = vmatmul.bf16.gmra.mxu0 %v4465
        %v5281 = vpop.f32.mrf.mxu0
        %v5282 = vadd.f32 %v5233, %v5281
        %v5283 = vpop.f32.mrf.mxu0
        %v5284 = vadd.f32 %v5235, %v5283
        %5285 = vdwg.mxu0
        %5286 = vmatpush.bf16.msra.mxu0 %v5007
        %5287 = vmatpush.bf16.msra.mxu0 %v5003
        %5288 = vmatpush.bf16.msra.mxu0 %v4999
        %5289 = vmatpush.bf16.msra.mxu0 %v4995
        %5290 = vmatpush.bf16.msra.mxu0 %v4991
        %5291 = vmatpush.bf16.msra.mxu0 %v4987
        %5292 = vmatpush.bf16.msra.mxu0 %v4983
        %5293 = vmatpush.bf16.msra.mxu0 %v4979
        %5294 = vmatmul.bf16.gmra.mxu0 %v4438
        %v5295 = vpop.f32.mrf.mxu0
        %v5296 = vadd.f32 %v5247, %v5295
        %v5297 = vpop.f32.mrf.mxu0
        %v5298 = vadd.f32 %v5249, %v5297
        %5299 = vmatmul.bf16.gmra.mxu0 %v4442
        %v5300 = vpop.f32.mrf.mxu0
        %v5301 = vadd.f32 %v5252, %v5300
        %v5302 = vpop.f32.mrf.mxu0
        %v5303 = vadd.f32 %v5254, %v5302
        %5304 = vmatmul.bf16.gmra.mxu0 %v4446
        %v5305 = vpop.f32.mrf.mxu0
        %v5306 = vadd.f32 %v5257, %v5305
        %v5307 = vpop.f32.mrf.mxu0
        %v5308 = vadd.f32 %v5259, %v5307
        %5309 = vmatmul.bf16.gmra.mxu0 %v4450
        %v5310 = vpop.f32.mrf.mxu0
        %v5311 = vadd.f32 %v5262, %v5310
        %v5312 = vpop.f32.mrf.mxu0
        %v5313 = vadd.f32 %v5264, %v5312
        %5314 = vmatmul.bf16.gmra.mxu0 %v4454
        %v5315 = vpop.f32.mrf.mxu0
        %v5316 = vadd.f32 %v5267, %v5315
        %v5317 = vpop.f32.mrf.mxu0
        %v5318 = vadd.f32 %v5269, %v5317
        %5319 = vmatmul.bf16.gmra.mxu0 %v4458
        %v5320 = vpop.f32.mrf.mxu0
        %v5321 = vadd.f32 %v5272, %v5320
        %v5322 = vpop.f32.mrf.mxu0
        %v5323 = vadd.f32 %v5274, %v5322
        %5324 = vmatmul.bf16.gmra.mxu0 %v4462
        %v5325 = vpop.f32.mrf.mxu0
        %v5326 = vadd.f32 %v5277, %v5325
        %v5327 = vpop.f32.mrf.mxu0
        %v5328 = vadd.f32 %v5279, %v5327
        %5329 = vmatmul.bf16.gmra.mxu0 %v4466
        %v5330 = vpop.f32.mrf.mxu0
        %v5331 = vadd.f32 %v5282, %v5330
        %v5332 = vpop.f32.mrf.mxu0
        %v5333 = vadd.f32 %v5284, %v5332
        %5334 = vdwg.mxu0
        %5335 = vmatpush.bf16.msra.mxu0 %v4912
        %5336 = vmatpush.bf16.msra.mxu0 %v4908
        %5337 = vmatpush.bf16.msra.mxu0 %v4904
        %5338 = vmatpush.bf16.msra.mxu0 %v4900
        %5339 = vmatpush.bf16.msra.mxu0 %v4896
        %5340 = vmatpush.bf16.msra.mxu0 %v4892
        %5341 = vmatpush.bf16.msra.mxu0 %v4888
        %5342 = vmatpush.bf16.msra.mxu0 %v4884
        %5343 = vmatmul.bf16.gmra.mxu0 %v4435
        %v5344 = vpop.f32.mrf.mxu0
        %v5345 = vadd.f32 %v4332, %v5344
        %v5346 = vpop.f32.mrf.mxu0
        %v5347 = vadd.f32 %v4332, %v5346
        %5348 = vmatmul.bf16.gmra.mxu0 %v4439
        %v5349 = vpop.f32.mrf.mxu0
        %v5350 = vadd.f32 %v4332, %v5349
        %v5351 = vpop.f32.mrf.mxu0
        %v5352 = vadd.f32 %v4332, %v5351
        %5353 = vmatmul.bf16.gmra.mxu0 %v4443
        %v5354 = vpop.f32.mrf.mxu0
        %v5355 = vadd.f32 %v4332, %v5354
        %v5356 = vpop.f32.mrf.mxu0
        %v5357 = vadd.f32 %v4332, %v5356
        %5358 = vmatmul.bf16.gmra.mxu0 %v4447
        %v5359 = vpop.f32.mrf.mxu0
        %v5360 = vadd.f32 %v4332, %v5359
        %v5361 = vpop.f32.mrf.mxu0
        %v5362 = vadd.f32 %v4332, %v5361
        %5363 = vmatmul.bf16.gmra.mxu0 %v4451
        %v5364 = vpop.f32.mrf.mxu0
        %v5365 = vadd.f32 %v4332, %v5364
        %v5366 = vpop.f32.mrf.mxu0
        %v5367 = vadd.f32 %v4332, %v5366
        %5368 = vmatmul.bf16.gmra.mxu0 %v4455
        %v5369 = vpop.f32.mrf.mxu0
        %v5370 = vadd.f32 %v4332, %v5369
        %v5371 = vpop.f32.mrf.mxu0
        %v5372 = vadd.f32 %v4332, %v5371
        %5373 = vmatmul.bf16.gmra.mxu0 %v4459
        %v5374 = vpop.f32.mrf.mxu0
        %v5375 = vadd.f32 %v4332, %v5374
        %v5376 = vpop.f32.mrf.mxu0
        %v5377 = vadd.f32 %v4332, %v5376
        %5378 = vmatmul.bf16.gmra.mxu0 %v4463
        %v5379 = vpop.f32.mrf.mxu0
        %v5380 = vadd.f32 %v4332, %v5379
        %v5381 = vpop.f32.mrf.mxu0
        %v5382 = vadd.f32 %v4332, %v5381
        %5383 = vdwg.mxu0
        %5384 = vmatpush.bf16.msra.mxu0 %v4944
        %5385 = vmatpush.bf16.msra.mxu0 %v4940
        %5386 = vmatpush.bf16.msra.mxu0 %v4936
        %5387 = vmatpush.bf16.msra.mxu0 %v4932
        %5388 = vmatpush.bf16.msra.mxu0 %v4928
        %5389 = vmatpush.bf16.msra.mxu0 %v4924
        %5390 = vmatpush.bf16.msra.mxu0 %v4920
        %5391 = vmatpush.bf16.msra.mxu0 %v4916
        %5392 = vmatmul.bf16.gmra.mxu0 %v4436
        %v5393 = vpop.f32.mrf.mxu0
        %v5394 = vadd.f32 %v5345, %v5393
        %v5395 = vpop.f32.mrf.mxu0
        %v5396 = vadd.f32 %v5347, %v5395
        %5397 = vmatmul.bf16.gmra.mxu0 %v4440
        %v5398 = vpop.f32.mrf.mxu0
        %v5399 = vadd.f32 %v5350, %v5398
        %v5400 = vpop.f32.mrf.mxu0
        %v5401 = vadd.f32 %v5352, %v5400
        %5402 = vmatmul.bf16.gmra.mxu0 %v4444
        %v5403 = vpop.f32.mrf.mxu0
        %v5404 = vadd.f32 %v5355, %v5403
        %v5405 = vpop.f32.mrf.mxu0
        %v5406 = vadd.f32 %v5357, %v5405
        %5407 = vmatmul.bf16.gmra.mxu0 %v4448
        %v5408 = vpop.f32.mrf.mxu0
        %v5409 = vadd.f32 %v5360, %v5408
        %v5410 = vpop.f32.mrf.mxu0
        %v5411 = vadd.f32 %v5362, %v5410
        %5412 = vmatmul.bf16.gmra.mxu0 %v4452
        %v5413 = vpop.f32.mrf.mxu0
        %v5414 = vadd.f32 %v5365, %v5413
        %v5415 = vpop.f32.mrf.mxu0
        %v5416 = vadd.f32 %v5367, %v5415
        %5417 = vmatmul.bf16.gmra.mxu0 %v4456
        %v5418 = vpop.f32.mrf.mxu0
        %v5419 = vadd.f32 %v5370, %v5418
        %v5420 = vpop.f32.mrf.mxu0
        %v5421 = vadd.f32 %v5372, %v5420
        %5422 = vmatmul.bf16.gmra.mxu0 %v4460
        %v5423 = vpop.f32.mrf.mxu0
        %v5424 = vadd.f32 %v5375, %v5423
        %v5425 = vpop.f32.mrf.mxu0
        %v5426 = vadd.f32 %v5377, %v5425
        %5427 = vmatmul.bf16.gmra.mxu0 %v4464
        %v5428 = vpop.f32.mrf.mxu0
        %v5429 = vadd.f32 %v5380, %v5428
        %v5430 = vpop.f32.mrf.mxu0
        %v5431 = vadd.f32 %v5382, %v5430
        %5432 = vdwg.mxu0
        %5433 = vmatpush.bf16.msra.mxu0 %v4976
        %5434 = vmatpush.bf16.msra.mxu0 %v4972
        %5435 = vmatpush.bf16.msra.mxu0 %v4968
        %5436 = vmatpush.bf16.msra.mxu0 %v4964
        %5437 = vmatpush.bf16.msra.mxu0 %v4960
        %5438 = vmatpush.bf16.msra.mxu0 %v4956
        %5439 = vmatpush.bf16.msra.mxu0 %v4952
        %5440 = vmatpush.bf16.msra.mxu0 %v4948
        %5441 = vmatmul.bf16.gmra.mxu0 %v4437
        %v5442 = vpop.f32.mrf.mxu0
        %v5443 = vadd.f32 %v5394, %v5442
        %v5444 = vpop.f32.mrf.mxu0
        %v5445 = vadd.f32 %v5396, %v5444
        %5446 = vmatmul.bf16.gmra.mxu0 %v4441
        %v5447 = vpop.f32.mrf.mxu0
        %v5448 = vadd.f32 %v5399, %v5447
        %v5449 = vpop.f32.mrf.mxu0
        %v5450 = vadd.f32 %v5401, %v5449
        %5451 = vmatmul.bf16.gmra.mxu0 %v4445
        %v5452 = vpop.f32.mrf.mxu0
        %v5453 = vadd.f32 %v5404, %v5452
        %v5454 = vpop.f32.mrf.mxu0
        %v5455 = vadd.f32 %v5406, %v5454
        %5456 = vmatmul.bf16.gmra.mxu0 %v4449
        %v5457 = vpop.f32.mrf.mxu0
        %v5458 = vadd.f32 %v5409, %v5457
        %v5459 = vpop.f32.mrf.mxu0
        %v5460 = vadd.f32 %v5411, %v5459
        %5461 = vmatmul.bf16.gmra.mxu0 %v4453
        %v5462 = vpop.f32.mrf.mxu0
        %v5463 = vadd.f32 %v5414, %v5462
        %v5464 = vpop.f32.mrf.mxu0
        %v5465 = vadd.f32 %v5416, %v5464
        %5466 = vmatmul.bf16.gmra.mxu0 %v4457
        %v5467 = vpop.f32.mrf.mxu0
        %v5468 = vadd.f32 %v5419, %v5467
        %v5469 = vpop.f32.mrf.mxu0
        %v5470 = vadd.f32 %v5421, %v5469
        %5471 = vmatmul.bf16.gmra.mxu0 %v4461
        %v5472 = vpop.f32.mrf.mxu0
        %v5473 = vadd.f32 %v5424, %v5472
        %v5474 = vpop.f32.mrf.mxu0
        %v5475 = vadd.f32 %v5426, %v5474
        %5476 = vmatmul.bf16.gmra.mxu0 %v4465
        %v5477 = vpop.f32.mrf.mxu0
        %v5478 = vadd.f32 %v5429, %v5477
        %v5479 = vpop.f32.mrf.mxu0
        %v5480 = vadd.f32 %v5431, %v5479
        %5481 = vdwg.mxu0
        %5482 = vmatpush.bf16.msra.mxu0 %v5008
        %5483 = vmatpush.bf16.msra.mxu0 %v5004
        %5484 = vmatpush.bf16.msra.mxu0 %v5000
        %5485 = vmatpush.bf16.msra.mxu0 %v4996
        %5486 = vmatpush.bf16.msra.mxu0 %v4992
        %5487 = vmatpush.bf16.msra.mxu0 %v4988
        %5488 = vmatpush.bf16.msra.mxu0 %v4984
        %5489 = vmatpush.bf16.msra.mxu0 %v4980
        %5490 = vmatmul.bf16.gmra.mxu0 %v4438
        %v5491 = vpop.f32.mrf.mxu0
        %v5492 = vadd.f32 %v5443, %v5491
        %v5493 = vpop.f32.mrf.mxu0
        %v5494 = vadd.f32 %v5445, %v5493
        %5495 = vmatmul.bf16.gmra.mxu0 %v4442
        %v5496 = vpop.f32.mrf.mxu0
        %v5497 = vadd.f32 %v5448, %v5496
        %v5498 = vpop.f32.mrf.mxu0
        %v5499 = vadd.f32 %v5450, %v5498
        %5500 = vmatmul.bf16.gmra.mxu0 %v4446
        %v5501 = vpop.f32.mrf.mxu0
        %v5502 = vadd.f32 %v5453, %v5501
        %v5503 = vpop.f32.mrf.mxu0
        %v5504 = vadd.f32 %v5455, %v5503
        %5505 = vmatmul.bf16.gmra.mxu0 %v4450
        %v5506 = vpop.f32.mrf.mxu0
        %v5507 = vadd.f32 %v5458, %v5506
        %v5508 = vpop.f32.mrf.mxu0
        %v5509 = vadd.f32 %v5460, %v5508
        %5510 = vmatmul.bf16.gmra.mxu0 %v4454
        %v5511 = vpop.f32.mrf.mxu0
        %v5512 = vadd.f32 %v5463, %v5511
        %v5513 = vpop.f32.mrf.mxu0
        %v5514 = vadd.f32 %v5465, %v5513
        %5515 = vmatmul.bf16.gmra.mxu0 %v4458
        %v5516 = vpop.f32.mrf.mxu0
        %v5517 = vadd.f32 %v5468, %v5516
        %v5518 = vpop.f32.mrf.mxu0
        %v5519 = vadd.f32 %v5470, %v5518
        %5520 = vmatmul.bf16.gmra.mxu0 %v4462
        %v5521 = vpop.f32.mrf.mxu0
        %v5522 = vadd.f32 %v5473, %v5521
        %v5523 = vpop.f32.mrf.mxu0
        %v5524 = vadd.f32 %v5475, %v5523
        %5525 = vmatmul.bf16.gmra.mxu0 %v4466
        %v5526 = vpop.f32.mrf.mxu0
        %v5527 = vadd.f32 %v5478, %v5526
        %v5528 = vpop.f32.mrf.mxu0
        %v5529 = vadd.f32 %v5480, %v5528
        %5530 = vdwg.mxu0
        %5531 = vmatpush.bf16.msra.mxu0 %v4913
        %5532 = vmatpush.bf16.msra.mxu0 %v4909
        %5533 = vmatpush.bf16.msra.mxu0 %v4905
        %5534 = vmatpush.bf16.msra.mxu0 %v4901
        %5535 = vmatpush.bf16.msra.mxu0 %v4897
        %5536 = vmatpush.bf16.msra.mxu0 %v4893
        %5537 = vmatpush.bf16.msra.mxu0 %v4889
        %5538 = vmatpush.bf16.msra.mxu0 %v4885
        %5539 = vmatmul.bf16.gmra.mxu0 %v4435
        %v5540 = vpop.f32.mrf.mxu0
        %v5541 = vadd.f32 %v4333, %v5540
        %v5542 = vpop.f32.mrf.mxu0
        %v5543 = vadd.f32 %v4333, %v5542
        %5544 = vmatmul.bf16.gmra.mxu0 %v4439
        %v5545 = vpop.f32.mrf.mxu0
        %v5546 = vadd.f32 %v4333, %v5545
        %v5547 = vpop.f32.mrf.mxu0
        %v5548 = vadd.f32 %v4333, %v5547
        %5549 = vmatmul.bf16.gmra.mxu0 %v4443
        %v5550 = vpop.f32.mrf.mxu0
        %v5551 = vadd.f32 %v4333, %v5550
        %v5552 = vpop.f32.mrf.mxu0
        %v5553 = vadd.f32 %v4333, %v5552
        %5554 = vmatmul.bf16.gmra.mxu0 %v4447
        %v5555 = vpop.f32.mrf.mxu0
        %v5556 = vadd.f32 %v4333, %v5555
        %v5557 = vpop.f32.mrf.mxu0
        %v5558 = vadd.f32 %v4333, %v5557
        %5559 = vmatmul.bf16.gmra.mxu0 %v4451
        %v5560 = vpop.f32.mrf.mxu0
        %v5561 = vadd.f32 %v4333, %v5560
        %v5562 = vpop.f32.mrf.mxu0
        %v5563 = vadd.f32 %v4333, %v5562
        %5564 = vmatmul.bf16.gmra.mxu0 %v4455
        %v5565 = vpop.f32.mrf.mxu0
        %v5566 = vadd.f32 %v4333, %v5565
        %v5567 = vpop.f32.mrf.mxu0
        %v5568 = vadd.f32 %v4333, %v5567
        %5569 = vmatmul.bf16.gmra.mxu0 %v4459
        %v5570 = vpop.f32.mrf.mxu0
        %v5571 = vadd.f32 %v4333, %v5570
        %v5572 = vpop.f32.mrf.mxu0
        %v5573 = vadd.f32 %v4333, %v5572
        %5574 = vmatmul.bf16.gmra.mxu0 %v4463
        %v5575 = vpop.f32.mrf.mxu0
        %v5576 = vadd.f32 %v4333, %v5575
        %v5577 = vpop.f32.mrf.mxu0
        %v5578 = vadd.f32 %v4333, %v5577
        %5579 = vdwg.mxu0
        %5580 = vmatpush.bf16.msra.mxu0 %v4945
        %5581 = vmatpush.bf16.msra.mxu0 %v4941
        %5582 = vmatpush.bf16.msra.mxu0 %v4937
        %5583 = vmatpush.bf16.msra.mxu0 %v4933
        %5584 = vmatpush.bf16.msra.mxu0 %v4929
        %5585 = vmatpush.bf16.msra.mxu0 %v4925
        %5586 = vmatpush.bf16.msra.mxu0 %v4921
        %5587 = vmatpush.bf16.msra.mxu0 %v4917
        %5588 = vmatmul.bf16.gmra.mxu0 %v4436
        %v5589 = vpop.f32.mrf.mxu0
        %v5590 = vadd.f32 %v5541, %v5589
        %v5591 = vpop.f32.mrf.mxu0
        %v5592 = vadd.f32 %v5543, %v5591
        %5593 = vmatmul.bf16.gmra.mxu0 %v4440
        %v5594 = vpop.f32.mrf.mxu0
        %v5595 = vadd.f32 %v5546, %v5594
        %v5596 = vpop.f32.mrf.mxu0
        %v5597 = vadd.f32 %v5548, %v5596
        %5598 = vmatmul.bf16.gmra.mxu0 %v4444
        %v5599 = vpop.f32.mrf.mxu0
        %v5600 = vadd.f32 %v5551, %v5599
        %v5601 = vpop.f32.mrf.mxu0
        %v5602 = vadd.f32 %v5553, %v5601
        %5603 = vmatmul.bf16.gmra.mxu0 %v4448
        %v5604 = vpop.f32.mrf.mxu0
        %v5605 = vadd.f32 %v5556, %v5604
        %v5606 = vpop.f32.mrf.mxu0
        %v5607 = vadd.f32 %v5558, %v5606
        %5608 = vmatmul.bf16.gmra.mxu0 %v4452
        %v5609 = vpop.f32.mrf.mxu0
        %v5610 = vadd.f32 %v5561, %v5609
        %v5611 = vpop.f32.mrf.mxu0
        %v5612 = vadd.f32 %v5563, %v5611
        %5613 = vmatmul.bf16.gmra.mxu0 %v4456
        %v5614 = vpop.f32.mrf.mxu0
        %v5615 = vadd.f32 %v5566, %v5614
        %v5616 = vpop.f32.mrf.mxu0
        %v5617 = vadd.f32 %v5568, %v5616
        %5618 = vmatmul.bf16.gmra.mxu0 %v4460
        %v5619 = vpop.f32.mrf.mxu0
        %v5620 = vadd.f32 %v5571, %v5619
        %v5621 = vpop.f32.mrf.mxu0
        %v5622 = vadd.f32 %v5573, %v5621
        %5623 = vmatmul.bf16.gmra.mxu0 %v4464
        %v5624 = vpop.f32.mrf.mxu0
        %v5625 = vadd.f32 %v5576, %v5624
        %v5626 = vpop.f32.mrf.mxu0
        %v5627 = vadd.f32 %v5578, %v5626
        %5628 = vdwg.mxu0
        %5629 = vmatpush.bf16.msra.mxu0 %v4977
        %5630 = vmatpush.bf16.msra.mxu0 %v4973
        %5631 = vmatpush.bf16.msra.mxu0 %v4969
        %5632 = vmatpush.bf16.msra.mxu0 %v4965
        %5633 = vmatpush.bf16.msra.mxu0 %v4961
        %5634 = vmatpush.bf16.msra.mxu0 %v4957
        %5635 = vmatpush.bf16.msra.mxu0 %v4953
        %5636 = vmatpush.bf16.msra.mxu0 %v4949
        %5637 = vmatmul.bf16.gmra.mxu0 %v4437
        %v5638 = vpop.f32.mrf.mxu0
        %v5639 = vadd.f32 %v5590, %v5638
        %v5640 = vpop.f32.mrf.mxu0
        %v5641 = vadd.f32 %v5592, %v5640
        %5642 = vmatmul.bf16.gmra.mxu0 %v4441
        %v5643 = vpop.f32.mrf.mxu0
        %v5644 = vadd.f32 %v5595, %v5643
        %v5645 = vpop.f32.mrf.mxu0
        %v5646 = vadd.f32 %v5597, %v5645
        %5647 = vmatmul.bf16.gmra.mxu0 %v4445
        %v5648 = vpop.f32.mrf.mxu0
        %v5649 = vadd.f32 %v5600, %v5648
        %v5650 = vpop.f32.mrf.mxu0
        %v5651 = vadd.f32 %v5602, %v5650
        %5652 = vmatmul.bf16.gmra.mxu0 %v4449
        %v5653 = vpop.f32.mrf.mxu0
        %v5654 = vadd.f32 %v5605, %v5653
        %v5655 = vpop.f32.mrf.mxu0
        %v5656 = vadd.f32 %v5607, %v5655
        %5657 = vmatmul.bf16.gmra.mxu0 %v4453
        %v5658 = vpop.f32.mrf.mxu0
        %v5659 = vadd.f32 %v5610, %v5658
        %v5660 = vpop.f32.mrf.mxu0
        %v5661 = vadd.f32 %v5612, %v5660
        %5662 = vmatmul.bf16.gmra.mxu0 %v4457
        %v5663 = vpop.f32.mrf.mxu0
        %v5664 = vadd.f32 %v5615, %v5663
        %v5665 = vpop.f32.mrf.mxu0
        %v5666 = vadd.f32 %v5617, %v5665
        %5667 = vmatmul.bf16.gmra.mxu0 %v4461
        %v5668 = vpop.f32.mrf.mxu0
        %v5669 = vadd.f32 %v5620, %v5668
        %v5670 = vpop.f32.mrf.mxu0
        %v5671 = vadd.f32 %v5622, %v5670
        %5672 = vmatmul.bf16.gmra.mxu0 %v4465
        %v5673 = vpop.f32.mrf.mxu0
        %v5674 = vadd.f32 %v5625, %v5673
        %v5675 = vpop.f32.mrf.mxu0
        %v5676 = vadd.f32 %v5627, %v5675
        %5677 = vdwg.mxu0
        %5678 = vmatpush.bf16.msra.mxu0 %v5009
        %5679 = vmatpush.bf16.msra.mxu0 %v5005
        %5680 = vmatpush.bf16.msra.mxu0 %v5001
        %5681 = vmatpush.bf16.msra.mxu0 %v4997
        %5682 = vmatpush.bf16.msra.mxu0 %v4993
        %5683 = vmatpush.bf16.msra.mxu0 %v4989
        %5684 = vmatpush.bf16.msra.mxu0 %v4985
        %5685 = vmatpush.bf16.msra.mxu0 %v4981
        %5686 = vmatmul.bf16.gmra.mxu0 %v4438
        %v5687 = vpop.f32.mrf.mxu0
        %v5688 = vadd.f32 %v5639, %v5687
        %v5689 = vpop.f32.mrf.mxu0
        %v5690 = vadd.f32 %v5641, %v5689
        %5691 = vmatmul.bf16.gmra.mxu0 %v4442
        %v5692 = vpop.f32.mrf.mxu0
        %v5693 = vadd.f32 %v5644, %v5692
        %v5694 = vpop.f32.mrf.mxu0
        %v5695 = vadd.f32 %v5646, %v5694
        %5696 = vmatmul.bf16.gmra.mxu0 %v4446
        %v5697 = vpop.f32.mrf.mxu0
        %v5698 = vadd.f32 %v5649, %v5697
        %v5699 = vpop.f32.mrf.mxu0
        %v5700 = vadd.f32 %v5651, %v5699
        %5701 = vmatmul.bf16.gmra.mxu0 %v4450
        %v5702 = vpop.f32.mrf.mxu0
        %v5703 = vadd.f32 %v5654, %v5702
        %v5704 = vpop.f32.mrf.mxu0
        %v5705 = vadd.f32 %v5656, %v5704
        %5706 = vmatmul.bf16.gmra.mxu0 %v4454
        %v5707 = vpop.f32.mrf.mxu0
        %v5708 = vadd.f32 %v5659, %v5707
        %v5709 = vpop.f32.mrf.mxu0
        %v5710 = vadd.f32 %v5661, %v5709
        %5711 = vmatmul.bf16.gmra.mxu0 %v4458
        %v5712 = vpop.f32.mrf.mxu0
        %v5713 = vadd.f32 %v5664, %v5712
        %v5714 = vpop.f32.mrf.mxu0
        %v5715 = vadd.f32 %v5666, %v5714
        %5716 = vmatmul.bf16.gmra.mxu0 %v4462
        %v5717 = vpop.f32.mrf.mxu0
        %v5718 = vadd.f32 %v5669, %v5717
        %v5719 = vpop.f32.mrf.mxu0
        %v5720 = vadd.f32 %v5671, %v5719
        %5721 = vmatmul.bf16.gmra.mxu0 %v4466
        %v5722 = vpop.f32.mrf.mxu0
        %v5723 = vadd.f32 %v5674, %v5722
        %v5724 = vpop.f32.mrf.mxu0
        %v5725 = vadd.f32 %v5676, %v5724
        %5726 = vdwg.mxu0
        %5727 = vmatpush.bf16.msra.mxu0 %v4914
        %5728 = vmatpush.bf16.msra.mxu0 %v4910
        %5729 = vmatpush.bf16.msra.mxu0 %v4906
        %5730 = vmatpush.bf16.msra.mxu0 %v4902
        %5731 = vmatpush.bf16.msra.mxu0 %v4898
        %5732 = vmatpush.bf16.msra.mxu0 %v4894
        %5733 = vmatpush.bf16.msra.mxu0 %v4890
        %5734 = vmatpush.bf16.msra.mxu0 %v4886
        %5735 = vmatmul.bf16.gmra.mxu0 %v4435
        %v5736 = vpop.f32.mrf.mxu0
        %v5737 = vadd.f32 %v4334, %v5736
        %v5738 = vpop.f32.mrf.mxu0
        %v5739 = vadd.f32 %v4334, %v5738
        %5740 = vmatmul.bf16.gmra.mxu0 %v4439
        %v5741 = vpop.f32.mrf.mxu0
        %v5742 = vadd.f32 %v4334, %v5741
        %v5743 = vpop.f32.mrf.mxu0
        %v5744 = vadd.f32 %v4334, %v5743
        %5745 = vmatmul.bf16.gmra.mxu0 %v4443
        %v5746 = vpop.f32.mrf.mxu0
        %v5747 = vadd.f32 %v4334, %v5746
        %v5748 = vpop.f32.mrf.mxu0
        %v5749 = vadd.f32 %v4334, %v5748
        %5750 = vmatmul.bf16.gmra.mxu0 %v4447
        %v5751 = vpop.f32.mrf.mxu0
        %v5752 = vadd.f32 %v4334, %v5751
        %v5753 = vpop.f32.mrf.mxu0
        %v5754 = vadd.f32 %v4334, %v5753
        %5755 = vmatmul.bf16.gmra.mxu0 %v4451
        %v5756 = vpop.f32.mrf.mxu0
        %v5757 = vadd.f32 %v4334, %v5756
        %v5758 = vpop.f32.mrf.mxu0
        %v5759 = vadd.f32 %v4334, %v5758
        %5760 = vmatmul.bf16.gmra.mxu0 %v4455
        %v5761 = vpop.f32.mrf.mxu0
        %v5762 = vadd.f32 %v4334, %v5761
        %v5763 = vpop.f32.mrf.mxu0
        %v5764 = vadd.f32 %v4334, %v5763
        %5765 = vmatmul.bf16.gmra.mxu0 %v4459
        %v5766 = vpop.f32.mrf.mxu0
        %v5767 = vadd.f32 %v4334, %v5766
        %v5768 = vpop.f32.mrf.mxu0
        %v5769 = vadd.f32 %v4334, %v5768
        %5770 = vmatmul.bf16.gmra.mxu0 %v4463
        %v5771 = vpop.f32.mrf.mxu0
        %v5772 = vadd.f32 %v4334, %v5771
        %v5773 = vpop.f32.mrf.mxu0
        %v5774 = vadd.f32 %v4334, %v5773
        %5775 = vdwg.mxu0
        %5776 = vmatpush.bf16.msra.mxu0 %v4946
        %5777 = vmatpush.bf16.msra.mxu0 %v4942
        %5778 = vmatpush.bf16.msra.mxu0 %v4938
        %5779 = vmatpush.bf16.msra.mxu0 %v4934
        %5780 = vmatpush.bf16.msra.mxu0 %v4930
        %5781 = vmatpush.bf16.msra.mxu0 %v4926
        %5782 = vmatpush.bf16.msra.mxu0 %v4922
        %5783 = vmatpush.bf16.msra.mxu0 %v4918
        %5784 = vmatmul.bf16.gmra.mxu0 %v4436
        %v5785 = vpop.f32.mrf.mxu0
        %v5786 = vadd.f32 %v5737, %v5785
        %v5787 = vpop.f32.mrf.mxu0
        %v5788 = vadd.f32 %v5739, %v5787
        %5789 = vmatmul.bf16.gmra.mxu0 %v4440
        %v5790 = vpop.f32.mrf.mxu0
        %v5791 = vadd.f32 %v5742, %v5790
        %v5792 = vpop.f32.mrf.mxu0
        %v5793 = vadd.f32 %v5744, %v5792
        %5794 = vmatmul.bf16.gmra.mxu0 %v4444
        %v5795 = vpop.f32.mrf.mxu0
        %v5796 = vadd.f32 %v5747, %v5795
        %v5797 = vpop.f32.mrf.mxu0
        %v5798 = vadd.f32 %v5749, %v5797
        %5799 = vmatmul.bf16.gmra.mxu0 %v4448
        %v5800 = vpop.f32.mrf.mxu0
        %v5801 = vadd.f32 %v5752, %v5800
        %v5802 = vpop.f32.mrf.mxu0
        %v5803 = vadd.f32 %v5754, %v5802
        %5804 = vmatmul.bf16.gmra.mxu0 %v4452
        %v5805 = vpop.f32.mrf.mxu0
        %v5806 = vadd.f32 %v5757, %v5805
        %v5807 = vpop.f32.mrf.mxu0
        %v5808 = vadd.f32 %v5759, %v5807
        %5809 = vmatmul.bf16.gmra.mxu0 %v4456
        %v5810 = vpop.f32.mrf.mxu0
        %v5811 = vadd.f32 %v5762, %v5810
        %v5812 = vpop.f32.mrf.mxu0
        %v5813 = vadd.f32 %v5764, %v5812
        %5814 = vmatmul.bf16.gmra.mxu0 %v4460
        %v5815 = vpop.f32.mrf.mxu0
        %v5816 = vadd.f32 %v5767, %v5815
        %v5817 = vpop.f32.mrf.mxu0
        %v5818 = vadd.f32 %v5769, %v5817
        %5819 = vmatmul.bf16.gmra.mxu0 %v4464
        %v5820 = vpop.f32.mrf.mxu0
        %v5821 = vadd.f32 %v5772, %v5820
        %v5822 = vpop.f32.mrf.mxu0
        %v5823 = vadd.f32 %v5774, %v5822
        %5824 = vdwg.mxu0
        %5825 = vmatpush.bf16.msra.mxu0 %v4978
        %5826 = vmatpush.bf16.msra.mxu0 %v4974
        %5827 = vmatpush.bf16.msra.mxu0 %v4970
        %5828 = vmatpush.bf16.msra.mxu0 %v4966
        %5829 = vmatpush.bf16.msra.mxu0 %v4962
        %5830 = vmatpush.bf16.msra.mxu0 %v4958
        %5831 = vmatpush.bf16.msra.mxu0 %v4954
        %5832 = vmatpush.bf16.msra.mxu0 %v4950
        %5833 = vmatmul.bf16.gmra.mxu0 %v4437
        %v5834 = vpop.f32.mrf.mxu0
        %v5835 = vadd.f32 %v5786, %v5834
        %v5836 = vpop.f32.mrf.mxu0
        %v5837 = vadd.f32 %v5788, %v5836
        %5838 = vmatmul.bf16.gmra.mxu0 %v4441
        %v5839 = vpop.f32.mrf.mxu0
        %v5840 = vadd.f32 %v5791, %v5839
        %v5841 = vpop.f32.mrf.mxu0
        %v5842 = vadd.f32 %v5793, %v5841
        %5843 = vmatmul.bf16.gmra.mxu0 %v4445
        %v5844 = vpop.f32.mrf.mxu0
        %v5845 = vadd.f32 %v5796, %v5844
        %v5846 = vpop.f32.mrf.mxu0
        %v5847 = vadd.f32 %v5798, %v5846
        %5848 = vmatmul.bf16.gmra.mxu0 %v4449
        %v5849 = vpop.f32.mrf.mxu0
        %v5850 = vadd.f32 %v5801, %v5849
        %v5851 = vpop.f32.mrf.mxu0
        %v5852 = vadd.f32 %v5803, %v5851
        %5853 = vmatmul.bf16.gmra.mxu0 %v4453
        %v5854 = vpop.f32.mrf.mxu0
        %v5855 = vadd.f32 %v5806, %v5854
        %v5856 = vpop.f32.mrf.mxu0
        %v5857 = vadd.f32 %v5808, %v5856
        %5858 = vmatmul.bf16.gmra.mxu0 %v4457
        %v5859 = vpop.f32.mrf.mxu0
        %v5860 = vadd.f32 %v5811, %v5859
        %v5861 = vpop.f32.mrf.mxu0
        %v5862 = vadd.f32 %v5813, %v5861
        %5863 = vmatmul.bf16.gmra.mxu0 %v4461
        %v5864 = vpop.f32.mrf.mxu0
        %v5865 = vadd.f32 %v5816, %v5864
        %v5866 = vpop.f32.mrf.mxu0
        %v5867 = vadd.f32 %v5818, %v5866
        %5868 = vmatmul.bf16.gmra.mxu0 %v4465
        %v5869 = vpop.f32.mrf.mxu0
        %v5870 = vadd.f32 %v5821, %v5869
        %v5871 = vpop.f32.mrf.mxu0
        %v5872 = vadd.f32 %v5823, %v5871
        %5873 = vdwg.mxu0
        %5874 = vmatpush.bf16.msra.mxu0 %v5010
        %5875 = vmatpush.bf16.msra.mxu0 %v5006
        %5876 = vmatpush.bf16.msra.mxu0 %v5002
        %5877 = vmatpush.bf16.msra.mxu0 %v4998
        %5878 = vmatpush.bf16.msra.mxu0 %v4994
        %5879 = vmatpush.bf16.msra.mxu0 %v4990
        %5880 = vmatpush.bf16.msra.mxu0 %v4986
        %5881 = vmatpush.bf16.msra.mxu0 %v4982
        %5882 = vmatmul.bf16.gmra.mxu0 %v4438
        %v5883 = vpop.f32.mrf.mxu0
        %v5884 = vadd.f32 %v5835, %v5883
        %v5885 = vpop.f32.mrf.mxu0
        %v5886 = vadd.f32 %v5837, %v5885
        %5887 = vmatmul.bf16.gmra.mxu0 %v4442
        %v5888 = vpop.f32.mrf.mxu0
        %v5889 = vadd.f32 %v5840, %v5888
        %v5890 = vpop.f32.mrf.mxu0
        %v5891 = vadd.f32 %v5842, %v5890
        %5892 = vmatmul.bf16.gmra.mxu0 %v4446
        %v5893 = vpop.f32.mrf.mxu0
        %v5894 = vadd.f32 %v5845, %v5893
        %v5895 = vpop.f32.mrf.mxu0
        %v5896 = vadd.f32 %v5847, %v5895
        %5897 = vmatmul.bf16.gmra.mxu0 %v4450
        %v5898 = vpop.f32.mrf.mxu0
        %v5899 = vadd.f32 %v5850, %v5898
        %v5900 = vpop.f32.mrf.mxu0
        %v5901 = vadd.f32 %v5852, %v5900
        %5902 = vmatmul.bf16.gmra.mxu0 %v4454
        %v5903 = vpop.f32.mrf.mxu0
        %v5904 = vadd.f32 %v5855, %v5903
        %v5905 = vpop.f32.mrf.mxu0
        %v5906 = vadd.f32 %v5857, %v5905
        %5907 = vmatmul.bf16.gmra.mxu0 %v4458
        %v5908 = vpop.f32.mrf.mxu0
        %v5909 = vadd.f32 %v5860, %v5908
        %v5910 = vpop.f32.mrf.mxu0
        %v5911 = vadd.f32 %v5862, %v5910
        %5912 = vmatmul.bf16.gmra.mxu0 %v4462
        %v5913 = vpop.f32.mrf.mxu0
        %v5914 = vadd.f32 %v5865, %v5913
        %v5915 = vpop.f32.mrf.mxu0
        %v5916 = vadd.f32 %v5867, %v5915
        %5917 = vmatmul.bf16.gmra.mxu0 %v4466
        %v5918 = vpop.f32.mrf.mxu0
        %v5919 = vadd.f32 %v5870, %v5918
        %v5920 = vpop.f32.mrf.mxu0
        %v5921 = vadd.f32 %v5872, %v5920
        %5922 = vdwg.mxu0
        %v5923 = vtanh.pop %v5296
        %v5924 = vtanh.pop %v5492
        %v5925 = vtanh.pop %v5688
        %v5926 = vtanh.pop %v5884
        %v5927 = vtanh.pop %v5298
        %v5928 = vtanh.pop %v5494
        %v5929 = vtanh.pop %v5690
        %v5930 = vtanh.pop %v5886
        %v5931 = vtanh.pop %v5301
        %v5932 = vtanh.pop %v5497
        %v5933 = vtanh.pop %v5693
        %v5934 = vtanh.pop %v5889
        %v5935 = vtanh.pop %v5303
        %v5936 = vtanh.pop %v5499
        %v5937 = vtanh.pop %v5695
        %v5938 = vtanh.pop %v5891
        %v5939 = vtanh.pop %v5306
        %v5940 = vtanh.pop %v5502
        %v5941 = vtanh.pop %v5698
        %v5942 = vtanh.pop %v5894
        %v5943 = vtanh.pop %v5308
        %v5944 = vtanh.pop %v5504
        %v5945 = vtanh.pop %v5700
        %v5946 = vtanh.pop %v5896
        %v5947 = vtanh.pop %v5311
        %v5948 = vtanh.pop %v5507
        %v5949 = vtanh.pop %v5703
        %v5950 = vtanh.pop %v5899
        %v5951 = vtanh.pop %v5313
        %v5952 = vtanh.pop %v5509
        %v5953 = vtanh.pop %v5705
        %v5954 = vtanh.pop %v5901
        %v5955 = vtanh.pop %v5316
        %v5956 = vtanh.pop %v5512
        %v5957 = vtanh.pop %v5708
        %v5958 = vtanh.pop %v5904
        %v5959 = vtanh.pop %v5318
        %v5960 = vtanh.pop %v5514
        %v5961 = vtanh.pop %v5710
        %v5962 = vtanh.pop %v5906
        %v5963 = vtanh.pop %v5321
        %v5964 = vtanh.pop %v5517
        %v5965 = vtanh.pop %v5713
        %v5966 = vtanh.pop %v5909
        %v5967 = vtanh.pop %v5323
        %v5968 = vtanh.pop %v5519
        %v5969 = vtanh.pop %v5715
        %v5970 = vtanh.pop %v5911
        %v5971 = vtanh.pop %v5326
        %v5972 = vtanh.pop %v5522
        %v5973 = vtanh.pop %v5718
        %v5974 = vtanh.pop %v5914
        %v5975 = vtanh.pop %v5328
        %v5976 = vtanh.pop %v5524
        %v5977 = vtanh.pop %v5720
        %v5978 = vtanh.pop %v5916
        %v5979 = vtanh.pop %v5331
        %v5980 = vtanh.pop %v5527
        %v5981 = vtanh.pop %v5723
        %v5982 = vtanh.pop %v5919
        %v5983 = vtanh.pop %v5333
        %v5984 = vtanh.pop %v5529
        %v5985 = vtanh.pop %v5725
        %v5986 = vtanh.pop %v5921
        %v5987 = vpack.c.bf16 %v5927, %v5923
        %v5988 = vpack.c.bf16 %v5928, %v5924
        %v5989 = vpack.c.bf16 %v5929, %v5925
        %v5990 = vpack.c.bf16 %v5930, %v5926
        %v5991 = vpack.c.bf16 %v5935, %v5931
        %v5992 = vpack.c.bf16 %v5936, %v5932
        %v5993 = vpack.c.bf16 %v5937, %v5933
        %v5994 = vpack.c.bf16 %v5938, %v5934
        %v5995 = vpack.c.bf16 %v5943, %v5939
        %v5996 = vpack.c.bf16 %v5944, %v5940
        %v5997 = vpack.c.bf16 %v5945, %v5941
        %v5998 = vpack.c.bf16 %v5946, %v5942
        %v5999 = vpack.c.bf16 %v5951, %v5947
        %v6000 = vpack.c.bf16 %v5952, %v5948
        %v6001 = vpack.c.bf16 %v5953, %v5949
        %v6002 = vpack.c.bf16 %v5954, %v5950
        %v6003 = vpack.c.bf16 %v5959, %v5955
        %v6004 = vpack.c.bf16 %v5960, %v5956
        %v6005 = vpack.c.bf16 %v5961, %v5957
        %v6006 = vpack.c.bf16 %v5962, %v5958
        %v6007 = vpack.c.bf16 %v5967, %v5963
        %v6008 = vpack.c.bf16 %v5968, %v5964
        %v6009 = vpack.c.bf16 %v5969, %v5965
        %v6010 = vpack.c.bf16 %v5970, %v5966
        %v6011 = vpack.c.bf16 %v5975, %v5971
        %v6012 = vpack.c.bf16 %v5976, %v5972
        %v6013 = vpack.c.bf16 %v5977, %v5973
        %v6014 = vpack.c.bf16 %v5978, %v5974
        %v6015 = vpack.c.bf16 %v5983, %v5979
        %v6016 = vpack.c.bf16 %v5984, %v5980
        %v6017 = vpack.c.bf16 %v5985, %v5981
        %v6018 = vpack.c.bf16 %v5986, %v5982
        %v6020 = vperm.slane %v1111, 0
        %v6021 = vperm.slane %v1111, 1
        %v6022 = vperm.slane %v1111, 2
        %v6023 = vperm.slane %v1111, 3
        %v6156 = vunpack.c.l.b16 %v983
        %v6157 = vunpack.c.h.b16 %v983
        %v6158 = vunpack.c.l.b16 %v984
        %v6159 = vunpack.c.h.b16 %v984
        %v6160 = vunpack.c.l.b16 %v985
        %v6161 = vunpack.c.h.b16 %v985
        %v6162 = vunpack.c.l.b16 %v986
        %v6163 = vunpack.c.h.b16 %v986
        %v6164 = vunpack.c.l.b16 %v987
        %v6165 = vunpack.c.h.b16 %v987
        %v6166 = vunpack.c.l.b16 %v988
        %v6167 = vunpack.c.h.b16 %v988
        %v6168 = vunpack.c.l.b16 %v989
        %v6169 = vunpack.c.h.b16 %v989
        %v6170 = vunpack.c.l.b16 %v990
        %v6171 = vunpack.c.h.b16 %v990
        %v6172 = vunpack.c.l.b16 %v991
        %v6173 = vunpack.c.h.b16 %v991
        %v6174 = vunpack.c.l.b16 %v992
        %v6175 = vunpack.c.h.b16 %v992
        %v6176 = vunpack.c.l.b16 %v993
        %v6177 = vunpack.c.h.b16 %v993
        %v6178 = vunpack.c.l.b16 %v994
        %v6179 = vunpack.c.h.b16 %v994
        %v6180 = vunpack.c.l.b16 %v995
        %v6181 = vunpack.c.h.b16 %v995
        %v6182 = vunpack.c.l.b16 %v996
        %v6183 = vunpack.c.h.b16 %v996
        %v6184 = vunpack.c.l.b16 %v997
        %v6185 = vunpack.c.h.b16 %v997
        %v6186 = vunpack.c.l.b16 %v998
        %v6187 = vunpack.c.h.b16 %v998
        %v6188 = vunpack.c.l.b16 %v999
        %v6189 = vunpack.c.h.b16 %v999
        %v6190 = vunpack.c.l.b16 %v1000
        %v6191 = vunpack.c.h.b16 %v1000
        %v6192 = vunpack.c.l.b16 %v1001
        %v6193 = vunpack.c.h.b16 %v1001
        %v6194 = vunpack.c.l.b16 %v1002
        %v6195 = vunpack.c.h.b16 %v1002
        %v6196 = vunpack.c.l.b16 %v1003
        %v6197 = vunpack.c.h.b16 %v1003
        %v6198 = vunpack.c.l.b16 %v1004
        %v6199 = vunpack.c.h.b16 %v1004
        %v6200 = vunpack.c.l.b16 %v1005
        %v6201 = vunpack.c.h.b16 %v1005
        %v6202 = vunpack.c.l.b16 %v1006
        %v6203 = vunpack.c.h.b16 %v1006
        %v6204 = vunpack.c.l.b16 %v1007
        %v6205 = vunpack.c.h.b16 %v1007
        %v6206 = vunpack.c.l.b16 %v1008
        %v6207 = vunpack.c.h.b16 %v1008
        %v6208 = vunpack.c.l.b16 %v1009
        %v6209 = vunpack.c.h.b16 %v1009
        %v6210 = vunpack.c.l.b16 %v1010
        %v6211 = vunpack.c.h.b16 %v1010
        %v6212 = vunpack.c.l.b16 %v1011
        %v6213 = vunpack.c.h.b16 %v1011
        %v6214 = vunpack.c.l.b16 %v1012
        %v6215 = vunpack.c.h.b16 %v1012
        %v6216 = vunpack.c.l.b16 %v1013
        %v6217 = vunpack.c.h.b16 %v1013
        %v6218 = vunpack.c.l.b16 %v1014
        %v6219 = vunpack.c.h.b16 %v1014
        %v6220 = vunpack.c.l.b16 %v1015
        %v6221 = vunpack.c.h.b16 %v1015
        %v6222 = vunpack.c.l.b16 %v1016
        %v6223 = vunpack.c.h.b16 %v1016
        %v6224 = vunpack.c.l.b16 %v1017
        %v6225 = vunpack.c.h.b16 %v1017
        %v6226 = vunpack.c.l.b16 %v1018
        %v6227 = vunpack.c.h.b16 %v1018
        %v6228 = vunpack.c.l.b16 %v1019
        %v6229 = vunpack.c.h.b16 %v1019
        %v6230 = vunpack.c.l.b16 %v1020
        %v6231 = vunpack.c.h.b16 %v1020
        %v6232 = vunpack.c.l.b16 %v1021
        %v6233 = vunpack.c.h.b16 %v1021
        %v6234 = vunpack.c.l.b16 %v1022
        %v6235 = vunpack.c.h.b16 %v1022
        %v6236 = vunpack.c.l.b16 %v1023
        %v6237 = vunpack.c.h.b16 %v1023
        %v6238 = vunpack.c.l.b16 %v1024
        %v6239 = vunpack.c.h.b16 %v1024
        %v6240 = vunpack.c.l.b16 %v1025
        %v6241 = vunpack.c.h.b16 %v1025
        %v6242 = vunpack.c.l.b16 %v1026
        %v6243 = vunpack.c.h.b16 %v1026
        %v6244 = vunpack.c.l.b16 %v1027
        %v6245 = vunpack.c.h.b16 %v1027
        %v6246 = vunpack.c.l.b16 %v1028
        %v6247 = vunpack.c.h.b16 %v1028
        %v6248 = vunpack.c.l.b16 %v1029
        %v6249 = vunpack.c.h.b16 %v1029
        %v6250 = vunpack.c.l.b16 %v1030
        %v6251 = vunpack.c.h.b16 %v1030
        %v6252 = vunpack.c.l.b16 %v1031
        %v6253 = vunpack.c.h.b16 %v1031
        %v6254 = vunpack.c.l.b16 %v1032
        %v6255 = vunpack.c.h.b16 %v1032
        %v6256 = vunpack.c.l.b16 %v1033
        %v6257 = vunpack.c.h.b16 %v1033
        %v6258 = vunpack.c.l.b16 %v1034
        %v6259 = vunpack.c.h.b16 %v1034
        %v6260 = vunpack.c.l.b16 %v1035
        %v6261 = vunpack.c.h.b16 %v1035
        %v6262 = vunpack.c.l.b16 %v1036
        %v6263 = vunpack.c.h.b16 %v1036
        %v6264 = vunpack.c.l.b16 %v1037
        %v6265 = vunpack.c.h.b16 %v1037
        %v6266 = vunpack.c.l.b16 %v1038
        %v6267 = vunpack.c.h.b16 %v1038
        %v6268 = vunpack.c.l.b16 %v1039
        %v6269 = vunpack.c.h.b16 %v1039
        %v6270 = vunpack.c.l.b16 %v1040
        %v6271 = vunpack.c.h.b16 %v1040
        %v6272 = vunpack.c.l.b16 %v1041
        %v6273 = vunpack.c.h.b16 %v1041
        %v6274 = vunpack.c.l.b16 %v1042
        %v6275 = vunpack.c.h.b16 %v1042
        %v6276 = vunpack.c.l.b16 %v1043
        %v6277 = vunpack.c.h.b16 %v1043
        %v6278 = vunpack.c.l.b16 %v1044
        %v6279 = vunpack.c.h.b16 %v1044
        %v6280 = vunpack.c.l.b16 %v1045
        %v6281 = vunpack.c.h.b16 %v1045
        %v6282 = vunpack.c.l.b16 %v1046
        %v6283 = vunpack.c.h.b16 %v1046
        %v6284 = vunpack.c.l.b16 %v1047
        %v6285 = vunpack.c.h.b16 %v1047
        %v6286 = vunpack.c.l.b16 %v1048
        %v6287 = vunpack.c.h.b16 %v1048
        %v6288 = vunpack.c.l.b16 %v1049
        %v6289 = vunpack.c.h.b16 %v1049
        %v6290 = vunpack.c.l.b16 %v1050
        %v6291 = vunpack.c.h.b16 %v1050
        %v6292 = vunpack.c.l.b16 %v1051
        %v6293 = vunpack.c.h.b16 %v1051
        %v6294 = vunpack.c.l.b16 %v1052
        %v6295 = vunpack.c.h.b16 %v1052
        %v6296 = vunpack.c.l.b16 %v1053
        %v6297 = vunpack.c.h.b16 %v1053
        %v6298 = vunpack.c.l.b16 %v1054
        %v6299 = vunpack.c.h.b16 %v1054
        %v6300 = vunpack.c.l.b16 %v1055
        %v6301 = vunpack.c.h.b16 %v1055
        %v6302 = vunpack.c.l.b16 %v1056
        %v6303 = vunpack.c.h.b16 %v1056
        %v6304 = vunpack.c.l.b16 %v1057
        %v6305 = vunpack.c.h.b16 %v1057
        %v6306 = vunpack.c.l.b16 %v1058
        %v6307 = vunpack.c.h.b16 %v1058
        %v6308 = vunpack.c.l.b16 %v1059
        %v6309 = vunpack.c.h.b16 %v1059
        %v6310 = vunpack.c.l.b16 %v1060
        %v6311 = vunpack.c.h.b16 %v1060
        %v6312 = vunpack.c.l.b16 %v1061
        %v6313 = vunpack.c.h.b16 %v1061
        %v6314 = vunpack.c.l.b16 %v1062
        %v6315 = vunpack.c.h.b16 %v1062
        %v6316 = vunpack.c.l.b16 %v1063
        %v6317 = vunpack.c.h.b16 %v1063
        %v6318 = vunpack.c.l.b16 %v1064
        %v6319 = vunpack.c.h.b16 %v1064
        %v6320 = vunpack.c.l.b16 %v1065
        %v6321 = vunpack.c.h.b16 %v1065
        %v6322 = vunpack.c.l.b16 %v1066
        %v6323 = vunpack.c.h.b16 %v1066
        %v6324 = vunpack.c.l.b16 %v1067
        %v6325 = vunpack.c.h.b16 %v1067
        %v6326 = vunpack.c.l.b16 %v1068
        %v6327 = vunpack.c.h.b16 %v1068
        %v6328 = vunpack.c.l.b16 %v1069
        %v6329 = vunpack.c.h.b16 %v1069
        %v6330 = vunpack.c.l.b16 %v1070
        %v6331 = vunpack.c.h.b16 %v1070
        %v6332 = vunpack.c.l.b16 %v1071
        %v6333 = vunpack.c.h.b16 %v1071
        %v6334 = vunpack.c.l.b16 %v1072
        %v6335 = vunpack.c.h.b16 %v1072
        %v6336 = vunpack.c.l.b16 %v1073
        %v6337 = vunpack.c.h.b16 %v1073
        %v6338 = vunpack.c.l.b16 %v1074
        %v6339 = vunpack.c.h.b16 %v1074
        %v6340 = vunpack.c.l.b16 %v1075
        %v6341 = vunpack.c.h.b16 %v1075
        %v6342 = vunpack.c.l.b16 %v1076
        %v6343 = vunpack.c.h.b16 %v1076
        %v6344 = vunpack.c.l.b16 %v1077
        %v6345 = vunpack.c.h.b16 %v1077
        %v6346 = vunpack.c.l.b16 %v1078
        %v6347 = vunpack.c.h.b16 %v1078
        %v6348 = vunpack.c.l.b16 %v1079
        %v6349 = vunpack.c.h.b16 %v1079
        %v6350 = vunpack.c.l.b16 %v1080
        %v6351 = vunpack.c.h.b16 %v1080
        %v6352 = vunpack.c.l.b16 %v1081
        %v6353 = vunpack.c.h.b16 %v1081
        %v6354 = vunpack.c.l.b16 %v1082
        %v6355 = vunpack.c.h.b16 %v1082
        %v6356 = vunpack.c.l.b16 %v1083
        %v6357 = vunpack.c.h.b16 %v1083
        %v6358 = vunpack.c.l.b16 %v1084
        %v6359 = vunpack.c.h.b16 %v1084
        %v6360 = vunpack.c.l.b16 %v1085
        %v6361 = vunpack.c.h.b16 %v1085
        %v6362 = vunpack.c.l.b16 %v1086
        %v6363 = vunpack.c.h.b16 %v1086
        %v6364 = vunpack.c.l.b16 %v1087
        %v6365 = vunpack.c.h.b16 %v1087
        %v6366 = vunpack.c.l.b16 %v1088
        %v6367 = vunpack.c.h.b16 %v1088
        %v6368 = vunpack.c.l.b16 %v1089
        %v6369 = vunpack.c.h.b16 %v1089
        %v6370 = vunpack.c.l.b16 %v1090
        %v6371 = vunpack.c.h.b16 %v1090
        %v6372 = vunpack.c.l.b16 %v1091
        %v6373 = vunpack.c.h.b16 %v1091
        %v6374 = vunpack.c.l.b16 %v1092
        %v6375 = vunpack.c.h.b16 %v1092
        %v6376 = vunpack.c.l.b16 %v1093
        %v6377 = vunpack.c.h.b16 %v1093
        %v6378 = vunpack.c.l.b16 %v1094
        %v6379 = vunpack.c.h.b16 %v1094
        %v6380 = vunpack.c.l.b16 %v1095
        %v6381 = vunpack.c.h.b16 %v1095
        %v6382 = vunpack.c.l.b16 %v1096
        %v6383 = vunpack.c.h.b16 %v1096
        %v6384 = vunpack.c.l.b16 %v1097
        %v6385 = vunpack.c.h.b16 %v1097
        %v6386 = vunpack.c.l.b16 %v1098
        %v6387 = vunpack.c.h.b16 %v1098
        %v6388 = vunpack.c.l.b16 %v1099
        %v6389 = vunpack.c.h.b16 %v1099
        %v6390 = vunpack.c.l.b16 %v1100
        %v6391 = vunpack.c.h.b16 %v1100
        %v6392 = vunpack.c.l.b16 %v1101
        %v6393 = vunpack.c.h.b16 %v1101
        %v6394 = vunpack.c.l.b16 %v1102
        %v6395 = vunpack.c.h.b16 %v1102
        %v6396 = vunpack.c.l.b16 %v1103
        %v6397 = vunpack.c.h.b16 %v1103
        %v6398 = vunpack.c.l.b16 %v1104
        %v6399 = vunpack.c.h.b16 %v1104
        %v6400 = vunpack.c.l.b16 %v1105
        %v6401 = vunpack.c.h.b16 %v1105
        %v6402 = vunpack.c.l.b16 %v1106
        %v6403 = vunpack.c.h.b16 %v1106
        %v6404 = vunpack.c.l.b16 %v1107
        %v6405 = vunpack.c.h.b16 %v1107
        %v6406 = vunpack.c.l.b16 %v1108
        %v6407 = vunpack.c.h.b16 %v1108
        %v6408 = vunpack.c.l.b16 %v1109
        %v6409 = vunpack.c.h.b16 %v1109
        %v6410 = vunpack.c.l.b16 %v1110
        %v6411 = vunpack.c.h.b16 %v1110
        %v6412 = vpack.c.b16 %v6160, %v6156
        %v6413 = vpack.c.b16 %v6161, %v6157
        %v6414 = vpack.c.b16 %v6162, %v6158
        %v6415 = vpack.c.b16 %v6163, %v6159
        %v6416 = vpack.c.b16 %v6168, %v6164
        %v6417 = vpack.c.b16 %v6169, %v6165
        %v6418 = vpack.c.b16 %v6170, %v6166
        %v6419 = vpack.c.b16 %v6171, %v6167
        %v6420 = vpack.c.b16 %v6176, %v6172
        %v6421 = vpack.c.b16 %v6177, %v6173
        %v6422 = vpack.c.b16 %v6178, %v6174
        %v6423 = vpack.c.b16 %v6179, %v6175
        %v6424 = vpack.c.b16 %v6184, %v6180
        %v6425 = vpack.c.b16 %v6185, %v6181
        %v6426 = vpack.c.b16 %v6186, %v6182
        %v6427 = vpack.c.b16 %v6187, %v6183
        %v6428 = vpack.c.b16 %v6192, %v6188
        %v6429 = vpack.c.b16 %v6193, %v6189
        %v6430 = vpack.c.b16 %v6194, %v6190
        %v6431 = vpack.c.b16 %v6195, %v6191
        %v6432 = vpack.c.b16 %v6200, %v6196
        %v6433 = vpack.c.b16 %v6201, %v6197
        %v6434 = vpack.c.b16 %v6202, %v6198
        %v6435 = vpack.c.b16 %v6203, %v6199
        %v6436 = vpack.c.b16 %v6208, %v6204
        %v6437 = vpack.c.b16 %v6209, %v6205
        %v6438 = vpack.c.b16 %v6210, %v6206
        %v6439 = vpack.c.b16 %v6211, %v6207
        %v6440 = vpack.c.b16 %v6216, %v6212
        %v6441 = vpack.c.b16 %v6217, %v6213
        %v6442 = vpack.c.b16 %v6218, %v6214
        %v6443 = vpack.c.b16 %v6219, %v6215
        %v6444 = vpack.c.b16 %v6224, %v6220
        %v6445 = vpack.c.b16 %v6225, %v6221
        %v6446 = vpack.c.b16 %v6226, %v6222
        %v6447 = vpack.c.b16 %v6227, %v6223
        %v6448 = vpack.c.b16 %v6232, %v6228
        %v6449 = vpack.c.b16 %v6233, %v6229
        %v6450 = vpack.c.b16 %v6234, %v6230
        %v6451 = vpack.c.b16 %v6235, %v6231
        %v6452 = vpack.c.b16 %v6240, %v6236
        %v6453 = vpack.c.b16 %v6241, %v6237
        %v6454 = vpack.c.b16 %v6242, %v6238
        %v6455 = vpack.c.b16 %v6243, %v6239
        %v6456 = vpack.c.b16 %v6248, %v6244
        %v6457 = vpack.c.b16 %v6249, %v6245
        %v6458 = vpack.c.b16 %v6250, %v6246
        %v6459 = vpack.c.b16 %v6251, %v6247
        %v6460 = vpack.c.b16 %v6256, %v6252
        %v6461 = vpack.c.b16 %v6257, %v6253
        %v6462 = vpack.c.b16 %v6258, %v6254
        %v6463 = vpack.c.b16 %v6259, %v6255
        %v6464 = vpack.c.b16 %v6264, %v6260
        %v6465 = vpack.c.b16 %v6265, %v6261
        %v6466 = vpack.c.b16 %v6266, %v6262
        %v6467 = vpack.c.b16 %v6267, %v6263
        %v6468 = vpack.c.b16 %v6272, %v6268
        %v6469 = vpack.c.b16 %v6273, %v6269
        %v6470 = vpack.c.b16 %v6274, %v6270
        %v6471 = vpack.c.b16 %v6275, %v6271
        %v6472 = vpack.c.b16 %v6280, %v6276
        %v6473 = vpack.c.b16 %v6281, %v6277
        %v6474 = vpack.c.b16 %v6282, %v6278
        %v6475 = vpack.c.b16 %v6283, %v6279
        %v6476 = vpack.c.b16 %v6288, %v6284
        %v6477 = vpack.c.b16 %v6289, %v6285
        %v6478 = vpack.c.b16 %v6290, %v6286
        %v6479 = vpack.c.b16 %v6291, %v6287
        %v6480 = vpack.c.b16 %v6296, %v6292
        %v6481 = vpack.c.b16 %v6297, %v6293
        %v6482 = vpack.c.b16 %v6298, %v6294
        %v6483 = vpack.c.b16 %v6299, %v6295
        %v6484 = vpack.c.b16 %v6304, %v6300
        %v6485 = vpack.c.b16 %v6305, %v6301
        %v6486 = vpack.c.b16 %v6306, %v6302
        %v6487 = vpack.c.b16 %v6307, %v6303
        %v6488 = vpack.c.b16 %v6312, %v6308
        %v6489 = vpack.c.b16 %v6313, %v6309
        %v6490 = vpack.c.b16 %v6314, %v6310
        %v6491 = vpack.c.b16 %v6315, %v6311
        %v6492 = vpack.c.b16 %v6320, %v6316
        %v6493 = vpack.c.b16 %v6321, %v6317
        %v6494 = vpack.c.b16 %v6322, %v6318
        %v6495 = vpack.c.b16 %v6323, %v6319
        %v6496 = vpack.c.b16 %v6328, %v6324
        %v6497 = vpack.c.b16 %v6329, %v6325
        %v6498 = vpack.c.b16 %v6330, %v6326
        %v6499 = vpack.c.b16 %v6331, %v6327
        %v6500 = vpack.c.b16 %v6336, %v6332
        %v6501 = vpack.c.b16 %v6337, %v6333
        %v6502 = vpack.c.b16 %v6338, %v6334
        %v6503 = vpack.c.b16 %v6339, %v6335
        %v6504 = vpack.c.b16 %v6344, %v6340
        %v6505 = vpack.c.b16 %v6345, %v6341
        %v6506 = vpack.c.b16 %v6346, %v6342
        %v6507 = vpack.c.b16 %v6347, %v6343
        %v6508 = vpack.c.b16 %v6352, %v6348
        %v6509 = vpack.c.b16 %v6353, %v6349
        %v6510 = vpack.c.b16 %v6354, %v6350
        %v6511 = vpack.c.b16 %v6355, %v6351
        %v6512 = vpack.c.b16 %v6360, %v6356
        %v6513 = vpack.c.b16 %v6361, %v6357
        %v6514 = vpack.c.b16 %v6362, %v6358
        %v6515 = vpack.c.b16 %v6363, %v6359
        %v6516 = vpack.c.b16 %v6368, %v6364
        %v6517 = vpack.c.b16 %v6369, %v6365
        %v6518 = vpack.c.b16 %v6370, %v6366
        %v6519 = vpack.c.b16 %v6371, %v6367
        %v6520 = vpack.c.b16 %v6376, %v6372
        %v6521 = vpack.c.b16 %v6377, %v6373
        %v6522 = vpack.c.b16 %v6378, %v6374
        %v6523 = vpack.c.b16 %v6379, %v6375
        %v6524 = vpack.c.b16 %v6384, %v6380
        %v6525 = vpack.c.b16 %v6385, %v6381
        %v6526 = vpack.c.b16 %v6386, %v6382
        %v6527 = vpack.c.b16 %v6387, %v6383
        %v6528 = vpack.c.b16 %v6392, %v6388
        %v6529 = vpack.c.b16 %v6393, %v6389
        %v6530 = vpack.c.b16 %v6394, %v6390
        %v6531 = vpack.c.b16 %v6395, %v6391
        %v6532 = vpack.c.b16 %v6400, %v6396
        %v6533 = vpack.c.b16 %v6401, %v6397
        %v6534 = vpack.c.b16 %v6402, %v6398
        %v6535 = vpack.c.b16 %v6403, %v6399
        %v6536 = vpack.c.b16 %v6408, %v6404
        %v6537 = vpack.c.b16 %v6409, %v6405
        %v6538 = vpack.c.b16 %v6410, %v6406
        %v6539 = vpack.c.b16 %v6411, %v6407
        %6668 = vmatpush.bf16.msra.mxu0 %v6440
        %6669 = vmatpush.bf16.msra.mxu0 %v6436
        %6670 = vmatpush.bf16.msra.mxu0 %v6432
        %6671 = vmatpush.bf16.msra.mxu0 %v6428
        %6672 = vmatpush.bf16.msra.mxu0 %v6424
        %6673 = vmatpush.bf16.msra.mxu0 %v6420
        %6674 = vmatpush.bf16.msra.mxu0 %v6416
        %6675 = vmatpush.bf16.msra.mxu0 %v6412
        %6676 = vmatmul.bf16.gmra.mxu0 %v5987
        %v6677 = vpop.f32.mrf.mxu0
        %v6678 = vadd.f32 %v6020, %v6677
        %v6679 = vpop.f32.mrf.mxu0
        %v6680 = vadd.f32 %v6020, %v6679
        %6681 = vmatmul.bf16.gmra.mxu0 %v5991
        %v6682 = vpop.f32.mrf.mxu0
        %v6683 = vadd.f32 %v6020, %v6682
        %v6684 = vpop.f32.mrf.mxu0
        %v6685 = vadd.f32 %v6020, %v6684
        %6686 = vmatmul.bf16.gmra.mxu0 %v5995
        %v6687 = vpop.f32.mrf.mxu0
        %v6688 = vadd.f32 %v6020, %v6687
        %v6689 = vpop.f32.mrf.mxu0
        %v6690 = vadd.f32 %v6020, %v6689
        %6691 = vmatmul.bf16.gmra.mxu0 %v5999
        %v6692 = vpop.f32.mrf.mxu0
        %v6693 = vadd.f32 %v6020, %v6692
        %v6694 = vpop.f32.mrf.mxu0
        %v6695 = vadd.f32 %v6020, %v6694
        %6696 = vmatmul.bf16.gmra.mxu0 %v6003
        %v6697 = vpop.f32.mrf.mxu0
        %v6698 = vadd.f32 %v6020, %v6697
        %v6699 = vpop.f32.mrf.mxu0
        %v6700 = vadd.f32 %v6020, %v6699
        %6701 = vmatmul.bf16.gmra.mxu0 %v6007
        %v6702 = vpop.f32.mrf.mxu0
        %v6703 = vadd.f32 %v6020, %v6702
        %v6704 = vpop.f32.mrf.mxu0
        %v6705 = vadd.f32 %v6020, %v6704
        %6706 = vmatmul.bf16.gmra.mxu0 %v6011
        %v6707 = vpop.f32.mrf.mxu0
        %v6708 = vadd.f32 %v6020, %v6707
        %v6709 = vpop.f32.mrf.mxu0
        %v6710 = vadd.f32 %v6020, %v6709
        %6711 = vmatmul.bf16.gmra.mxu0 %v6015
        %v6712 = vpop.f32.mrf.mxu0
        %v6713 = vadd.f32 %v6020, %v6712
        %v6714 = vpop.f32.mrf.mxu0
        %v6715 = vadd.f32 %v6020, %v6714
        %6716 = vdwg.mxu0
        %6717 = vmatpush.bf16.msra.mxu0 %v6472
        %6718 = vmatpush.bf16.msra.mxu0 %v6468
        %6719 = vmatpush.bf16.msra.mxu0 %v6464
        %6720 = vmatpush.bf16.msra.mxu0 %v6460
        %6721 = vmatpush.bf16.msra.mxu0 %v6456
        %6722 = vmatpush.bf16.msra.mxu0 %v6452
        %6723 = vmatpush.bf16.msra.mxu0 %v6448
        %6724 = vmatpush.bf16.msra.mxu0 %v6444
        %6725 = vmatmul.bf16.gmra.mxu0 %v5988
        %v6726 = vpop.f32.mrf.mxu0
        %v6727 = vadd.f32 %v6678, %v6726
        %v6728 = vpop.f32.mrf.mxu0
        %v6729 = vadd.f32 %v6680, %v6728
        %6730 = vmatmul.bf16.gmra.mxu0 %v5992
        %v6731 = vpop.f32.mrf.mxu0
        %v6732 = vadd.f32 %v6683, %v6731
        %v6733 = vpop.f32.mrf.mxu0
        %v6734 = vadd.f32 %v6685, %v6733
        %6735 = vmatmul.bf16.gmra.mxu0 %v5996
        %v6736 = vpop.f32.mrf.mxu0
        %v6737 = vadd.f32 %v6688, %v6736
        %v6738 = vpop.f32.mrf.mxu0
        %v6739 = vadd.f32 %v6690, %v6738
        %6740 = vmatmul.bf16.gmra.mxu0 %v6000
        %v6741 = vpop.f32.mrf.mxu0
        %v6742 = vadd.f32 %v6693, %v6741
        %v6743 = vpop.f32.mrf.mxu0
        %v6744 = vadd.f32 %v6695, %v6743
        %6745 = vmatmul.bf16.gmra.mxu0 %v6004
        %v6746 = vpop.f32.mrf.mxu0
        %v6747 = vadd.f32 %v6698, %v6746
        %v6748 = vpop.f32.mrf.mxu0
        %v6749 = vadd.f32 %v6700, %v6748
        %6750 = vmatmul.bf16.gmra.mxu0 %v6008
        %v6751 = vpop.f32.mrf.mxu0
        %v6752 = vadd.f32 %v6703, %v6751
        %v6753 = vpop.f32.mrf.mxu0
        %v6754 = vadd.f32 %v6705, %v6753
        %6755 = vmatmul.bf16.gmra.mxu0 %v6012
        %v6756 = vpop.f32.mrf.mxu0
        %v6757 = vadd.f32 %v6708, %v6756
        %v6758 = vpop.f32.mrf.mxu0
        %v6759 = vadd.f32 %v6710, %v6758
        %6760 = vmatmul.bf16.gmra.mxu0 %v6016
        %v6761 = vpop.f32.mrf.mxu0
        %v6762 = vadd.f32 %v6713, %v6761
        %v6763 = vpop.f32.mrf.mxu0
        %v6764 = vadd.f32 %v6715, %v6763
        %6765 = vdwg.mxu0
        %6766 = vmatpush.bf16.msra.mxu0 %v6504
        %6767 = vmatpush.bf16.msra.mxu0 %v6500
        %6768 = vmatpush.bf16.msra.mxu0 %v6496
        %6769 = vmatpush.bf16.msra.mxu0 %v6492
        %6770 = vmatpush.bf16.msra.mxu0 %v6488
        %6771 = vmatpush.bf16.msra.mxu0 %v6484
        %6772 = vmatpush.bf16.msra.mxu0 %v6480
        %6773 = vmatpush.bf16.msra.mxu0 %v6476
        %6774 = vmatmul.bf16.gmra.mxu0 %v5989
        %v6775 = vpop.f32.mrf.mxu0
        %v6776 = vadd.f32 %v6727, %v6775
        %v6777 = vpop.f32.mrf.mxu0
        %v6778 = vadd.f32 %v6729, %v6777
        %6779 = vmatmul.bf16.gmra.mxu0 %v5993
        %v6780 = vpop.f32.mrf.mxu0
        %v6781 = vadd.f32 %v6732, %v6780
        %v6782 = vpop.f32.mrf.mxu0
        %v6783 = vadd.f32 %v6734, %v6782
        %6784 = vmatmul.bf16.gmra.mxu0 %v5997
        %v6785 = vpop.f32.mrf.mxu0
        %v6786 = vadd.f32 %v6737, %v6785
        %v6787 = vpop.f32.mrf.mxu0
        %v6788 = vadd.f32 %v6739, %v6787
        %6789 = vmatmul.bf16.gmra.mxu0 %v6001
        %v6790 = vpop.f32.mrf.mxu0
        %v6791 = vadd.f32 %v6742, %v6790
        %v6792 = vpop.f32.mrf.mxu0
        %v6793 = vadd.f32 %v6744, %v6792
        %6794 = vmatmul.bf16.gmra.mxu0 %v6005
        %v6795 = vpop.f32.mrf.mxu0
        %v6796 = vadd.f32 %v6747, %v6795
        %v6797 = vpop.f32.mrf.mxu0
        %v6798 = vadd.f32 %v6749, %v6797
        %6799 = vmatmul.bf16.gmra.mxu0 %v6009
        %v6800 = vpop.f32.mrf.mxu0
        %v6801 = vadd.f32 %v6752, %v6800
        %v6802 = vpop.f32.mrf.mxu0
        %v6803 = vadd.f32 %v6754, %v6802
        %6804 = vmatmul.bf16.gmra.mxu0 %v6013
        %v6805 = vpop.f32.mrf.mxu0
        %v6806 = vadd.f32 %v6757, %v6805
        %v6807 = vpop.f32.mrf.mxu0
        %v6808 = vadd.f32 %v6759, %v6807
        %6809 = vmatmul.bf16.gmra.mxu0 %v6017
        %v6810 = vpop.f32.mrf.mxu0
        %v6811 = vadd.f32 %v6762, %v6810
        %v6812 = vpop.f32.mrf.mxu0
        %v6813 = vadd.f32 %v6764, %v6812
        %6814 = vdwg.mxu0
        %6815 = vmatpush.bf16.msra.mxu0 %v6536
        %6816 = vmatpush.bf16.msra.mxu0 %v6532
        %6817 = vmatpush.bf16.msra.mxu0 %v6528
        %6818 = vmatpush.bf16.msra.mxu0 %v6524
        %6819 = vmatpush.bf16.msra.mxu0 %v6520
        %6820 = vmatpush.bf16.msra.mxu0 %v6516
        %6821 = vmatpush.bf16.msra.mxu0 %v6512
        %6822 = vmatpush.bf16.msra.mxu0 %v6508
        %6823 = vmatmul.bf16.gmra.mxu0 %v5990
        %v6824 = vpop.f32.mrf.mxu0
        %v6825 = vadd.f32 %v6776, %v6824
        %v6826 = vpop.f32.mrf.mxu0
        %v6827 = vadd.f32 %v6778, %v6826
        %6828 = vmatmul.bf16.gmra.mxu0 %v5994
        %v6829 = vpop.f32.mrf.mxu0
        %v6830 = vadd.f32 %v6781, %v6829
        %v6831 = vpop.f32.mrf.mxu0
        %v6832 = vadd.f32 %v6783, %v6831
        %6833 = vmatmul.bf16.gmra.mxu0 %v5998
        %v6834 = vpop.f32.mrf.mxu0
        %v6835 = vadd.f32 %v6786, %v6834
        %v6836 = vpop.f32.mrf.mxu0
        %v6837 = vadd.f32 %v6788, %v6836
        %6838 = vmatmul.bf16.gmra.mxu0 %v6002
        %v6839 = vpop.f32.mrf.mxu0
        %v6840 = vadd.f32 %v6791, %v6839
        %v6841 = vpop.f32.mrf.mxu0
        %v6842 = vadd.f32 %v6793, %v6841
        %6843 = vmatmul.bf16.gmra.mxu0 %v6006
        %v6844 = vpop.f32.mrf.mxu0
        %v6845 = vadd.f32 %v6796, %v6844
        %v6846 = vpop.f32.mrf.mxu0
        %v6847 = vadd.f32 %v6798, %v6846
        %6848 = vmatmul.bf16.gmra.mxu0 %v6010
        %v6849 = vpop.f32.mrf.mxu0
        %v6850 = vadd.f32 %v6801, %v6849
        %v6851 = vpop.f32.mrf.mxu0
        %v6852 = vadd.f32 %v6803, %v6851
        %6853 = vmatmul.bf16.gmra.mxu0 %v6014
        %v6854 = vpop.f32.mrf.mxu0
        %v6855 = vadd.f32 %v6806, %v6854
        %v6856 = vpop.f32.mrf.mxu0
        %v6857 = vadd.f32 %v6808, %v6856
        %6858 = vmatmul.bf16.gmra.mxu0 %v6018
        %v6859 = vpop.f32.mrf.mxu0
        %v6860 = vadd.f32 %v6811, %v6859
        %v6861 = vpop.f32.mrf.mxu0
        %v6862 = vadd.f32 %v6813, %v6861
        %6863 = vdwg.mxu0
        %6864 = vmatpush.bf16.msra.mxu0 %v6441
        %6865 = vmatpush.bf16.msra.mxu0 %v6437
        %6866 = vmatpush.bf16.msra.mxu0 %v6433
        %6867 = vmatpush.bf16.msra.mxu0 %v6429
        %6868 = vmatpush.bf16.msra.mxu0 %v6425
        %6869 = vmatpush.bf16.msra.mxu0 %v6421
        %6870 = vmatpush.bf16.msra.mxu0 %v6417
        %6871 = vmatpush.bf16.msra.mxu0 %v6413
        %6872 = vmatmul.bf16.gmra.mxu0 %v5987
        %v6873 = vpop.f32.mrf.mxu0
        %v6874 = vadd.f32 %v6021, %v6873
        %v6875 = vpop.f32.mrf.mxu0
        %v6876 = vadd.f32 %v6021, %v6875
        %6877 = vmatmul.bf16.gmra.mxu0 %v5991
        %v6878 = vpop.f32.mrf.mxu0
        %v6879 = vadd.f32 %v6021, %v6878
        %v6880 = vpop.f32.mrf.mxu0
        %v6881 = vadd.f32 %v6021, %v6880
        %6882 = vmatmul.bf16.gmra.mxu0 %v5995
        %v6883 = vpop.f32.mrf.mxu0
        %v6884 = vadd.f32 %v6021, %v6883
        %v6885 = vpop.f32.mrf.mxu0
        %v6886 = vadd.f32 %v6021, %v6885
        %6887 = vmatmul.bf16.gmra.mxu0 %v5999
        %v6888 = vpop.f32.mrf.mxu0
        %v6889 = vadd.f32 %v6021, %v6888
        %v6890 = vpop.f32.mrf.mxu0
        %v6891 = vadd.f32 %v6021, %v6890
        %6892 = vmatmul.bf16.gmra.mxu0 %v6003
        %v6893 = vpop.f32.mrf.mxu0
        %v6894 = vadd.f32 %v6021, %v6893
        %v6895 = vpop.f32.mrf.mxu0
        %v6896 = vadd.f32 %v6021, %v6895
        %6897 = vmatmul.bf16.gmra.mxu0 %v6007
        %v6898 = vpop.f32.mrf.mxu0
        %v6899 = vadd.f32 %v6021, %v6898
        %v6900 = vpop.f32.mrf.mxu0
        %v6901 = vadd.f32 %v6021, %v6900
        %6902 = vmatmul.bf16.gmra.mxu0 %v6011
        %v6903 = vpop.f32.mrf.mxu0
        %v6904 = vadd.f32 %v6021, %v6903
        %v6905 = vpop.f32.mrf.mxu0
        %v6906 = vadd.f32 %v6021, %v6905
        %6907 = vmatmul.bf16.gmra.mxu0 %v6015
        %v6908 = vpop.f32.mrf.mxu0
        %v6909 = vadd.f32 %v6021, %v6908
        %v6910 = vpop.f32.mrf.mxu0
        %v6911 = vadd.f32 %v6021, %v6910
        %6912 = vdwg.mxu0
        %6913 = vmatpush.bf16.msra.mxu0 %v6473
        %6914 = vmatpush.bf16.msra.mxu0 %v6469
        %6915 = vmatpush.bf16.msra.mxu0 %v6465
        %6916 = vmatpush.bf16.msra.mxu0 %v6461
        %6917 = vmatpush.bf16.msra.mxu0 %v6457
        %6918 = vmatpush.bf16.msra.mxu0 %v6453
        %6919 = vmatpush.bf16.msra.mxu0 %v6449
        %6920 = vmatpush.bf16.msra.mxu0 %v6445
        %6921 = vmatmul.bf16.gmra.mxu0 %v5988
        %v6922 = vpop.f32.mrf.mxu0
        %v6923 = vadd.f32 %v6874, %v6922
        %v6924 = vpop.f32.mrf.mxu0
        %v6925 = vadd.f32 %v6876, %v6924
        %6926 = vmatmul.bf16.gmra.mxu0 %v5992
        %v6927 = vpop.f32.mrf.mxu0
        %v6928 = vadd.f32 %v6879, %v6927
        %v6929 = vpop.f32.mrf.mxu0
        %v6930 = vadd.f32 %v6881, %v6929
        %6931 = vmatmul.bf16.gmra.mxu0 %v5996
        %v6932 = vpop.f32.mrf.mxu0
        %v6933 = vadd.f32 %v6884, %v6932
        %v6934 = vpop.f32.mrf.mxu0
        %v6935 = vadd.f32 %v6886, %v6934
        %6936 = vmatmul.bf16.gmra.mxu0 %v6000
        %v6937 = vpop.f32.mrf.mxu0
        %v6938 = vadd.f32 %v6889, %v6937
        %v6939 = vpop.f32.mrf.mxu0
        %v6940 = vadd.f32 %v6891, %v6939
        %6941 = vmatmul.bf16.gmra.mxu0 %v6004
        %v6942 = vpop.f32.mrf.mxu0
        %v6943 = vadd.f32 %v6894, %v6942
        %v6944 = vpop.f32.mrf.mxu0
        %v6945 = vadd.f32 %v6896, %v6944
        %6946 = vmatmul.bf16.gmra.mxu0 %v6008
        %v6947 = vpop.f32.mrf.mxu0
        %v6948 = vadd.f32 %v6899, %v6947
        %v6949 = vpop.f32.mrf.mxu0
        %v6950 = vadd.f32 %v6901, %v6949
        %6951 = vmatmul.bf16.gmra.mxu0 %v6012
        %v6952 = vpop.f32.mrf.mxu0
        %v6953 = vadd.f32 %v6904, %v6952
        %v6954 = vpop.f32.mrf.mxu0
        %v6955 = vadd.f32 %v6906, %v6954
        %6956 = vmatmul.bf16.gmra.mxu0 %v6016
        %v6957 = vpop.f32.mrf.mxu0
        %v6958 = vadd.f32 %v6909, %v6957
        %v6959 = vpop.f32.mrf.mxu0
        %v6960 = vadd.f32 %v6911, %v6959
        %6961 = vdwg.mxu0
        %6962 = vmatpush.bf16.msra.mxu0 %v6505
        %6963 = vmatpush.bf16.msra.mxu0 %v6501
        %6964 = vmatpush.bf16.msra.mxu0 %v6497
        %6965 = vmatpush.bf16.msra.mxu0 %v6493
        %6966 = vmatpush.bf16.msra.mxu0 %v6489
        %6967 = vmatpush.bf16.msra.mxu0 %v6485
        %6968 = vmatpush.bf16.msra.mxu0 %v6481
        %6969 = vmatpush.bf16.msra.mxu0 %v6477
        %6970 = vmatmul.bf16.gmra.mxu0 %v5989
        %v6971 = vpop.f32.mrf.mxu0
        %v6972 = vadd.f32 %v6923, %v6971
        %v6973 = vpop.f32.mrf.mxu0
        %v6974 = vadd.f32 %v6925, %v6973
        %6975 = vmatmul.bf16.gmra.mxu0 %v5993
        %v6976 = vpop.f32.mrf.mxu0
        %v6977 = vadd.f32 %v6928, %v6976
        %v6978 = vpop.f32.mrf.mxu0
        %v6979 = vadd.f32 %v6930, %v6978
        %6980 = vmatmul.bf16.gmra.mxu0 %v5997
        %v6981 = vpop.f32.mrf.mxu0
        %v6982 = vadd.f32 %v6933, %v6981
        %v6983 = vpop.f32.mrf.mxu0
        %v6984 = vadd.f32 %v6935, %v6983
        %6985 = vmatmul.bf16.gmra.mxu0 %v6001
        %v6986 = vpop.f32.mrf.mxu0
        %v6987 = vadd.f32 %v6938, %v6986
        %v6988 = vpop.f32.mrf.mxu0
        %v6989 = vadd.f32 %v6940, %v6988
        %6990 = vmatmul.bf16.gmra.mxu0 %v6005
        %v6991 = vpop.f32.mrf.mxu0
        %v6992 = vadd.f32 %v6943, %v6991
        %v6993 = vpop.f32.mrf.mxu0
        %v6994 = vadd.f32 %v6945, %v6993
        %6995 = vmatmul.bf16.gmra.mxu0 %v6009
        %v6996 = vpop.f32.mrf.mxu0
        %v6997 = vadd.f32 %v6948, %v6996
        %v6998 = vpop.f32.mrf.mxu0
        %v6999 = vadd.f32 %v6950, %v6998
        %7000 = vmatmul.bf16.gmra.mxu0 %v6013
        %v7001 = vpop.f32.mrf.mxu0
        %v7002 = vadd.f32 %v6953, %v7001
        %v7003 = vpop.f32.mrf.mxu0
        %v7004 = vadd.f32 %v6955, %v7003
        %7005 = vmatmul.bf16.gmra.mxu0 %v6017
        %v7006 = vpop.f32.mrf.mxu0
        %v7007 = vadd.f32 %v6958, %v7006
        %v7008 = vpop.f32.mrf.mxu0
        %v7009 = vadd.f32 %v6960, %v7008
        %7010 = vdwg.mxu0
        %7011 = vmatpush.bf16.msra.mxu0 %v6537
        %7012 = vmatpush.bf16.msra.mxu0 %v6533
        %7013 = vmatpush.bf16.msra.mxu0 %v6529
        %7014 = vmatpush.bf16.msra.mxu0 %v6525
        %7015 = vmatpush.bf16.msra.mxu0 %v6521
        %7016 = vmatpush.bf16.msra.mxu0 %v6517
        %7017 = vmatpush.bf16.msra.mxu0 %v6513
        %7018 = vmatpush.bf16.msra.mxu0 %v6509
        %7019 = vmatmul.bf16.gmra.mxu0 %v5990
        %v7020 = vpop.f32.mrf.mxu0
        %v7021 = vadd.f32 %v6972, %v7020
        %v7022 = vpop.f32.mrf.mxu0
        %v7023 = vadd.f32 %v6974, %v7022
        %7024 = vmatmul.bf16.gmra.mxu0 %v5994
        %v7025 = vpop.f32.mrf.mxu0
        %v7026 = vadd.f32 %v6977, %v7025
        %v7027 = vpop.f32.mrf.mxu0
        %v7028 = vadd.f32 %v6979, %v7027
        %7029 = vmatmul.bf16.gmra.mxu0 %v5998
        %v7030 = vpop.f32.mrf.mxu0
        %v7031 = vadd.f32 %v6982, %v7030
        %v7032 = vpop.f32.mrf.mxu0
        %v7033 = vadd.f32 %v6984, %v7032
        %7034 = vmatmul.bf16.gmra.mxu0 %v6002
        %v7035 = vpop.f32.mrf.mxu0
        %v7036 = vadd.f32 %v6987, %v7035
        %v7037 = vpop.f32.mrf.mxu0
        %v7038 = vadd.f32 %v6989, %v7037
        %7039 = vmatmul.bf16.gmra.mxu0 %v6006
        %v7040 = vpop.f32.mrf.mxu0
        %v7041 = vadd.f32 %v6992, %v7040
        %v7042 = vpop.f32.mrf.mxu0
        %v7043 = vadd.f32 %v6994, %v7042
        %7044 = vmatmul.bf16.gmra.mxu0 %v6010
        %v7045 = vpop.f32.mrf.mxu0
        %v7046 = vadd.f32 %v6997, %v7045
        %v7047 = vpop.f32.mrf.mxu0
        %v7048 = vadd.f32 %v6999, %v7047
        %7049 = vmatmul.bf16.gmra.mxu0 %v6014
        %v7050 = vpop.f32.mrf.mxu0
        %v7051 = vadd.f32 %v7002, %v7050
        %v7052 = vpop.f32.mrf.mxu0
        %v7053 = vadd.f32 %v7004, %v7052
        %7054 = vmatmul.bf16.gmra.mxu0 %v6018
        %v7055 = vpop.f32.mrf.mxu0
        %v7056 = vadd.f32 %v7007, %v7055
        %v7057 = vpop.f32.mrf.mxu0
        %v7058 = vadd.f32 %v7009, %v7057
        %7059 = vdwg.mxu0
        %7060 = vmatpush.bf16.msra.mxu0 %v6442
        %7061 = vmatpush.bf16.msra.mxu0 %v6438
        %7062 = vmatpush.bf16.msra.mxu0 %v6434
        %7063 = vmatpush.bf16.msra.mxu0 %v6430
        %7064 = vmatpush.bf16.msra.mxu0 %v6426
        %7065 = vmatpush.bf16.msra.mxu0 %v6422
        %7066 = vmatpush.bf16.msra.mxu0 %v6418
        %7067 = vmatpush.bf16.msra.mxu0 %v6414
        %7068 = vmatmul.bf16.gmra.mxu0 %v5987
        %v7069 = vpop.f32.mrf.mxu0
        %v7070 = vadd.f32 %v6022, %v7069
        %v7071 = vpop.f32.mrf.mxu0
        %v7072 = vadd.f32 %v6022, %v7071
        %7073 = vmatmul.bf16.gmra.mxu0 %v5991
        %v7074 = vpop.f32.mrf.mxu0
        %v7075 = vadd.f32 %v6022, %v7074
        %v7076 = vpop.f32.mrf.mxu0
        %v7077 = vadd.f32 %v6022, %v7076
        %7078 = vmatmul.bf16.gmra.mxu0 %v5995
        %v7079 = vpop.f32.mrf.mxu0
        %v7080 = vadd.f32 %v6022, %v7079
        %v7081 = vpop.f32.mrf.mxu0
        %v7082 = vadd.f32 %v6022, %v7081
        %7083 = vmatmul.bf16.gmra.mxu0 %v5999
        %v7084 = vpop.f32.mrf.mxu0
        %v7085 = vadd.f32 %v6022, %v7084
        %v7086 = vpop.f32.mrf.mxu0
        %v7087 = vadd.f32 %v6022, %v7086
        %7088 = vmatmul.bf16.gmra.mxu0 %v6003
        %v7089 = vpop.f32.mrf.mxu0
        %v7090 = vadd.f32 %v6022, %v7089
        %v7091 = vpop.f32.mrf.mxu0
        %v7092 = vadd.f32 %v6022, %v7091
        %7093 = vmatmul.bf16.gmra.mxu0 %v6007
        %v7094 = vpop.f32.mrf.mxu0
        %v7095 = vadd.f32 %v6022, %v7094
        %v7096 = vpop.f32.mrf.mxu0
        %v7097 = vadd.f32 %v6022, %v7096
        %7098 = vmatmul.bf16.gmra.mxu0 %v6011
        %v7099 = vpop.f32.mrf.mxu0
        %v7100 = vadd.f32 %v6022, %v7099
        %v7101 = vpop.f32.mrf.mxu0
        %v7102 = vadd.f32 %v6022, %v7101
        %7103 = vmatmul.bf16.gmra.mxu0 %v6015
        %v7104 = vpop.f32.mrf.mxu0
        %v7105 = vadd.f32 %v6022, %v7104
        %v7106 = vpop.f32.mrf.mxu0
        %v7107 = vadd.f32 %v6022, %v7106
        %7108 = vdwg.mxu0
        %7109 = vmatpush.bf16.msra.mxu0 %v6474
        %7110 = vmatpush.bf16.msra.mxu0 %v6470
        %7111 = vmatpush.bf16.msra.mxu0 %v6466
        %7112 = vmatpush.bf16.msra.mxu0 %v6462
        %7113 = vmatpush.bf16.msra.mxu0 %v6458
        %7114 = vmatpush.bf16.msra.mxu0 %v6454
        %7115 = vmatpush.bf16.msra.mxu0 %v6450
        %7116 = vmatpush.bf16.msra.mxu0 %v6446
        %7117 = vmatmul.bf16.gmra.mxu0 %v5988
        %v7118 = vpop.f32.mrf.mxu0
        %v7119 = vadd.f32 %v7070, %v7118
        %v7120 = vpop.f32.mrf.mxu0
        %v7121 = vadd.f32 %v7072, %v7120
        %7122 = vmatmul.bf16.gmra.mxu0 %v5992
        %v7123 = vpop.f32.mrf.mxu0
        %v7124 = vadd.f32 %v7075, %v7123
        %v7125 = vpop.f32.mrf.mxu0
        %v7126 = vadd.f32 %v7077, %v7125
        %7127 = vmatmul.bf16.gmra.mxu0 %v5996
        %v7128 = vpop.f32.mrf.mxu0
        %v7129 = vadd.f32 %v7080, %v7128
        %v7130 = vpop.f32.mrf.mxu0
        %v7131 = vadd.f32 %v7082, %v7130
        %7132 = vmatmul.bf16.gmra.mxu0 %v6000
        %v7133 = vpop.f32.mrf.mxu0
        %v7134 = vadd.f32 %v7085, %v7133
        %v7135 = vpop.f32.mrf.mxu0
        %v7136 = vadd.f32 %v7087, %v7135
        %7137 = vmatmul.bf16.gmra.mxu0 %v6004
        %v7138 = vpop.f32.mrf.mxu0
        %v7139 = vadd.f32 %v7090, %v7138
        %v7140 = vpop.f32.mrf.mxu0
        %v7141 = vadd.f32 %v7092, %v7140
        %7142 = vmatmul.bf16.gmra.mxu0 %v6008
        %v7143 = vpop.f32.mrf.mxu0
        %v7144 = vadd.f32 %v7095, %v7143
        %v7145 = vpop.f32.mrf.mxu0
        %v7146 = vadd.f32 %v7097, %v7145
        %7147 = vmatmul.bf16.gmra.mxu0 %v6012
        %v7148 = vpop.f32.mrf.mxu0
        %v7149 = vadd.f32 %v7100, %v7148
        %v7150 = vpop.f32.mrf.mxu0
        %v7151 = vadd.f32 %v7102, %v7150
        %7152 = vmatmul.bf16.gmra.mxu0 %v6016
        %v7153 = vpop.f32.mrf.mxu0
        %v7154 = vadd.f32 %v7105, %v7153
        %v7155 = vpop.f32.mrf.mxu0
        %v7156 = vadd.f32 %v7107, %v7155
        %7157 = vdwg.mxu0
        %7158 = vmatpush.bf16.msra.mxu0 %v6506
        %7159 = vmatpush.bf16.msra.mxu0 %v6502
        %7160 = vmatpush.bf16.msra.mxu0 %v6498
        %7161 = vmatpush.bf16.msra.mxu0 %v6494
        %7162 = vmatpush.bf16.msra.mxu0 %v6490
        %7163 = vmatpush.bf16.msra.mxu0 %v6486
        %7164 = vmatpush.bf16.msra.mxu0 %v6482
        %7165 = vmatpush.bf16.msra.mxu0 %v6478
        %7166 = vmatmul.bf16.gmra.mxu0 %v5989
        %v7167 = vpop.f32.mrf.mxu0
        %v7168 = vadd.f32 %v7119, %v7167
        %v7169 = vpop.f32.mrf.mxu0
        %v7170 = vadd.f32 %v7121, %v7169
        %7171 = vmatmul.bf16.gmra.mxu0 %v5993
        %v7172 = vpop.f32.mrf.mxu0
        %v7173 = vadd.f32 %v7124, %v7172
        %v7174 = vpop.f32.mrf.mxu0
        %v7175 = vadd.f32 %v7126, %v7174
        %7176 = vmatmul.bf16.gmra.mxu0 %v5997
        %v7177 = vpop.f32.mrf.mxu0
        %v7178 = vadd.f32 %v7129, %v7177
        %v7179 = vpop.f32.mrf.mxu0
        %v7180 = vadd.f32 %v7131, %v7179
        %7181 = vmatmul.bf16.gmra.mxu0 %v6001
        %v7182 = vpop.f32.mrf.mxu0
        %v7183 = vadd.f32 %v7134, %v7182
        %v7184 = vpop.f32.mrf.mxu0
        %v7185 = vadd.f32 %v7136, %v7184
        %7186 = vmatmul.bf16.gmra.mxu0 %v6005
        %v7187 = vpop.f32.mrf.mxu0
        %v7188 = vadd.f32 %v7139, %v7187
        %v7189 = vpop.f32.mrf.mxu0
        %v7190 = vadd.f32 %v7141, %v7189
        %7191 = vmatmul.bf16.gmra.mxu0 %v6009
        %v7192 = vpop.f32.mrf.mxu0
        %v7193 = vadd.f32 %v7144, %v7192
        %v7194 = vpop.f32.mrf.mxu0
        %v7195 = vadd.f32 %v7146, %v7194
        %7196 = vmatmul.bf16.gmra.mxu0 %v6013
        %v7197 = vpop.f32.mrf.mxu0
        %v7198 = vadd.f32 %v7149, %v7197
        %v7199 = vpop.f32.mrf.mxu0
        %v7200 = vadd.f32 %v7151, %v7199
        %7201 = vmatmul.bf16.gmra.mxu0 %v6017
        %v7202 = vpop.f32.mrf.mxu0
        %v7203 = vadd.f32 %v7154, %v7202
        %v7204 = vpop.f32.mrf.mxu0
        %v7205 = vadd.f32 %v7156, %v7204
        %7206 = vdwg.mxu0
        %7207 = vmatpush.bf16.msra.mxu0 %v6538
        %7208 = vmatpush.bf16.msra.mxu0 %v6534
        %7209 = vmatpush.bf16.msra.mxu0 %v6530
        %7210 = vmatpush.bf16.msra.mxu0 %v6526
        %7211 = vmatpush.bf16.msra.mxu0 %v6522
        %7212 = vmatpush.bf16.msra.mxu0 %v6518
        %7213 = vmatpush.bf16.msra.mxu0 %v6514
        %7214 = vmatpush.bf16.msra.mxu0 %v6510
        %7215 = vmatmul.bf16.gmra.mxu0 %v5990
        %v7216 = vpop.f32.mrf.mxu0
        %v7217 = vadd.f32 %v7168, %v7216
        %v7218 = vpop.f32.mrf.mxu0
        %v7219 = vadd.f32 %v7170, %v7218
        %7220 = vmatmul.bf16.gmra.mxu0 %v5994
        %v7221 = vpop.f32.mrf.mxu0
        %v7222 = vadd.f32 %v7173, %v7221
        %v7223 = vpop.f32.mrf.mxu0
        %v7224 = vadd.f32 %v7175, %v7223
        %7225 = vmatmul.bf16.gmra.mxu0 %v5998
        %v7226 = vpop.f32.mrf.mxu0
        %v7227 = vadd.f32 %v7178, %v7226
        %v7228 = vpop.f32.mrf.mxu0
        %v7229 = vadd.f32 %v7180, %v7228
        %7230 = vmatmul.bf16.gmra.mxu0 %v6002
        %v7231 = vpop.f32.mrf.mxu0
        %v7232 = vadd.f32 %v7183, %v7231
        %v7233 = vpop.f32.mrf.mxu0
        %v7234 = vadd.f32 %v7185, %v7233
        %7235 = vmatmul.bf16.gmra.mxu0 %v6006
        %v7236 = vpop.f32.mrf.mxu0
        %v7237 = vadd.f32 %v7188, %v7236
        %v7238 = vpop.f32.mrf.mxu0
        %v7239 = vadd.f32 %v7190, %v7238
        %7240 = vmatmul.bf16.gmra.mxu0 %v6010
        %v7241 = vpop.f32.mrf.mxu0
        %v7242 = vadd.f32 %v7193, %v7241
        %v7243 = vpop.f32.mrf.mxu0
        %v7244 = vadd.f32 %v7195, %v7243
        %7245 = vmatmul.bf16.gmra.mxu0 %v6014
        %v7246 = vpop.f32.mrf.mxu0
        %v7247 = vadd.f32 %v7198, %v7246
        %v7248 = vpop.f32.mrf.mxu0
        %v7249 = vadd.f32 %v7200, %v7248
        %7250 = vmatmul.bf16.gmra.mxu0 %v6018
        %v7251 = vpop.f32.mrf.mxu0
        %v7252 = vadd.f32 %v7203, %v7251
        %v7253 = vpop.f32.mrf.mxu0
        %v7254 = vadd.f32 %v7205, %v7253
        %7255 = vdwg.mxu0
        %7256 = vmatpush.bf16.msra.mxu0 %v6443
        %7257 = vmatpush.bf16.msra.mxu0 %v6439
        %7258 = vmatpush.bf16.msra.mxu0 %v6435
        %7259 = vmatpush.bf16.msra.mxu0 %v6431
        %7260 = vmatpush.bf16.msra.mxu0 %v6427
        %7261 = vmatpush.bf16.msra.mxu0 %v6423
        %7262 = vmatpush.bf16.msra.mxu0 %v6419
        %7263 = vmatpush.bf16.msra.mxu0 %v6415
        %7264 = vmatmul.bf16.gmra.mxu0 %v5987
        %v7265 = vpop.f32.mrf.mxu0
        %v7266 = vadd.f32 %v6023, %v7265
        %v7267 = vpop.f32.mrf.mxu0
        %v7268 = vadd.f32 %v6023, %v7267
        %7269 = vmatmul.bf16.gmra.mxu0 %v5991
        %v7270 = vpop.f32.mrf.mxu0
        %v7271 = vadd.f32 %v6023, %v7270
        %v7272 = vpop.f32.mrf.mxu0
        %v7273 = vadd.f32 %v6023, %v7272
        %7274 = vmatmul.bf16.gmra.mxu0 %v5995
        %v7275 = vpop.f32.mrf.mxu0
        %v7276 = vadd.f32 %v6023, %v7275
        %v7277 = vpop.f32.mrf.mxu0
        %v7278 = vadd.f32 %v6023, %v7277
        %7279 = vmatmul.bf16.gmra.mxu0 %v5999
        %v7280 = vpop.f32.mrf.mxu0
        %v7281 = vadd.f32 %v6023, %v7280
        %v7282 = vpop.f32.mrf.mxu0
        %v7283 = vadd.f32 %v6023, %v7282
        %7284 = vmatmul.bf16.gmra.mxu0 %v6003
        %v7285 = vpop.f32.mrf.mxu0
        %v7286 = vadd.f32 %v6023, %v7285
        %v7287 = vpop.f32.mrf.mxu0
        %v7288 = vadd.f32 %v6023, %v7287
        %7289 = vmatmul.bf16.gmra.mxu0 %v6007
        %v7290 = vpop.f32.mrf.mxu0
        %v7291 = vadd.f32 %v6023, %v7290
        %v7292 = vpop.f32.mrf.mxu0
        %v7293 = vadd.f32 %v6023, %v7292
        %7294 = vmatmul.bf16.gmra.mxu0 %v6011
        %v7295 = vpop.f32.mrf.mxu0
        %v7296 = vadd.f32 %v6023, %v7295
        %v7297 = vpop.f32.mrf.mxu0
        %v7298 = vadd.f32 %v6023, %v7297
        %7299 = vmatmul.bf16.gmra.mxu0 %v6015
        %v7300 = vpop.f32.mrf.mxu0
        %v7301 = vadd.f32 %v6023, %v7300
        %v7302 = vpop.f32.mrf.mxu0
        %v7303 = vadd.f32 %v6023, %v7302
        %7304 = vdwg.mxu0
        %7305 = vmatpush.bf16.msra.mxu0 %v6475
        %7306 = vmatpush.bf16.msra.mxu0 %v6471
        %7307 = vmatpush.bf16.msra.mxu0 %v6467
        %7308 = vmatpush.bf16.msra.mxu0 %v6463
        %7309 = vmatpush.bf16.msra.mxu0 %v6459
        %7310 = vmatpush.bf16.msra.mxu0 %v6455
        %7311 = vmatpush.bf16.msra.mxu0 %v6451
        %7312 = vmatpush.bf16.msra.mxu0 %v6447
        %7313 = vmatmul.bf16.gmra.mxu0 %v5988
        %v7314 = vpop.f32.mrf.mxu0
        %v7315 = vadd.f32 %v7266, %v7314
        %v7316 = vpop.f32.mrf.mxu0
        %v7317 = vadd.f32 %v7268, %v7316
        %7318 = vmatmul.bf16.gmra.mxu0 %v5992
        %v7319 = vpop.f32.mrf.mxu0
        %v7320 = vadd.f32 %v7271, %v7319
        %v7321 = vpop.f32.mrf.mxu0
        %v7322 = vadd.f32 %v7273, %v7321
        %7323 = vmatmul.bf16.gmra.mxu0 %v5996
        %v7324 = vpop.f32.mrf.mxu0
        %v7325 = vadd.f32 %v7276, %v7324
        %v7326 = vpop.f32.mrf.mxu0
        %v7327 = vadd.f32 %v7278, %v7326
        %7328 = vmatmul.bf16.gmra.mxu0 %v6000
        %v7329 = vpop.f32.mrf.mxu0
        %v7330 = vadd.f32 %v7281, %v7329
        %v7331 = vpop.f32.mrf.mxu0
        %v7332 = vadd.f32 %v7283, %v7331
        %7333 = vmatmul.bf16.gmra.mxu0 %v6004
        %v7334 = vpop.f32.mrf.mxu0
        %v7335 = vadd.f32 %v7286, %v7334
        %v7336 = vpop.f32.mrf.mxu0
        %v7337 = vadd.f32 %v7288, %v7336
        %7338 = vmatmul.bf16.gmra.mxu0 %v6008
        %v7339 = vpop.f32.mrf.mxu0
        %v7340 = vadd.f32 %v7291, %v7339
        %v7341 = vpop.f32.mrf.mxu0
        %v7342 = vadd.f32 %v7293, %v7341
        %7343 = vmatmul.bf16.gmra.mxu0 %v6012
        %v7344 = vpop.f32.mrf.mxu0
        %v7345 = vadd.f32 %v7296, %v7344
        %v7346 = vpop.f32.mrf.mxu0
        %v7347 = vadd.f32 %v7298, %v7346
        %7348 = vmatmul.bf16.gmra.mxu0 %v6016
        %v7349 = vpop.f32.mrf.mxu0
        %v7350 = vadd.f32 %v7301, %v7349
        %v7351 = vpop.f32.mrf.mxu0
        %v7352 = vadd.f32 %v7303, %v7351
        %7353 = vdwg.mxu0
        %7354 = vmatpush.bf16.msra.mxu0 %v6507
        %7355 = vmatpush.bf16.msra.mxu0 %v6503
        %7356 = vmatpush.bf16.msra.mxu0 %v6499
        %7357 = vmatpush.bf16.msra.mxu0 %v6495
        %7358 = vmatpush.bf16.msra.mxu0 %v6491
        %7359 = vmatpush.bf16.msra.mxu0 %v6487
        %7360 = vmatpush.bf16.msra.mxu0 %v6483
        %7361 = vmatpush.bf16.msra.mxu0 %v6479
        %7362 = vmatmul.bf16.gmra.mxu0 %v5989
        %v7363 = vpop.f32.mrf.mxu0
        %v7364 = vadd.f32 %v7315, %v7363
        %v7365 = vpop.f32.mrf.mxu0
        %v7366 = vadd.f32 %v7317, %v7365
        %7367 = vmatmul.bf16.gmra.mxu0 %v5993
        %v7368 = vpop.f32.mrf.mxu0
        %v7369 = vadd.f32 %v7320, %v7368
        %v7370 = vpop.f32.mrf.mxu0
        %v7371 = vadd.f32 %v7322, %v7370
        %7372 = vmatmul.bf16.gmra.mxu0 %v5997
        %v7373 = vpop.f32.mrf.mxu0
        %v7374 = vadd.f32 %v7325, %v7373
        %v7375 = vpop.f32.mrf.mxu0
        %v7376 = vadd.f32 %v7327, %v7375
        %7377 = vmatmul.bf16.gmra.mxu0 %v6001
        %v7378 = vpop.f32.mrf.mxu0
        %v7379 = vadd.f32 %v7330, %v7378
        %v7380 = vpop.f32.mrf.mxu0
        %v7381 = vadd.f32 %v7332, %v7380
        %7382 = vmatmul.bf16.gmra.mxu0 %v6005
        %v7383 = vpop.f32.mrf.mxu0
        %v7384 = vadd.f32 %v7335, %v7383
        %v7385 = vpop.f32.mrf.mxu0
        %v7386 = vadd.f32 %v7337, %v7385
        %7387 = vmatmul.bf16.gmra.mxu0 %v6009
        %v7388 = vpop.f32.mrf.mxu0
        %v7389 = vadd.f32 %v7340, %v7388
        %v7390 = vpop.f32.mrf.mxu0
        %v7391 = vadd.f32 %v7342, %v7390
        %7392 = vmatmul.bf16.gmra.mxu0 %v6013
        %v7393 = vpop.f32.mrf.mxu0
        %v7394 = vadd.f32 %v7345, %v7393
        %v7395 = vpop.f32.mrf.mxu0
        %v7396 = vadd.f32 %v7347, %v7395
        %7397 = vmatmul.bf16.gmra.mxu0 %v6017
        %v7398 = vpop.f32.mrf.mxu0
        %v7399 = vadd.f32 %v7350, %v7398
        %v7400 = vpop.f32.mrf.mxu0
        %v7401 = vadd.f32 %v7352, %v7400
        %7402 = vdwg.mxu0
        %7403 = vmatpush.bf16.msra.mxu0 %v6539
        %7404 = vmatpush.bf16.msra.mxu0 %v6535
        %7405 = vmatpush.bf16.msra.mxu0 %v6531
        %7406 = vmatpush.bf16.msra.mxu0 %v6527
        %7407 = vmatpush.bf16.msra.mxu0 %v6523
        %7408 = vmatpush.bf16.msra.mxu0 %v6519
        %7409 = vmatpush.bf16.msra.mxu0 %v6515
        %7410 = vmatpush.bf16.msra.mxu0 %v6511
        %7411 = vmatmul.bf16.gmra.mxu0 %v5990
        %v7412 = vpop.f32.mrf.mxu0
        %v7413 = vadd.f32 %v7364, %v7412
        %v7414 = vpop.f32.mrf.mxu0
        %v7415 = vadd.f32 %v7366, %v7414
        %7416 = vmatmul.bf16.gmra.mxu0 %v5994
        %v7417 = vpop.f32.mrf.mxu0
        %v7418 = vadd.f32 %v7369, %v7417
        %v7419 = vpop.f32.mrf.mxu0
        %v7420 = vadd.f32 %v7371, %v7419
        %7421 = vmatmul.bf16.gmra.mxu0 %v5998
        %v7422 = vpop.f32.mrf.mxu0
        %v7423 = vadd.f32 %v7374, %v7422
        %v7424 = vpop.f32.mrf.mxu0
        %v7425 = vadd.f32 %v7376, %v7424
        %7426 = vmatmul.bf16.gmra.mxu0 %v6002
        %v7427 = vpop.f32.mrf.mxu0
        %v7428 = vadd.f32 %v7379, %v7427
        %v7429 = vpop.f32.mrf.mxu0
        %v7430 = vadd.f32 %v7381, %v7429
        %7431 = vmatmul.bf16.gmra.mxu0 %v6006
        %v7432 = vpop.f32.mrf.mxu0
        %v7433 = vadd.f32 %v7384, %v7432
        %v7434 = vpop.f32.mrf.mxu0
        %v7435 = vadd.f32 %v7386, %v7434
        %7436 = vmatmul.bf16.gmra.mxu0 %v6010
        %v7437 = vpop.f32.mrf.mxu0
        %v7438 = vadd.f32 %v7389, %v7437
        %v7439 = vpop.f32.mrf.mxu0
        %v7440 = vadd.f32 %v7391, %v7439
        %7441 = vmatmul.bf16.gmra.mxu0 %v6014
        %v7442 = vpop.f32.mrf.mxu0
        %v7443 = vadd.f32 %v7394, %v7442
        %v7444 = vpop.f32.mrf.mxu0
        %v7445 = vadd.f32 %v7396, %v7444
        %7446 = vmatmul.bf16.gmra.mxu0 %v6018
        %v7447 = vpop.f32.mrf.mxu0
        %v7448 = vadd.f32 %v7399, %v7447
        %v7449 = vpop.f32.mrf.mxu0
        %v7450 = vadd.f32 %v7401, %v7449
        %7451 = vdwg.mxu0
        %v7452 = vpack.c.bf16 %v7021, %v6825
        %v7453 = vpack.c.bf16 %v7413, %v7217
        %v7454 = vpack.c.bf16 %v7023, %v6827
        %v7455 = vpack.c.bf16 %v7415, %v7219
        %v7456 = vpack.c.bf16 %v7026, %v6830
        %v7457 = vpack.c.bf16 %v7418, %v7222
        %v7458 = vpack.c.bf16 %v7028, %v6832
        %v7459 = vpack.c.bf16 %v7420, %v7224
        %v7460 = vpack.c.bf16 %v7031, %v6835
        %v7461 = vpack.c.bf16 %v7423, %v7227
        %v7462 = vpack.c.bf16 %v7033, %v6837
        %v7463 = vpack.c.bf16 %v7425, %v7229
        %v7464 = vpack.c.bf16 %v7036, %v6840
        %v7465 = vpack.c.bf16 %v7428, %v7232
        %v7466 = vpack.c.bf16 %v7038, %v6842
        %v7467 = vpack.c.bf16 %v7430, %v7234
        %v7468 = vpack.c.bf16 %v7041, %v6845
        %v7469 = vpack.c.bf16 %v7433, %v7237
        %v7470 = vpack.c.bf16 %v7043, %v6847
        %v7471 = vpack.c.bf16 %v7435, %v7239
        %v7472 = vpack.c.bf16 %v7046, %v6850
        %v7473 = vpack.c.bf16 %v7438, %v7242
        %v7474 = vpack.c.bf16 %v7048, %v6852
        %v7475 = vpack.c.bf16 %v7440, %v7244
        %v7476 = vpack.c.bf16 %v7051, %v6855
        %v7477 = vpack.c.bf16 %v7443, %v7247
        %v7478 = vpack.c.bf16 %v7053, %v6857
        %v7479 = vpack.c.bf16 %v7445, %v7249
        %v7480 = vpack.c.bf16 %v7056, %v6860
        %v7481 = vpack.c.bf16 %v7448, %v7252
        %v7482 = vpack.c.bf16 %v7058, %v6862
        %v7483 = vpack.c.bf16 %v7450, %v7254
        %v7484 = vld [vmem:[%s496] sm:$0xff]
        %v7485 = vld [vmem:[%s496 + $0x8] sm:$0xff]
        %v7488 = vunpack.c.l.b16 %v7484
        %v7489 = vunpack.c.h.b16 %v7484
        %v7490 = vunpack.c.l.b16 %v7485
        %v7491 = vunpack.c.h.b16 %v7485
        %v7492 = vpack.c.b16 %v7488, %v7488
        %v7493 = vpack.c.b16 %v7489, %v7489
        %v7494 = vpack.c.b16 %v7490, %v7490
        %v7495 = vpack.c.b16 %v7491, %v7491
        %7500 = vmatpush.bf16.msra.mxu0 %v1725
        %7501 = vmatpush.bf16.msra.mxu0 %v1721
        %7502 = vmatpush.bf16.msra.mxu0 %v1717
        %7503 = vmatpush.bf16.msra.mxu0 %v1713
        %7504 = vmatpush.bf16.msra.mxu0 %v1709
        %7505 = vmatpush.bf16.msra.mxu0 %v1705
        %7506 = vmatpush.bf16.msra.mxu0 %v1701
        %7507 = vmatpush.bf16.msra.mxu0 %v1697
        %7508 = vmatmul.bf16.gmra.mxu0 %v7492
        %v7509 = vpop.f32.mrf.mxu0
        %v7510 = vadd.f32 %v1145, %v7509
        %v7511 = vpop.f32.mrf.mxu0
        %7512 = vdwg.mxu0
        %7513 = vmatpush.bf16.msra.mxu0 %v1757
        %7514 = vmatpush.bf16.msra.mxu0 %v1753
        %7515 = vmatpush.bf16.msra.mxu0 %v1749
        %7516 = vmatpush.bf16.msra.mxu0 %v1745
        %7517 = vmatpush.bf16.msra.mxu0 %v1741
        %7518 = vmatpush.bf16.msra.mxu0 %v1737
        %7519 = vmatpush.bf16.msra.mxu0 %v1733
        %7520 = vmatpush.bf16.msra.mxu0 %v1729
        %7521 = vmatmul.bf16.gmra.mxu0 %v7493
        %v7522 = vpop.f32.mrf.mxu0
        %v7523 = vadd.f32 %v7510, %v7522
        %v7524 = vpop.f32.mrf.mxu0
        %7525 = vdwg.mxu0
        %7526 = vmatpush.bf16.msra.mxu0 %v1789
        %7527 = vmatpush.bf16.msra.mxu0 %v1785
        %7528 = vmatpush.bf16.msra.mxu0 %v1781
        %7529 = vmatpush.bf16.msra.mxu0 %v1777
        %7530 = vmatpush.bf16.msra.mxu0 %v1773
        %7531 = vmatpush.bf16.msra.mxu0 %v1769
        %7532 = vmatpush.bf16.msra.mxu0 %v1765
        %7533 = vmatpush.bf16.msra.mxu0 %v1761
        %7534 = vmatmul.bf16.gmra.mxu0 %v7494
        %v7535 = vpop.f32.mrf.mxu0
        %v7536 = vadd.f32 %v7523, %v7535
        %v7537 = vpop.f32.mrf.mxu0
        %7538 = vdwg.mxu0
        %7539 = vmatpush.bf16.msra.mxu0 %v1821
        %7540 = vmatpush.bf16.msra.mxu0 %v1817
        %7541 = vmatpush.bf16.msra.mxu0 %v1813
        %7542 = vmatpush.bf16.msra.mxu0 %v1809
        %7543 = vmatpush.bf16.msra.mxu0 %v1805
        %7544 = vmatpush.bf16.msra.mxu0 %v1801
        %7545 = vmatpush.bf16.msra.mxu0 %v1797
        %7546 = vmatpush.bf16.msra.mxu0 %v1793
        %7547 = vmatmul.bf16.gmra.mxu0 %v7495
        %v7548 = vpop.f32.mrf.mxu0
        %v7549 = vadd.f32 %v7536, %v7548
        %v7550 = vpop.f32.mrf.mxu0
        %7551 = vdwg.mxu0
        %7552 = vmatpush.bf16.msra.mxu0 %v1726
        %7553 = vmatpush.bf16.msra.mxu0 %v1722
        %7554 = vmatpush.bf16.msra.mxu0 %v1718
        %7555 = vmatpush.bf16.msra.mxu0 %v1714
        %7556 = vmatpush.bf16.msra.mxu0 %v1710
        %7557 = vmatpush.bf16.msra.mxu0 %v1706
        %7558 = vmatpush.bf16.msra.mxu0 %v1702
        %7559 = vmatpush.bf16.msra.mxu0 %v1698
        %7560 = vmatmul.bf16.gmra.mxu0 %v7492
        %v7561 = vpop.f32.mrf.mxu0
        %v7562 = vadd.f32 %v1146, %v7561
        %v7563 = vpop.f32.mrf.mxu0
        %7564 = vdwg.mxu0
        %7565 = vmatpush.bf16.msra.mxu0 %v1758
        %7566 = vmatpush.bf16.msra.mxu0 %v1754
        %7567 = vmatpush.bf16.msra.mxu0 %v1750
        %7568 = vmatpush.bf16.msra.mxu0 %v1746
        %7569 = vmatpush.bf16.msra.mxu0 %v1742
        %7570 = vmatpush.bf16.msra.mxu0 %v1738
        %7571 = vmatpush.bf16.msra.mxu0 %v1734
        %7572 = vmatpush.bf16.msra.mxu0 %v1730
        %7573 = vmatmul.bf16.gmra.mxu0 %v7493
        %v7574 = vpop.f32.mrf.mxu0
        %v7575 = vadd.f32 %v7562, %v7574
        %v7576 = vpop.f32.mrf.mxu0
        %7577 = vdwg.mxu0
        %7578 = vmatpush.bf16.msra.mxu0 %v1790
        %7579 = vmatpush.bf16.msra.mxu0 %v1786
        %7580 = vmatpush.bf16.msra.mxu0 %v1782
        %7581 = vmatpush.bf16.msra.mxu0 %v1778
        %7582 = vmatpush.bf16.msra.mxu0 %v1774
        %7583 = vmatpush.bf16.msra.mxu0 %v1770
        %7584 = vmatpush.bf16.msra.mxu0 %v1766
        %7585 = vmatpush.bf16.msra.mxu0 %v1762
        %7586 = vmatmul.bf16.gmra.mxu0 %v7494
        %v7587 = vpop.f32.mrf.mxu0
        %v7588 = vadd.f32 %v7575, %v7587
        %v7589 = vpop.f32.mrf.mxu0
        %7590 = vdwg.mxu0
        %7591 = vmatpush.bf16.msra.mxu0 %v1822
        %7592 = vmatpush.bf16.msra.mxu0 %v1818
        %7593 = vmatpush.bf16.msra.mxu0 %v1814
        %7594 = vmatpush.bf16.msra.mxu0 %v1810
        %7595 = vmatpush.bf16.msra.mxu0 %v1806
        %7596 = vmatpush.bf16.msra.mxu0 %v1802
        %7597 = vmatpush.bf16.msra.mxu0 %v1798
        %7598 = vmatpush.bf16.msra.mxu0 %v1794
        %7599 = vmatmul.bf16.gmra.mxu0 %v7495
        %v7600 = vpop.f32.mrf.mxu0
        %v7601 = vadd.f32 %v7588, %v7600
        %v7602 = vpop.f32.mrf.mxu0
        %7603 = vdwg.mxu0
        %7604 = vmatpush.bf16.msra.mxu0 %v1727
        %7605 = vmatpush.bf16.msra.mxu0 %v1723
        %7606 = vmatpush.bf16.msra.mxu0 %v1719
        %7607 = vmatpush.bf16.msra.mxu0 %v1715
        %7608 = vmatpush.bf16.msra.mxu0 %v1711
        %7609 = vmatpush.bf16.msra.mxu0 %v1707
        %7610 = vmatpush.bf16.msra.mxu0 %v1703
        %7611 = vmatpush.bf16.msra.mxu0 %v1699
        %7612 = vmatmul.bf16.gmra.mxu0 %v7492
        %v7613 = vpop.f32.mrf.mxu0
        %v7614 = vadd.f32 %v1147, %v7613
        %v7615 = vpop.f32.mrf.mxu0
        %7616 = vdwg.mxu0
        %7617 = vmatpush.bf16.msra.mxu0 %v1759
        %7618 = vmatpush.bf16.msra.mxu0 %v1755
        %7619 = vmatpush.bf16.msra.mxu0 %v1751
        %7620 = vmatpush.bf16.msra.mxu0 %v1747
        %7621 = vmatpush.bf16.msra.mxu0 %v1743
        %7622 = vmatpush.bf16.msra.mxu0 %v1739
        %7623 = vmatpush.bf16.msra.mxu0 %v1735
        %7624 = vmatpush.bf16.msra.mxu0 %v1731
        %7625 = vmatmul.bf16.gmra.mxu0 %v7493
        %v7626 = vpop.f32.mrf.mxu0
        %v7627 = vadd.f32 %v7614, %v7626
        %v7628 = vpop.f32.mrf.mxu0
        %7629 = vdwg.mxu0
        %7630 = vmatpush.bf16.msra.mxu0 %v1791
        %7631 = vmatpush.bf16.msra.mxu0 %v1787
        %7632 = vmatpush.bf16.msra.mxu0 %v1783
        %7633 = vmatpush.bf16.msra.mxu0 %v1779
        %7634 = vmatpush.bf16.msra.mxu0 %v1775
        %7635 = vmatpush.bf16.msra.mxu0 %v1771
        %7636 = vmatpush.bf16.msra.mxu0 %v1767
        %7637 = vmatpush.bf16.msra.mxu0 %v1763
        %7638 = vmatmul.bf16.gmra.mxu0 %v7494
        %v7639 = vpop.f32.mrf.mxu0
        %v7640 = vadd.f32 %v7627, %v7639
        %v7641 = vpop.f32.mrf.mxu0
        %7642 = vdwg.mxu0
        %7643 = vmatpush.bf16.msra.mxu0 %v1823
        %7644 = vmatpush.bf16.msra.mxu0 %v1819
        %7645 = vmatpush.bf16.msra.mxu0 %v1815
        %7646 = vmatpush.bf16.msra.mxu0 %v1811
        %7647 = vmatpush.bf16.msra.mxu0 %v1807
        %7648 = vmatpush.bf16.msra.mxu0 %v1803
        %7649 = vmatpush.bf16.msra.mxu0 %v1799
        %7650 = vmatpush.bf16.msra.mxu0 %v1795
        %7651 = vmatmul.bf16.gmra.mxu0 %v7495
        %v7652 = vpop.f32.mrf.mxu0
        %v7653 = vadd.f32 %v7640, %v7652
        %v7654 = vpop.f32.mrf.mxu0
        %7655 = vdwg.mxu0
        %7656 = vmatpush.bf16.msra.mxu0 %v1728
        %7657 = vmatpush.bf16.msra.mxu0 %v1724
        %7658 = vmatpush.bf16.msra.mxu0 %v1720
        %7659 = vmatpush.bf16.msra.mxu0 %v1716
        %7660 = vmatpush.bf16.msra.mxu0 %v1712
        %7661 = vmatpush.bf16.msra.mxu0 %v1708
        %7662 = vmatpush.bf16.msra.mxu0 %v1704
        %7663 = vmatpush.bf16.msra.mxu0 %v1700
        %7664 = vmatmul.bf16.gmra.mxu0 %v7492
        %v7665 = vpop.f32.mrf.mxu0
        %v7666 = vadd.f32 %v1148, %v7665
        %v7667 = vpop.f32.mrf.mxu0
        %7668 = vdwg.mxu0
        %7669 = vmatpush.bf16.msra.mxu0 %v1760
        %7670 = vmatpush.bf16.msra.mxu0 %v1756
        %7671 = vmatpush.bf16.msra.mxu0 %v1752
        %7672 = vmatpush.bf16.msra.mxu0 %v1748
        %7673 = vmatpush.bf16.msra.mxu0 %v1744
        %7674 = vmatpush.bf16.msra.mxu0 %v1740
        %7675 = vmatpush.bf16.msra.mxu0 %v1736
        %7676 = vmatpush.bf16.msra.mxu0 %v1732
        %7677 = vmatmul.bf16.gmra.mxu0 %v7493
        %v7678 = vpop.f32.mrf.mxu0
        %v7679 = vadd.f32 %v7666, %v7678
        %v7680 = vpop.f32.mrf.mxu0
        %7681 = vdwg.mxu0
        %7682 = vmatpush.bf16.msra.mxu0 %v1792
        %7683 = vmatpush.bf16.msra.mxu0 %v1788
        %7684 = vmatpush.bf16.msra.mxu0 %v1784
        %7685 = vmatpush.bf16.msra.mxu0 %v1780
        %7686 = vmatpush.bf16.msra.mxu0 %v1776
        %7687 = vmatpush.bf16.msra.mxu0 %v1772
        %7688 = vmatpush.bf16.msra.mxu0 %v1768
        %7689 = vmatpush.bf16.msra.mxu0 %v1764
        %7690 = vmatmul.bf16.gmra.mxu0 %v7494
        %v7691 = vpop.f32.mrf.mxu0
        %v7692 = vadd.f32 %v7679, %v7691
        %v7693 = vpop.f32.mrf.mxu0
        %7694 = vdwg.mxu0
        %7695 = vmatpush.bf16.msra.mxu0 %v1824
        %7696 = vmatpush.bf16.msra.mxu0 %v1820
        %7697 = vmatpush.bf16.msra.mxu0 %v1816
        %7698 = vmatpush.bf16.msra.mxu0 %v1812
        %7699 = vmatpush.bf16.msra.mxu0 %v1808
        %7700 = vmatpush.bf16.msra.mxu0 %v1804
        %7701 = vmatpush.bf16.msra.mxu0 %v1800
        %7702 = vmatpush.bf16.msra.mxu0 %v1796
        %7703 = vmatmul.bf16.gmra.mxu0 %v7495
        %v7704 = vpop.f32.mrf.mxu0
        %v7705 = vadd.f32 %v7692, %v7704
        %v7706 = vpop.f32.mrf.mxu0
        %7707 = vdwg.mxu0
        %v7708 = vtanh.pop %v7549
        %v7709 = vtanh.pop %v7601
        %v7710 = vtanh.pop %v7653
        %v7711 = vtanh.pop %v7705
        %v7712 = vpack.c.bf16 %v7708, %v7708
        %v7713 = vpack.c.bf16 %v7709, %v7709
        %v7714 = vpack.c.bf16 %v7710, %v7710
        %v7715 = vpack.c.bf16 %v7711, %v7711
        %7716 = vmatpush.bf16.msra.mxu0 %v3254
        %7717 = vmatpush.bf16.msra.mxu0 %v3250
        %7718 = vmatpush.bf16.msra.mxu0 %v3246
        %7719 = vmatpush.bf16.msra.mxu0 %v3242
        %7720 = vmatpush.bf16.msra.mxu0 %v3238
        %7721 = vmatpush.bf16.msra.mxu0 %v3234
        %7722 = vmatpush.bf16.msra.mxu0 %v3230
        %7723 = vmatpush.bf16.msra.mxu0 %v3226
        %7724 = vmatmul.bf16.gmra.mxu0 %v7712
        %v7725 = vpop.f32.mrf.mxu0
        %v7726 = vadd.f32 %v2834, %v7725
        %v7727 = vpop.f32.mrf.mxu0
        %7728 = vdwg.mxu0
        %7729 = vmatpush.bf16.msra.mxu0 %v3286
        %7730 = vmatpush.bf16.msra.mxu0 %v3282
        %7731 = vmatpush.bf16.msra.mxu0 %v3278
        %7732 = vmatpush.bf16.msra.mxu0 %v3274
        %7733 = vmatpush.bf16.msra.mxu0 %v3270
        %7734 = vmatpush.bf16.msra.mxu0 %v3266
        %7735 = vmatpush.bf16.msra.mxu0 %v3262
        %7736 = vmatpush.bf16.msra.mxu0 %v3258
        %7737 = vmatmul.bf16.gmra.mxu0 %v7713
        %v7738 = vpop.f32.mrf.mxu0
        %v7739 = vadd.f32 %v7726, %v7738
        %v7740 = vpop.f32.mrf.mxu0
        %7741 = vdwg.mxu0
        %7742 = vmatpush.bf16.msra.mxu0 %v3318
        %7743 = vmatpush.bf16.msra.mxu0 %v3314
        %7744 = vmatpush.bf16.msra.mxu0 %v3310
        %7745 = vmatpush.bf16.msra.mxu0 %v3306
        %7746 = vmatpush.bf16.msra.mxu0 %v3302
        %7747 = vmatpush.bf16.msra.mxu0 %v3298
        %7748 = vmatpush.bf16.msra.mxu0 %v3294
        %7749 = vmatpush.bf16.msra.mxu0 %v3290
        %7750 = vmatmul.bf16.gmra.mxu0 %v7714
        %v7751 = vpop.f32.mrf.mxu0
        %v7752 = vadd.f32 %v7739, %v7751
        %v7753 = vpop.f32.mrf.mxu0
        %7754 = vdwg.mxu0
        %7755 = vmatpush.bf16.msra.mxu0 %v3350
        %7756 = vmatpush.bf16.msra.mxu0 %v3346
        %7757 = vmatpush.bf16.msra.mxu0 %v3342
        %7758 = vmatpush.bf16.msra.mxu0 %v3338
        %7759 = vmatpush.bf16.msra.mxu0 %v3334
        %7760 = vmatpush.bf16.msra.mxu0 %v3330
        %7761 = vmatpush.bf16.msra.mxu0 %v3326
        %7762 = vmatpush.bf16.msra.mxu0 %v3322
        %7763 = vmatmul.bf16.gmra.mxu0 %v7715
        %v7764 = vpop.f32.mrf.mxu0
        %v7765 = vadd.f32 %v7752, %v7764
        %v7766 = vpop.f32.mrf.mxu0
        %7767 = vdwg.mxu0
        %7768 = vmatpush.bf16.msra.mxu0 %v3255
        %7769 = vmatpush.bf16.msra.mxu0 %v3251
        %7770 = vmatpush.bf16.msra.mxu0 %v3247
        %7771 = vmatpush.bf16.msra.mxu0 %v3243
        %7772 = vmatpush.bf16.msra.mxu0 %v3239
        %7773 = vmatpush.bf16.msra.mxu0 %v3235
        %7774 = vmatpush.bf16.msra.mxu0 %v3231
        %7775 = vmatpush.bf16.msra.mxu0 %v3227
        %7776 = vmatmul.bf16.gmra.mxu0 %v7712
        %v7777 = vpop.f32.mrf.mxu0
        %v7778 = vadd.f32 %v2835, %v7777
        %v7779 = vpop.f32.mrf.mxu0
        %7780 = vdwg.mxu0
        %7781 = vmatpush.bf16.msra.mxu0 %v3287
        %7782 = vmatpush.bf16.msra.mxu0 %v3283
        %7783 = vmatpush.bf16.msra.mxu0 %v3279
        %7784 = vmatpush.bf16.msra.mxu0 %v3275
        %7785 = vmatpush.bf16.msra.mxu0 %v3271
        %7786 = vmatpush.bf16.msra.mxu0 %v3267
        %7787 = vmatpush.bf16.msra.mxu0 %v3263
        %7788 = vmatpush.bf16.msra.mxu0 %v3259
        %7789 = vmatmul.bf16.gmra.mxu0 %v7713
        %v7790 = vpop.f32.mrf.mxu0
        %v7791 = vadd.f32 %v7778, %v7790
        %v7792 = vpop.f32.mrf.mxu0
        %7793 = vdwg.mxu0
        %7794 = vmatpush.bf16.msra.mxu0 %v3319
        %7795 = vmatpush.bf16.msra.mxu0 %v3315
        %7796 = vmatpush.bf16.msra.mxu0 %v3311
        %7797 = vmatpush.bf16.msra.mxu0 %v3307
        %7798 = vmatpush.bf16.msra.mxu0 %v3303
        %7799 = vmatpush.bf16.msra.mxu0 %v3299
        %7800 = vmatpush.bf16.msra.mxu0 %v3295
        %7801 = vmatpush.bf16.msra.mxu0 %v3291
        %7802 = vmatmul.bf16.gmra.mxu0 %v7714
        %v7803 = vpop.f32.mrf.mxu0
        %v7804 = vadd.f32 %v7791, %v7803
        %v7805 = vpop.f32.mrf.mxu0
        %7806 = vdwg.mxu0
        %7807 = vmatpush.bf16.msra.mxu0 %v3351
        %7808 = vmatpush.bf16.msra.mxu0 %v3347
        %7809 = vmatpush.bf16.msra.mxu0 %v3343
        %7810 = vmatpush.bf16.msra.mxu0 %v3339
        %7811 = vmatpush.bf16.msra.mxu0 %v3335
        %7812 = vmatpush.bf16.msra.mxu0 %v3331
        %7813 = vmatpush.bf16.msra.mxu0 %v3327
        %7814 = vmatpush.bf16.msra.mxu0 %v3323
        %7815 = vmatmul.bf16.gmra.mxu0 %v7715
        %v7816 = vpop.f32.mrf.mxu0
        %v7817 = vadd.f32 %v7804, %v7816
        %v7818 = vpop.f32.mrf.mxu0
        %7819 = vdwg.mxu0
        %7820 = vmatpush.bf16.msra.mxu0 %v3256
        %7821 = vmatpush.bf16.msra.mxu0 %v3252
        %7822 = vmatpush.bf16.msra.mxu0 %v3248
        %7823 = vmatpush.bf16.msra.mxu0 %v3244
        %7824 = vmatpush.bf16.msra.mxu0 %v3240
        %7825 = vmatpush.bf16.msra.mxu0 %v3236
        %7826 = vmatpush.bf16.msra.mxu0 %v3232
        %7827 = vmatpush.bf16.msra.mxu0 %v3228
        %7828 = vmatmul.bf16.gmra.mxu0 %v7712
        %v7829 = vpop.f32.mrf.mxu0
        %v7830 = vadd.f32 %v2836, %v7829
        %v7831 = vpop.f32.mrf.mxu0
        %7832 = vdwg.mxu0
        %7833 = vmatpush.bf16.msra.mxu0 %v3288
        %7834 = vmatpush.bf16.msra.mxu0 %v3284
        %7835 = vmatpush.bf16.msra.mxu0 %v3280
        %7836 = vmatpush.bf16.msra.mxu0 %v3276
        %7837 = vmatpush.bf16.msra.mxu0 %v3272
        %7838 = vmatpush.bf16.msra.mxu0 %v3268
        %7839 = vmatpush.bf16.msra.mxu0 %v3264
        %7840 = vmatpush.bf16.msra.mxu0 %v3260
        %7841 = vmatmul.bf16.gmra.mxu0 %v7713
        %v7842 = vpop.f32.mrf.mxu0
        %v7843 = vadd.f32 %v7830, %v7842
        %v7844 = vpop.f32.mrf.mxu0
        %7845 = vdwg.mxu0
        %7846 = vmatpush.bf16.msra.mxu0 %v3320
        %7847 = vmatpush.bf16.msra.mxu0 %v3316
        %7848 = vmatpush.bf16.msra.mxu0 %v3312
        %7849 = vmatpush.bf16.msra.mxu0 %v3308
        %7850 = vmatpush.bf16.msra.mxu0 %v3304
        %7851 = vmatpush.bf16.msra.mxu0 %v3300
        %7852 = vmatpush.bf16.msra.mxu0 %v3296
        %7853 = vmatpush.bf16.msra.mxu0 %v3292
        %7854 = vmatmul.bf16.gmra.mxu0 %v7714
        %v7855 = vpop.f32.mrf.mxu0
        %v7856 = vadd.f32 %v7843, %v7855
        %v7857 = vpop.f32.mrf.mxu0
        %7858 = vdwg.mxu0
        %7859 = vmatpush.bf16.msra.mxu0 %v3352
        %7860 = vmatpush.bf16.msra.mxu0 %v3348
        %7861 = vmatpush.bf16.msra.mxu0 %v3344
        %7862 = vmatpush.bf16.msra.mxu0 %v3340
        %7863 = vmatpush.bf16.msra.mxu0 %v3336
        %7864 = vmatpush.bf16.msra.mxu0 %v3332
        %7865 = vmatpush.bf16.msra.mxu0 %v3328
        %7866 = vmatpush.bf16.msra.mxu0 %v3324
        %7867 = vmatmul.bf16.gmra.mxu0 %v7715
        %v7868 = vpop.f32.mrf.mxu0
        %v7869 = vadd.f32 %v7856, %v7868
        %v7870 = vpop.f32.mrf.mxu0
        %7871 = vdwg.mxu0
        %7872 = vmatpush.bf16.msra.mxu0 %v3257
        %7873 = vmatpush.bf16.msra.mxu0 %v3253
        %7874 = vmatpush.bf16.msra.mxu0 %v3249
        %7875 = vmatpush.bf16.msra.mxu0 %v3245
        %7876 = vmatpush.bf16.msra.mxu0 %v3241
        %7877 = vmatpush.bf16.msra.mxu0 %v3237
        %7878 = vmatpush.bf16.msra.mxu0 %v3233
        %7879 = vmatpush.bf16.msra.mxu0 %v3229
        %7880 = vmatmul.bf16.gmra.mxu0 %v7712
        %v7881 = vpop.f32.mrf.mxu0
        %v7882 = vadd.f32 %v2837, %v7881
        %v7883 = vpop.f32.mrf.mxu0
        %7884 = vdwg.mxu0
        %7885 = vmatpush.bf16.msra.mxu0 %v3289
        %7886 = vmatpush.bf16.msra.mxu0 %v3285
        %7887 = vmatpush.bf16.msra.mxu0 %v3281
        %7888 = vmatpush.bf16.msra.mxu0 %v3277
        %7889 = vmatpush.bf16.msra.mxu0 %v3273
        %7890 = vmatpush.bf16.msra.mxu0 %v3269
        %7891 = vmatpush.bf16.msra.mxu0 %v3265
        %7892 = vmatpush.bf16.msra.mxu0 %v3261
        %7893 = vmatmul.bf16.gmra.mxu0 %v7713
        %v7894 = vpop.f32.mrf.mxu0
        %v7895 = vadd.f32 %v7882, %v7894
        %v7896 = vpop.f32.mrf.mxu0
        %7897 = vdwg.mxu0
        %7898 = vmatpush.bf16.msra.mxu0 %v3321
        %7899 = vmatpush.bf16.msra.mxu0 %v3317
        %7900 = vmatpush.bf16.msra.mxu0 %v3313
        %7901 = vmatpush.bf16.msra.mxu0 %v3309
        %7902 = vmatpush.bf16.msra.mxu0 %v3305
        %7903 = vmatpush.bf16.msra.mxu0 %v3301
        %7904 = vmatpush.bf16.msra.mxu0 %v3297
        %7905 = vmatpush.bf16.msra.mxu0 %v3293
        %7906 = vmatmul.bf16.gmra.mxu0 %v7714
        %v7907 = vpop.f32.mrf.mxu0
        %v7908 = vadd.f32 %v7895, %v7907
        %v7909 = vpop.f32.mrf.mxu0
        %7910 = vdwg.mxu0
        %7911 = vmatpush.bf16.msra.mxu0 %v3353
        %7912 = vmatpush.bf16.msra.mxu0 %v3349
        %7913 = vmatpush.bf16.msra.mxu0 %v3345
        %7914 = vmatpush.bf16.msra.mxu0 %v3341
        %7915 = vmatpush.bf16.msra.mxu0 %v3337
        %7916 = vmatpush.bf16.msra.mxu0 %v3333
        %7917 = vmatpush.bf16.msra.mxu0 %v3329
        %7918 = vmatpush.bf16.msra.mxu0 %v3325
        %7919 = vmatmul.bf16.gmra.mxu0 %v7715
        %v7920 = vpop.f32.mrf.mxu0
        %v7921 = vadd.f32 %v7908, %v7920
        %v7922 = vpop.f32.mrf.mxu0
        %7923 = vdwg.mxu0
        %v7924 = vmul.f32 %v7765, 0.5
        %v7925 = vmul.f32 %v7817, 0.5
        %v7926 = vmul.f32 %v7869, 0.5
        %v7927 = vmul.f32 %v7921, 0.5
        %v7928 = vpack.c.bf16 %v7925, %v7924
        %v7929 = vpack.c.bf16 %v7927, %v7926
        %v7930 = vld [vmem:[%s595] sm:$0xf]
        %7932 = vst [vmem:[#allocation1] ss:$9 sm:$0xff] %v7930
        %v7933 = vld [vmem:[#allocation1] sm:$0xff]
        %v7934 = vld [vmem:[#allocation1 + $0x9] sm:$0xff]
        %v7935 = vld [vmem:[#allocation1 + $0x12] sm:$0xff]
        %v7936 = vld [vmem:[#allocation1 + $0x1b] sm:$0xff]
        %7941 = vmatpush.bf16.msra.mxu0 %v4911
        %7942 = vmatpush.bf16.msra.mxu0 %v4907
        %7943 = vmatpush.bf16.msra.mxu0 %v4903
        %7944 = vmatpush.bf16.msra.mxu0 %v4899
        %7945 = vmatpush.bf16.msra.mxu0 %v4895
        %7946 = vmatpush.bf16.msra.mxu0 %v4891
        %7947 = vmatpush.bf16.msra.mxu0 %v4887
        %7948 = vmatpush.bf16.msra.mxu0 %v4883
        %7949 = vmatmul.bf16.gmra.mxu0 %v7933
        %v7950 = vpop.f32.mrf.mxu0
        %v7951 = vadd.f32 %v4331, %v7950
        %v7952 = vpop.f32.mrf.mxu0
        %7953 = vdwg.mxu0
        %7954 = vmatpush.bf16.msra.mxu0 %v4943
        %7955 = vmatpush.bf16.msra.mxu0 %v4939
        %7956 = vmatpush.bf16.msra.mxu0 %v4935
        %7957 = vmatpush.bf16.msra.mxu0 %v4931
        %7958 = vmatpush.bf16.msra.mxu0 %v4927
        %7959 = vmatpush.bf16.msra.mxu0 %v4923
        %7960 = vmatpush.bf16.msra.mxu0 %v4919
        %7961 = vmatpush.bf16.msra.mxu0 %v4915
        %7962 = vmatmul.bf16.gmra.mxu0 %v7934
        %v7963 = vpop.f32.mrf.mxu0
        %v7964 = vadd.f32 %v7951, %v7963
        %v7965 = vpop.f32.mrf.mxu0
        %7966 = vdwg.mxu0
        %7967 = vmatpush.bf16.msra.mxu0 %v4975
        %7968 = vmatpush.bf16.msra.mxu0 %v4971
        %7969 = vmatpush.bf16.msra.mxu0 %v4967
        %7970 = vmatpush.bf16.msra.mxu0 %v4963
        %7971 = vmatpush.bf16.msra.mxu0 %v4959
        %7972 = vmatpush.bf16.msra.mxu0 %v4955
        %7973 = vmatpush.bf16.msra.mxu0 %v4951
        %7974 = vmatpush.bf16.msra.mxu0 %v4947
        %7975 = vmatmul.bf16.gmra.mxu0 %v7935
        %v7976 = vpop.f32.mrf.mxu0
        %v7977 = vadd.f32 %v7964, %v7976
        %v7978 = vpop.f32.mrf.mxu0
        %7979 = vdwg.mxu0
        %7980 = vmatpush.bf16.msra.mxu0 %v5007
        %7981 = vmatpush.bf16.msra.mxu0 %v5003
        %7982 = vmatpush.bf16.msra.mxu0 %v4999
        %7983 = vmatpush.bf16.msra.mxu0 %v4995
        %7984 = vmatpush.bf16.msra.mxu0 %v4991
        %7985 = vmatpush.bf16.msra.mxu0 %v4987
        %7986 = vmatpush.bf16.msra.mxu0 %v4983
        %7987 = vmatpush.bf16.msra.mxu0 %v4979
        %7988 = vmatmul.bf16.gmra.mxu0 %v7936
        %v7989 = vpop.f32.mrf.mxu0
        %v7990 = vadd.f32 %v7977, %v7989
        %v7991 = vpop.f32.mrf.mxu0
        %7992 = vdwg.mxu0
        %7993 = vmatpush.bf16.msra.mxu0 %v4912
        %7994 = vmatpush.bf16.msra.mxu0 %v4908
        %7995 = vmatpush.bf16.msra.mxu0 %v4904
        %7996 = vmatpush.bf16.msra.mxu0 %v4900
        %7997 = vmatpush.bf16.msra.mxu0 %v4896
        %7998 = vmatpush.bf16.msra.mxu0 %v4892
        %7999 = vmatpush.bf16.msra.mxu0 %v4888
        %8000 = vmatpush.bf16.msra.mxu0 %v4884
        %8001 = vmatmul.bf16.gmra.mxu0 %v7933
        %v8002 = vpop.f32.mrf.mxu0
        %v8003 = vadd.f32 %v4332, %v8002
        %v8004 = vpop.f32.mrf.mxu0
        %8005 = vdwg.mxu0
        %8006 = vmatpush.bf16.msra.mxu0 %v4944
        %8007 = vmatpush.bf16.msra.mxu0 %v4940
        %8008 = vmatpush.bf16.msra.mxu0 %v4936
        %8009 = vmatpush.bf16.msra.mxu0 %v4932
        %8010 = vmatpush.bf16.msra.mxu0 %v4928
        %8011 = vmatpush.bf16.msra.mxu0 %v4924
        %8012 = vmatpush.bf16.msra.mxu0 %v4920
        %8013 = vmatpush.bf16.msra.mxu0 %v4916
        %8014 = vmatmul.bf16.gmra.mxu0 %v7934
        %v8015 = vpop.f32.mrf.mxu0
        %v8016 = vadd.f32 %v8003, %v8015
        %v8017 = vpop.f32.mrf.mxu0
        %8018 = vdwg.mxu0
        %8019 = vmatpush.bf16.msra.mxu0 %v4976
        %8020 = vmatpush.bf16.msra.mxu0 %v4972
        %8021 = vmatpush.bf16.msra.mxu0 %v4968
        %8022 = vmatpush.bf16.msra.mxu0 %v4964
        %8023 = vmatpush.bf16.msra.mxu0 %v4960
        %8024 = vmatpush.bf16.msra.mxu0 %v4956
        %8025 = vmatpush.bf16.msra.mxu0 %v4952
        %8026 = vmatpush.bf16.msra.mxu0 %v4948
        %8027 = vmatmul.bf16.gmra.mxu0 %v7935
        %v8028 = vpop.f32.mrf.mxu0
        %v8029 = vadd.f32 %v8016, %v8028
        %v8030 = vpop.f32.mrf.mxu0
        %8031 = vdwg.mxu0
        %8032 = vmatpush.bf16.msra.mxu0 %v5008
        %8033 = vmatpush.bf16.msra.mxu0 %v5004
        %8034 = vmatpush.bf16.msra.mxu0 %v5000
        %8035 = vmatpush.bf16.msra.mxu0 %v4996
        %8036 = vmatpush.bf16.msra.mxu0 %v4992
        %8037 = vmatpush.bf16.msra.mxu0 %v4988
        %8038 = vmatpush.bf16.msra.mxu0 %v4984
        %8039 = vmatpush.bf16.msra.mxu0 %v4980
        %8040 = vmatmul.bf16.gmra.mxu0 %v7936
        %v8041 = vpop.f32.mrf.mxu0
        %v8042 = vadd.f32 %v8029, %v8041
        %v8043 = vpop.f32.mrf.mxu0
        %8044 = vdwg.mxu0
        %8045 = vmatpush.bf16.msra.mxu0 %v4913
        %8046 = vmatpush.bf16.msra.mxu0 %v4909
        %8047 = vmatpush.bf16.msra.mxu0 %v4905
        %8048 = vmatpush.bf16.msra.mxu0 %v4901
        %8049 = vmatpush.bf16.msra.mxu0 %v4897
        %8050 = vmatpush.bf16.msra.mxu0 %v4893
        %8051 = vmatpush.bf16.msra.mxu0 %v4889
        %8052 = vmatpush.bf16.msra.mxu0 %v4885
        %8053 = vmatmul.bf16.gmra.mxu0 %v7933
        %v8054 = vpop.f32.mrf.mxu0
        %v8055 = vadd.f32 %v4333, %v8054
        %v8056 = vpop.f32.mrf.mxu0
        %8057 = vdwg.mxu0
        %8058 = vmatpush.bf16.msra.mxu0 %v4945
        %8059 = vmatpush.bf16.msra.mxu0 %v4941
        %8060 = vmatpush.bf16.msra.mxu0 %v4937
        %8061 = vmatpush.bf16.msra.mxu0 %v4933
        %8062 = vmatpush.bf16.msra.mxu0 %v4929
        %8063 = vmatpush.bf16.msra.mxu0 %v4925
        %8064 = vmatpush.bf16.msra.mxu0 %v4921
        %8065 = vmatpush.bf16.msra.mxu0 %v4917
        %8066 = vmatmul.bf16.gmra.mxu0 %v7934
        %v8067 = vpop.f32.mrf.mxu0
        %v8068 = vadd.f32 %v8055, %v8067
        %v8069 = vpop.f32.mrf.mxu0
        %8070 = vdwg.mxu0
        %8071 = vmatpush.bf16.msra.mxu0 %v4977
        %8072 = vmatpush.bf16.msra.mxu0 %v4973
        %8073 = vmatpush.bf16.msra.mxu0 %v4969
        %8074 = vmatpush.bf16.msra.mxu0 %v4965
        %8075 = vmatpush.bf16.msra.mxu0 %v4961
        %8076 = vmatpush.bf16.msra.mxu0 %v4957
        %8077 = vmatpush.bf16.msra.mxu0 %v4953
        %8078 = vmatpush.bf16.msra.mxu0 %v4949
        %8079 = vmatmul.bf16.gmra.mxu0 %v7935
        %v8080 = vpop.f32.mrf.mxu0
        %v8081 = vadd.f32 %v8068, %v8080
        %v8082 = vpop.f32.mrf.mxu0
        %8083 = vdwg.mxu0
        %8084 = vmatpush.bf16.msra.mxu0 %v5009
        %8085 = vmatpush.bf16.msra.mxu0 %v5005
        %8086 = vmatpush.bf16.msra.mxu0 %v5001
        %8087 = vmatpush.bf16.msra.mxu0 %v4997
        %8088 = vmatpush.bf16.msra.mxu0 %v4993
        %8089 = vmatpush.bf16.msra.mxu0 %v4989
        %8090 = vmatpush.bf16.msra.mxu0 %v4985
        %8091 = vmatpush.bf16.msra.mxu0 %v4981
        %8092 = vmatmul.bf16.gmra.mxu0 %v7936
        %v8093 = vpop.f32.mrf.mxu0
        %v8094 = vadd.f32 %v8081, %v8093
        %v8095 = vpop.f32.mrf.mxu0
        %8096 = vdwg.mxu0
        %8097 = vmatpush.bf16.msra.mxu0 %v4914
        %8098 = vmatpush.bf16.msra.mxu0 %v4910
        %8099 = vmatpush.bf16.msra.mxu0 %v4906
        %8100 = vmatpush.bf16.msra.mxu0 %v4902
        %8101 = vmatpush.bf16.msra.mxu0 %v4898
        %8102 = vmatpush.bf16.msra.mxu0 %v4894
        %8103 = vmatpush.bf16.msra.mxu0 %v4890
        %8104 = vmatpush.bf16.msra.mxu0 %v4886
        %8105 = vmatmul.bf16.gmra.mxu0 %v7933
        %v8106 = vpop.f32.mrf.mxu0
        %v8107 = vadd.f32 %v4334, %v8106
        %v8108 = vpop.f32.mrf.mxu0
        %8109 = vdwg.mxu0
        %8110 = vmatpush.bf16.msra.mxu0 %v4946
        %8111 = vmatpush.bf16.msra.mxu0 %v4942
        %8112 = vmatpush.bf16.msra.mxu0 %v4938
        %8113 = vmatpush.bf16.msra.mxu0 %v4934
        %8114 = vmatpush.bf16.msra.mxu0 %v4930
        %8115 = vmatpush.bf16.msra.mxu0 %v4926
        %8116 = vmatpush.bf16.msra.mxu0 %v4922
        %8117 = vmatpush.bf16.msra.mxu0 %v4918
        %8118 = vmatmul.bf16.gmra.mxu0 %v7934
        %v8119 = vpop.f32.mrf.mxu0
        %v8120 = vadd.f32 %v8107, %v8119
        %v8121 = vpop.f32.mrf.mxu0
        %8122 = vdwg.mxu0
        %8123 = vmatpush.bf16.msra.mxu0 %v4978
        %8124 = vmatpush.bf16.msra.mxu0 %v4974
        %8125 = vmatpush.bf16.msra.mxu0 %v4970
        %8126 = vmatpush.bf16.msra.mxu0 %v4966
        %8127 = vmatpush.bf16.msra.mxu0 %v4962
        %8128 = vmatpush.bf16.msra.mxu0 %v4958
        %8129 = vmatpush.bf16.msra.mxu0 %v4954
        %8130 = vmatpush.bf16.msra.mxu0 %v4950
        %8131 = vmatmul.bf16.gmra.mxu0 %v7935
        %v8132 = vpop.f32.mrf.mxu0
        %v8133 = vadd.f32 %v8120, %v8132
        %v8134 = vpop.f32.mrf.mxu0
        %8135 = vdwg.mxu0
        %8136 = vmatpush.bf16.msra.mxu0 %v5010
        %8137 = vmatpush.bf16.msra.mxu0 %v5006
        %8138 = vmatpush.bf16.msra.mxu0 %v5002
        %8139 = vmatpush.bf16.msra.mxu0 %v4998
        %8140 = vmatpush.bf16.msra.mxu0 %v4994
        %8141 = vmatpush.bf16.msra.mxu0 %v4990
        %8142 = vmatpush.bf16.msra.mxu0 %v4986
        %8143 = vmatpush.bf16.msra.mxu0 %v4982
        %8144 = vmatmul.bf16.gmra.mxu0 %v7936
        %v8145 = vpop.f32.mrf.mxu0
        %v8146 = vadd.f32 %v8133, %v8145
        %v8147 = vpop.f32.mrf.mxu0
        %8148 = vdwg.mxu0
        %v8149 = vtanh.pop %v7990
        %v8150 = vtanh.pop %v8042
        %v8151 = vtanh.pop %v8094
        %v8152 = vtanh.pop %v8146
        %v8153 = vpack.c.bf16 %v8149, %v8149
        %v8154 = vpack.c.bf16 %v8150, %v8150
        %v8155 = vpack.c.bf16 %v8151, %v8151
        %v8156 = vpack.c.bf16 %v8152, %v8152
        %8157 = vmatpush.bf16.msra.mxu0 %v6440
        %8158 = vmatpush.bf16.msra.mxu0 %v6436
        %8159 = vmatpush.bf16.msra.mxu0 %v6432
        %8160 = vmatpush.bf16.msra.mxu0 %v6428
        %8161 = vmatpush.bf16.msra.mxu0 %v6424
        %8162 = vmatpush.bf16.msra.mxu0 %v6420
        %8163 = vmatpush.bf16.msra.mxu0 %v6416
        %8164 = vmatpush.bf16.msra.mxu0 %v6412
        %8165 = vmatmul.bf16.gmra.mxu0 %v8153
        %v8166 = vpop.f32.mrf.mxu0
        %v8167 = vadd.f32 %v6020, %v8166
        %v8168 = vpop.f32.mrf.mxu0
        %8169 = vdwg.mxu0
        %8170 = vmatpush.bf16.msra.mxu0 %v6472
        %8171 = vmatpush.bf16.msra.mxu0 %v6468
        %8172 = vmatpush.bf16.msra.mxu0 %v6464
        %8173 = vmatpush.bf16.msra.mxu0 %v6460
        %8174 = vmatpush.bf16.msra.mxu0 %v6456
        %8175 = vmatpush.bf16.msra.mxu0 %v6452
        %8176 = vmatpush.bf16.msra.mxu0 %v6448
        %8177 = vmatpush.bf16.msra.mxu0 %v6444
        %8178 = vmatmul.bf16.gmra.mxu0 %v8154
        %v8179 = vpop.f32.mrf.mxu0
        %v8180 = vadd.f32 %v8167, %v8179
        %v8181 = vpop.f32.mrf.mxu0
        %8182 = vdwg.mxu0
        %8183 = vmatpush.bf16.msra.mxu0 %v6504
        %8184 = vmatpush.bf16.msra.mxu0 %v6500
        %8185 = vmatpush.bf16.msra.mxu0 %v6496
        %8186 = vmatpush.bf16.msra.mxu0 %v6492
        %8187 = vmatpush.bf16.msra.mxu0 %v6488
        %8188 = vmatpush.bf16.msra.mxu0 %v6484
        %8189 = vmatpush.bf16.msra.mxu0 %v6480
        %8190 = vmatpush.bf16.msra.mxu0 %v6476
        %8191 = vmatmul.bf16.gmra.mxu0 %v8155
        %v8192 = vpop.f32.mrf.mxu0
        %v8193 = vadd.f32 %v8180, %v8192
        %v8194 = vpop.f32.mrf.mxu0
        %8195 = vdwg.mxu0
        %8196 = vmatpush.bf16.msra.mxu0 %v6536
        %8197 = vmatpush.bf16.msra.mxu0 %v6532
        %8198 = vmatpush.bf16.msra.mxu0 %v6528
        %8199 = vmatpush.bf16.msra.mxu0 %v6524
        %8200 = vmatpush.bf16.msra.mxu0 %v6520
        %8201 = vmatpush.bf16.msra.mxu0 %v6516
        %8202 = vmatpush.bf16.msra.mxu0 %v6512
        %8203 = vmatpush.bf16.msra.mxu0 %v6508
        %8204 = vmatmul.bf16.gmra.mxu0 %v8156
        %v8205 = vpop.f32.mrf.mxu0
        %v8206 = vadd.f32 %v8193, %v8205
        %v8207 = vpop.f32.mrf.mxu0
        %8208 = vdwg.mxu0
        %8209 = vmatpush.bf16.msra.mxu0 %v6441
        %8210 = vmatpush.bf16.msra.mxu0 %v6437
        %8211 = vmatpush.bf16.msra.mxu0 %v6433
        %8212 = vmatpush.bf16.msra.mxu0 %v6429
        %8213 = vmatpush.bf16.msra.mxu0 %v6425
        %8214 = vmatpush.bf16.msra.mxu0 %v6421
        %8215 = vmatpush.bf16.msra.mxu0 %v6417
        %8216 = vmatpush.bf16.msra.mxu0 %v6413
        %8217 = vmatmul.bf16.gmra.mxu0 %v8153
        %v8218 = vpop.f32.mrf.mxu0
        %v8219 = vadd.f32 %v6021, %v8218
        %v8220 = vpop.f32.mrf.mxu0
        %8221 = vdwg.mxu0
        %8222 = vmatpush.bf16.msra.mxu0 %v6473
        %8223 = vmatpush.bf16.msra.mxu0 %v6469
        %8224 = vmatpush.bf16.msra.mxu0 %v6465
        %8225 = vmatpush.bf16.msra.mxu0 %v6461
        %8226 = vmatpush.bf16.msra.mxu0 %v6457
        %8227 = vmatpush.bf16.msra.mxu0 %v6453
        %8228 = vmatpush.bf16.msra.mxu0 %v6449
        %8229 = vmatpush.bf16.msra.mxu0 %v6445
        %8230 = vmatmul.bf16.gmra.mxu0 %v8154
        %v8231 = vpop.f32.mrf.mxu0
        %v8232 = vadd.f32 %v8219, %v8231
        %v8233 = vpop.f32.mrf.mxu0
        %8234 = vdwg.mxu0
        %8235 = vmatpush.bf16.msra.mxu0 %v6505
        %8236 = vmatpush.bf16.msra.mxu0 %v6501
        %8237 = vmatpush.bf16.msra.mxu0 %v6497
        %8238 = vmatpush.bf16.msra.mxu0 %v6493
        %8239 = vmatpush.bf16.msra.mxu0 %v6489
        %8240 = vmatpush.bf16.msra.mxu0 %v6485
        %8241 = vmatpush.bf16.msra.mxu0 %v6481
        %8242 = vmatpush.bf16.msra.mxu0 %v6477
        %8243 = vmatmul.bf16.gmra.mxu0 %v8155
        %v8244 = vpop.f32.mrf.mxu0
        %v8245 = vadd.f32 %v8232, %v8244
        %v8246 = vpop.f32.mrf.mxu0
        %8247 = vdwg.mxu0
        %8248 = vmatpush.bf16.msra.mxu0 %v6537
        %8249 = vmatpush.bf16.msra.mxu0 %v6533
        %8250 = vmatpush.bf16.msra.mxu0 %v6529
        %8251 = vmatpush.bf16.msra.mxu0 %v6525
        %8252 = vmatpush.bf16.msra.mxu0 %v6521
        %8253 = vmatpush.bf16.msra.mxu0 %v6517
        %8254 = vmatpush.bf16.msra.mxu0 %v6513
        %8255 = vmatpush.bf16.msra.mxu0 %v6509
        %8256 = vmatmul.bf16.gmra.mxu0 %v8156
        %v8257 = vpop.f32.mrf.mxu0
        %v8258 = vadd.f32 %v8245, %v8257
        %v8259 = vpop.f32.mrf.mxu0
        %8260 = vdwg.mxu0
        %8261 = vmatpush.bf16.msra.mxu0 %v6442
        %8262 = vmatpush.bf16.msra.mxu0 %v6438
        %8263 = vmatpush.bf16.msra.mxu0 %v6434
        %8264 = vmatpush.bf16.msra.mxu0 %v6430
        %8265 = vmatpush.bf16.msra.mxu0 %v6426
        %8266 = vmatpush.bf16.msra.mxu0 %v6422
        %8267 = vmatpush.bf16.msra.mxu0 %v6418
        %8268 = vmatpush.bf16.msra.mxu0 %v6414
        %8269 = vmatmul.bf16.gmra.mxu0 %v8153
        %v8270 = vpop.f32.mrf.mxu0
        %v8271 = vadd.f32 %v6022, %v8270
        %v8272 = vpop.f32.mrf.mxu0
        %8273 = vdwg.mxu0
        %8274 = vmatpush.bf16.msra.mxu0 %v6474
        %8275 = vmatpush.bf16.msra.mxu0 %v6470
        %8276 = vmatpush.bf16.msra.mxu0 %v6466
        %8277 = vmatpush.bf16.msra.mxu0 %v6462
        %8278 = vmatpush.bf16.msra.mxu0 %v6458
        %8279 = vmatpush.bf16.msra.mxu0 %v6454
        %8280 = vmatpush.bf16.msra.mxu0 %v6450
        %8281 = vmatpush.bf16.msra.mxu0 %v6446
        %8282 = vmatmul.bf16.gmra.mxu0 %v8154
        %v8283 = vpop.f32.mrf.mxu0
        %v8284 = vadd.f32 %v8271, %v8283
        %v8285 = vpop.f32.mrf.mxu0
        %8286 = vdwg.mxu0
        %8287 = vmatpush.bf16.msra.mxu0 %v6506
        %8288 = vmatpush.bf16.msra.mxu0 %v6502
        %8289 = vmatpush.bf16.msra.mxu0 %v6498
        %8290 = vmatpush.bf16.msra.mxu0 %v6494
        %8291 = vmatpush.bf16.msra.mxu0 %v6490
        %8292 = vmatpush.bf16.msra.mxu0 %v6486
        %8293 = vmatpush.bf16.msra.mxu0 %v6482
        %8294 = vmatpush.bf16.msra.mxu0 %v6478
        %8295 = vmatmul.bf16.gmra.mxu0 %v8155
        %v8296 = vpop.f32.mrf.mxu0
        %v8297 = vadd.f32 %v8284, %v8296
        %v8298 = vpop.f32.mrf.mxu0
        %8299 = vdwg.mxu0
        %8300 = vmatpush.bf16.msra.mxu0 %v6538
        %8301 = vmatpush.bf16.msra.mxu0 %v6534
        %8302 = vmatpush.bf16.msra.mxu0 %v6530
        %8303 = vmatpush.bf16.msra.mxu0 %v6526
        %8304 = vmatpush.bf16.msra.mxu0 %v6522
        %8305 = vmatpush.bf16.msra.mxu0 %v6518
        %8306 = vmatpush.bf16.msra.mxu0 %v6514
        %8307 = vmatpush.bf16.msra.mxu0 %v6510
        %8308 = vmatmul.bf16.gmra.mxu0 %v8156
        %v8309 = vpop.f32.mrf.mxu0
        %v8310 = vadd.f32 %v8297, %v8309
        %v8311 = vpop.f32.mrf.mxu0
        %8312 = vdwg.mxu0
        %8313 = vmatpush.bf16.msra.mxu0 %v6443
        %8314 = vmatpush.bf16.msra.mxu0 %v6439
        %8315 = vmatpush.bf16.msra.mxu0 %v6435
        %8316 = vmatpush.bf16.msra.mxu0 %v6431
        %8317 = vmatpush.bf16.msra.mxu0 %v6427
        %8318 = vmatpush.bf16.msra.mxu0 %v6423
        %8319 = vmatpush.bf16.msra.mxu0 %v6419
        %8320 = vmatpush.bf16.msra.mxu0 %v6415
        %8321 = vmatmul.bf16.gmra.mxu0 %v8153
        %v8322 = vpop.f32.mrf.mxu0
        %v8323 = vadd.f32 %v6023, %v8322
        %v8324 = vpop.f32.mrf.mxu0
        %8325 = vdwg.mxu0
        %8326 = vmatpush.bf16.msra.mxu0 %v6475
        %8327 = vmatpush.bf16.msra.mxu0 %v6471
        %8328 = vmatpush.bf16.msra.mxu0 %v6467
        %8329 = vmatpush.bf16.msra.mxu0 %v6463
        %8330 = vmatpush.bf16.msra.mxu0 %v6459
        %8331 = vmatpush.bf16.msra.mxu0 %v6455
        %8332 = vmatpush.bf16.msra.mxu0 %v6451
        %8333 = vmatpush.bf16.msra.mxu0 %v6447
        %8334 = vmatmul.bf16.gmra.mxu0 %v8154
        %v8335 = vpop.f32.mrf.mxu0
        %v8336 = vadd.f32 %v8323, %v8335
        %v8337 = vpop.f32.mrf.mxu0
        %8338 = vdwg.mxu0
        %8339 = vmatpush.bf16.msra.mxu0 %v6507
        %8340 = vmatpush.bf16.msra.mxu0 %v6503
        %8341 = vmatpush.bf16.msra.mxu0 %v6499
        %8342 = vmatpush.bf16.msra.mxu0 %v6495
        %8343 = vmatpush.bf16.msra.mxu0 %v6491
        %8344 = vmatpush.bf16.msra.mxu0 %v6487
        %8345 = vmatpush.bf16.msra.mxu0 %v6483
        %8346 = vmatpush.bf16.msra.mxu0 %v6479
        %8347 = vmatmul.bf16.gmra.mxu0 %v8155
        %v8348 = vpop.f32.mrf.mxu0
        %v8349 = vadd.f32 %v8336, %v8348
        %v8350 = vpop.f32.mrf.mxu0
        %8351 = vdwg.mxu0
        %8352 = vmatpush.bf16.msra.mxu0 %v6539
        %8353 = vmatpush.bf16.msra.mxu0 %v6535
        %8354 = vmatpush.bf16.msra.mxu0 %v6531
        %8355 = vmatpush.bf16.msra.mxu0 %v6527
        %8356 = vmatpush.bf16.msra.mxu0 %v6523
        %8357 = vmatpush.bf16.msra.mxu0 %v6519
        %8358 = vmatpush.bf16.msra.mxu0 %v6515
        %8359 = vmatpush.bf16.msra.mxu0 %v6511
        %8360 = vmatmul.bf16.gmra.mxu0 %v8156
        %v8361 = vpop.f32.mrf.mxu0
        %v8362 = vadd.f32 %v8349, %v8361
        %v8363 = vpop.f32.mrf.mxu0
        %8364 = vdwg.mxu0
        %v8365 = vmul.f32 %v8206, 0.5
        %v8366 = vmul.f32 %v8258, 0.5
        %v8367 = vmul.f32 %v8310, 0.5
        %v8368 = vmul.f32 %v8362, 0.5
        %v8369 = vpack.c.bf16 %v8366, %v8365
        %v8370 = vpack.c.bf16 %v8368, %v8367
        %v8373 = vunpack.c.l.b16 %v8369
        %v8374 = vunpack.c.h.b16 %v8369
        %v8375 = vunpack.c.l.b16 %v8370
        %v8376 = vunpack.c.h.b16 %v8370
        %v8377 = vpack.c.b16 %v8373, %v8373
        %v8378 = vpack.c.b16 %v8374, %v8374
        %v8379 = vpack.c.b16 %v8375, %v8375
        %v8380 = vpack.c.b16 %v8376, %v8376
        %v8417 = vunpack.c.l.b16 %v7452
        %v8418 = vunpack.c.h.b16 %v7452
        %v8419 = vunpack.c.l.b16 %v7453
        %v8420 = vunpack.c.h.b16 %v7453
        %v8421 = vunpack.c.l.b16 %v7454
        %v8422 = vunpack.c.h.b16 %v7454
        %v8423 = vunpack.c.l.b16 %v7455
        %v8424 = vunpack.c.h.b16 %v7455
        %v8425 = vunpack.c.l.b16 %v7456
        %v8426 = vunpack.c.h.b16 %v7456
        %v8427 = vunpack.c.l.b16 %v7457
        %v8428 = vunpack.c.h.b16 %v7457
        %v8429 = vunpack.c.l.b16 %v7458
        %v8430 = vunpack.c.h.b16 %v7458
        %v8431 = vunpack.c.l.b16 %v7459
        %v8432 = vunpack.c.h.b16 %v7459
        %v8433 = vunpack.c.l.b16 %v7460
        %v8434 = vunpack.c.h.b16 %v7460
        %v8435 = vunpack.c.l.b16 %v7461
        %v8436 = vunpack.c.h.b16 %v7461
        %v8437 = vunpack.c.l.b16 %v7462
        %v8438 = vunpack.c.h.b16 %v7462
        %v8439 = vunpack.c.l.b16 %v7463
        %v8440 = vunpack.c.h.b16 %v7463
        %v8441 = vunpack.c.l.b16 %v7464
        %v8442 = vunpack.c.h.b16 %v7464
        %v8443 = vunpack.c.l.b16 %v7465
        %v8444 = vunpack.c.h.b16 %v7465
        %v8445 = vunpack.c.l.b16 %v7466
        %v8446 = vunpack.c.h.b16 %v7466
        %v8447 = vunpack.c.l.b16 %v7467
        %v8448 = vunpack.c.h.b16 %v7467
        %v8449 = vunpack.c.l.b16 %v7468
        %v8450 = vunpack.c.h.b16 %v7468
        %v8451 = vunpack.c.l.b16 %v7469
        %v8452 = vunpack.c.h.b16 %v7469
        %v8453 = vunpack.c.l.b16 %v7470
        %v8454 = vunpack.c.h.b16 %v7470
        %v8455 = vunpack.c.l.b16 %v7471
        %v8456 = vunpack.c.h.b16 %v7471
        %v8457 = vunpack.c.l.b16 %v7472
        %v8458 = vunpack.c.h.b16 %v7472
        %v8459 = vunpack.c.l.b16 %v7473
        %v8460 = vunpack.c.h.b16 %v7473
        %v8461 = vunpack.c.l.b16 %v7474
        %v8462 = vunpack.c.h.b16 %v7474
        %v8463 = vunpack.c.l.b16 %v7475
        %v8464 = vunpack.c.h.b16 %v7475
        %v8465 = vunpack.c.l.b16 %v7476
        %v8466 = vunpack.c.h.b16 %v7476
        %v8467 = vunpack.c.l.b16 %v7477
        %v8468 = vunpack.c.h.b16 %v7477
        %v8469 = vunpack.c.l.b16 %v7478
        %v8470 = vunpack.c.h.b16 %v7478
        %v8471 = vunpack.c.l.b16 %v7479
        %v8472 = vunpack.c.h.b16 %v7479
        %v8473 = vunpack.c.l.b16 %v7480
        %v8474 = vunpack.c.h.b16 %v7480
        %v8475 = vunpack.c.l.b16 %v7481
        %v8476 = vunpack.c.h.b16 %v7481
        %v8477 = vunpack.c.l.b16 %v7482
        %v8478 = vunpack.c.h.b16 %v7482
        %v8479 = vunpack.c.l.b16 %v7483
        %v8480 = vunpack.c.h.b16 %v7483
        %v8481 = vpack.c.b16 %v8421, %v8417
        %v8482 = vpack.c.b16 %v8422, %v8418
        %v8483 = vpack.c.b16 %v8423, %v8419
        %v8484 = vpack.c.b16 %v8424, %v8420
        %v8485 = vpack.c.b16 %v8429, %v8425
        %v8486 = vpack.c.b16 %v8430, %v8426
        %v8487 = vpack.c.b16 %v8431, %v8427
        %v8488 = vpack.c.b16 %v8432, %v8428
        %v8489 = vpack.c.b16 %v8437, %v8433
        %v8490 = vpack.c.b16 %v8438, %v8434
        %v8491 = vpack.c.b16 %v8439, %v8435
        %v8492 = vpack.c.b16 %v8440, %v8436
        %v8493 = vpack.c.b16 %v8445, %v8441
        %v8494 = vpack.c.b16 %v8446, %v8442
        %v8495 = vpack.c.b16 %v8447, %v8443
        %v8496 = vpack.c.b16 %v8448, %v8444
        %v8497 = vpack.c.b16 %v8453, %v8449
        %v8498 = vpack.c.b16 %v8454, %v8450
        %v8499 = vpack.c.b16 %v8455, %v8451
        %v8500 = vpack.c.b16 %v8456, %v8452
        %v8501 = vpack.c.b16 %v8461, %v8457
        %v8502 = vpack.c.b16 %v8462, %v8458
        %v8503 = vpack.c.b16 %v8463, %v8459
        %v8504 = vpack.c.b16 %v8464, %v8460
        %v8505 = vpack.c.b16 %v8469, %v8465
        %v8506 = vpack.c.b16 %v8470, %v8466
        %v8507 = vpack.c.b16 %v8471, %v8467
        %v8508 = vpack.c.b16 %v8472, %v8468
        %v8509 = vpack.c.b16 %v8477, %v8473
        %v8510 = vpack.c.b16 %v8478, %v8474
        %v8511 = vpack.c.b16 %v8479, %v8475
        %v8512 = vpack.c.b16 %v8480, %v8476
        %8545 = vmatpush.bf16.xpose.msra.mxu0 %v8509
        %8546 = vmatpush.bf16.xpose.msra.mxu0 %v8505
        %8547 = vmatpush.bf16.xpose.msra.mxu0 %v8501
        %8548 = vmatpush.bf16.xpose.msra.mxu0 %v8497
        %8549 = vmatpush.bf16.xpose.msra.mxu0 %v8493
        %8550 = vmatpush.bf16.xpose.msra.mxu0 %v8489
        %8551 = vmatpush.bf16.xpose.msra.mxu0 %v8485
        %8552 = vmatpush.bf16.xpose.msra.mxu0 %v8481
        %8553 = vmatmul.bf16.gmra.mxu0 %v8377
        %v8554 = vpop.f32.mrf.mxu0
        %v8555 = vadd.f32 0.0, %v8554
        %v8556 = vpop.f32.mrf.mxu0
        %8557 = vdwg.mxu0
        %8558 = vmatpush.bf16.xpose.msra.mxu0 %v8510
        %8559 = vmatpush.bf16.xpose.msra.mxu0 %v8506
        %8560 = vmatpush.bf16.xpose.msra.mxu0 %v8502
        %8561 = vmatpush.bf16.xpose.msra.mxu0 %v8498
        %8562 = vmatpush.bf16.xpose.msra.mxu0 %v8494
        %8563 = vmatpush.bf16.xpose.msra.mxu0 %v8490
        %8564 = vmatpush.bf16.xpose.msra.mxu0 %v8486
        %8565 = vmatpush.bf16.xpose.msra.mxu0 %v8482
        %8566 = vmatmul.bf16.gmra.mxu0 %v8378
        %v8567 = vpop.f32.mrf.mxu0
        %v8568 = vadd.f32 %v8555, %v8567
        %v8569 = vpop.f32.mrf.mxu0
        %8570 = vdwg.mxu0
        %8571 = vmatpush.bf16.xpose.msra.mxu0 %v8511
        %8572 = vmatpush.bf16.xpose.msra.mxu0 %v8507
        %8573 = vmatpush.bf16.xpose.msra.mxu0 %v8503
        %8574 = vmatpush.bf16.xpose.msra.mxu0 %v8499
        %8575 = vmatpush.bf16.xpose.msra.mxu0 %v8495
        %8576 = vmatpush.bf16.xpose.msra.mxu0 %v8491
        %8577 = vmatpush.bf16.xpose.msra.mxu0 %v8487
        %8578 = vmatpush.bf16.xpose.msra.mxu0 %v8483
        %8579 = vmatmul.bf16.gmra.mxu0 %v8379
        %v8580 = vpop.f32.mrf.mxu0
        %v8581 = vadd.f32 %v8568, %v8580
        %v8582 = vpop.f32.mrf.mxu0
        %8583 = vdwg.mxu0
        %8584 = vmatpush.bf16.xpose.msra.mxu0 %v8512
        %8585 = vmatpush.bf16.xpose.msra.mxu0 %v8508
        %8586 = vmatpush.bf16.xpose.msra.mxu0 %v8504
        %8587 = vmatpush.bf16.xpose.msra.mxu0 %v8500
        %8588 = vmatpush.bf16.xpose.msra.mxu0 %v8496
        %8589 = vmatpush.bf16.xpose.msra.mxu0 %v8492
        %8590 = vmatpush.bf16.xpose.msra.mxu0 %v8488
        %8591 = vmatpush.bf16.xpose.msra.mxu0 %v8484
        %8592 = vmatmul.bf16.gmra.mxu0 %v8380
        %v8593 = vpop.f32.mrf.mxu0
        %v8594 = vadd.f32 %v8581, %v8593
        %v8595 = vpop.f32.mrf.mxu0
        %8596 = vdwg.mxu0
        %v8597 = vperm.slane %v8594, 0
        %v8600 = vunpack.c.l.b16 %v7928
        %v8601 = vunpack.c.h.b16 %v7928
        %v8602 = vunpack.c.l.b16 %v7929
        %v8603 = vunpack.c.h.b16 %v7929
        %v8604 = vpack.c.b16 %v8600, %v8600
        %v8605 = vpack.c.b16 %v8601, %v8601
        %v8606 = vpack.c.b16 %v8602, %v8602
        %v8607 = vpack.c.b16 %v8603, %v8603
        %v8644 = vunpack.c.l.b16 %v4266
        %v8645 = vunpack.c.h.b16 %v4266
        %v8646 = vunpack.c.l.b16 %v4267
        %v8647 = vunpack.c.h.b16 %v4267
        %v8648 = vunpack.c.l.b16 %v4268
        %v8649 = vunpack.c.h.b16 %v4268
        %v8650 = vunpack.c.l.b16 %v4269
        %v8651 = vunpack.c.h.b16 %v4269
        %v8652 = vunpack.c.l.b16 %v4270
        %v8653 = vunpack.c.h.b16 %v4270
        %v8654 = vunpack.c.l.b16 %v4271
        %v8655 = vunpack.c.h.b16 %v4271
        %v8656 = vunpack.c.l.b16 %v4272
        %v8657 = vunpack.c.h.b16 %v4272
        %v8658 = vunpack.c.l.b16 %v4273
        %v8659 = vunpack.c.h.b16 %v4273
        %v8660 = vunpack.c.l.b16 %v4274
        %v8661 = vunpack.c.h.b16 %v4274
        %v8662 = vunpack.c.l.b16 %v4275
        %v8663 = vunpack.c.h.b16 %v4275
        %v8664 = vunpack.c.l.b16 %v4276
        %v8665 = vunpack.c.h.b16 %v4276
        %v8666 = vunpack.c.l.b16 %v4277
        %v8667 = vunpack.c.h.b16 %v4277
        %v8668 = vunpack.c.l.b16 %v4278
        %v8669 = vunpack.c.h.b16 %v4278
        %v8670 = vunpack.c.l.b16 %v4279
        %v8671 = vunpack.c.h.b16 %v4279
        %v8672 = vunpack.c.l.b16 %v4280
        %v8673 = vunpack.c.h.b16 %v4280
        %v8674 = vunpack.c.l.b16 %v4281
        %v8675 = vunpack.c.h.b16 %v4281
        %v8676 = vunpack.c.l.b16 %v4282
        %v8677 = vunpack.c.h.b16 %v4282
        %v8678 = vunpack.c.l.b16 %v4283
        %v8679 = vunpack.c.h.b16 %v4283
        %v8680 = vunpack.c.l.b16 %v4284
        %v8681 = vunpack.c.h.b16 %v4284
        %v8682 = vunpack.c.l.b16 %v4285
        %v8683 = vunpack.c.h.b16 %v4285
        %v8684 = vunpack.c.l.b16 %v4286
        %v8685 = vunpack.c.h.b16 %v4286
        %v8686 = vunpack.c.l.b16 %v4287
        %v8687 = vunpack.c.h.b16 %v4287
        %v8688 = vunpack.c.l.b16 %v4288
        %v8689 = vunpack.c.h.b16 %v4288
        %v8690 = vunpack.c.l.b16 %v4289
        %v8691 = vunpack.c.h.b16 %v4289
        %v8692 = vunpack.c.l.b16 %v4290
        %v8693 = vunpack.c.h.b16 %v4290
        %v8694 = vunpack.c.l.b16 %v4291
        %v8695 = vunpack.c.h.b16 %v4291
        %v8696 = vunpack.c.l.b16 %v4292
        %v8697 = vunpack.c.h.b16 %v4292
        %v8698 = vunpack.c.l.b16 %v4293
        %v8699 = vunpack.c.h.b16 %v4293
        %v8700 = vunpack.c.l.b16 %v4294
        %v8701 = vunpack.c.h.b16 %v4294
        %v8702 = vunpack.c.l.b16 %v4295
        %v8703 = vunpack.c.h.b16 %v4295
        %v8704 = vunpack.c.l.b16 %v4296
        %v8705 = vunpack.c.h.b16 %v4296
        %v8706 = vunpack.c.l.b16 %v4297
        %v8707 = vunpack.c.h.b16 %v4297
        %v8708 = vpack.c.b16 %v8648, %v8644
        %v8709 = vpack.c.b16 %v8649, %v8645
        %v8710 = vpack.c.b16 %v8650, %v8646
        %v8711 = vpack.c.b16 %v8651, %v8647
        %v8712 = vpack.c.b16 %v8656, %v8652
        %v8713 = vpack.c.b16 %v8657, %v8653
        %v8714 = vpack.c.b16 %v8658, %v8654
        %v8715 = vpack.c.b16 %v8659, %v8655
        %v8716 = vpack.c.b16 %v8664, %v8660
        %v8717 = vpack.c.b16 %v8665, %v8661
        %v8718 = vpack.c.b16 %v8666, %v8662
        %v8719 = vpack.c.b16 %v8667, %v8663
        %v8720 = vpack.c.b16 %v8672, %v8668
        %v8721 = vpack.c.b16 %v8673, %v8669
        %v8722 = vpack.c.b16 %v8674, %v8670
        %v8723 = vpack.c.b16 %v8675, %v8671
        %v8724 = vpack.c.b16 %v8680, %v8676
        %v8725 = vpack.c.b16 %v8681, %v8677
        %v8726 = vpack.c.b16 %v8682, %v8678
        %v8727 = vpack.c.b16 %v8683, %v8679
        %v8728 = vpack.c.b16 %v8688, %v8684
        %v8729 = vpack.c.b16 %v8689, %v8685
        %v8730 = vpack.c.b16 %v8690, %v8686
        %v8731 = vpack.c.b16 %v8691, %v8687
        %v8732 = vpack.c.b16 %v8696, %v8692
        %v8733 = vpack.c.b16 %v8697, %v8693
        %v8734 = vpack.c.b16 %v8698, %v8694
        %v8735 = vpack.c.b16 %v8699, %v8695
        %v8736 = vpack.c.b16 %v8704, %v8700
        %v8737 = vpack.c.b16 %v8705, %v8701
        %v8738 = vpack.c.b16 %v8706, %v8702
        %v8739 = vpack.c.b16 %v8707, %v8703
        %8772 = vmatpush.bf16.xpose.msra.mxu0 %v8736
        %8773 = vmatpush.bf16.xpose.msra.mxu0 %v8732
        %8774 = vmatpush.bf16.xpose.msra.mxu0 %v8728
        %8775 = vmatpush.bf16.xpose.msra.mxu0 %v8724
        %8776 = vmatpush.bf16.xpose.msra.mxu0 %v8720
        %8777 = vmatpush.bf16.xpose.msra.mxu0 %v8716
        %8778 = vmatpush.bf16.xpose.msra.mxu0 %v8712
        %8779 = vmatpush.bf16.xpose.msra.mxu0 %v8708
        %8780 = vmatmul.bf16.gmra.mxu0 %v8604
        %v8781 = vpop.f32.mrf.mxu0
        %v8782 = vadd.f32 %v8597, %v8781
        %v8783 = vpop.f32.mrf.mxu0
        %8784 = vdwg.mxu0
        %8785 = vmatpush.bf16.xpose.msra.mxu0 %v8737
        %8786 = vmatpush.bf16.xpose.msra.mxu0 %v8733
        %8787 = vmatpush.bf16.xpose.msra.mxu0 %v8729
        %8788 = vmatpush.bf16.xpose.msra.mxu0 %v8725
        %8789 = vmatpush.bf16.xpose.msra.mxu0 %v8721
        %8790 = vmatpush.bf16.xpose.msra.mxu0 %v8717
        %8791 = vmatpush.bf16.xpose.msra.mxu0 %v8713
        %8792 = vmatpush.bf16.xpose.msra.mxu0 %v8709
        %8793 = vmatmul.bf16.gmra.mxu0 %v8605
        %v8794 = vpop.f32.mrf.mxu0
        %v8795 = vadd.f32 %v8782, %v8794
        %v8796 = vpop.f32.mrf.mxu0
        %8797 = vdwg.mxu0
        %8798 = vmatpush.bf16.xpose.msra.mxu0 %v8738
        %8799 = vmatpush.bf16.xpose.msra.mxu0 %v8734
        %8800 = vmatpush.bf16.xpose.msra.mxu0 %v8730
        %8801 = vmatpush.bf16.xpose.msra.mxu0 %v8726
        %8802 = vmatpush.bf16.xpose.msra.mxu0 %v8722
        %8803 = vmatpush.bf16.xpose.msra.mxu0 %v8718
        %8804 = vmatpush.bf16.xpose.msra.mxu0 %v8714
        %8805 = vmatpush.bf16.xpose.msra.mxu0 %v8710
        %8806 = vmatmul.bf16.gmra.mxu0 %v8606
        %v8807 = vpop.f32.mrf.mxu0
        %v8808 = vadd.f32 %v8795, %v8807
        %v8809 = vpop.f32.mrf.mxu0
        %8810 = vdwg.mxu0
        %8811 = vmatpush.bf16.xpose.msra.mxu0 %v8739
        %8812 = vmatpush.bf16.xpose.msra.mxu0 %v8735
        %8813 = vmatpush.bf16.xpose.msra.mxu0 %v8731
        %8814 = vmatpush.bf16.xpose.msra.mxu0 %v8727
        %8815 = vmatpush.bf16.xpose.msra.mxu0 %v8723
        %8816 = vmatpush.bf16.xpose.msra.mxu0 %v8719
        %8817 = vmatpush.bf16.xpose.msra.mxu0 %v8715
        %8818 = vmatpush.bf16.xpose.msra.mxu0 %v8711
        %8819 = vmatmul.bf16.gmra.mxu0 %v8607
        %v8820 = vpop.f32.mrf.mxu0
        %v8821 = vadd.f32 %v8808, %v8820
        %v8822 = vpop.f32.mrf.mxu0
        %8823 = vdwg.mxu0
        %8824 = vst [vmem:[%s591] sm:$0xff] %v8821
        %s8825 = sand.u32 %s314, 1
        %s8826 = scalar_lea.sflag [#allocation4], %s8825
        %s8827 = sand.u32 %s314, 1
        %s8828 = smul.addr %s8827, 8
        %s8829 = scalar_lea.vmem [#allocation14], %s8828
        // Predicated region
        $region97: #{tpu_custom_call.1} parent=67 // pred_check
          %p8830 = pneg %p324
        $region98: #{tpu_custom_call.1} parent=67 // pred_check_branch
          %8832 = sbr.rel (%p8830) target = $region100
        $region99: #{tpu_custom_call.1} parent=67 // pred_region
          %8834 = vsyncadd %s8826, 0
          %s8835 = smul.addr %s34, 8
          %s8836 = scalar_lea.hbm %s12, %s8835
          %s8838 = sshll.u32 %s8829, 4
          %s8839 = int_to_ptr.vmem [resolvable:$true] %s8838
          %s8840 = sshll.u32 %s8836, 4
          %s8841 = int_to_ptr.hbm [resolvable:$true] %s8840
          %8843 = dma.vmem_to_hbm [thread:$0]  %s8839, 128, %s8841, %s8826
        $region100: #{tpu_custom_call.1} parent=67 // pred_fallthru
          _
      $region68: #{tpu_custom_call.1} parent=5 // pred_fallthru
        _
      %p8844 = scmp.le.s32.totalorder 2, %s29
      // Predicated region
      $region101: #{tpu_custom_call.1} parent=5 // pred_check
        %p8845 = pneg %p8844
      $region102: #{tpu_custom_call.1} parent=5 // pred_check_branch
        %8847 = sbr.rel (%p8845) target = $region104
      $region103: #{tpu_custom_call.1} parent=5 // pred_region
        %s8848 = ssub.s32 %s29, 2
        // Predicated region
        $region105: #{tpu_custom_call.1} parent=103 // pred_check
          %p8849 = pneg %p330
        $region106: #{tpu_custom_call.1} parent=103 // pred_check_branch
          %8851 = sbr.rel (%p8849) target = $region108
        $region107: #{tpu_custom_call.1} parent=103 // pred_region
          %s8852 = sand.u32 %s315, 1
          %s8853 = scalar_lea.sflag [#allocation4], %s8852
          %s8854 = sand.u32 %s315, 1
          %s8855 = smul.addr %s8854, 8
          %s8856 = scalar_lea.vmem [#allocation14], %s8855
          %8858 = dma.done %s8853, 128
        $region108: #{tpu_custom_call.1} parent=103 // pred_fallthru
          _
      $region104: #{tpu_custom_call.1} parent=5 // pred_fallthru
        _
    $region6: #{tpu_custom_call.1} parent=1 // loop_footer
      %s33 = sadd.s32 1, %s29
    $region7: #{tpu_custom_call.1} parent=1 // loop_footer_branch
      %28 = sbr.rel target = $region3
    $region8: #{tpu_custom_call.1} parent=1 // loop_exit
      _
    %8859 = vsyncpa [#allocation3], 1
    %s8860 = scalar_lea.sflag [#allocation3], 1
    %8861 = vsyncpa %s8860, 1
    %8862 = vsyncpa [#allocation6], 1
    %s8863 = scalar_lea.sflag [#allocation6], 1
    %8864 = vsyncpa %s8863, 1
    %8865 = vsyncpa [#allocation9], 1
    %8866 = vsyncpa [#allocation12], 1
    %8867 = vsyncpa [#allocation4], 1
    %s8868 = scalar_lea.sflag [#allocation4], 1
    %8869 = vsyncpa %s8868, 1

</llo_original>
